<compile_context>
chip_gen: v5e
topology: v5e:2x2
jax: 0.10.0
libtpu: 0.0.40
codegen_flags: <defaults>
</compile_context>

<pallas_src>
import functools

import jax
import jax.numpy as jnp
from jax.experimental import pallas as pl
from jax.experimental.pallas import tpu as pltpu

LS = 120   # hidden width from the PyTorch module ("ls = 120")
P = 128    # hidden width padded to a full lane tile


def _sigmoid(z, approx):
    # sigmoid(z) = 1 / (1 + exp(-z)); exp runs on the EUP, and approx=True
    # uses the hardware vrcp without Newton refinement (VPU work saved).
    t = 1.0 + jnp.exp(-z)
    if approx:
        return pl.reciprocal(t, approx=True)
    return 1.0 / t


def mlp_kernel(x_ref,
               w1_ref, b1_ref, w2_ref, b2_ref, w3_ref, b3_ref,
               w4_ref, b4_ref, w5_ref, b5_ref, w6_ref, b6_ref,
               o_ref, *, approx):
    # Transposed layout: h is (P, tn), batch on the lane axis.
    x = x_ref[...]                                          # (1, tn) f32

    # Layer 1 has K=1 (an outer product): do it on the VPU as a broadcast
    # multiply instead of wasting a full MXU pass.
    h = _sigmoid(w1_ref[...] * x + b1_ref[...], approx)     # (P, tn) f32

    # Hidden layers: full (P, P) x (P, tn) MXU tiles, f32 accumulation.
    for w_ref, b_ref in ((w2_ref, b2_ref), (w3_ref, b3_ref),
                         (w4_ref, b4_ref), (w5_ref, b5_ref)):
        z = jnp.dot(w_ref[...], h.astype(w_ref.dtype),
                    preferred_element_type=jnp.float32) + b_ref[...]
        h = _sigmoid(z, approx)

    # Final layer (out_features=1): M=1, but the (1, tn) result is lane-dense
    # so the output store and writeback DMA are wide and unmasked.
    o_ref[...] = jnp.dot(w6_ref[...], h.astype(w6_ref.dtype),
                         preferred_element_type=jnp.float32) + b6_ref[...]


def init_params(key):
    """PyTorch-style init: W:(out,in), b:(out,), U(-1/sqrt(fan_in), 1/sqrt(fan_in))."""
    dims = [(1, LS), (LS, LS), (LS, LS), (LS, LS), (LS, LS), (LS, 1)]
    params = []
    for fan_in, fan_out in dims:
        key, kw, kb = jax.random.split(key, 3)
        bound = 1.0 / jnp.sqrt(jnp.float32(fan_in))
        w = jax.random.uniform(kw, (fan_out, fan_in), jnp.float32, -bound, bound)
        b = jax.random.uniform(kb, (fan_out,), jnp.float32, -bound, bound)
        params.append((w, b))
    return params


def _pad2(a, rows, cols):
    out = jnp.zeros((rows, cols), a.dtype)
    return out.at[:a.shape[0], :a.shape[1]].set(a)


def _pack_params(params, compute_dtype):
    """Zero-pad hidden width 120 -> 128 and lay out for the transposed kernel.

    Padded rows produce sigmoid(0)=0.5 in the padded activation rows, but the
    corresponding (zero-padded) input columns of the next layer's weight kill
    them, so they never reach the output.
    """
    (w1, b1), (w2, b2), (w3, b3), (w4, b4), (w5, b5), (w6, b6) = params
    flat = [_pad2(w1, P, 1), _pad2(b1[:, None], P, 1)]          # layer 1 (VPU)
    for w, b in ((w2, b2), (w3, b3), (w4, b4), (w5, b5)):
        flat.append(_pad2(w, P, P).astype(compute_dtype))
        flat.append(_pad2(b[:, None], P, 1))
    flat.append(_pad2(w6, 1, P).astype(compute_dtype))
    flat.append(b6.reshape(1, 1))
    return flat


def _whole_block(shape):
    # Helper with a constant index_map (avoids the late-binding-lambda footgun
    # flagged in review).
    return pl.BlockSpec(shape, lambda i: (0, 0))


def network_forward(x, params, *, tn=512, compute_dtype=jnp.bfloat16,
                    approx_sigmoid=True):
    """x: (N, 1) float32 -> (N, 1) float32."""
    N = x.shape[0]

    # Lane-dense batch tile: a multiple of 128; keep >= 2 grid steps when the
    # batch allows it so the 'parallel' axis shards across both v7x TCs.
    tn = max(128, min(tn, 128 * pl.cdiv(N, 2 * 128)))
    n_pad = tn * pl.cdiv(N, tn)

    # Batch rides the lane axis: x^T is (1, n_pad), zero-padded.
    xt = jnp.zeros((1, n_pad), jnp.float32).at[0, :N].set(x[:, 0])

    flat = _pack_params(params, compute_dtype)
    kernel = functools.partial(mlp_kernel, approx=approx_sigmoid)

    out_t = pl.pallas_call(
        kernel,
        out_shape=jax.ShapeDtypeStruct((1, n_pad), jnp.float32),
        grid_spec=pltpu.PrefetchScalarGridSpec(
            num_scalar_prefetch=0,
            grid=(n_pad // tn,),
            in_specs=[pl.BlockSpec((1, tn), lambda i: (0, i))]
                     + [_whole_block(p.shape) for p in flat],
            out_specs=pl.BlockSpec((1, tn), lambda i: (0, i)),
        ),
        compiler_params=pltpu.CompilerParams(
            dimension_semantics=("parallel",)),
    )(xt, *flat)

    return out_t[:, :N].T


def network_ref(x, params):
    h = x
    for idx, (w, b) in enumerate(params):
        h = h @ w.T + b
        if idx < len(params) - 1:
            h = jax.nn.sigmoid(h)
    return h


if __name__ == "__main__":
    key = jax.random.PRNGKey(0)
    kx, kp = jax.random.split(key)

    N = 1024  # batch of time points; input is (N, 1) as in the PyTorch module
    x = jax.random.uniform(kx, (N, 1), jnp.float32, 0.0, 2.0)
    params = init_params(kp)

    ref = network_ref(x, params)

    # Exact path: f32 matmul operands, exact sigmoid. Tolerance covers only
    # matmul-algorithm/summation-order differences vs. the XLA reference.
    out_f32 = jax.block_until_ready(
        network_forward(x, params, compute_dtype=jnp.float32,
                        approx_sigmoid=False))
    assert out_f32.shape == (N, 1)
    assert jnp.allclose(out_f32, ref, atol=2e-3, rtol=2e-3), \
        "f32 kernel mismatch vs JAX reference"

    # Fast path (default): bf16 matmul operands (f32 accumulation) +
    # approx-reciprocal sigmoid. Looser tolerance for bf16 operand rounding.
    out_fast = jax.block_until_ready(network_forward(x, params))
    assert out_fast.shape == (N, 1)
    assert jnp.allclose(out_fast, ref, atol=3e-2, rtol=3e-2), \
        "bf16 kernel mismatch vs JAX reference"

    print("KERNEL_OK")
</pallas_src>

<mosaic_0001>
module attributes {stable_mosaic.version = 11 : i64} {
  func.func @mlp_kernel(%arg0: i32, %arg1: memref<1x512xf32, #tpu.memory_space<vmem>>, %arg2: memref<128x1xf32, #tpu.memory_space<vmem>>, %arg3: memref<128x1xf32, #tpu.memory_space<vmem>>, %arg4: memref<128x128xf32, #tpu.memory_space<vmem>>, %arg5: memref<128x1xf32, #tpu.memory_space<vmem>>, %arg6: memref<128x128xf32, #tpu.memory_space<vmem>>, %arg7: memref<128x1xf32, #tpu.memory_space<vmem>>, %arg8: memref<128x128xf32, #tpu.memory_space<vmem>>, %arg9: memref<128x1xf32, #tpu.memory_space<vmem>>, %arg10: memref<128x128xf32, #tpu.memory_space<vmem>>, %arg11: memref<128x1xf32, #tpu.memory_space<vmem>>, %arg12: memref<1x128xf32, #tpu.memory_space<vmem>>, %arg13: memref<1x1xf32, #tpu.memory_space<vmem>>, %arg14: memref<1x512xf32, #tpu.memory_space<vmem>>) attributes {dimension_semantics = [#tpu.dimension_semantics<parallel>], iteration_bounds = array<i64: 2>, scalar_prefetch = 0 : i64, scratch_operands = 0 : i64, tpu.core_type = #tpu.core_type<tc>, window_params = [{transform_indices = @transform_0, window_bounds = array<i64: 1, 512>}, {pipeline_mode = #tpu.pipeline_mode<synchronous>, transform_indices = @transform_1, window_bounds = array<i64: 128, 1>}, {pipeline_mode = #tpu.pipeline_mode<synchronous>, transform_indices = @transform_2, window_bounds = array<i64: 128, 1>}, {pipeline_mode = #tpu.pipeline_mode<synchronous>, transform_indices = @transform_3, window_bounds = array<i64: 128, 128>}, {pipeline_mode = #tpu.pipeline_mode<synchronous>, transform_indices = @transform_4, window_bounds = array<i64: 128, 1>}, {pipeline_mode = #tpu.pipeline_mode<synchronous>, transform_indices = @transform_5, window_bounds = array<i64: 128, 128>}, {pipeline_mode = #tpu.pipeline_mode<synchronous>, transform_indices = @transform_6, window_bounds = array<i64: 128, 1>}, {pipeline_mode = #tpu.pipeline_mode<synchronous>, transform_indices = @transform_7, window_bounds = array<i64: 128, 128>}, {pipeline_mode = #tpu.pipeline_mode<synchronous>, transform_indices = @transform_8, window_bounds = array<i64: 128, 1>}, {pipeline_mode = #tpu.pipeline_mode<synchronous>, transform_indices = @transform_9, window_bounds = array<i64: 128, 128>}, {pipeline_mode = #tpu.pipeline_mode<synchronous>, transform_indices = @transform_10, window_bounds = array<i64: 128, 1>}, {pipeline_mode = #tpu.pipeline_mode<synchronous>, transform_indices = @transform_11, window_bounds = array<i64: 1, 128>}, {pipeline_mode = #tpu.pipeline_mode<synchronous>, transform_indices = @transform_12, window_bounds = array<i64: 1, 1>}, {transform_indices = @transform_13, window_bounds = array<i64: 1, 512>}]} {
    %c0 = arith.constant 0 : index
    %c0_0 = arith.constant 0 : index
    %0 = vector.load %arg1[%c0, %c0_0] : memref<1x512xf32, #tpu.memory_space<vmem>>, vector<1x512xf32>
    %c0_1 = arith.constant 0 : index
    %c0_2 = arith.constant 0 : index
    %1 = vector.load %arg2[%c0_1, %c0_2] : memref<128x1xf32, #tpu.memory_space<vmem>>, vector<128x1xf32>
    %2 = vector.broadcast %1 : vector<128x1xf32> to vector<128x512xf32>
    %3 = vector.broadcast %0 : vector<1x512xf32> to vector<128x512xf32>
    %4 = arith.mulf %2, %3 : vector<128x512xf32>
    %c0_3 = arith.constant 0 : index
    %c0_4 = arith.constant 0 : index
    %5 = vector.load %arg3[%c0_3, %c0_4] : memref<128x1xf32, #tpu.memory_space<vmem>>, vector<128x1xf32>
    %6 = vector.broadcast %5 : vector<128x1xf32> to vector<128x512xf32>
    %7 = arith.addf %4, %6 : vector<128x512xf32>
    %cst = arith.constant 0.000000e+00 : f32
    %8 = vector.broadcast %cst : f32 to vector<128x512xf32>
    %9 = arith.subf %8, %7 : vector<128x512xf32>
    %10 = math.exp %9 : vector<128x512xf32>
    %cst_5 = arith.constant 1.000000e+00 : f32
    %11 = vector.broadcast %cst_5 : f32 to vector<128x512xf32>
    %12 = arith.addf %11, %10 : vector<128x512xf32>
    %cst_6 = arith.constant 1.000000e+00 : f32
    %13 = vector.broadcast %cst_6 : f32 to vector<128x512xf32>
    %14 = arith.divf %13, %12 : vector<128x512xf32>
    %c0_7 = arith.constant 0 : index
    %c0_8 = arith.constant 0 : index
    %15 = vector.load %arg4[%c0_7, %c0_8] : memref<128x128xf32, #tpu.memory_space<vmem>>, vector<128x128xf32>
    %cst_9 = arith.constant dense<0.000000e+00> : vector<128x512xf32>
    %16 = tpu.matmul %15, %14, %cst_9 {dimension_numbers = #tpu.dot_dimension_numbers<[1], [0], [0], [1], [0, 0, 1, 1], [], []>} : vector<128x128xf32>, vector<128x512xf32>, vector<128x512xf32> -> vector<128x512xf32>
    %c0_10 = arith.constant 0 : index
    %c0_11 = arith.constant 0 : index
    %17 = vector.load %arg5[%c0_10, %c0_11] : memref<128x1xf32, #tpu.memory_space<vmem>>, vector<128x1xf32>
    %18 = vector.broadcast %17 : vector<128x1xf32> to vector<128x512xf32>
    %19 = arith.addf %16, %18 : vector<128x512xf32>
    %cst_12 = arith.constant 0.000000e+00 : f32
    %20 = vector.broadcast %cst_12 : f32 to vector<128x512xf32>
    %21 = arith.subf %20, %19 : vector<128x512xf32>
    %22 = math.exp %21 : vector<128x512xf32>
    %cst_13 = arith.constant 1.000000e+00 : f32
    %23 = vector.broadcast %cst_13 : f32 to vector<128x512xf32>
    %24 = arith.addf %23, %22 : vector<128x512xf32>
    %cst_14 = arith.constant 1.000000e+00 : f32
    %25 = vector.broadcast %cst_14 : f32 to vector<128x512xf32>
    %26 = arith.divf %25, %24 : vector<128x512xf32>
    %c0_15 = arith.constant 0 : index
    %c0_16 = arith.constant 0 : index
    %27 = vector.load %arg6[%c0_15, %c0_16] : memref<128x128xf32, #tpu.memory_space<vmem>>, vector<128x128xf32>
    %cst_17 = arith.constant dense<0.000000e+00> : vector<128x512xf32>
    %28 = tpu.matmul %27, %26, %cst_17 {dimension_numbers = #tpu.dot_dimension_numbers<[1], [0], [0], [1], [0, 0, 1, 1], [], []>} : vector<128x128xf32>, vector<128x512xf32>, vector<128x512xf32> -> vector<128x512xf32>
    %c0_18 = arith.constant 0 : index
    %c0_19 = arith.constant 0 : index
    %29 = vector.load %arg7[%c0_18, %c0_19] : memref<128x1xf32, #tpu.memory_space<vmem>>, vector<128x1xf32>
    %30 = vector.broadcast %29 : vector<128x1xf32> to vector<128x512xf32>
    %31 = arith.addf %28, %30 : vector<128x512xf32>
    %cst_20 = arith.constant 0.000000e+00 : f32
    %32 = vector.broadcast %cst_20 : f32 to vector<128x512xf32>
    %33 = arith.subf %32, %31 : vector<128x512xf32>
    %34 = math.exp %33 : vector<128x512xf32>
    %cst_21 = arith.constant 1.000000e+00 : f32
    %35 = vector.broadcast %cst_21 : f32 to vector<128x512xf32>
    %36 = arith.addf %35, %34 : vector<128x512xf32>
    %cst_22 = arith.constant 1.000000e+00 : f32
    %37 = vector.broadcast %cst_22 : f32 to vector<128x512xf32>
    %38 = arith.divf %37, %36 : vector<128x512xf32>
    %c0_23 = arith.constant 0 : index
    %c0_24 = arith.constant 0 : index
    %39 = vector.load %arg8[%c0_23, %c0_24] : memref<128x128xf32, #tpu.memory_space<vmem>>, vector<128x128xf32>
    %cst_25 = arith.constant dense<0.000000e+00> : vector<128x512xf32>
    %40 = tpu.matmul %39, %38, %cst_25 {dimension_numbers = #tpu.dot_dimension_numbers<[1], [0], [0], [1], [0, 0, 1, 1], [], []>} : vector<128x128xf32>, vector<128x512xf32>, vector<128x512xf32> -> vector<128x512xf32>
    %c0_26 = arith.constant 0 : index
    %c0_27 = arith.constant 0 : index
    %41 = vector.load %arg9[%c0_26, %c0_27] : memref<128x1xf32, #tpu.memory_space<vmem>>, vector<128x1xf32>
    %42 = vector.broadcast %41 : vector<128x1xf32> to vector<128x512xf32>
    %43 = arith.addf %40, %42 : vector<128x512xf32>
    %cst_28 = arith.constant 0.000000e+00 : f32
    %44 = vector.broadcast %cst_28 : f32 to vector<128x512xf32>
    %45 = arith.subf %44, %43 : vector<128x512xf32>
    %46 = math.exp %45 : vector<128x512xf32>
    %cst_29 = arith.constant 1.000000e+00 : f32
    %47 = vector.broadcast %cst_29 : f32 to vector<128x512xf32>
    %48 = arith.addf %47, %46 : vector<128x512xf32>
    %cst_30 = arith.constant 1.000000e+00 : f32
    %49 = vector.broadcast %cst_30 : f32 to vector<128x512xf32>
    %50 = arith.divf %49, %48 : vector<128x512xf32>
    %c0_31 = arith.constant 0 : index
    %c0_32 = arith.constant 0 : index
    %51 = vector.load %arg10[%c0_31, %c0_32] : memref<128x128xf32, #tpu.memory_space<vmem>>, vector<128x128xf32>
    %cst_33 = arith.constant dense<0.000000e+00> : vector<128x512xf32>
    %52 = tpu.matmul %51, %50, %cst_33 {dimension_numbers = #tpu.dot_dimension_numbers<[1], [0], [0], [1], [0, 0, 1, 1], [], []>} : vector<128x128xf32>, vector<128x512xf32>, vector<128x512xf32> -> vector<128x512xf32>
    %c0_34 = arith.constant 0 : index
    %c0_35 = arith.constant 0 : index
    %53 = vector.load %arg11[%c0_34, %c0_35] : memref<128x1xf32, #tpu.memory_space<vmem>>, vector<128x1xf32>
    %54 = vector.broadcast %53 : vector<128x1xf32> to vector<128x512xf32>
    %55 = arith.addf %52, %54 : vector<128x512xf32>
    %cst_36 = arith.constant 0.000000e+00 : f32
    %56 = vector.broadcast %cst_36 : f32 to vector<128x512xf32>
    %57 = arith.subf %56, %55 : vector<128x512xf32>
    %58 = math.exp %57 : vector<128x512xf32>
    %cst_37 = arith.constant 1.000000e+00 : f32
    %59 = vector.broadcast %cst_37 : f32 to vector<128x512xf32>
    %60 = arith.addf %59, %58 : vector<128x512xf32>
    %cst_38 = arith.constant 1.000000e+00 : f32
    %61 = vector.broadcast %cst_38 : f32 to vector<128x512xf32>
    %62 = arith.divf %61, %60 : vector<128x512xf32>
    %c0_39 = arith.constant 0 : index
    %c0_40 = arith.constant 0 : index
    %63 = vector.load %arg12[%c0_39, %c0_40] : memref<1x128xf32, #tpu.memory_space<vmem>>, vector<1x128xf32>
    %cst_41 = arith.constant dense<0.000000e+00> : vector<1x512xf32>
    %64 = tpu.matmul %63, %62, %cst_41 {dimension_numbers = #tpu.dot_dimension_numbers<[1], [0], [0], [1], [0, 0, 1, 1], [], []>} : vector<1x128xf32>, vector<128x512xf32>, vector<1x512xf32> -> vector<1x512xf32>
    %c0_42 = arith.constant 0 : index
    %c0_43 = arith.constant 0 : index
    %65 = vector.load %arg13[%c0_42, %c0_43] : memref<1x1xf32, #tpu.memory_space<vmem>>, vector<1x1xf32>
    %66 = vector.broadcast %65 : vector<1x1xf32> to vector<1x512xf32>
    %67 = arith.addf %64, %66 : vector<1x512xf32>
    %c0_44 = arith.constant 0 : index
    %c0_45 = arith.constant 0 : index
    %68 = vector.load %arg14[%c0_44, %c0_45] : memref<1x512xf32, #tpu.memory_space<vmem>>, vector<1x512xf32>
    tpu.vector_store %arg14[%c0_44, %c0_45], %67 {strides = array<i32>} : memref<1x512xf32, #tpu.memory_space<vmem>>, vector<1x512xf32>,
    return
  }
  func.func @transform_0(%arg0: i32) -> (i32, i32) {
    %c0_i32 = arith.constant 0 : i32
    %c0_i32_0 = arith.constant 0 : i32
    return %c0_i32, %arg0 : i32, i32
  }
  func.func @transform_1(%arg0: i32) -> (i32, i32) {
    %c0_i32 = arith.constant 0 : i32
    %c0_i32_0 = arith.constant 0 : i32
    %c0_i32_1 = arith.constant 0 : i32
    return %c0_i32, %c0_i32_0 : i32, i32
  }
  func.func @transform_2(%arg0: i32) -> (i32, i32) {
    %c0_i32 = arith.constant 0 : i32
    %c0_i32_0 = arith.constant 0 : i32
    %c0_i32_1 = arith.constant 0 : i32
    return %c0_i32, %c0_i32_0 : i32, i32
  }
  func.func @transform_3(%arg0: i32) -> (i32, i32) {
    %c0_i32 = arith.constant 0 : i32
    %c0_i32_0 = arith.constant 0 : i32
    %c0_i32_1 = arith.constant 0 : i32
    return %c0_i32, %c0_i32_0 : i32, i32
  }
  func.func @transform_4(%arg0: i32) -> (i32, i32) {
    %c0_i32 = arith.constant 0 : i32
    %c0_i32_0 = arith.constant 0 : i32
    %c0_i32_1 = arith.constant 0 : i32
    return %c0_i32, %c0_i32_0 : i32, i32
  }
  func.func @transform_5(%arg0: i32) -> (i32, i32) {
    %c0_i32 = arith.constant 0 : i32
    %c0_i32_0 = arith.constant 0 : i32
    %c0_i32_1 = arith.constant 0 : i32
    return %c0_i32, %c0_i32_0 : i32, i32
  }
  func.func @transform_6(%arg0: i32) -> (i32, i32) {
    %c0_i32 = arith.constant 0 : i32
    %c0_i32_0 = arith.constant 0 : i32
    %c0_i32_1 = arith.constant 0 : i32
    return %c0_i32, %c0_i32_0 : i32, i32
  }
  func.func @transform_7(%arg0: i32) -> (i32, i32) {
    %c0_i32 = arith.constant 0 : i32
    %c0_i32_0 = arith.constant 0 : i32
    %c0_i32_1 = arith.constant 0 : i32
    return %c0_i32, %c0_i32_0 : i32, i32
  }
  func.func @transform_8(%arg0: i32) -> (i32, i32) {
    %c0_i32 = arith.constant 0 : i32
    %c0_i32_0 = arith.constant 0 : i32
    %c0_i32_1 = arith.constant 0 : i32
    return %c0_i32, %c0_i32_0 : i32, i32
  }
  func.func @transform_9(%arg0: i32) -> (i32, i32) {
    %c0_i32 = arith.constant 0 : i32
    %c0_i32_0 = arith.constant 0 : i32
    %c0_i32_1 = arith.constant 0 : i32
    return %c0_i32, %c0_i32_0 : i32, i32
  }
  func.func @transform_10(%arg0: i32) -> (i32, i32) {
    %c0_i32 = arith.constant 0 : i32
    %c0_i32_0 = arith.constant 0 : i32
    %c0_i32_1 = arith.constant 0 : i32
    return %c0_i32, %c0_i32_0 : i32, i32
  }
  func.func @transform_11(%arg0: i32) -> (i32, i32) {
    %c0_i32 = arith.constant 0 : i32
    %c0_i32_0 = arith.constant 0 : i32
    %c0_i32_1 = arith.constant 0 : i32
    return %c0_i32, %c0_i32_0 : i32, i32
  }
  func.func @transform_12(%arg0: i32) -> (i32, i32) {
    %c0_i32 = arith.constant 0 : i32
    %c0_i32_0 = arith.constant 0 : i32
    %c0_i32_1 = arith.constant 0 : i32
    return %c0_i32, %c0_i32_0 : i32, i32
  }
  func.func @transform_13(%arg0: i32) -> (i32, i32) {
    %c0_i32 = arith.constant 0 : i32
    %c0_i32_0 = arith.constant 0 : i32
    return %c0_i32, %arg0 : i32, i32
  }
}

</mosaic_0001>

<llo_original>
// kernel: tpu_custom_call.1
$region0: #{tpu_custom_call.1}
  #allocation0 [shape = 'u32[]', space=smem, size = 0x4, offset = 0x4, fixed_abs, tag = 'smem constant byte address 0x4 - core index']
  #allocation1 [shape = 'u32[72,128]{1,0:T(1,128)}', space=vmem, size = 0x9000, scoped, tag = 'internal scratch']
  #allocation2 [shape = 'f32[1,1]{1,0:T(1,128)S(1)}', space=vmem, size = 0x200, scoped, tag = 'scoped memory for tpu_custom_call.1']
  %s0 = inlined_call_operand.vmem [shape: f32[1,1024], index: 0, kind: input, shape index: {}]
  %s1 = inlined_call_operand.vmem [shape: f32[128,1], index: 1, kind: input, shape index: {}]
  %s2 = inlined_call_operand.vmem [shape: f32[128,1], index: 2, kind: input, shape index: {}]
  %s3 = inlined_call_operand.vmem [shape: f32[128,128], index: 3, kind: input, shape index: {}]
  %s4 = inlined_call_operand.vmem [shape: f32[128,1], index: 4, kind: input, shape index: {}]
  %s5 = inlined_call_operand.vmem [shape: f32[128,128], index: 5, kind: input, shape index: {}]
  %s6 = inlined_call_operand.vmem [shape: f32[128,1], index: 6, kind: input, shape index: {}]
  %s7 = inlined_call_operand.vmem [shape: f32[128,128], index: 7, kind: input, shape index: {}]
  %s8 = inlined_call_operand.vmem [shape: f32[128,1], index: 8, kind: input, shape index: {}]
  %s9 = inlined_call_operand.vmem [shape: f32[128,128], index: 9, kind: input, shape index: {}]
  %s10 = inlined_call_operand.vmem [shape: f32[128,1], index: 10, kind: input, shape index: {}]
  %s11 = inlined_call_operand.vmem [shape: f32[1,128], index: 11, kind: input, shape index: {}]
  %s12 = inlined_call_operand.<no memory space> [shape: f32[1,1], index: 12, kind: input, shape index: {}]
  %s13 = inlined_call_operand.hbm [shape: f32[1,1024], index: 13, kind: output, shape index: {}]
  %s14 = sld [smem:[#allocation0]]
  $region85: #{tpu_custom_call.1} parent=0
    _
  %s16 = ssub.s32 1, %s14
  %s17 = scalar_select 0, %s16, %s14
  %v18 = vstv %s12
  %19 = vst [vmem:[#allocation2] sm:$0x1] %v18
  $region1: #{tpu_custom_call.1} parent=0
    #allocation3 [shape = 'u8[4096]{0}', space=vmem, size = 0x1000, scoped, tag = 'output window, operand 0']
    #allocation4 [shape = 's32[2]{0}', space=sflag, size = 0x8, scoped, tag = 'scoped memory for tpu_custom_call.1']
    %20 = vsyncpa [#allocation4], 0
    %s21 = scalar_lea.sflag [#allocation4], 1
    %22 = vsyncpa %s21, 0
    loop: start=0, step=1, limit=4
    $region2: #{tpu_custom_call.1} parent=1 // loop_pre_header
      _
    $region3: #{tpu_custom_call.1} parent=1 // loop_header
      %s24 = sphi 0, %s28
      %p25 = scmp.ge.s32.totalorder %s24, 4
      %s34 = sphi 0, %s36
      %s37 = sphi 0, %s34
      %s38 = sphi 0, %s37
      %s54 = sphi 0, %s38
      %s58 = sphi 0, %s58
      %s60 = sphi 0, %s58
      %s61 = sphi 0, %s60
      %s75 = sphi 0, %s61
      %s79 = sphi 0, %s79
      %s81 = sphi 0, %s79
      %s82 = sphi 0, %s81
      %s96 = sphi 0, %s82
      %s100 = sphi 0, %s100
      %s102 = sphi 0, %s100
      %s103 = sphi 0, %s102
      %s117 = sphi 0, %s103
      %s121 = sphi 0, %s121
      %s123 = sphi 0, %s121
      %s124 = sphi 0, %s123
      %s138 = sphi 0, %s124
      %s142 = sphi 0, %s142
      %s144 = sphi 0, %s142
      %s145 = sphi 0, %s144
      %s159 = sphi 0, %s145
      %s163 = sphi 0, %s163
      %s165 = sphi 0, %s163
      %s166 = sphi 0, %s165
      %s180 = sphi 0, %s166
      %s184 = sphi 0, %s184
      %s186 = sphi 0, %s184
      %s187 = sphi 0, %s186
      %s201 = sphi 0, %s187
      %s205 = sphi 0, %s205
      %s207 = sphi 0, %s205
      %s208 = sphi 0, %s207
      %s222 = sphi 0, %s208
      %s226 = sphi 0, %s226
      %s228 = sphi 0, %s226
      %s229 = sphi 0, %s228
      %s243 = sphi 0, %s229
      %s247 = sphi 0, %s247
      %s249 = sphi 0, %s247
      %s250 = sphi 0, %s249
      %s264 = sphi 0, %s250
      %s268 = sphi 0, %s268
      %s270 = sphi 0, %s268
      %s271 = sphi 0, %s270
      %s285 = sphi 0, %s271
      %s289 = sphi 0, %s289
      %s291 = sphi 0, %s289
      %s292 = sphi 0, %s291
      %s306 = sphi 0, %s292
      %s312 = sphi 0, %s314
      %s315 = sphi 0, %s312
      %s316 = sphi 0, %s315
      %s332 = sphi 0, %s316
    $region4: #{tpu_custom_call.1} parent=1 // loop_header_branch
      %27 = sbr.rel (%p25) target = $region8
    $region5: #{tpu_custom_call.1} parent=1 // loop_body
      %s29 = ssub.s32 %s24, 1
      %s30 = ssub.s32 %s24, 2
      %s31 = sadd.s32 %s24, 1
      %s32 = ssub.s32 %s24, %s31
      %p33 = scmp.eq.s32.totalorder %s32, 0
      %s35 = sadd.s32 %s34, 1
      %s36 = scalar_select %p33, %s34, %s35
      %p39 = pneg %p33
      %p40 = scmp.eq.s32.totalorder %s24, 1
      %p41 = por %p39, %p40
      %p42 = scmp.ne.s32.totalorder %s34, %s37
      %p43 = scmp.eq.s32.totalorder %s24, 0
      %p44 = por %p42, %p43
      %p45 = scmp.ne.s32.totalorder %s34, %s37
      %p46 = scmp.eq.s32.totalorder %s29, 1
      %p47 = por %p45, %p46
      %p48 = scmp.ne.s32.totalorder %s37, %s38
      %p49 = scmp.eq.s32.totalorder %s29, 0
      %p50 = por %p48, %p49
      %p51 = scmp.ne.s32.totalorder %s37, %s38
      %p52 = scmp.eq.s32.totalorder %s30, 1
      %p53 = por %p51, %p52
      %p55 = scmp.ne.s32.totalorder %s38, %s54
      %p56 = scmp.eq.s32.totalorder %s30, 0
      %p57 = por %p55, %p56
      %s59 = sadd.s32 %s58, 1
      %p62 = scmp.eq.s32.totalorder %s24, 1
      %p63 = scmp.ne.s32.totalorder %s58, %s60
      %p64 = scmp.eq.s32.totalorder %s24, 0
      %p65 = por %p63, %p64
      %p66 = scmp.ne.s32.totalorder %s58, %s60
      %p67 = scmp.eq.s32.totalorder %s29, 1
      %p68 = por %p66, %p67
      %p69 = scmp.ne.s32.totalorder %s60, %s61
      %p70 = scmp.eq.s32.totalorder %s29, 0
      %p71 = por %p69, %p70
      %p72 = scmp.ne.s32.totalorder %s60, %s61
      %p73 = scmp.eq.s32.totalorder %s30, 1
      %p74 = por %p72, %p73
      %p76 = scmp.ne.s32.totalorder %s61, %s75
      %p77 = scmp.eq.s32.totalorder %s30, 0
      %p78 = por %p76, %p77
      %s80 = sadd.s32 %s79, 1
      %p83 = scmp.eq.s32.totalorder %s24, 1
      %p84 = scmp.ne.s32.totalorder %s79, %s81
      %p85 = scmp.eq.s32.totalorder %s24, 0
      %p86 = por %p84, %p85
      %p87 = scmp.ne.s32.totalorder %s79, %s81
      %p88 = scmp.eq.s32.totalorder %s29, 1
      %p89 = por %p87, %p88
      %p90 = scmp.ne.s32.totalorder %s81, %s82
      %p91 = scmp.eq.s32.totalorder %s29, 0
      %p92 = por %p90, %p91
      %p93 = scmp.ne.s32.totalorder %s81, %s82
      %p94 = scmp.eq.s32.totalorder %s30, 1
      %p95 = por %p93, %p94
      %p97 = scmp.ne.s32.totalorder %s82, %s96
      %p98 = scmp.eq.s32.totalorder %s30, 0
      %p99 = por %p97, %p98
      %s101 = sadd.s32 %s100, 1
      %p104 = scmp.eq.s32.totalorder %s24, 1
      %p105 = scmp.ne.s32.totalorder %s100, %s102
      %p106 = scmp.eq.s32.totalorder %s24, 0
      %p107 = por %p105, %p106
      %p108 = scmp.ne.s32.totalorder %s100, %s102
      %p109 = scmp.eq.s32.totalorder %s29, 1
      %p110 = por %p108, %p109
      %p111 = scmp.ne.s32.totalorder %s102, %s103
      %p112 = scmp.eq.s32.totalorder %s29, 0
      %p113 = por %p111, %p112
      %p114 = scmp.ne.s32.totalorder %s102, %s103
      %p115 = scmp.eq.s32.totalorder %s30, 1
      %p116 = por %p114, %p115
      %p118 = scmp.ne.s32.totalorder %s103, %s117
      %p119 = scmp.eq.s32.totalorder %s30, 0
      %p120 = por %p118, %p119
      %s122 = sadd.s32 %s121, 1
      %p125 = scmp.eq.s32.totalorder %s24, 1
      %p126 = scmp.ne.s32.totalorder %s121, %s123
      %p127 = scmp.eq.s32.totalorder %s24, 0
      %p128 = por %p126, %p127
      %p129 = scmp.ne.s32.totalorder %s121, %s123
      %p130 = scmp.eq.s32.totalorder %s29, 1
      %p131 = por %p129, %p130
      %p132 = scmp.ne.s32.totalorder %s123, %s124
      %p133 = scmp.eq.s32.totalorder %s29, 0
      %p134 = por %p132, %p133
      %p135 = scmp.ne.s32.totalorder %s123, %s124
      %p136 = scmp.eq.s32.totalorder %s30, 1
      %p137 = por %p135, %p136
      %p139 = scmp.ne.s32.totalorder %s124, %s138
      %p140 = scmp.eq.s32.totalorder %s30, 0
      %p141 = por %p139, %p140
      %s143 = sadd.s32 %s142, 1
      %p146 = scmp.eq.s32.totalorder %s24, 1
      %p147 = scmp.ne.s32.totalorder %s142, %s144
      %p148 = scmp.eq.s32.totalorder %s24, 0
      %p149 = por %p147, %p148
      %p150 = scmp.ne.s32.totalorder %s142, %s144
      %p151 = scmp.eq.s32.totalorder %s29, 1
      %p152 = por %p150, %p151
      %p153 = scmp.ne.s32.totalorder %s144, %s145
      %p154 = scmp.eq.s32.totalorder %s29, 0
      %p155 = por %p153, %p154
      %p156 = scmp.ne.s32.totalorder %s144, %s145
      %p157 = scmp.eq.s32.totalorder %s30, 1
      %p158 = por %p156, %p157
      %p160 = scmp.ne.s32.totalorder %s145, %s159
      %p161 = scmp.eq.s32.totalorder %s30, 0
      %p162 = por %p160, %p161
      %s164 = sadd.s32 %s163, 1
      %p167 = scmp.eq.s32.totalorder %s24, 1
      %p168 = scmp.ne.s32.totalorder %s163, %s165
      %p169 = scmp.eq.s32.totalorder %s24, 0
      %p170 = por %p168, %p169
      %p171 = scmp.ne.s32.totalorder %s163, %s165
      %p172 = scmp.eq.s32.totalorder %s29, 1
      %p173 = por %p171, %p172
      %p174 = scmp.ne.s32.totalorder %s165, %s166
      %p175 = scmp.eq.s32.totalorder %s29, 0
      %p176 = por %p174, %p175
      %p177 = scmp.ne.s32.totalorder %s165, %s166
      %p178 = scmp.eq.s32.totalorder %s30, 1
      %p179 = por %p177, %p178
      %p181 = scmp.ne.s32.totalorder %s166, %s180
      %p182 = scmp.eq.s32.totalorder %s30, 0
      %p183 = por %p181, %p182
      %s185 = sadd.s32 %s184, 1
      %p188 = scmp.eq.s32.totalorder %s24, 1
      %p189 = scmp.ne.s32.totalorder %s184, %s186
      %p190 = scmp.eq.s32.totalorder %s24, 0
      %p191 = por %p189, %p190
      %p192 = scmp.ne.s32.totalorder %s184, %s186
      %p193 = scmp.eq.s32.totalorder %s29, 1
      %p194 = por %p192, %p193
      %p195 = scmp.ne.s32.totalorder %s186, %s187
      %p196 = scmp.eq.s32.totalorder %s29, 0
      %p197 = por %p195, %p196
      %p198 = scmp.ne.s32.totalorder %s186, %s187
      %p199 = scmp.eq.s32.totalorder %s30, 1
      %p200 = por %p198, %p199
      %p202 = scmp.ne.s32.totalorder %s187, %s201
      %p203 = scmp.eq.s32.totalorder %s30, 0
      %p204 = por %p202, %p203
      %s206 = sadd.s32 %s205, 1
      %p209 = scmp.eq.s32.totalorder %s24, 1
      %p210 = scmp.ne.s32.totalorder %s205, %s207
      %p211 = scmp.eq.s32.totalorder %s24, 0
      %p212 = por %p210, %p211
      %p213 = scmp.ne.s32.totalorder %s205, %s207
      %p214 = scmp.eq.s32.totalorder %s29, 1
      %p215 = por %p213, %p214
      %p216 = scmp.ne.s32.totalorder %s207, %s208
      %p217 = scmp.eq.s32.totalorder %s29, 0
      %p218 = por %p216, %p217
      %p219 = scmp.ne.s32.totalorder %s207, %s208
      %p220 = scmp.eq.s32.totalorder %s30, 1
      %p221 = por %p219, %p220
      %p223 = scmp.ne.s32.totalorder %s208, %s222
      %p224 = scmp.eq.s32.totalorder %s30, 0
      %p225 = por %p223, %p224
      %s227 = sadd.s32 %s226, 1
      %p230 = scmp.eq.s32.totalorder %s24, 1
      %p231 = scmp.ne.s32.totalorder %s226, %s228
      %p232 = scmp.eq.s32.totalorder %s24, 0
      %p233 = por %p231, %p232
      %p234 = scmp.ne.s32.totalorder %s226, %s228
      %p235 = scmp.eq.s32.totalorder %s29, 1
      %p236 = por %p234, %p235
      %p237 = scmp.ne.s32.totalorder %s228, %s229
      %p238 = scmp.eq.s32.totalorder %s29, 0
      %p239 = por %p237, %p238
      %p240 = scmp.ne.s32.totalorder %s228, %s229
      %p241 = scmp.eq.s32.totalorder %s30, 1
      %p242 = por %p240, %p241
      %p244 = scmp.ne.s32.totalorder %s229, %s243
      %p245 = scmp.eq.s32.totalorder %s30, 0
      %p246 = por %p244, %p245
      %s248 = sadd.s32 %s247, 1
      %p251 = scmp.eq.s32.totalorder %s24, 1
      %p252 = scmp.ne.s32.totalorder %s247, %s249
      %p253 = scmp.eq.s32.totalorder %s24, 0
      %p254 = por %p252, %p253
      %p255 = scmp.ne.s32.totalorder %s247, %s249
      %p256 = scmp.eq.s32.totalorder %s29, 1
      %p257 = por %p255, %p256
      %p258 = scmp.ne.s32.totalorder %s249, %s250
      %p259 = scmp.eq.s32.totalorder %s29, 0
      %p260 = por %p258, %p259
      %p261 = scmp.ne.s32.totalorder %s249, %s250
      %p262 = scmp.eq.s32.totalorder %s30, 1
      %p263 = por %p261, %p262
      %p265 = scmp.ne.s32.totalorder %s250, %s264
      %p266 = scmp.eq.s32.totalorder %s30, 0
      %p267 = por %p265, %p266
      %s269 = sadd.s32 %s268, 1
      %p272 = scmp.eq.s32.totalorder %s24, 1
      %p273 = scmp.ne.s32.totalorder %s268, %s270
      %p274 = scmp.eq.s32.totalorder %s24, 0
      %p275 = por %p273, %p274
      %p276 = scmp.ne.s32.totalorder %s268, %s270
      %p277 = scmp.eq.s32.totalorder %s29, 1
      %p278 = por %p276, %p277
      %p279 = scmp.ne.s32.totalorder %s270, %s271
      %p280 = scmp.eq.s32.totalorder %s29, 0
      %p281 = por %p279, %p280
      %p282 = scmp.ne.s32.totalorder %s270, %s271
      %p283 = scmp.eq.s32.totalorder %s30, 1
      %p284 = por %p282, %p283
      %p286 = scmp.ne.s32.totalorder %s271, %s285
      %p287 = scmp.eq.s32.totalorder %s30, 0
      %p288 = por %p286, %p287
      %s290 = sadd.s32 %s289, 1
      %p293 = scmp.eq.s32.totalorder %s24, 1
      %p294 = scmp.ne.s32.totalorder %s289, %s291
      %p295 = scmp.eq.s32.totalorder %s24, 0
      %p296 = por %p294, %p295
      %p297 = scmp.ne.s32.totalorder %s289, %s291
      %p298 = scmp.eq.s32.totalorder %s29, 1
      %p299 = por %p297, %p298
      %p300 = scmp.ne.s32.totalorder %s291, %s292
      %p301 = scmp.eq.s32.totalorder %s29, 0
      %p302 = por %p300, %p301
      %p303 = scmp.ne.s32.totalorder %s291, %s292
      %p304 = scmp.eq.s32.totalorder %s30, 1
      %p305 = por %p303, %p304
      %p307 = scmp.ne.s32.totalorder %s292, %s306
      %p308 = scmp.eq.s32.totalorder %s30, 0
      %p309 = por %p307, %p308
      %s310 = ssub.s32 %s24, %s31
      %p311 = scmp.eq.s32.totalorder %s310, 0
      %s313 = sadd.s32 %s312, 1
      %s314 = scalar_select %p311, %s312, %s313
      %p317 = pneg %p311
      %p318 = scmp.eq.s32.totalorder %s24, 1
      %p319 = por %p317, %p318
      %p320 = scmp.ne.s32.totalorder %s312, %s315
      %p321 = scmp.eq.s32.totalorder %s24, 0
      %p322 = por %p320, %p321
      %p323 = scmp.ne.s32.totalorder %s312, %s315
      %p324 = scmp.eq.s32.totalorder %s29, 1
      %p325 = por %p323, %p324
      %p326 = scmp.ne.s32.totalorder %s315, %s316
      %p327 = scmp.eq.s32.totalorder %s29, 0
      %p328 = por %p326, %p327
      %p329 = scmp.ne.s32.totalorder %s315, %s316
      %p330 = scmp.eq.s32.totalorder %s30, 1
      %p331 = por %p329, %p330
      %p333 = scmp.ne.s32.totalorder %s316, %s332
      %p334 = scmp.eq.s32.totalorder %s30, 0
      %p335 = por %p333, %p334
      %p336 = scmp.le.s32.totalorder 1, %s24
      %p337 = scmp.lt.s32.totalorder %s24, 3
      %p338 = pnand %p336, %p337
      %p339 = pneg %p338
      // Predicated region
      $region9: #{tpu_custom_call.1} parent=5 // pred_check
        _
      $region10: #{tpu_custom_call.1} parent=5 // pred_check_branch
        %341 = sbr.rel (%p338) target = $region12
      $region11: #{tpu_custom_call.1} parent=5 // pred_region
        %s342 = ssub.s32 %s24, 1
        // Predicated region
        $region13: #{tpu_custom_call.1} parent=11 // pred_check
          %p343 = pneg %p71
        $region14: #{tpu_custom_call.1} parent=11 // pred_check_branch
          %345 = sbr.rel (%p343) target = $region16
        $region15: #{tpu_custom_call.1} parent=11 // pred_region
          _
        $region16: #{tpu_custom_call.1} parent=11 // pred_fallthru
          _
        // Predicated region
        $region17: #{tpu_custom_call.1} parent=11 // pred_check
          %p346 = pneg %p92
        $region18: #{tpu_custom_call.1} parent=11 // pred_check_branch
          %348 = sbr.rel (%p346) target = $region20
        $region19: #{tpu_custom_call.1} parent=11 // pred_region
          _
        $region20: #{tpu_custom_call.1} parent=11 // pred_fallthru
          _
        // Predicated region
        $region21: #{tpu_custom_call.1} parent=11 // pred_check
          %p349 = pneg %p113
        $region22: #{tpu_custom_call.1} parent=11 // pred_check_branch
          %351 = sbr.rel (%p349) target = $region24
        $region23: #{tpu_custom_call.1} parent=11 // pred_region
          _
        $region24: #{tpu_custom_call.1} parent=11 // pred_fallthru
          _
        // Predicated region
        $region25: #{tpu_custom_call.1} parent=11 // pred_check
          %p352 = pneg %p134
        $region26: #{tpu_custom_call.1} parent=11 // pred_check_branch
          %354 = sbr.rel (%p352) target = $region28
        $region27: #{tpu_custom_call.1} parent=11 // pred_region
          _
        $region28: #{tpu_custom_call.1} parent=11 // pred_fallthru
          _
        // Predicated region
        $region29: #{tpu_custom_call.1} parent=11 // pred_check
          %p355 = pneg %p155
        $region30: #{tpu_custom_call.1} parent=11 // pred_check_branch
          %357 = sbr.rel (%p355) target = $region32
        $region31: #{tpu_custom_call.1} parent=11 // pred_region
          _
        $region32: #{tpu_custom_call.1} parent=11 // pred_fallthru
          _
        // Predicated region
        $region33: #{tpu_custom_call.1} parent=11 // pred_check
          %p358 = pneg %p176
        $region34: #{tpu_custom_call.1} parent=11 // pred_check_branch
          %360 = sbr.rel (%p358) target = $region36
        $region35: #{tpu_custom_call.1} parent=11 // pred_region
          _
        $region36: #{tpu_custom_call.1} parent=11 // pred_fallthru
          _
        // Predicated region
        $region37: #{tpu_custom_call.1} parent=11 // pred_check
          %p361 = pneg %p197
        $region38: #{tpu_custom_call.1} parent=11 // pred_check_branch
          %363 = sbr.rel (%p361) target = $region40
        $region39: #{tpu_custom_call.1} parent=11 // pred_region
          _
        $region40: #{tpu_custom_call.1} parent=11 // pred_fallthru
          _
        // Predicated region
        $region41: #{tpu_custom_call.1} parent=11 // pred_check
          %p364 = pneg %p218
        $region42: #{tpu_custom_call.1} parent=11 // pred_check_branch
          %366 = sbr.rel (%p364) target = $region44
        $region43: #{tpu_custom_call.1} parent=11 // pred_region
          _
        $region44: #{tpu_custom_call.1} parent=11 // pred_fallthru
          _
        // Predicated region
        $region45: #{tpu_custom_call.1} parent=11 // pred_check
          %p367 = pneg %p239
        $region46: #{tpu_custom_call.1} parent=11 // pred_check_branch
          %369 = sbr.rel (%p367) target = $region48
        $region47: #{tpu_custom_call.1} parent=11 // pred_region
          _
        $region48: #{tpu_custom_call.1} parent=11 // pred_fallthru
          _
        // Predicated region
        $region49: #{tpu_custom_call.1} parent=11 // pred_check
          %p370 = pneg %p260
        $region50: #{tpu_custom_call.1} parent=11 // pred_check_branch
          %372 = sbr.rel (%p370) target = $region52
        $region51: #{tpu_custom_call.1} parent=11 // pred_region
          _
        $region52: #{tpu_custom_call.1} parent=11 // pred_fallthru
          _
        // Predicated region
        $region53: #{tpu_custom_call.1} parent=11 // pred_check
          %p373 = pneg %p281
        $region54: #{tpu_custom_call.1} parent=11 // pred_check_branch
          %375 = sbr.rel (%p373) target = $region56
        $region55: #{tpu_custom_call.1} parent=11 // pred_region
          _
        $region56: #{tpu_custom_call.1} parent=11 // pred_fallthru
          _
        // Predicated region
        $region57: #{tpu_custom_call.1} parent=11 // pred_check
          %p376 = pneg %p302
        $region58: #{tpu_custom_call.1} parent=11 // pred_check_branch
          %378 = sbr.rel (%p376) target = $region60
        $region59: #{tpu_custom_call.1} parent=11 // pred_region
          _
        $region60: #{tpu_custom_call.1} parent=11 // pred_fallthru
          _
      $region12: #{tpu_custom_call.1} parent=5 // pred_fallthru
        _
      %p379 = scmp.lt.s32.totalorder %s24, 2
      // Predicated region
      $region61: #{tpu_custom_call.1} parent=5 // pred_check
        %p380 = pneg %p379
      $region62: #{tpu_custom_call.1} parent=5 // pred_check_branch
        %382 = sbr.rel (%p380) target = $region64
      $region63: #{tpu_custom_call.1} parent=5 // pred_region
        // Predicated region
        $region65: #{tpu_custom_call.1} parent=63 // pred_check
          %p383 = pneg %p44
        $region66: #{tpu_custom_call.1} parent=63 // pred_check_branch
          %385 = sbr.rel (%p383) target = $region68
        $region67: #{tpu_custom_call.1} parent=63 // pred_region
          %s386 = smul.u32 4, %s24
          %p387 = scmp.lt.s32.totalorder %s386, 7
          %s388 = scalar_select %p387, %s386, 7
          %s389 = scalar_lea.vmem %s0, %s388
          %s390 = smul.u32 4, %s24
        $region68: #{tpu_custom_call.1} parent=63 // pred_fallthru
          _
      $region64: #{tpu_custom_call.1} parent=5 // pred_fallthru
        _
      %p391 = scmp.le.s32.totalorder 1, %s24
      %p392 = scmp.lt.s32.totalorder %s24, 3
      %p393 = pnand %p391, %p392
      %p394 = pneg %p393
      // Predicated region
      $region69: #{tpu_custom_call.1} parent=5 // pred_check
        _
      $region70: #{tpu_custom_call.1} parent=5 // pred_check_branch
        %396 = sbr.rel (%p393) target = $region72
      $region71: #{tpu_custom_call.1} parent=5 // pred_region
        %s397 = ssub.s32 %s24, 1
        %s398 = smul.u32 4, %s29
        %p399 = scmp.lt.s32.totalorder %s398, 7
        %s400 = scalar_select %p399, %s398, 7
        %s401 = scalar_lea.vmem %s0, %s400
        %p402 = pneg %p50
        %p403 = pneg %p47
        %p404 = pneg %p71
        %p405 = pneg %p68
        %p406 = pneg %p92
        %p407 = pneg %p89
        %p408 = pneg %p113
        %p409 = pneg %p110
        %p410 = pneg %p134
        %p411 = pneg %p131
        %p412 = pneg %p155
        %p413 = pneg %p152
        %p414 = pneg %p176
        %p415 = pneg %p173
        %p416 = pneg %p197
        %p417 = pneg %p194
        %p418 = pneg %p218
        %p419 = pneg %p215
        %p420 = pneg %p239
        %p421 = pneg %p236
        %p422 = pneg %p260
        %p423 = pneg %p257
        %p424 = pneg %p281
        %p425 = pneg %p278
        %p426 = pneg %p302
        %p427 = pneg %p299
        %p428 = pneg %p328
        %p429 = pneg %p325
        %s430 = sand.u32 %s315, 1
        %s431 = scalar_lea.sflag [#allocation4], %s430
        %s432 = sand.u32 %s315, 1
        %s433 = smul.addr %s432, 4
        %s434 = scalar_lea.vmem [#allocation3], %s433
        %s435 = smul.u32 4, %s29
        %p436 = scmp.lt.s32.totalorder %s435, 7
        %s437 = scalar_select %p436, %s435, 7
        %s438 = scalar_lea.vmem %s0, %s437
        %s439 = smul.u32 4, %s29
        %s440 = smul.u32 4, %s29
        %v441 = vld [vmem:[%s438] sm:$0xf]
        %v442 = vld [vmem:[%s1] sm:$0xff]
        %v443 = vld [vmem:[%s1 + $0x8] sm:$0xff]
        %v444 = vld [vmem:[%s1 + $0x10] sm:$0xff]
        %v445 = vld [vmem:[%s1 + $0x18] sm:$0xff]
        %v446 = vld [vmem:[%s1 + $0x20] sm:$0xff]
        %v447 = vld [vmem:[%s1 + $0x28] sm:$0xff]
        %v448 = vld [vmem:[%s1 + $0x30] sm:$0xff]
        %v449 = vld [vmem:[%s1 + $0x38] sm:$0xff]
        %v450 = vld [vmem:[%s1 + $0x40] sm:$0xff]
        %v451 = vld [vmem:[%s1 + $0x48] sm:$0xff]
        %v452 = vld [vmem:[%s1 + $0x50] sm:$0xff]
        %v453 = vld [vmem:[%s1 + $0x58] sm:$0xff]
        %v454 = vld [vmem:[%s1 + $0x60] sm:$0xff]
        %v455 = vld [vmem:[%s1 + $0x68] sm:$0xff]
        %v456 = vld [vmem:[%s1 + $0x70] sm:$0xff]
        %v457 = vld [vmem:[%s1 + $0x78] sm:$0xff]
        %459 = vset.pattern.permute.xlu0 0
        %460 = vperm.xlu0 %459, %v442
        %v461 = vpop.permute.xlu0 %460
        %464 = vset.pattern.permute.xlu0 0
        %465 = vperm.xlu0 %464, %v443
        %v466 = vpop.permute.xlu0 %465
        %469 = vset.pattern.permute.xlu0 0
        %470 = vperm.xlu0 %469, %v444
        %v471 = vpop.permute.xlu0 %470
        %474 = vset.pattern.permute.xlu0 0
        %475 = vperm.xlu0 %474, %v445
        %v476 = vpop.permute.xlu0 %475
        %479 = vset.pattern.permute.xlu0 0
        %480 = vperm.xlu0 %479, %v446
        %v481 = vpop.permute.xlu0 %480
        %484 = vset.pattern.permute.xlu0 0
        %485 = vperm.xlu0 %484, %v447
        %v486 = vpop.permute.xlu0 %485
        %489 = vset.pattern.permute.xlu0 0
        %490 = vperm.xlu0 %489, %v448
        %v491 = vpop.permute.xlu0 %490
        %494 = vset.pattern.permute.xlu0 0
        %495 = vperm.xlu0 %494, %v449
        %v496 = vpop.permute.xlu0 %495
        %499 = vset.pattern.permute.xlu0 0
        %500 = vperm.xlu0 %499, %v450
        %v501 = vpop.permute.xlu0 %500
        %504 = vset.pattern.permute.xlu0 0
        %505 = vperm.xlu0 %504, %v451
        %v506 = vpop.permute.xlu0 %505
        %509 = vset.pattern.permute.xlu0 0
        %510 = vperm.xlu0 %509, %v452
        %v511 = vpop.permute.xlu0 %510
        %514 = vset.pattern.permute.xlu0 0
        %515 = vperm.xlu0 %514, %v453
        %v516 = vpop.permute.xlu0 %515
        %519 = vset.pattern.permute.xlu0 0
        %520 = vperm.xlu0 %519, %v454
        %v521 = vpop.permute.xlu0 %520
        %524 = vset.pattern.permute.xlu0 0
        %525 = vperm.xlu0 %524, %v455
        %v526 = vpop.permute.xlu0 %525
        %529 = vset.pattern.permute.xlu0 0
        %530 = vperm.xlu0 %529, %v456
        %v531 = vpop.permute.xlu0 %530
        %534 = vset.pattern.permute.xlu0 0
        %535 = vperm.xlu0 %534, %v457
        %v536 = vpop.permute.xlu0 %535
        %v539 = vperm.slane %v441, 0
        %v540 = vperm.slane %v441, 1
        %v541 = vperm.slane %v441, 2
        %v542 = vperm.slane %v441, 3
        %v547 = vmul.f32 %v461, %v539
        %v548 = vmul.f32 %v461, %v540
        %v549 = vmul.f32 %v461, %v541
        %v550 = vmul.f32 %v461, %v542
        %v551 = vmul.f32 %v466, %v539
        %v552 = vmul.f32 %v466, %v540
        %v553 = vmul.f32 %v466, %v541
        %v554 = vmul.f32 %v466, %v542
        %v555 = vmul.f32 %v471, %v539
        %v556 = vmul.f32 %v471, %v540
        %v557 = vmul.f32 %v471, %v541
        %v558 = vmul.f32 %v471, %v542
        %v559 = vmul.f32 %v476, %v539
        %v560 = vmul.f32 %v476, %v540
        %v561 = vmul.f32 %v476, %v541
        %v562 = vmul.f32 %v476, %v542
        %v563 = vmul.f32 %v481, %v539
        %v564 = vmul.f32 %v481, %v540
        %v565 = vmul.f32 %v481, %v541
        %v566 = vmul.f32 %v481, %v542
        %v567 = vmul.f32 %v486, %v539
        %v568 = vmul.f32 %v486, %v540
        %v569 = vmul.f32 %v486, %v541
        %v570 = vmul.f32 %v486, %v542
        %v571 = vmul.f32 %v491, %v539
        %v572 = vmul.f32 %v491, %v540
        %v573 = vmul.f32 %v491, %v541
        %v574 = vmul.f32 %v491, %v542
        %v575 = vmul.f32 %v496, %v539
        %v576 = vmul.f32 %v496, %v540
        %v577 = vmul.f32 %v496, %v541
        %v578 = vmul.f32 %v496, %v542
        %v579 = vmul.f32 %v501, %v539
        %v580 = vmul.f32 %v501, %v540
        %v581 = vmul.f32 %v501, %v541
        %v582 = vmul.f32 %v501, %v542
        %v583 = vmul.f32 %v506, %v539
        %v584 = vmul.f32 %v506, %v540
        %v585 = vmul.f32 %v506, %v541
        %v586 = vmul.f32 %v506, %v542
        %v587 = vmul.f32 %v511, %v539
        %v588 = vmul.f32 %v511, %v540
        %v589 = vmul.f32 %v511, %v541
        %v590 = vmul.f32 %v511, %v542
        %v591 = vmul.f32 %v516, %v539
        %v592 = vmul.f32 %v516, %v540
        %v593 = vmul.f32 %v516, %v541
        %v594 = vmul.f32 %v516, %v542
        %v595 = vmul.f32 %v521, %v539
        %v596 = vmul.f32 %v521, %v540
        %v597 = vmul.f32 %v521, %v541
        %v598 = vmul.f32 %v521, %v542
        %v599 = vmul.f32 %v526, %v539
        %v600 = vmul.f32 %v526, %v540
        %v601 = vmul.f32 %v526, %v541
        %v602 = vmul.f32 %v526, %v542
        %v603 = vmul.f32 %v531, %v539
        %v604 = vmul.f32 %v531, %v540
        %v605 = vmul.f32 %v531, %v541
        %v606 = vmul.f32 %v531, %v542
        %v607 = vmul.f32 %v536, %v539
        %v608 = vmul.f32 %v536, %v540
        %v609 = vmul.f32 %v536, %v541
        %v610 = vmul.f32 %v536, %v542
        %v611 = vld [vmem:[%s2] sm:$0xff]
        %v612 = vld [vmem:[%s2 + $0x8] sm:$0xff]
        %v613 = vld [vmem:[%s2 + $0x10] sm:$0xff]
        %v614 = vld [vmem:[%s2 + $0x18] sm:$0xff]
        %v615 = vld [vmem:[%s2 + $0x20] sm:$0xff]
        %v616 = vld [vmem:[%s2 + $0x28] sm:$0xff]
        %v617 = vld [vmem:[%s2 + $0x30] sm:$0xff]
        %v618 = vld [vmem:[%s2 + $0x38] sm:$0xff]
        %v619 = vld [vmem:[%s2 + $0x40] sm:$0xff]
        %v620 = vld [vmem:[%s2 + $0x48] sm:$0xff]
        %v621 = vld [vmem:[%s2 + $0x50] sm:$0xff]
        %v622 = vld [vmem:[%s2 + $0x58] sm:$0xff]
        %v623 = vld [vmem:[%s2 + $0x60] sm:$0xff]
        %v624 = vld [vmem:[%s2 + $0x68] sm:$0xff]
        %v625 = vld [vmem:[%s2 + $0x70] sm:$0xff]
        %v626 = vld [vmem:[%s2 + $0x78] sm:$0xff]
        %628 = vset.pattern.permute.xlu0 0
        %629 = vperm.xlu0 %628, %v611
        %v630 = vpop.permute.xlu0 %629
        %633 = vset.pattern.permute.xlu0 0
        %634 = vperm.xlu0 %633, %v612
        %v635 = vpop.permute.xlu0 %634
        %638 = vset.pattern.permute.xlu0 0
        %639 = vperm.xlu0 %638, %v613
        %v640 = vpop.permute.xlu0 %639
        %643 = vset.pattern.permute.xlu0 0
        %644 = vperm.xlu0 %643, %v614
        %v645 = vpop.permute.xlu0 %644
        %648 = vset.pattern.permute.xlu0 0
        %649 = vperm.xlu0 %648, %v615
        %v650 = vpop.permute.xlu0 %649
        %653 = vset.pattern.permute.xlu0 0
        %654 = vperm.xlu0 %653, %v616
        %v655 = vpop.permute.xlu0 %654
        %658 = vset.pattern.permute.xlu0 0
        %659 = vperm.xlu0 %658, %v617
        %v660 = vpop.permute.xlu0 %659
        %663 = vset.pattern.permute.xlu0 0
        %664 = vperm.xlu0 %663, %v618
        %v665 = vpop.permute.xlu0 %664
        %668 = vset.pattern.permute.xlu0 0
        %669 = vperm.xlu0 %668, %v619
        %v670 = vpop.permute.xlu0 %669
        %673 = vset.pattern.permute.xlu0 0
        %674 = vperm.xlu0 %673, %v620
        %v675 = vpop.permute.xlu0 %674
        %678 = vset.pattern.permute.xlu0 0
        %679 = vperm.xlu0 %678, %v621
        %v680 = vpop.permute.xlu0 %679
        %683 = vset.pattern.permute.xlu0 0
        %684 = vperm.xlu0 %683, %v622
        %v685 = vpop.permute.xlu0 %684
        %688 = vset.pattern.permute.xlu0 0
        %689 = vperm.xlu0 %688, %v623
        %v690 = vpop.permute.xlu0 %689
        %693 = vset.pattern.permute.xlu0 0
        %694 = vperm.xlu0 %693, %v624
        %v695 = vpop.permute.xlu0 %694
        %698 = vset.pattern.permute.xlu0 0
        %699 = vperm.xlu0 %698, %v625
        %v700 = vpop.permute.xlu0 %699
        %703 = vset.pattern.permute.xlu0 0
        %704 = vperm.xlu0 %703, %v626
        %v705 = vpop.permute.xlu0 %704
        %v707 = vadd.f32 %v547, %v630
        %v708 = vadd.f32 %v548, %v630
        %v709 = vadd.f32 %v549, %v630
        %v710 = vadd.f32 %v550, %v630
        %v711 = vadd.f32 %v551, %v635
        %v712 = vadd.f32 %v552, %v635
        %v713 = vadd.f32 %v553, %v635
        %v714 = vadd.f32 %v554, %v635
        %v715 = vadd.f32 %v555, %v640
        %v716 = vadd.f32 %v556, %v640
        %v717 = vadd.f32 %v557, %v640
        %v718 = vadd.f32 %v558, %v640
        %v719 = vadd.f32 %v559, %v645
        %v720 = vadd.f32 %v560, %v645
        %v721 = vadd.f32 %v561, %v645
        %v722 = vadd.f32 %v562, %v645
        %v723 = vadd.f32 %v563, %v650
        %v724 = vadd.f32 %v564, %v650
        %v725 = vadd.f32 %v565, %v650
        %v726 = vadd.f32 %v566, %v650
        %v727 = vadd.f32 %v567, %v655
        %v728 = vadd.f32 %v568, %v655
        %v729 = vadd.f32 %v569, %v655
        %v730 = vadd.f32 %v570, %v655
        %v731 = vadd.f32 %v571, %v660
        %v732 = vadd.f32 %v572, %v660
        %v733 = vadd.f32 %v573, %v660
        %v734 = vadd.f32 %v574, %v660
        %v735 = vadd.f32 %v575, %v665
        %v736 = vadd.f32 %v576, %v665
        %v737 = vadd.f32 %v577, %v665
        %v738 = vadd.f32 %v578, %v665
        %v739 = vadd.f32 %v579, %v670
        %v740 = vadd.f32 %v580, %v670
        %v741 = vadd.f32 %v581, %v670
        %v742 = vadd.f32 %v582, %v670
        %v743 = vadd.f32 %v583, %v675
        %v744 = vadd.f32 %v584, %v675
        %v745 = vadd.f32 %v585, %v675
        %v746 = vadd.f32 %v586, %v675
        %v747 = vadd.f32 %v587, %v680
        %v748 = vadd.f32 %v588, %v680
        %v749 = vadd.f32 %v589, %v680
        %v750 = vadd.f32 %v590, %v680
        %v751 = vadd.f32 %v591, %v685
        %v752 = vadd.f32 %v592, %v685
        %v753 = vadd.f32 %v593, %v685
        %v754 = vadd.f32 %v594, %v685
        %v755 = vadd.f32 %v595, %v690
        %v756 = vadd.f32 %v596, %v690
        %v757 = vadd.f32 %v597, %v690
        %v758 = vadd.f32 %v598, %v690
        %v759 = vadd.f32 %v599, %v695
        %v760 = vadd.f32 %v600, %v695
        %v761 = vadd.f32 %v601, %v695
        %v762 = vadd.f32 %v602, %v695
        %v763 = vadd.f32 %v603, %v700
        %v764 = vadd.f32 %v604, %v700
        %v765 = vadd.f32 %v605, %v700
        %v766 = vadd.f32 %v606, %v700
        %v767 = vadd.f32 %v607, %v705
        %v768 = vadd.f32 %v608, %v705
        %v769 = vadd.f32 %v609, %v705
        %v770 = vadd.f32 %v610, %v705
        %v771 = vsub.f32 0.0, %v707
        %v772 = vsub.f32 0.0, %v708
        %v773 = vsub.f32 0.0, %v709
        %v774 = vsub.f32 0.0, %v710
        %v775 = vsub.f32 0.0, %v711
        %v776 = vsub.f32 0.0, %v712
        %v777 = vsub.f32 0.0, %v713
        %v778 = vsub.f32 0.0, %v714
        %v779 = vsub.f32 0.0, %v715
        %v780 = vsub.f32 0.0, %v716
        %v781 = vsub.f32 0.0, %v717
        %v782 = vsub.f32 0.0, %v718
        %v783 = vsub.f32 0.0, %v719
        %v784 = vsub.f32 0.0, %v720
        %v785 = vsub.f32 0.0, %v721
        %v786 = vsub.f32 0.0, %v722
        %v787 = vsub.f32 0.0, %v723
        %v788 = vsub.f32 0.0, %v724
        %v789 = vsub.f32 0.0, %v725
        %v790 = vsub.f32 0.0, %v726
        %v791 = vsub.f32 0.0, %v727
        %v792 = vsub.f32 0.0, %v728
        %v793 = vsub.f32 0.0, %v729
        %v794 = vsub.f32 0.0, %v730
        %v795 = vsub.f32 0.0, %v731
        %v796 = vsub.f32 0.0, %v732
        %v797 = vsub.f32 0.0, %v733
        %v798 = vsub.f32 0.0, %v734
        %v799 = vsub.f32 0.0, %v735
        %v800 = vsub.f32 0.0, %v736
        %v801 = vsub.f32 0.0, %v737
        %v802 = vsub.f32 0.0, %v738
        %v803 = vsub.f32 0.0, %v739
        %v804 = vsub.f32 0.0, %v740
        %v805 = vsub.f32 0.0, %v741
        %v806 = vsub.f32 0.0, %v742
        %v807 = vsub.f32 0.0, %v743
        %v808 = vsub.f32 0.0, %v744
        %v809 = vsub.f32 0.0, %v745
        %v810 = vsub.f32 0.0, %v746
        %v811 = vsub.f32 0.0, %v747
        %v812 = vsub.f32 0.0, %v748
        %v813 = vsub.f32 0.0, %v749
        %v814 = vsub.f32 0.0, %v750
        %v815 = vsub.f32 0.0, %v751
        %v816 = vsub.f32 0.0, %v752
        %v817 = vsub.f32 0.0, %v753
        %v818 = vsub.f32 0.0, %v754
        %v819 = vsub.f32 0.0, %v755
        %v820 = vsub.f32 0.0, %v756
        %v821 = vsub.f32 0.0, %v757
        %v822 = vsub.f32 0.0, %v758
        %v823 = vsub.f32 0.0, %v759
        %v824 = vsub.f32 0.0, %v760
        %v825 = vsub.f32 0.0, %v761
        %v826 = vsub.f32 0.0, %v762
        %v827 = vsub.f32 0.0, %v763
        %v828 = vsub.f32 0.0, %v764
        %v829 = vsub.f32 0.0, %v765
        %v830 = vsub.f32 0.0, %v766
        %v831 = vsub.f32 0.0, %v767
        %v832 = vsub.f32 0.0, %v768
        %v833 = vsub.f32 0.0, %v769
        %v834 = vsub.f32 0.0, %v770
        %v835 = vmul.f32 %v771, 1.442695
        %v836 = vpow.pop %v835
        %v837 = vmul.f32 %v772, 1.442695
        %v838 = vpow.pop %v837
        %v839 = vmul.f32 %v773, 1.442695
        %v840 = vpow.pop %v839
        %v841 = vmul.f32 %v774, 1.442695
        %v842 = vpow.pop %v841
        %v843 = vmul.f32 %v775, 1.442695
        %v844 = vpow.pop %v843
        %v845 = vmul.f32 %v776, 1.442695
        %v846 = vpow.pop %v845
        %v847 = vmul.f32 %v777, 1.442695
        %v848 = vpow.pop %v847
        %v849 = vmul.f32 %v778, 1.442695
        %v850 = vpow.pop %v849
        %v851 = vmul.f32 %v779, 1.442695
        %v852 = vpow.pop %v851
        %v853 = vmul.f32 %v780, 1.442695
        %v854 = vpow.pop %v853
        %v855 = vmul.f32 %v781, 1.442695
        %v856 = vpow.pop %v855
        %v857 = vmul.f32 %v782, 1.442695
        %v858 = vpow.pop %v857
        %v859 = vmul.f32 %v783, 1.442695
        %v860 = vpow.pop %v859
        %v861 = vmul.f32 %v784, 1.442695
        %v862 = vpow.pop %v861
        %v863 = vmul.f32 %v785, 1.442695
        %v864 = vpow.pop %v863
        %v865 = vmul.f32 %v786, 1.442695
        %v866 = vpow.pop %v865
        %v867 = vmul.f32 %v787, 1.442695
        %v868 = vpow.pop %v867
        %v869 = vmul.f32 %v788, 1.442695
        %v870 = vpow.pop %v869
        %v871 = vmul.f32 %v789, 1.442695
        %v872 = vpow.pop %v871
        %v873 = vmul.f32 %v790, 1.442695
        %v874 = vpow.pop %v873
        %v875 = vmul.f32 %v791, 1.442695
        %v876 = vpow.pop %v875
        %v877 = vmul.f32 %v792, 1.442695
        %v878 = vpow.pop %v877
        %v879 = vmul.f32 %v793, 1.442695
        %v880 = vpow.pop %v879
        %v881 = vmul.f32 %v794, 1.442695
        %v882 = vpow.pop %v881
        %v883 = vmul.f32 %v795, 1.442695
        %v884 = vpow.pop %v883
        %v885 = vmul.f32 %v796, 1.442695
        %v886 = vpow.pop %v885
        %v887 = vmul.f32 %v797, 1.442695
        %v888 = vpow.pop %v887
        %v889 = vmul.f32 %v798, 1.442695
        %v890 = vpow.pop %v889
        %v891 = vmul.f32 %v799, 1.442695
        %v892 = vpow.pop %v891
        %v893 = vmul.f32 %v800, 1.442695
        %v894 = vpow.pop %v893
        %v895 = vmul.f32 %v801, 1.442695
        %v896 = vpow.pop %v895
        %v897 = vmul.f32 %v802, 1.442695
        %v898 = vpow.pop %v897
        %v899 = vmul.f32 %v803, 1.442695
        %v900 = vpow.pop %v899
        %v901 = vmul.f32 %v804, 1.442695
        %v902 = vpow.pop %v901
        %v903 = vmul.f32 %v805, 1.442695
        %v904 = vpow.pop %v903
        %v905 = vmul.f32 %v806, 1.442695
        %v906 = vpow.pop %v905
        %v907 = vmul.f32 %v807, 1.442695
        %v908 = vpow.pop %v907
        %v909 = vmul.f32 %v808, 1.442695
        %v910 = vpow.pop %v909
        %v911 = vmul.f32 %v809, 1.442695
        %v912 = vpow.pop %v911
        %v913 = vmul.f32 %v810, 1.442695
        %v914 = vpow.pop %v913
        %v915 = vmul.f32 %v811, 1.442695
        %v916 = vpow.pop %v915
        %v917 = vmul.f32 %v812, 1.442695
        %v918 = vpow.pop %v917
        %v919 = vmul.f32 %v813, 1.442695
        %v920 = vpow.pop %v919
        %v921 = vmul.f32 %v814, 1.442695
        %v922 = vpow.pop %v921
        %v923 = vmul.f32 %v815, 1.442695
        %v924 = vpow.pop %v923
        %v925 = vmul.f32 %v816, 1.442695
        %v926 = vpow.pop %v925
        %v927 = vmul.f32 %v817, 1.442695
        %v928 = vpow.pop %v927
        %v929 = vmul.f32 %v818, 1.442695
        %v930 = vpow.pop %v929
        %v931 = vmul.f32 %v819, 1.442695
        %v932 = vpow.pop %v931
        %v933 = vmul.f32 %v820, 1.442695
        %v934 = vpow.pop %v933
        %v935 = vmul.f32 %v821, 1.442695
        %v936 = vpow.pop %v935
        %v937 = vmul.f32 %v822, 1.442695
        %v938 = vpow.pop %v937
        %v939 = vmul.f32 %v823, 1.442695
        %v940 = vpow.pop %v939
        %v941 = vmul.f32 %v824, 1.442695
        %v942 = vpow.pop %v941
        %v943 = vmul.f32 %v825, 1.442695
        %v944 = vpow.pop %v943
        %v945 = vmul.f32 %v826, 1.442695
        %v946 = vpow.pop %v945
        %v947 = vmul.f32 %v827, 1.442695
        %v948 = vpow.pop %v947
        %v949 = vmul.f32 %v828, 1.442695
        %v950 = vpow.pop %v949
        %v951 = vmul.f32 %v829, 1.442695
        %v952 = vpow.pop %v951
        %v953 = vmul.f32 %v830, 1.442695
        %v954 = vpow.pop %v953
        %v955 = vmul.f32 %v831, 1.442695
        %v956 = vpow.pop %v955
        %v957 = vmul.f32 %v832, 1.442695
        %v958 = vpow.pop %v957
        %v959 = vmul.f32 %v833, 1.442695
        %v960 = vpow.pop %v959
        %v961 = vmul.f32 %v834, 1.442695
        %v962 = vpow.pop %v961
        %v963 = vadd.f32 %v836, 1.0
        %v964 = vadd.f32 %v838, 1.0
        %v965 = vadd.f32 %v840, 1.0
        %v966 = vadd.f32 %v842, 1.0
        %v967 = vadd.f32 %v844, 1.0
        %v968 = vadd.f32 %v846, 1.0
        %v969 = vadd.f32 %v848, 1.0
        %v970 = vadd.f32 %v850, 1.0
        %v971 = vadd.f32 %v852, 1.0
        %v972 = vadd.f32 %v854, 1.0
        %v973 = vadd.f32 %v856, 1.0
        %v974 = vadd.f32 %v858, 1.0
        %v975 = vadd.f32 %v860, 1.0
        %v976 = vadd.f32 %v862, 1.0
        %v977 = vadd.f32 %v864, 1.0
        %v978 = vadd.f32 %v866, 1.0
        %v979 = vadd.f32 %v868, 1.0
        %v980 = vadd.f32 %v870, 1.0
        %v981 = vadd.f32 %v872, 1.0
        %v982 = vadd.f32 %v874, 1.0
        %v983 = vadd.f32 %v876, 1.0
        %v984 = vadd.f32 %v878, 1.0
        %v985 = vadd.f32 %v880, 1.0
        %v986 = vadd.f32 %v882, 1.0
        %v987 = vadd.f32 %v884, 1.0
        %v988 = vadd.f32 %v886, 1.0
        %v989 = vadd.f32 %v888, 1.0
        %v990 = vadd.f32 %v890, 1.0
        %v991 = vadd.f32 %v892, 1.0
        %v992 = vadd.f32 %v894, 1.0
        %v993 = vadd.f32 %v896, 1.0
        %v994 = vadd.f32 %v898, 1.0
        %v995 = vadd.f32 %v900, 1.0
        %v996 = vadd.f32 %v902, 1.0
        %v997 = vadd.f32 %v904, 1.0
        %v998 = vadd.f32 %v906, 1.0
        %v999 = vadd.f32 %v908, 1.0
        %v1000 = vadd.f32 %v910, 1.0
        %v1001 = vadd.f32 %v912, 1.0
        %v1002 = vadd.f32 %v914, 1.0
        %v1003 = vadd.f32 %v916, 1.0
        %v1004 = vadd.f32 %v918, 1.0
        %v1005 = vadd.f32 %v920, 1.0
        %v1006 = vadd.f32 %v922, 1.0
        %v1007 = vadd.f32 %v924, 1.0
        %v1008 = vadd.f32 %v926, 1.0
        %v1009 = vadd.f32 %v928, 1.0
        %v1010 = vadd.f32 %v930, 1.0
        %v1011 = vadd.f32 %v932, 1.0
        %v1012 = vadd.f32 %v934, 1.0
        %v1013 = vadd.f32 %v936, 1.0
        %v1014 = vadd.f32 %v938, 1.0
        %v1015 = vadd.f32 %v940, 1.0
        %v1016 = vadd.f32 %v942, 1.0
        %v1017 = vadd.f32 %v944, 1.0
        %v1018 = vadd.f32 %v946, 1.0
        %v1019 = vadd.f32 %v948, 1.0
        %v1020 = vadd.f32 %v950, 1.0
        %v1021 = vadd.f32 %v952, 1.0
        %v1022 = vadd.f32 %v954, 1.0
        %v1023 = vadd.f32 %v956, 1.0
        %v1024 = vadd.f32 %v958, 1.0
        %v1025 = vadd.f32 %v960, 1.0
        %v1026 = vadd.f32 %v962, 1.0
        %v1027 = vrcp.pop %v963
        %v1028 = vmul.f32 %v963, %v1027
        %v1029 = vsub.f32 1.0, %v1028
        %v1030 = vmul.f32 %v1027, %v1029
        %v1031 = vadd.f32 %v1027, %v1030
        %vm1032 = vweird.f32 %v963
        %vm1033 = vweird.f32 %v1027
        %vm1034 = vmor %vm1032, %vm1033
        %v1035 = vsel %vm1034, %v1027, %v1031
        %v1036 = vand.u32 2147483647, %v963
        %vm1037 = vcmp.eq.f32.partialorder %v1036, 8.507059e+37
        %v1038 = vand.u32 %v963, 2147483648
        %v1039 = vor.u32 1.1754944e-38, %v1038
        %v1040 = vsel %vm1037, %v1039, %v1035
        %v1041 = vmul.f32 1.0, %v1040
        %v1042 = vrcp.pop %v964
        %v1043 = vmul.f32 %v964, %v1042
        %v1044 = vsub.f32 1.0, %v1043
        %v1045 = vmul.f32 %v1042, %v1044
        %v1046 = vadd.f32 %v1042, %v1045
        %vm1047 = vweird.f32 %v964
        %vm1048 = vweird.f32 %v1042
        %vm1049 = vmor %vm1047, %vm1048
        %v1050 = vsel %vm1049, %v1042, %v1046
        %v1051 = vand.u32 2147483647, %v964
        %vm1052 = vcmp.eq.f32.partialorder %v1051, 8.507059e+37
        %v1053 = vand.u32 %v964, 2147483648
        %v1054 = vor.u32 1.1754944e-38, %v1053
        %v1055 = vsel %vm1052, %v1054, %v1050
        %v1056 = vmul.f32 1.0, %v1055
        %v1057 = vrcp.pop %v965
        %v1058 = vmul.f32 %v965, %v1057
        %v1059 = vsub.f32 1.0, %v1058
        %v1060 = vmul.f32 %v1057, %v1059
        %v1061 = vadd.f32 %v1057, %v1060
        %vm1062 = vweird.f32 %v965
        %vm1063 = vweird.f32 %v1057
        %vm1064 = vmor %vm1062, %vm1063
        %v1065 = vsel %vm1064, %v1057, %v1061
        %v1066 = vand.u32 2147483647, %v965
        %vm1067 = vcmp.eq.f32.partialorder %v1066, 8.507059e+37
        %v1068 = vand.u32 %v965, 2147483648
        %v1069 = vor.u32 1.1754944e-38, %v1068
        %v1070 = vsel %vm1067, %v1069, %v1065
        %v1071 = vmul.f32 1.0, %v1070
        %v1072 = vrcp.pop %v966
        %v1073 = vmul.f32 %v966, %v1072
        %v1074 = vsub.f32 1.0, %v1073
        %v1075 = vmul.f32 %v1072, %v1074
        %v1076 = vadd.f32 %v1072, %v1075
        %vm1077 = vweird.f32 %v966
        %vm1078 = vweird.f32 %v1072
        %vm1079 = vmor %vm1077, %vm1078
        %v1080 = vsel %vm1079, %v1072, %v1076
        %v1081 = vand.u32 2147483647, %v966
        %vm1082 = vcmp.eq.f32.partialorder %v1081, 8.507059e+37
        %v1083 = vand.u32 %v966, 2147483648
        %v1084 = vor.u32 1.1754944e-38, %v1083
        %v1085 = vsel %vm1082, %v1084, %v1080
        %v1086 = vmul.f32 1.0, %v1085
        %v1087 = vrcp.pop %v967
        %v1088 = vmul.f32 %v967, %v1087
        %v1089 = vsub.f32 1.0, %v1088
        %v1090 = vmul.f32 %v1087, %v1089
        %v1091 = vadd.f32 %v1087, %v1090
        %vm1092 = vweird.f32 %v967
        %vm1093 = vweird.f32 %v1087
        %vm1094 = vmor %vm1092, %vm1093
        %v1095 = vsel %vm1094, %v1087, %v1091
        %v1096 = vand.u32 2147483647, %v967
        %vm1097 = vcmp.eq.f32.partialorder %v1096, 8.507059e+37
        %v1098 = vand.u32 %v967, 2147483648
        %v1099 = vor.u32 1.1754944e-38, %v1098
        %v1100 = vsel %vm1097, %v1099, %v1095
        %v1101 = vmul.f32 1.0, %v1100
        %v1102 = vrcp.pop %v968
        %v1103 = vmul.f32 %v968, %v1102
        %v1104 = vsub.f32 1.0, %v1103
        %v1105 = vmul.f32 %v1102, %v1104
        %v1106 = vadd.f32 %v1102, %v1105
        %vm1107 = vweird.f32 %v968
        %vm1108 = vweird.f32 %v1102
        %vm1109 = vmor %vm1107, %vm1108
        %v1110 = vsel %vm1109, %v1102, %v1106
        %v1111 = vand.u32 2147483647, %v968
        %vm1112 = vcmp.eq.f32.partialorder %v1111, 8.507059e+37
        %v1113 = vand.u32 %v968, 2147483648
        %v1114 = vor.u32 1.1754944e-38, %v1113
        %v1115 = vsel %vm1112, %v1114, %v1110
        %v1116 = vmul.f32 1.0, %v1115
        %v1117 = vrcp.pop %v969
        %v1118 = vmul.f32 %v969, %v1117
        %v1119 = vsub.f32 1.0, %v1118
        %v1120 = vmul.f32 %v1117, %v1119
        %v1121 = vadd.f32 %v1117, %v1120
        %vm1122 = vweird.f32 %v969
        %vm1123 = vweird.f32 %v1117
        %vm1124 = vmor %vm1122, %vm1123
        %v1125 = vsel %vm1124, %v1117, %v1121
        %v1126 = vand.u32 2147483647, %v969
        %vm1127 = vcmp.eq.f32.partialorder %v1126, 8.507059e+37
        %v1128 = vand.u32 %v969, 2147483648
        %v1129 = vor.u32 1.1754944e-38, %v1128
        %v1130 = vsel %vm1127, %v1129, %v1125
        %v1131 = vmul.f32 1.0, %v1130
        %v1132 = vrcp.pop %v970
        %v1133 = vmul.f32 %v970, %v1132
        %v1134 = vsub.f32 1.0, %v1133
        %v1135 = vmul.f32 %v1132, %v1134
        %v1136 = vadd.f32 %v1132, %v1135
        %vm1137 = vweird.f32 %v970
        %vm1138 = vweird.f32 %v1132
        %vm1139 = vmor %vm1137, %vm1138
        %v1140 = vsel %vm1139, %v1132, %v1136
        %v1141 = vand.u32 2147483647, %v970
        %vm1142 = vcmp.eq.f32.partialorder %v1141, 8.507059e+37
        %v1143 = vand.u32 %v970, 2147483648
        %v1144 = vor.u32 1.1754944e-38, %v1143
        %v1145 = vsel %vm1142, %v1144, %v1140
        %v1146 = vmul.f32 1.0, %v1145
        %v1147 = vrcp.pop %v971
        %v1148 = vmul.f32 %v971, %v1147
        %v1149 = vsub.f32 1.0, %v1148
        %v1150 = vmul.f32 %v1147, %v1149
        %v1151 = vadd.f32 %v1147, %v1150
        %vm1152 = vweird.f32 %v971
        %vm1153 = vweird.f32 %v1147
        %vm1154 = vmor %vm1152, %vm1153
        %v1155 = vsel %vm1154, %v1147, %v1151
        %v1156 = vand.u32 2147483647, %v971
        %vm1157 = vcmp.eq.f32.partialorder %v1156, 8.507059e+37
        %v1158 = vand.u32 %v971, 2147483648
        %v1159 = vor.u32 1.1754944e-38, %v1158
        %v1160 = vsel %vm1157, %v1159, %v1155
        %v1161 = vmul.f32 1.0, %v1160
        %v1162 = vrcp.pop %v972
        %v1163 = vmul.f32 %v972, %v1162
        %v1164 = vsub.f32 1.0, %v1163
        %v1165 = vmul.f32 %v1162, %v1164
        %v1166 = vadd.f32 %v1162, %v1165
        %vm1167 = vweird.f32 %v972
        %vm1168 = vweird.f32 %v1162
        %vm1169 = vmor %vm1167, %vm1168
        %v1170 = vsel %vm1169, %v1162, %v1166
        %v1171 = vand.u32 2147483647, %v972
        %vm1172 = vcmp.eq.f32.partialorder %v1171, 8.507059e+37
        %v1173 = vand.u32 %v972, 2147483648
        %v1174 = vor.u32 1.1754944e-38, %v1173
        %v1175 = vsel %vm1172, %v1174, %v1170
        %v1176 = vmul.f32 1.0, %v1175
        %v1177 = vrcp.pop %v973
        %v1178 = vmul.f32 %v973, %v1177
        %v1179 = vsub.f32 1.0, %v1178
        %v1180 = vmul.f32 %v1177, %v1179
        %v1181 = vadd.f32 %v1177, %v1180
        %vm1182 = vweird.f32 %v973
        %vm1183 = vweird.f32 %v1177
        %vm1184 = vmor %vm1182, %vm1183
        %v1185 = vsel %vm1184, %v1177, %v1181
        %v1186 = vand.u32 2147483647, %v973
        %vm1187 = vcmp.eq.f32.partialorder %v1186, 8.507059e+37
        %v1188 = vand.u32 %v973, 2147483648
        %v1189 = vor.u32 1.1754944e-38, %v1188
        %v1190 = vsel %vm1187, %v1189, %v1185
        %v1191 = vmul.f32 1.0, %v1190
        %v1192 = vrcp.pop %v974
        %v1193 = vmul.f32 %v974, %v1192
        %v1194 = vsub.f32 1.0, %v1193
        %v1195 = vmul.f32 %v1192, %v1194
        %v1196 = vadd.f32 %v1192, %v1195
        %vm1197 = vweird.f32 %v974
        %vm1198 = vweird.f32 %v1192
        %vm1199 = vmor %vm1197, %vm1198
        %v1200 = vsel %vm1199, %v1192, %v1196
        %v1201 = vand.u32 2147483647, %v974
        %vm1202 = vcmp.eq.f32.partialorder %v1201, 8.507059e+37
        %v1203 = vand.u32 %v974, 2147483648
        %v1204 = vor.u32 1.1754944e-38, %v1203
        %v1205 = vsel %vm1202, %v1204, %v1200
        %v1206 = vmul.f32 1.0, %v1205
        %v1207 = vrcp.pop %v975
        %v1208 = vmul.f32 %v975, %v1207
        %v1209 = vsub.f32 1.0, %v1208
        %v1210 = vmul.f32 %v1207, %v1209
        %v1211 = vadd.f32 %v1207, %v1210
        %vm1212 = vweird.f32 %v975
        %vm1213 = vweird.f32 %v1207
        %vm1214 = vmor %vm1212, %vm1213
        %v1215 = vsel %vm1214, %v1207, %v1211
        %v1216 = vand.u32 2147483647, %v975
        %vm1217 = vcmp.eq.f32.partialorder %v1216, 8.507059e+37
        %v1218 = vand.u32 %v975, 2147483648
        %v1219 = vor.u32 1.1754944e-38, %v1218
        %v1220 = vsel %vm1217, %v1219, %v1215
        %v1221 = vmul.f32 1.0, %v1220
        %v1222 = vrcp.pop %v976
        %v1223 = vmul.f32 %v976, %v1222
        %v1224 = vsub.f32 1.0, %v1223
        %v1225 = vmul.f32 %v1222, %v1224
        %v1226 = vadd.f32 %v1222, %v1225
        %vm1227 = vweird.f32 %v976
        %vm1228 = vweird.f32 %v1222
        %vm1229 = vmor %vm1227, %vm1228
        %v1230 = vsel %vm1229, %v1222, %v1226
        %v1231 = vand.u32 2147483647, %v976
        %vm1232 = vcmp.eq.f32.partialorder %v1231, 8.507059e+37
        %v1233 = vand.u32 %v976, 2147483648
        %v1234 = vor.u32 1.1754944e-38, %v1233
        %v1235 = vsel %vm1232, %v1234, %v1230
        %v1236 = vmul.f32 1.0, %v1235
        %v1237 = vrcp.pop %v977
        %v1238 = vmul.f32 %v977, %v1237
        %v1239 = vsub.f32 1.0, %v1238
        %v1240 = vmul.f32 %v1237, %v1239
        %v1241 = vadd.f32 %v1237, %v1240
        %vm1242 = vweird.f32 %v977
        %vm1243 = vweird.f32 %v1237
        %vm1244 = vmor %vm1242, %vm1243
        %v1245 = vsel %vm1244, %v1237, %v1241
        %v1246 = vand.u32 2147483647, %v977
        %vm1247 = vcmp.eq.f32.partialorder %v1246, 8.507059e+37
        %v1248 = vand.u32 %v977, 2147483648
        %v1249 = vor.u32 1.1754944e-38, %v1248
        %v1250 = vsel %vm1247, %v1249, %v1245
        %v1251 = vmul.f32 1.0, %v1250
        %v1252 = vrcp.pop %v978
        %v1253 = vmul.f32 %v978, %v1252
        %v1254 = vsub.f32 1.0, %v1253
        %v1255 = vmul.f32 %v1252, %v1254
        %v1256 = vadd.f32 %v1252, %v1255
        %vm1257 = vweird.f32 %v978
        %vm1258 = vweird.f32 %v1252
        %vm1259 = vmor %vm1257, %vm1258
        %v1260 = vsel %vm1259, %v1252, %v1256
        %v1261 = vand.u32 2147483647, %v978
        %vm1262 = vcmp.eq.f32.partialorder %v1261, 8.507059e+37
        %v1263 = vand.u32 %v978, 2147483648
        %v1264 = vor.u32 1.1754944e-38, %v1263
        %v1265 = vsel %vm1262, %v1264, %v1260
        %v1266 = vmul.f32 1.0, %v1265
        %v1267 = vrcp.pop %v979
        %v1268 = vmul.f32 %v979, %v1267
        %v1269 = vsub.f32 1.0, %v1268
        %v1270 = vmul.f32 %v1267, %v1269
        %v1271 = vadd.f32 %v1267, %v1270
        %vm1272 = vweird.f32 %v979
        %vm1273 = vweird.f32 %v1267
        %vm1274 = vmor %vm1272, %vm1273
        %v1275 = vsel %vm1274, %v1267, %v1271
        %v1276 = vand.u32 2147483647, %v979
        %vm1277 = vcmp.eq.f32.partialorder %v1276, 8.507059e+37
        %v1278 = vand.u32 %v979, 2147483648
        %v1279 = vor.u32 1.1754944e-38, %v1278
        %v1280 = vsel %vm1277, %v1279, %v1275
        %v1281 = vmul.f32 1.0, %v1280
        %v1282 = vrcp.pop %v980
        %v1283 = vmul.f32 %v980, %v1282
        %v1284 = vsub.f32 1.0, %v1283
        %v1285 = vmul.f32 %v1282, %v1284
        %v1286 = vadd.f32 %v1282, %v1285
        %vm1287 = vweird.f32 %v980
        %vm1288 = vweird.f32 %v1282
        %vm1289 = vmor %vm1287, %vm1288
        %v1290 = vsel %vm1289, %v1282, %v1286
        %v1291 = vand.u32 2147483647, %v980
        %vm1292 = vcmp.eq.f32.partialorder %v1291, 8.507059e+37
        %v1293 = vand.u32 %v980, 2147483648
        %v1294 = vor.u32 1.1754944e-38, %v1293
        %v1295 = vsel %vm1292, %v1294, %v1290
        %v1296 = vmul.f32 1.0, %v1295
        %v1297 = vrcp.pop %v981
        %v1298 = vmul.f32 %v981, %v1297
        %v1299 = vsub.f32 1.0, %v1298
        %v1300 = vmul.f32 %v1297, %v1299
        %v1301 = vadd.f32 %v1297, %v1300
        %vm1302 = vweird.f32 %v981
        %vm1303 = vweird.f32 %v1297
        %vm1304 = vmor %vm1302, %vm1303
        %v1305 = vsel %vm1304, %v1297, %v1301
        %v1306 = vand.u32 2147483647, %v981
        %vm1307 = vcmp.eq.f32.partialorder %v1306, 8.507059e+37
        %v1308 = vand.u32 %v981, 2147483648
        %v1309 = vor.u32 1.1754944e-38, %v1308
        %v1310 = vsel %vm1307, %v1309, %v1305
        %v1311 = vmul.f32 1.0, %v1310
        %v1312 = vrcp.pop %v982
        %v1313 = vmul.f32 %v982, %v1312
        %v1314 = vsub.f32 1.0, %v1313
        %v1315 = vmul.f32 %v1312, %v1314
        %v1316 = vadd.f32 %v1312, %v1315
        %vm1317 = vweird.f32 %v982
        %vm1318 = vweird.f32 %v1312
        %vm1319 = vmor %vm1317, %vm1318
        %v1320 = vsel %vm1319, %v1312, %v1316
        %v1321 = vand.u32 2147483647, %v982
        %vm1322 = vcmp.eq.f32.partialorder %v1321, 8.507059e+37
        %v1323 = vand.u32 %v982, 2147483648
        %v1324 = vor.u32 1.1754944e-38, %v1323
        %v1325 = vsel %vm1322, %v1324, %v1320
        %v1326 = vmul.f32 1.0, %v1325
        %v1327 = vrcp.pop %v983
        %v1328 = vmul.f32 %v983, %v1327
        %v1329 = vsub.f32 1.0, %v1328
        %v1330 = vmul.f32 %v1327, %v1329
        %v1331 = vadd.f32 %v1327, %v1330
        %vm1332 = vweird.f32 %v983
        %vm1333 = vweird.f32 %v1327
        %vm1334 = vmor %vm1332, %vm1333
        %v1335 = vsel %vm1334, %v1327, %v1331
        %v1336 = vand.u32 2147483647, %v983
        %vm1337 = vcmp.eq.f32.partialorder %v1336, 8.507059e+37
        %v1338 = vand.u32 %v983, 2147483648
        %v1339 = vor.u32 1.1754944e-38, %v1338
        %v1340 = vsel %vm1337, %v1339, %v1335
        %v1341 = vmul.f32 1.0, %v1340
        %v1342 = vrcp.pop %v984
        %v1343 = vmul.f32 %v984, %v1342
        %v1344 = vsub.f32 1.0, %v1343
        %v1345 = vmul.f32 %v1342, %v1344
        %v1346 = vadd.f32 %v1342, %v1345
        %vm1347 = vweird.f32 %v984
        %vm1348 = vweird.f32 %v1342
        %vm1349 = vmor %vm1347, %vm1348
        %v1350 = vsel %vm1349, %v1342, %v1346
        %v1351 = vand.u32 2147483647, %v984
        %vm1352 = vcmp.eq.f32.partialorder %v1351, 8.507059e+37
        %v1353 = vand.u32 %v984, 2147483648
        %v1354 = vor.u32 1.1754944e-38, %v1353
        %v1355 = vsel %vm1352, %v1354, %v1350
        %v1356 = vmul.f32 1.0, %v1355
        %v1357 = vrcp.pop %v985
        %v1358 = vmul.f32 %v985, %v1357
        %v1359 = vsub.f32 1.0, %v1358
        %v1360 = vmul.f32 %v1357, %v1359
        %v1361 = vadd.f32 %v1357, %v1360
        %vm1362 = vweird.f32 %v985
        %vm1363 = vweird.f32 %v1357
        %vm1364 = vmor %vm1362, %vm1363
        %v1365 = vsel %vm1364, %v1357, %v1361
        %v1366 = vand.u32 2147483647, %v985
        %vm1367 = vcmp.eq.f32.partialorder %v1366, 8.507059e+37
        %v1368 = vand.u32 %v985, 2147483648
        %v1369 = vor.u32 1.1754944e-38, %v1368
        %v1370 = vsel %vm1367, %v1369, %v1365
        %v1371 = vmul.f32 1.0, %v1370
        %v1372 = vrcp.pop %v986
        %v1373 = vmul.f32 %v986, %v1372
        %v1374 = vsub.f32 1.0, %v1373
        %v1375 = vmul.f32 %v1372, %v1374
        %v1376 = vadd.f32 %v1372, %v1375
        %vm1377 = vweird.f32 %v986
        %vm1378 = vweird.f32 %v1372
        %vm1379 = vmor %vm1377, %vm1378
        %v1380 = vsel %vm1379, %v1372, %v1376
        %v1381 = vand.u32 2147483647, %v986
        %vm1382 = vcmp.eq.f32.partialorder %v1381, 8.507059e+37
        %v1383 = vand.u32 %v986, 2147483648
        %v1384 = vor.u32 1.1754944e-38, %v1383
        %v1385 = vsel %vm1382, %v1384, %v1380
        %v1386 = vmul.f32 1.0, %v1385
        %v1387 = vrcp.pop %v987
        %v1388 = vmul.f32 %v987, %v1387
        %v1389 = vsub.f32 1.0, %v1388
        %v1390 = vmul.f32 %v1387, %v1389
        %v1391 = vadd.f32 %v1387, %v1390
        %vm1392 = vweird.f32 %v987
        %vm1393 = vweird.f32 %v1387
        %vm1394 = vmor %vm1392, %vm1393
        %v1395 = vsel %vm1394, %v1387, %v1391
        %v1396 = vand.u32 2147483647, %v987
        %vm1397 = vcmp.eq.f32.partialorder %v1396, 8.507059e+37
        %v1398 = vand.u32 %v987, 2147483648
        %v1399 = vor.u32 1.1754944e-38, %v1398
        %v1400 = vsel %vm1397, %v1399, %v1395
        %v1401 = vmul.f32 1.0, %v1400
        %v1402 = vrcp.pop %v988
        %v1403 = vmul.f32 %v988, %v1402
        %v1404 = vsub.f32 1.0, %v1403
        %v1405 = vmul.f32 %v1402, %v1404
        %v1406 = vadd.f32 %v1402, %v1405
        %vm1407 = vweird.f32 %v988
        %vm1408 = vweird.f32 %v1402
        %vm1409 = vmor %vm1407, %vm1408
        %v1410 = vsel %vm1409, %v1402, %v1406
        %v1411 = vand.u32 2147483647, %v988
        %vm1412 = vcmp.eq.f32.partialorder %v1411, 8.507059e+37
        %v1413 = vand.u32 %v988, 2147483648
        %v1414 = vor.u32 1.1754944e-38, %v1413
        %v1415 = vsel %vm1412, %v1414, %v1410
        %v1416 = vmul.f32 1.0, %v1415
        %v1417 = vrcp.pop %v989
        %v1418 = vmul.f32 %v989, %v1417
        %v1419 = vsub.f32 1.0, %v1418
        %v1420 = vmul.f32 %v1417, %v1419
        %v1421 = vadd.f32 %v1417, %v1420
        %vm1422 = vweird.f32 %v989
        %vm1423 = vweird.f32 %v1417
        %vm1424 = vmor %vm1422, %vm1423
        %v1425 = vsel %vm1424, %v1417, %v1421
        %v1426 = vand.u32 2147483647, %v989
        %vm1427 = vcmp.eq.f32.partialorder %v1426, 8.507059e+37
        %v1428 = vand.u32 %v989, 2147483648
        %v1429 = vor.u32 1.1754944e-38, %v1428
        %v1430 = vsel %vm1427, %v1429, %v1425
        %v1431 = vmul.f32 1.0, %v1430
        %v1432 = vrcp.pop %v990
        %v1433 = vmul.f32 %v990, %v1432
        %v1434 = vsub.f32 1.0, %v1433
        %v1435 = vmul.f32 %v1432, %v1434
        %v1436 = vadd.f32 %v1432, %v1435
        %vm1437 = vweird.f32 %v990
        %vm1438 = vweird.f32 %v1432
        %vm1439 = vmor %vm1437, %vm1438
        %v1440 = vsel %vm1439, %v1432, %v1436
        %v1441 = vand.u32 2147483647, %v990
        %vm1442 = vcmp.eq.f32.partialorder %v1441, 8.507059e+37
        %v1443 = vand.u32 %v990, 2147483648
        %v1444 = vor.u32 1.1754944e-38, %v1443
        %v1445 = vsel %vm1442, %v1444, %v1440
        %v1446 = vmul.f32 1.0, %v1445
        %v1447 = vrcp.pop %v991
        %v1448 = vmul.f32 %v991, %v1447
        %v1449 = vsub.f32 1.0, %v1448
        %v1450 = vmul.f32 %v1447, %v1449
        %v1451 = vadd.f32 %v1447, %v1450
        %vm1452 = vweird.f32 %v991
        %vm1453 = vweird.f32 %v1447
        %vm1454 = vmor %vm1452, %vm1453
        %v1455 = vsel %vm1454, %v1447, %v1451
        %v1456 = vand.u32 2147483647, %v991
        %vm1457 = vcmp.eq.f32.partialorder %v1456, 8.507059e+37
        %v1458 = vand.u32 %v991, 2147483648
        %v1459 = vor.u32 1.1754944e-38, %v1458
        %v1460 = vsel %vm1457, %v1459, %v1455
        %v1461 = vmul.f32 1.0, %v1460
        %v1462 = vrcp.pop %v992
        %v1463 = vmul.f32 %v992, %v1462
        %v1464 = vsub.f32 1.0, %v1463
        %v1465 = vmul.f32 %v1462, %v1464
        %v1466 = vadd.f32 %v1462, %v1465
        %vm1467 = vweird.f32 %v992
        %vm1468 = vweird.f32 %v1462
        %vm1469 = vmor %vm1467, %vm1468
        %v1470 = vsel %vm1469, %v1462, %v1466
        %v1471 = vand.u32 2147483647, %v992
        %vm1472 = vcmp.eq.f32.partialorder %v1471, 8.507059e+37
        %v1473 = vand.u32 %v992, 2147483648
        %v1474 = vor.u32 1.1754944e-38, %v1473
        %v1475 = vsel %vm1472, %v1474, %v1470
        %v1476 = vmul.f32 1.0, %v1475
        %v1477 = vrcp.pop %v993
        %v1478 = vmul.f32 %v993, %v1477
        %v1479 = vsub.f32 1.0, %v1478
        %v1480 = vmul.f32 %v1477, %v1479
        %v1481 = vadd.f32 %v1477, %v1480
        %vm1482 = vweird.f32 %v993
        %vm1483 = vweird.f32 %v1477
        %vm1484 = vmor %vm1482, %vm1483
        %v1485 = vsel %vm1484, %v1477, %v1481
        %v1486 = vand.u32 2147483647, %v993
        %vm1487 = vcmp.eq.f32.partialorder %v1486, 8.507059e+37
        %v1488 = vand.u32 %v993, 2147483648
        %v1489 = vor.u32 1.1754944e-38, %v1488
        %v1490 = vsel %vm1487, %v1489, %v1485
        %v1491 = vmul.f32 1.0, %v1490
        %v1492 = vrcp.pop %v994
        %v1493 = vmul.f32 %v994, %v1492
        %v1494 = vsub.f32 1.0, %v1493
        %v1495 = vmul.f32 %v1492, %v1494
        %v1496 = vadd.f32 %v1492, %v1495
        %vm1497 = vweird.f32 %v994
        %vm1498 = vweird.f32 %v1492
        %vm1499 = vmor %vm1497, %vm1498
        %v1500 = vsel %vm1499, %v1492, %v1496
        %v1501 = vand.u32 2147483647, %v994
        %vm1502 = vcmp.eq.f32.partialorder %v1501, 8.507059e+37
        %v1503 = vand.u32 %v994, 2147483648
        %v1504 = vor.u32 1.1754944e-38, %v1503
        %v1505 = vsel %vm1502, %v1504, %v1500
        %v1506 = vmul.f32 1.0, %v1505
        %v1507 = vrcp.pop %v995
        %v1508 = vmul.f32 %v995, %v1507
        %v1509 = vsub.f32 1.0, %v1508
        %v1510 = vmul.f32 %v1507, %v1509
        %v1511 = vadd.f32 %v1507, %v1510
        %vm1512 = vweird.f32 %v995
        %vm1513 = vweird.f32 %v1507
        %vm1514 = vmor %vm1512, %vm1513
        %v1515 = vsel %vm1514, %v1507, %v1511
        %v1516 = vand.u32 2147483647, %v995
        %vm1517 = vcmp.eq.f32.partialorder %v1516, 8.507059e+37
        %v1518 = vand.u32 %v995, 2147483648
        %v1519 = vor.u32 1.1754944e-38, %v1518
        %v1520 = vsel %vm1517, %v1519, %v1515
        %v1521 = vmul.f32 1.0, %v1520
        %v1522 = vrcp.pop %v996
        %v1523 = vmul.f32 %v996, %v1522
        %v1524 = vsub.f32 1.0, %v1523
        %v1525 = vmul.f32 %v1522, %v1524
        %v1526 = vadd.f32 %v1522, %v1525
        %vm1527 = vweird.f32 %v996
        %vm1528 = vweird.f32 %v1522
        %vm1529 = vmor %vm1527, %vm1528
        %v1530 = vsel %vm1529, %v1522, %v1526
        %v1531 = vand.u32 2147483647, %v996
        %vm1532 = vcmp.eq.f32.partialorder %v1531, 8.507059e+37
        %v1533 = vand.u32 %v996, 2147483648
        %v1534 = vor.u32 1.1754944e-38, %v1533
        %v1535 = vsel %vm1532, %v1534, %v1530
        %v1536 = vmul.f32 1.0, %v1535
        %v1537 = vrcp.pop %v997
        %v1538 = vmul.f32 %v997, %v1537
        %v1539 = vsub.f32 1.0, %v1538
        %v1540 = vmul.f32 %v1537, %v1539
        %v1541 = vadd.f32 %v1537, %v1540
        %vm1542 = vweird.f32 %v997
        %vm1543 = vweird.f32 %v1537
        %vm1544 = vmor %vm1542, %vm1543
        %v1545 = vsel %vm1544, %v1537, %v1541
        %v1546 = vand.u32 2147483647, %v997
        %vm1547 = vcmp.eq.f32.partialorder %v1546, 8.507059e+37
        %v1548 = vand.u32 %v997, 2147483648
        %v1549 = vor.u32 1.1754944e-38, %v1548
        %v1550 = vsel %vm1547, %v1549, %v1545
        %v1551 = vmul.f32 1.0, %v1550
        %v1552 = vrcp.pop %v998
        %v1553 = vmul.f32 %v998, %v1552
        %v1554 = vsub.f32 1.0, %v1553
        %v1555 = vmul.f32 %v1552, %v1554
        %v1556 = vadd.f32 %v1552, %v1555
        %vm1557 = vweird.f32 %v998
        %vm1558 = vweird.f32 %v1552
        %vm1559 = vmor %vm1557, %vm1558
        %v1560 = vsel %vm1559, %v1552, %v1556
        %v1561 = vand.u32 2147483647, %v998
        %vm1562 = vcmp.eq.f32.partialorder %v1561, 8.507059e+37
        %v1563 = vand.u32 %v998, 2147483648
        %v1564 = vor.u32 1.1754944e-38, %v1563
        %v1565 = vsel %vm1562, %v1564, %v1560
        %v1566 = vmul.f32 1.0, %v1565
        %v1567 = vrcp.pop %v999
        %v1568 = vmul.f32 %v999, %v1567
        %v1569 = vsub.f32 1.0, %v1568
        %v1570 = vmul.f32 %v1567, %v1569
        %v1571 = vadd.f32 %v1567, %v1570
        %vm1572 = vweird.f32 %v999
        %vm1573 = vweird.f32 %v1567
        %vm1574 = vmor %vm1572, %vm1573
        %v1575 = vsel %vm1574, %v1567, %v1571
        %v1576 = vand.u32 2147483647, %v999
        %vm1577 = vcmp.eq.f32.partialorder %v1576, 8.507059e+37
        %v1578 = vand.u32 %v999, 2147483648
        %v1579 = vor.u32 1.1754944e-38, %v1578
        %v1580 = vsel %vm1577, %v1579, %v1575
        %v1581 = vmul.f32 1.0, %v1580
        %v1582 = vrcp.pop %v1000
        %v1583 = vmul.f32 %v1000, %v1582
        %v1584 = vsub.f32 1.0, %v1583
        %v1585 = vmul.f32 %v1582, %v1584
        %v1586 = vadd.f32 %v1582, %v1585
        %vm1587 = vweird.f32 %v1000
        %vm1588 = vweird.f32 %v1582
        %vm1589 = vmor %vm1587, %vm1588
        %v1590 = vsel %vm1589, %v1582, %v1586
        %v1591 = vand.u32 2147483647, %v1000
        %vm1592 = vcmp.eq.f32.partialorder %v1591, 8.507059e+37
        %v1593 = vand.u32 %v1000, 2147483648
        %v1594 = vor.u32 1.1754944e-38, %v1593
        %v1595 = vsel %vm1592, %v1594, %v1590
        %v1596 = vmul.f32 1.0, %v1595
        %v1597 = vrcp.pop %v1001
        %v1598 = vmul.f32 %v1001, %v1597
        %v1599 = vsub.f32 1.0, %v1598
        %v1600 = vmul.f32 %v1597, %v1599
        %v1601 = vadd.f32 %v1597, %v1600
        %vm1602 = vweird.f32 %v1001
        %vm1603 = vweird.f32 %v1597
        %vm1604 = vmor %vm1602, %vm1603
        %v1605 = vsel %vm1604, %v1597, %v1601
        %v1606 = vand.u32 2147483647, %v1001
        %vm1607 = vcmp.eq.f32.partialorder %v1606, 8.507059e+37
        %v1608 = vand.u32 %v1001, 2147483648
        %v1609 = vor.u32 1.1754944e-38, %v1608
        %v1610 = vsel %vm1607, %v1609, %v1605
        %v1611 = vmul.f32 1.0, %v1610
        %v1612 = vrcp.pop %v1002
        %v1613 = vmul.f32 %v1002, %v1612
        %v1614 = vsub.f32 1.0, %v1613
        %v1615 = vmul.f32 %v1612, %v1614
        %v1616 = vadd.f32 %v1612, %v1615
        %vm1617 = vweird.f32 %v1002
        %vm1618 = vweird.f32 %v1612
        %vm1619 = vmor %vm1617, %vm1618
        %v1620 = vsel %vm1619, %v1612, %v1616
        %v1621 = vand.u32 2147483647, %v1002
        %vm1622 = vcmp.eq.f32.partialorder %v1621, 8.507059e+37
        %v1623 = vand.u32 %v1002, 2147483648
        %v1624 = vor.u32 1.1754944e-38, %v1623
        %v1625 = vsel %vm1622, %v1624, %v1620
        %v1626 = vmul.f32 1.0, %v1625
        %v1627 = vrcp.pop %v1003
        %v1628 = vmul.f32 %v1003, %v1627
        %v1629 = vsub.f32 1.0, %v1628
        %v1630 = vmul.f32 %v1627, %v1629
        %v1631 = vadd.f32 %v1627, %v1630
        %vm1632 = vweird.f32 %v1003
        %vm1633 = vweird.f32 %v1627
        %vm1634 = vmor %vm1632, %vm1633
        %v1635 = vsel %vm1634, %v1627, %v1631
        %v1636 = vand.u32 2147483647, %v1003
        %vm1637 = vcmp.eq.f32.partialorder %v1636, 8.507059e+37
        %v1638 = vand.u32 %v1003, 2147483648
        %v1639 = vor.u32 1.1754944e-38, %v1638
        %v1640 = vsel %vm1637, %v1639, %v1635
        %v1641 = vmul.f32 1.0, %v1640
        %v1642 = vrcp.pop %v1004
        %v1643 = vmul.f32 %v1004, %v1642
        %v1644 = vsub.f32 1.0, %v1643
        %v1645 = vmul.f32 %v1642, %v1644
        %v1646 = vadd.f32 %v1642, %v1645
        %vm1647 = vweird.f32 %v1004
        %vm1648 = vweird.f32 %v1642
        %vm1649 = vmor %vm1647, %vm1648
        %v1650 = vsel %vm1649, %v1642, %v1646
        %v1651 = vand.u32 2147483647, %v1004
        %vm1652 = vcmp.eq.f32.partialorder %v1651, 8.507059e+37
        %v1653 = vand.u32 %v1004, 2147483648
        %v1654 = vor.u32 1.1754944e-38, %v1653
        %v1655 = vsel %vm1652, %v1654, %v1650
        %v1656 = vmul.f32 1.0, %v1655
        %v1657 = vrcp.pop %v1005
        %v1658 = vmul.f32 %v1005, %v1657
        %v1659 = vsub.f32 1.0, %v1658
        %v1660 = vmul.f32 %v1657, %v1659
        %v1661 = vadd.f32 %v1657, %v1660
        %vm1662 = vweird.f32 %v1005
        %vm1663 = vweird.f32 %v1657
        %vm1664 = vmor %vm1662, %vm1663
        %v1665 = vsel %vm1664, %v1657, %v1661
        %v1666 = vand.u32 2147483647, %v1005
        %vm1667 = vcmp.eq.f32.partialorder %v1666, 8.507059e+37
        %v1668 = vand.u32 %v1005, 2147483648
        %v1669 = vor.u32 1.1754944e-38, %v1668
        %v1670 = vsel %vm1667, %v1669, %v1665
        %v1671 = vmul.f32 1.0, %v1670
        %v1672 = vrcp.pop %v1006
        %v1673 = vmul.f32 %v1006, %v1672
        %v1674 = vsub.f32 1.0, %v1673
        %v1675 = vmul.f32 %v1672, %v1674
        %v1676 = vadd.f32 %v1672, %v1675
        %vm1677 = vweird.f32 %v1006
        %vm1678 = vweird.f32 %v1672
        %vm1679 = vmor %vm1677, %vm1678
        %v1680 = vsel %vm1679, %v1672, %v1676
        %v1681 = vand.u32 2147483647, %v1006
        %vm1682 = vcmp.eq.f32.partialorder %v1681, 8.507059e+37
        %v1683 = vand.u32 %v1006, 2147483648
        %v1684 = vor.u32 1.1754944e-38, %v1683
        %v1685 = vsel %vm1682, %v1684, %v1680
        %v1686 = vmul.f32 1.0, %v1685
        %v1687 = vrcp.pop %v1007
        %v1688 = vmul.f32 %v1007, %v1687
        %v1689 = vsub.f32 1.0, %v1688
        %v1690 = vmul.f32 %v1687, %v1689
        %v1691 = vadd.f32 %v1687, %v1690
        %vm1692 = vweird.f32 %v1007
        %vm1693 = vweird.f32 %v1687
        %vm1694 = vmor %vm1692, %vm1693
        %v1695 = vsel %vm1694, %v1687, %v1691
        %v1696 = vand.u32 2147483647, %v1007
        %vm1697 = vcmp.eq.f32.partialorder %v1696, 8.507059e+37
        %v1698 = vand.u32 %v1007, 2147483648
        %v1699 = vor.u32 1.1754944e-38, %v1698
        %v1700 = vsel %vm1697, %v1699, %v1695
        %v1701 = vmul.f32 1.0, %v1700
        %v1702 = vrcp.pop %v1008
        %v1703 = vmul.f32 %v1008, %v1702
        %v1704 = vsub.f32 1.0, %v1703
        %v1705 = vmul.f32 %v1702, %v1704
        %v1706 = vadd.f32 %v1702, %v1705
        %vm1707 = vweird.f32 %v1008
        %vm1708 = vweird.f32 %v1702
        %vm1709 = vmor %vm1707, %vm1708
        %v1710 = vsel %vm1709, %v1702, %v1706
        %v1711 = vand.u32 2147483647, %v1008
        %vm1712 = vcmp.eq.f32.partialorder %v1711, 8.507059e+37
        %v1713 = vand.u32 %v1008, 2147483648
        %v1714 = vor.u32 1.1754944e-38, %v1713
        %v1715 = vsel %vm1712, %v1714, %v1710
        %v1716 = vmul.f32 1.0, %v1715
        %v1717 = vrcp.pop %v1009
        %v1718 = vmul.f32 %v1009, %v1717
        %v1719 = vsub.f32 1.0, %v1718
        %v1720 = vmul.f32 %v1717, %v1719
        %v1721 = vadd.f32 %v1717, %v1720
        %vm1722 = vweird.f32 %v1009
        %vm1723 = vweird.f32 %v1717
        %vm1724 = vmor %vm1722, %vm1723
        %v1725 = vsel %vm1724, %v1717, %v1721
        %v1726 = vand.u32 2147483647, %v1009
        %vm1727 = vcmp.eq.f32.partialorder %v1726, 8.507059e+37
        %v1728 = vand.u32 %v1009, 2147483648
        %v1729 = vor.u32 1.1754944e-38, %v1728
        %v1730 = vsel %vm1727, %v1729, %v1725
        %v1731 = vmul.f32 1.0, %v1730
        %v1732 = vrcp.pop %v1010
        %v1733 = vmul.f32 %v1010, %v1732
        %v1734 = vsub.f32 1.0, %v1733
        %v1735 = vmul.f32 %v1732, %v1734
        %v1736 = vadd.f32 %v1732, %v1735
        %vm1737 = vweird.f32 %v1010
        %vm1738 = vweird.f32 %v1732
        %vm1739 = vmor %vm1737, %vm1738
        %v1740 = vsel %vm1739, %v1732, %v1736
        %v1741 = vand.u32 2147483647, %v1010
        %vm1742 = vcmp.eq.f32.partialorder %v1741, 8.507059e+37
        %v1743 = vand.u32 %v1010, 2147483648
        %v1744 = vor.u32 1.1754944e-38, %v1743
        %v1745 = vsel %vm1742, %v1744, %v1740
        %v1746 = vmul.f32 1.0, %v1745
        %v1747 = vrcp.pop %v1011
        %v1748 = vmul.f32 %v1011, %v1747
        %v1749 = vsub.f32 1.0, %v1748
        %v1750 = vmul.f32 %v1747, %v1749
        %v1751 = vadd.f32 %v1747, %v1750
        %vm1752 = vweird.f32 %v1011
        %vm1753 = vweird.f32 %v1747
        %vm1754 = vmor %vm1752, %vm1753
        %v1755 = vsel %vm1754, %v1747, %v1751
        %v1756 = vand.u32 2147483647, %v1011
        %vm1757 = vcmp.eq.f32.partialorder %v1756, 8.507059e+37
        %v1758 = vand.u32 %v1011, 2147483648
        %v1759 = vor.u32 1.1754944e-38, %v1758
        %v1760 = vsel %vm1757, %v1759, %v1755
        %v1761 = vmul.f32 1.0, %v1760
        %v1762 = vrcp.pop %v1012
        %v1763 = vmul.f32 %v1012, %v1762
        %v1764 = vsub.f32 1.0, %v1763
        %v1765 = vmul.f32 %v1762, %v1764
        %v1766 = vadd.f32 %v1762, %v1765
        %vm1767 = vweird.f32 %v1012
        %vm1768 = vweird.f32 %v1762
        %vm1769 = vmor %vm1767, %vm1768
        %v1770 = vsel %vm1769, %v1762, %v1766
        %v1771 = vand.u32 2147483647, %v1012
        %vm1772 = vcmp.eq.f32.partialorder %v1771, 8.507059e+37
        %v1773 = vand.u32 %v1012, 2147483648
        %v1774 = vor.u32 1.1754944e-38, %v1773
        %v1775 = vsel %vm1772, %v1774, %v1770
        %v1776 = vmul.f32 1.0, %v1775
        %v1777 = vrcp.pop %v1013
        %v1778 = vmul.f32 %v1013, %v1777
        %v1779 = vsub.f32 1.0, %v1778
        %v1780 = vmul.f32 %v1777, %v1779
        %v1781 = vadd.f32 %v1777, %v1780
        %vm1782 = vweird.f32 %v1013
        %vm1783 = vweird.f32 %v1777
        %vm1784 = vmor %vm1782, %vm1783
        %v1785 = vsel %vm1784, %v1777, %v1781
        %v1786 = vand.u32 2147483647, %v1013
        %vm1787 = vcmp.eq.f32.partialorder %v1786, 8.507059e+37
        %v1788 = vand.u32 %v1013, 2147483648
        %v1789 = vor.u32 1.1754944e-38, %v1788
        %v1790 = vsel %vm1787, %v1789, %v1785
        %v1791 = vmul.f32 1.0, %v1790
        %v1792 = vrcp.pop %v1014
        %v1793 = vmul.f32 %v1014, %v1792
        %v1794 = vsub.f32 1.0, %v1793
        %v1795 = vmul.f32 %v1792, %v1794
        %v1796 = vadd.f32 %v1792, %v1795
        %vm1797 = vweird.f32 %v1014
        %vm1798 = vweird.f32 %v1792
        %vm1799 = vmor %vm1797, %vm1798
        %v1800 = vsel %vm1799, %v1792, %v1796
        %v1801 = vand.u32 2147483647, %v1014
        %vm1802 = vcmp.eq.f32.partialorder %v1801, 8.507059e+37
        %v1803 = vand.u32 %v1014, 2147483648
        %v1804 = vor.u32 1.1754944e-38, %v1803
        %v1805 = vsel %vm1802, %v1804, %v1800
        %v1806 = vmul.f32 1.0, %v1805
        %v1807 = vrcp.pop %v1015
        %v1808 = vmul.f32 %v1015, %v1807
        %v1809 = vsub.f32 1.0, %v1808
        %v1810 = vmul.f32 %v1807, %v1809
        %v1811 = vadd.f32 %v1807, %v1810
        %vm1812 = vweird.f32 %v1015
        %vm1813 = vweird.f32 %v1807
        %vm1814 = vmor %vm1812, %vm1813
        %v1815 = vsel %vm1814, %v1807, %v1811
        %v1816 = vand.u32 2147483647, %v1015
        %vm1817 = vcmp.eq.f32.partialorder %v1816, 8.507059e+37
        %v1818 = vand.u32 %v1015, 2147483648
        %v1819 = vor.u32 1.1754944e-38, %v1818
        %v1820 = vsel %vm1817, %v1819, %v1815
        %v1821 = vmul.f32 1.0, %v1820
        %v1822 = vrcp.pop %v1016
        %v1823 = vmul.f32 %v1016, %v1822
        %v1824 = vsub.f32 1.0, %v1823
        %v1825 = vmul.f32 %v1822, %v1824
        %v1826 = vadd.f32 %v1822, %v1825
        %vm1827 = vweird.f32 %v1016
        %vm1828 = vweird.f32 %v1822
        %vm1829 = vmor %vm1827, %vm1828
        %v1830 = vsel %vm1829, %v1822, %v1826
        %v1831 = vand.u32 2147483647, %v1016
        %vm1832 = vcmp.eq.f32.partialorder %v1831, 8.507059e+37
        %v1833 = vand.u32 %v1016, 2147483648
        %v1834 = vor.u32 1.1754944e-38, %v1833
        %v1835 = vsel %vm1832, %v1834, %v1830
        %v1836 = vmul.f32 1.0, %v1835
        %v1837 = vrcp.pop %v1017
        %v1838 = vmul.f32 %v1017, %v1837
        %v1839 = vsub.f32 1.0, %v1838
        %v1840 = vmul.f32 %v1837, %v1839
        %v1841 = vadd.f32 %v1837, %v1840
        %vm1842 = vweird.f32 %v1017
        %vm1843 = vweird.f32 %v1837
        %vm1844 = vmor %vm1842, %vm1843
        %v1845 = vsel %vm1844, %v1837, %v1841
        %v1846 = vand.u32 2147483647, %v1017
        %vm1847 = vcmp.eq.f32.partialorder %v1846, 8.507059e+37
        %v1848 = vand.u32 %v1017, 2147483648
        %v1849 = vor.u32 1.1754944e-38, %v1848
        %v1850 = vsel %vm1847, %v1849, %v1845
        %v1851 = vmul.f32 1.0, %v1850
        %v1852 = vrcp.pop %v1018
        %v1853 = vmul.f32 %v1018, %v1852
        %v1854 = vsub.f32 1.0, %v1853
        %v1855 = vmul.f32 %v1852, %v1854
        %v1856 = vadd.f32 %v1852, %v1855
        %vm1857 = vweird.f32 %v1018
        %vm1858 = vweird.f32 %v1852
        %vm1859 = vmor %vm1857, %vm1858
        %v1860 = vsel %vm1859, %v1852, %v1856
        %v1861 = vand.u32 2147483647, %v1018
        %vm1862 = vcmp.eq.f32.partialorder %v1861, 8.507059e+37
        %v1863 = vand.u32 %v1018, 2147483648
        %v1864 = vor.u32 1.1754944e-38, %v1863
        %v1865 = vsel %vm1862, %v1864, %v1860
        %v1866 = vmul.f32 1.0, %v1865
        %v1867 = vrcp.pop %v1019
        %v1868 = vmul.f32 %v1019, %v1867
        %v1869 = vsub.f32 1.0, %v1868
        %v1870 = vmul.f32 %v1867, %v1869
        %v1871 = vadd.f32 %v1867, %v1870
        %vm1872 = vweird.f32 %v1019
        %vm1873 = vweird.f32 %v1867
        %vm1874 = vmor %vm1872, %vm1873
        %v1875 = vsel %vm1874, %v1867, %v1871
        %v1876 = vand.u32 2147483647, %v1019
        %vm1877 = vcmp.eq.f32.partialorder %v1876, 8.507059e+37
        %v1878 = vand.u32 %v1019, 2147483648
        %v1879 = vor.u32 1.1754944e-38, %v1878
        %v1880 = vsel %vm1877, %v1879, %v1875
        %v1881 = vmul.f32 1.0, %v1880
        %v1882 = vrcp.pop %v1020
        %v1883 = vmul.f32 %v1020, %v1882
        %v1884 = vsub.f32 1.0, %v1883
        %v1885 = vmul.f32 %v1882, %v1884
        %v1886 = vadd.f32 %v1882, %v1885
        %vm1887 = vweird.f32 %v1020
        %vm1888 = vweird.f32 %v1882
        %vm1889 = vmor %vm1887, %vm1888
        %v1890 = vsel %vm1889, %v1882, %v1886
        %v1891 = vand.u32 2147483647, %v1020
        %vm1892 = vcmp.eq.f32.partialorder %v1891, 8.507059e+37
        %v1893 = vand.u32 %v1020, 2147483648
        %v1894 = vor.u32 1.1754944e-38, %v1893
        %v1895 = vsel %vm1892, %v1894, %v1890
        %v1896 = vmul.f32 1.0, %v1895
        %v1897 = vrcp.pop %v1021
        %v1898 = vmul.f32 %v1021, %v1897
        %v1899 = vsub.f32 1.0, %v1898
        %v1900 = vmul.f32 %v1897, %v1899
        %v1901 = vadd.f32 %v1897, %v1900
        %vm1902 = vweird.f32 %v1021
        %vm1903 = vweird.f32 %v1897
        %vm1904 = vmor %vm1902, %vm1903
        %v1905 = vsel %vm1904, %v1897, %v1901
        %v1906 = vand.u32 2147483647, %v1021
        %vm1907 = vcmp.eq.f32.partialorder %v1906, 8.507059e+37
        %v1908 = vand.u32 %v1021, 2147483648
        %v1909 = vor.u32 1.1754944e-38, %v1908
        %v1910 = vsel %vm1907, %v1909, %v1905
        %v1911 = vmul.f32 1.0, %v1910
        %v1912 = vrcp.pop %v1022
        %v1913 = vmul.f32 %v1022, %v1912
        %v1914 = vsub.f32 1.0, %v1913
        %v1915 = vmul.f32 %v1912, %v1914
        %v1916 = vadd.f32 %v1912, %v1915
        %vm1917 = vweird.f32 %v1022
        %vm1918 = vweird.f32 %v1912
        %vm1919 = vmor %vm1917, %vm1918
        %v1920 = vsel %vm1919, %v1912, %v1916
        %v1921 = vand.u32 2147483647, %v1022
        %vm1922 = vcmp.eq.f32.partialorder %v1921, 8.507059e+37
        %v1923 = vand.u32 %v1022, 2147483648
        %v1924 = vor.u32 1.1754944e-38, %v1923
        %v1925 = vsel %vm1922, %v1924, %v1920
        %v1926 = vmul.f32 1.0, %v1925
        %v1927 = vrcp.pop %v1023
        %v1928 = vmul.f32 %v1023, %v1927
        %v1929 = vsub.f32 1.0, %v1928
        %v1930 = vmul.f32 %v1927, %v1929
        %v1931 = vadd.f32 %v1927, %v1930
        %vm1932 = vweird.f32 %v1023
        %vm1933 = vweird.f32 %v1927
        %vm1934 = vmor %vm1932, %vm1933
        %v1935 = vsel %vm1934, %v1927, %v1931
        %v1936 = vand.u32 2147483647, %v1023
        %vm1937 = vcmp.eq.f32.partialorder %v1936, 8.507059e+37
        %v1938 = vand.u32 %v1023, 2147483648
        %v1939 = vor.u32 1.1754944e-38, %v1938
        %v1940 = vsel %vm1937, %v1939, %v1935
        %v1941 = vmul.f32 1.0, %v1940
        %v1942 = vrcp.pop %v1024
        %v1943 = vmul.f32 %v1024, %v1942
        %v1944 = vsub.f32 1.0, %v1943
        %v1945 = vmul.f32 %v1942, %v1944
        %v1946 = vadd.f32 %v1942, %v1945
        %vm1947 = vweird.f32 %v1024
        %vm1948 = vweird.f32 %v1942
        %vm1949 = vmor %vm1947, %vm1948
        %v1950 = vsel %vm1949, %v1942, %v1946
        %v1951 = vand.u32 2147483647, %v1024
        %vm1952 = vcmp.eq.f32.partialorder %v1951, 8.507059e+37
        %v1953 = vand.u32 %v1024, 2147483648
        %v1954 = vor.u32 1.1754944e-38, %v1953
        %v1955 = vsel %vm1952, %v1954, %v1950
        %v1956 = vmul.f32 1.0, %v1955
        %v1957 = vrcp.pop %v1025
        %v1958 = vmul.f32 %v1025, %v1957
        %v1959 = vsub.f32 1.0, %v1958
        %v1960 = vmul.f32 %v1957, %v1959
        %v1961 = vadd.f32 %v1957, %v1960
        %vm1962 = vweird.f32 %v1025
        %vm1963 = vweird.f32 %v1957
        %vm1964 = vmor %vm1962, %vm1963
        %v1965 = vsel %vm1964, %v1957, %v1961
        %v1966 = vand.u32 2147483647, %v1025
        %vm1967 = vcmp.eq.f32.partialorder %v1966, 8.507059e+37
        %v1968 = vand.u32 %v1025, 2147483648
        %v1969 = vor.u32 1.1754944e-38, %v1968
        %v1970 = vsel %vm1967, %v1969, %v1965
        %v1971 = vmul.f32 1.0, %v1970
        %v1972 = vrcp.pop %v1026
        %v1973 = vmul.f32 %v1026, %v1972
        %v1974 = vsub.f32 1.0, %v1973
        %v1975 = vmul.f32 %v1972, %v1974
        %v1976 = vadd.f32 %v1972, %v1975
        %vm1977 = vweird.f32 %v1026
        %vm1978 = vweird.f32 %v1972
        %vm1979 = vmor %vm1977, %vm1978
        %v1980 = vsel %vm1979, %v1972, %v1976
        %v1981 = vand.u32 2147483647, %v1026
        %vm1982 = vcmp.eq.f32.partialorder %v1981, 8.507059e+37
        %v1983 = vand.u32 %v1026, 2147483648
        %v1984 = vor.u32 1.1754944e-38, %v1983
        %v1985 = vsel %vm1982, %v1984, %v1980
        %v1986 = vmul.f32 1.0, %v1985
        %v1987 = vld [vmem:[%s3] sm:$0xff]
        %v1988 = vld [vmem:[%s3 + $0x8] sm:$0xff]
        %v1989 = vld [vmem:[%s3 + $0x10] sm:$0xff]
        %v1990 = vld [vmem:[%s3 + $0x18] sm:$0xff]
        %v1991 = vld [vmem:[%s3 + $0x20] sm:$0xff]
        %v1992 = vld [vmem:[%s3 + $0x28] sm:$0xff]
        %v1993 = vld [vmem:[%s3 + $0x30] sm:$0xff]
        %v1994 = vld [vmem:[%s3 + $0x38] sm:$0xff]
        %v1995 = vld [vmem:[%s3 + $0x40] sm:$0xff]
        %v1996 = vld [vmem:[%s3 + $0x48] sm:$0xff]
        %v1997 = vld [vmem:[%s3 + $0x50] sm:$0xff]
        %v1998 = vld [vmem:[%s3 + $0x58] sm:$0xff]
        %v1999 = vld [vmem:[%s3 + $0x60] sm:$0xff]
        %v2000 = vld [vmem:[%s3 + $0x68] sm:$0xff]
        %v2001 = vld [vmem:[%s3 + $0x70] sm:$0xff]
        %v2002 = vld [vmem:[%s3 + $0x78] sm:$0xff]
        %v2003 = vld [vmem:[%s4] sm:$0xff]
        %v2004 = vld [vmem:[%s4 + $0x8] sm:$0xff]
        %v2005 = vld [vmem:[%s4 + $0x10] sm:$0xff]
        %v2006 = vld [vmem:[%s4 + $0x18] sm:$0xff]
        %v2007 = vld [vmem:[%s4 + $0x20] sm:$0xff]
        %v2008 = vld [vmem:[%s4 + $0x28] sm:$0xff]
        %v2009 = vld [vmem:[%s4 + $0x30] sm:$0xff]
        %v2010 = vld [vmem:[%s4 + $0x38] sm:$0xff]
        %v2011 = vld [vmem:[%s4 + $0x40] sm:$0xff]
        %v2012 = vld [vmem:[%s4 + $0x48] sm:$0xff]
        %v2013 = vld [vmem:[%s4 + $0x50] sm:$0xff]
        %v2014 = vld [vmem:[%s4 + $0x58] sm:$0xff]
        %v2015 = vld [vmem:[%s4 + $0x60] sm:$0xff]
        %v2016 = vld [vmem:[%s4 + $0x68] sm:$0xff]
        %v2017 = vld [vmem:[%s4 + $0x70] sm:$0xff]
        %v2018 = vld [vmem:[%s4 + $0x78] sm:$0xff]
        %2020 = vset.pattern.permute.xlu0 0
        %2021 = vperm.xlu0 %2020, %v2003
        %v2022 = vpop.permute.xlu0 %2021
        %2025 = vset.pattern.permute.xlu0 0
        %2026 = vperm.xlu0 %2025, %v2004
        %v2027 = vpop.permute.xlu0 %2026
        %2030 = vset.pattern.permute.xlu0 0
        %2031 = vperm.xlu0 %2030, %v2005
        %v2032 = vpop.permute.xlu0 %2031
        %2035 = vset.pattern.permute.xlu0 0
        %2036 = vperm.xlu0 %2035, %v2006
        %v2037 = vpop.permute.xlu0 %2036
        %2040 = vset.pattern.permute.xlu0 0
        %2041 = vperm.xlu0 %2040, %v2007
        %v2042 = vpop.permute.xlu0 %2041
        %2045 = vset.pattern.permute.xlu0 0
        %2046 = vperm.xlu0 %2045, %v2008
        %v2047 = vpop.permute.xlu0 %2046
        %2050 = vset.pattern.permute.xlu0 0
        %2051 = vperm.xlu0 %2050, %v2009
        %v2052 = vpop.permute.xlu0 %2051
        %2055 = vset.pattern.permute.xlu0 0
        %2056 = vperm.xlu0 %2055, %v2010
        %v2057 = vpop.permute.xlu0 %2056
        %2060 = vset.pattern.permute.xlu0 0
        %2061 = vperm.xlu0 %2060, %v2011
        %v2062 = vpop.permute.xlu0 %2061
        %2065 = vset.pattern.permute.xlu0 0
        %2066 = vperm.xlu0 %2065, %v2012
        %v2067 = vpop.permute.xlu0 %2066
        %2070 = vset.pattern.permute.xlu0 0
        %2071 = vperm.xlu0 %2070, %v2013
        %v2072 = vpop.permute.xlu0 %2071
        %2075 = vset.pattern.permute.xlu0 0
        %2076 = vperm.xlu0 %2075, %v2014
        %v2077 = vpop.permute.xlu0 %2076
        %2080 = vset.pattern.permute.xlu0 0
        %2081 = vperm.xlu0 %2080, %v2015
        %v2082 = vpop.permute.xlu0 %2081
        %2085 = vset.pattern.permute.xlu0 0
        %2086 = vperm.xlu0 %2085, %v2016
        %v2087 = vpop.permute.xlu0 %2086
        %2090 = vset.pattern.permute.xlu0 0
        %2091 = vperm.xlu0 %2090, %v2017
        %v2092 = vpop.permute.xlu0 %2091
        %2095 = vset.pattern.permute.xlu0 0
        %2096 = vperm.xlu0 %2095, %v2018
        %v2097 = vpop.permute.xlu0 %2096
        %2099 = vmatpush.msra.mxu0 %v1941
        %2100 = vmatpush.msra.mxu0 %v1881
        %2101 = vmatpush.msra.mxu0 %v1821
        %2102 = vmatpush.msra.mxu0 %v1761
        %2103 = vmatpush.msra.mxu0 %v1701
        %2104 = vmatpush.msra.mxu0 %v1641
        %2105 = vmatpush.msra.mxu0 %v1581
        %2106 = vmatpush.msra.mxu0 %v1521
        %2107 = vmatpush.msra.mxu0 %v1461
        %2108 = vmatpush.msra.mxu0 %v1401
        %2109 = vmatpush.msra.mxu0 %v1341
        %2110 = vmatpush.msra.mxu0 %v1281
        %2111 = vmatpush.msra.mxu0 %v1221
        %2112 = vmatpush.msra.mxu0 %v1161
        %2113 = vmatpush.msra.mxu0 %v1101
        %2114 = vmatpush.msra.mxu0 %v1041
        %2115 = vmatmul.f32.gmra.mxu0 %v1987
        %v2116 = vpop.f32.mrf.mxu0
        %v2117 = vadd.f32 %v2022, %v2116
        %2118 = vmatmul.f32.gmra.mxu0 %v1988
        %v2119 = vpop.f32.mrf.mxu0
        %v2120 = vadd.f32 %v2027, %v2119
        %2121 = vmatmul.f32.gmra.mxu0 %v1989
        %v2122 = vpop.f32.mrf.mxu0
        %v2123 = vadd.f32 %v2032, %v2122
        %2124 = vmatmul.f32.gmra.mxu0 %v1990
        %v2125 = vpop.f32.mrf.mxu0
        %v2126 = vadd.f32 %v2037, %v2125
        %2127 = vmatmul.f32.gmra.mxu0 %v1991
        %v2128 = vpop.f32.mrf.mxu0
        %v2129 = vadd.f32 %v2042, %v2128
        %2130 = vmatmul.f32.gmra.mxu0 %v1992
        %v2131 = vpop.f32.mrf.mxu0
        %v2132 = vadd.f32 %v2047, %v2131
        %2133 = vmatmul.f32.gmra.mxu0 %v1993
        %v2134 = vpop.f32.mrf.mxu0
        %v2135 = vadd.f32 %v2052, %v2134
        %2136 = vmatmul.f32.gmra.mxu0 %v1994
        %v2137 = vpop.f32.mrf.mxu0
        %v2138 = vadd.f32 %v2057, %v2137
        %2139 = vmatmul.f32.gmra.mxu0 %v1995
        %v2140 = vpop.f32.mrf.mxu0
        %v2141 = vadd.f32 %v2062, %v2140
        %2142 = vmatmul.f32.gmra.mxu0 %v1996
        %v2143 = vpop.f32.mrf.mxu0
        %v2144 = vadd.f32 %v2067, %v2143
        %2145 = vmatmul.f32.gmra.mxu0 %v1997
        %v2146 = vpop.f32.mrf.mxu0
        %v2147 = vadd.f32 %v2072, %v2146
        %2148 = vmatmul.f32.gmra.mxu0 %v1998
        %v2149 = vpop.f32.mrf.mxu0
        %v2150 = vadd.f32 %v2077, %v2149
        %2151 = vmatmul.f32.gmra.mxu0 %v1999
        %v2152 = vpop.f32.mrf.mxu0
        %v2153 = vadd.f32 %v2082, %v2152
        %2154 = vmatmul.f32.gmra.mxu0 %v2000
        %v2155 = vpop.f32.mrf.mxu0
        %v2156 = vadd.f32 %v2087, %v2155
        %2157 = vmatmul.f32.gmra.mxu0 %v2001
        %v2158 = vpop.f32.mrf.mxu0
        %v2159 = vadd.f32 %v2092, %v2158
        %2160 = vmatmul.f32.gmra.mxu0 %v2002
        %v2161 = vpop.f32.mrf.mxu0
        %v2162 = vadd.f32 %v2097, %v2161
        %2163 = vdwg.mxu0
        %2164 = vmatpush.msra.mxu0 %v1956
        %2165 = vmatpush.msra.mxu0 %v1896
        %2166 = vmatpush.msra.mxu0 %v1836
        %2167 = vmatpush.msra.mxu0 %v1776
        %2168 = vmatpush.msra.mxu0 %v1716
        %2169 = vmatpush.msra.mxu0 %v1656
        %2170 = vmatpush.msra.mxu0 %v1596
        %2171 = vmatpush.msra.mxu0 %v1536
        %2172 = vmatpush.msra.mxu0 %v1476
        %2173 = vmatpush.msra.mxu0 %v1416
        %2174 = vmatpush.msra.mxu0 %v1356
        %2175 = vmatpush.msra.mxu0 %v1296
        %2176 = vmatpush.msra.mxu0 %v1236
        %2177 = vmatpush.msra.mxu0 %v1176
        %2178 = vmatpush.msra.mxu0 %v1116
        %2179 = vmatpush.msra.mxu0 %v1056
        %2180 = vmatmul.f32.gmra.mxu0 %v1987
        %v2181 = vpop.f32.mrf.mxu0
        %v2182 = vadd.f32 %v2022, %v2181
        %2183 = vmatmul.f32.gmra.mxu0 %v1988
        %v2184 = vpop.f32.mrf.mxu0
        %v2185 = vadd.f32 %v2027, %v2184
        %2186 = vmatmul.f32.gmra.mxu0 %v1989
        %v2187 = vpop.f32.mrf.mxu0
        %v2188 = vadd.f32 %v2032, %v2187
        %2189 = vmatmul.f32.gmra.mxu0 %v1990
        %v2190 = vpop.f32.mrf.mxu0
        %v2191 = vadd.f32 %v2037, %v2190
        %2192 = vmatmul.f32.gmra.mxu0 %v1991
        %v2193 = vpop.f32.mrf.mxu0
        %v2194 = vadd.f32 %v2042, %v2193
        %2195 = vmatmul.f32.gmra.mxu0 %v1992
        %v2196 = vpop.f32.mrf.mxu0
        %v2197 = vadd.f32 %v2047, %v2196
        %2198 = vmatmul.f32.gmra.mxu0 %v1993
        %v2199 = vpop.f32.mrf.mxu0
        %v2200 = vadd.f32 %v2052, %v2199
        %2201 = vmatmul.f32.gmra.mxu0 %v1994
        %v2202 = vpop.f32.mrf.mxu0
        %v2203 = vadd.f32 %v2057, %v2202
        %2204 = vmatmul.f32.gmra.mxu0 %v1995
        %v2205 = vpop.f32.mrf.mxu0
        %v2206 = vadd.f32 %v2062, %v2205
        %2207 = vmatmul.f32.gmra.mxu0 %v1996
        %v2208 = vpop.f32.mrf.mxu0
        %v2209 = vadd.f32 %v2067, %v2208
        %2210 = vmatmul.f32.gmra.mxu0 %v1997
        %v2211 = vpop.f32.mrf.mxu0
        %v2212 = vadd.f32 %v2072, %v2211
        %2213 = vmatmul.f32.gmra.mxu0 %v1998
        %v2214 = vpop.f32.mrf.mxu0
        %v2215 = vadd.f32 %v2077, %v2214
        %2216 = vmatmul.f32.gmra.mxu0 %v1999
        %v2217 = vpop.f32.mrf.mxu0
        %v2218 = vadd.f32 %v2082, %v2217
        %2219 = vmatmul.f32.gmra.mxu0 %v2000
        %v2220 = vpop.f32.mrf.mxu0
        %v2221 = vadd.f32 %v2087, %v2220
        %2222 = vmatmul.f32.gmra.mxu0 %v2001
        %v2223 = vpop.f32.mrf.mxu0
        %v2224 = vadd.f32 %v2092, %v2223
        %2225 = vmatmul.f32.gmra.mxu0 %v2002
        %v2226 = vpop.f32.mrf.mxu0
        %v2227 = vadd.f32 %v2097, %v2226
        %2228 = vdwg.mxu0
        %2229 = vmatpush.msra.mxu0 %v1971
        %2230 = vmatpush.msra.mxu0 %v1911
        %2231 = vmatpush.msra.mxu0 %v1851
        %2232 = vmatpush.msra.mxu0 %v1791
        %2233 = vmatpush.msra.mxu0 %v1731
        %2234 = vmatpush.msra.mxu0 %v1671
        %2235 = vmatpush.msra.mxu0 %v1611
        %2236 = vmatpush.msra.mxu0 %v1551
        %2237 = vmatpush.msra.mxu0 %v1491
        %2238 = vmatpush.msra.mxu0 %v1431
        %2239 = vmatpush.msra.mxu0 %v1371
        %2240 = vmatpush.msra.mxu0 %v1311
        %2241 = vmatpush.msra.mxu0 %v1251
        %2242 = vmatpush.msra.mxu0 %v1191
        %2243 = vmatpush.msra.mxu0 %v1131
        %2244 = vmatpush.msra.mxu0 %v1071
        %2245 = vmatmul.f32.gmra.mxu0 %v1987
        %v2246 = vpop.f32.mrf.mxu0
        %v2247 = vadd.f32 %v2022, %v2246
        %2248 = vmatmul.f32.gmra.mxu0 %v1988
        %v2249 = vpop.f32.mrf.mxu0
        %v2250 = vadd.f32 %v2027, %v2249
        %2251 = vmatmul.f32.gmra.mxu0 %v1989
        %v2252 = vpop.f32.mrf.mxu0
        %v2253 = vadd.f32 %v2032, %v2252
        %2254 = vmatmul.f32.gmra.mxu0 %v1990
        %v2255 = vpop.f32.mrf.mxu0
        %v2256 = vadd.f32 %v2037, %v2255
        %2257 = vmatmul.f32.gmra.mxu0 %v1991
        %v2258 = vpop.f32.mrf.mxu0
        %v2259 = vadd.f32 %v2042, %v2258
        %2260 = vmatmul.f32.gmra.mxu0 %v1992
        %v2261 = vpop.f32.mrf.mxu0
        %v2262 = vadd.f32 %v2047, %v2261
        %2263 = vmatmul.f32.gmra.mxu0 %v1993
        %v2264 = vpop.f32.mrf.mxu0
        %v2265 = vadd.f32 %v2052, %v2264
        %2266 = vmatmul.f32.gmra.mxu0 %v1994
        %v2267 = vpop.f32.mrf.mxu0
        %v2268 = vadd.f32 %v2057, %v2267
        %2269 = vmatmul.f32.gmra.mxu0 %v1995
        %v2270 = vpop.f32.mrf.mxu0
        %v2271 = vadd.f32 %v2062, %v2270
        %2272 = vmatmul.f32.gmra.mxu0 %v1996
        %v2273 = vpop.f32.mrf.mxu0
        %v2274 = vadd.f32 %v2067, %v2273
        %2275 = vmatmul.f32.gmra.mxu0 %v1997
        %v2276 = vpop.f32.mrf.mxu0
        %v2277 = vadd.f32 %v2072, %v2276
        %2278 = vmatmul.f32.gmra.mxu0 %v1998
        %v2279 = vpop.f32.mrf.mxu0
        %v2280 = vadd.f32 %v2077, %v2279
        %2281 = vmatmul.f32.gmra.mxu0 %v1999
        %v2282 = vpop.f32.mrf.mxu0
        %v2283 = vadd.f32 %v2082, %v2282
        %2284 = vmatmul.f32.gmra.mxu0 %v2000
        %v2285 = vpop.f32.mrf.mxu0
        %v2286 = vadd.f32 %v2087, %v2285
        %2287 = vmatmul.f32.gmra.mxu0 %v2001
        %v2288 = vpop.f32.mrf.mxu0
        %v2289 = vadd.f32 %v2092, %v2288
        %2290 = vmatmul.f32.gmra.mxu0 %v2002
        %v2291 = vpop.f32.mrf.mxu0
        %v2292 = vadd.f32 %v2097, %v2291
        %2293 = vdwg.mxu0
        %2294 = vmatpush.msra.mxu0 %v1986
        %2295 = vmatpush.msra.mxu0 %v1926
        %2296 = vmatpush.msra.mxu0 %v1866
        %2297 = vmatpush.msra.mxu0 %v1806
        %2298 = vmatpush.msra.mxu0 %v1746
        %2299 = vmatpush.msra.mxu0 %v1686
        %2300 = vmatpush.msra.mxu0 %v1626
        %2301 = vmatpush.msra.mxu0 %v1566
        %2302 = vmatpush.msra.mxu0 %v1506
        %2303 = vmatpush.msra.mxu0 %v1446
        %2304 = vmatpush.msra.mxu0 %v1386
        %2305 = vmatpush.msra.mxu0 %v1326
        %2306 = vmatpush.msra.mxu0 %v1266
        %2307 = vmatpush.msra.mxu0 %v1206
        %2308 = vmatpush.msra.mxu0 %v1146
        %2309 = vmatpush.msra.mxu0 %v1086
        %2310 = vmatmul.f32.gmra.mxu0 %v1987
        %v2311 = vpop.f32.mrf.mxu0
        %v2312 = vadd.f32 %v2022, %v2311
        %2313 = vmatmul.f32.gmra.mxu0 %v1988
        %v2314 = vpop.f32.mrf.mxu0
        %v2315 = vadd.f32 %v2027, %v2314
        %2316 = vmatmul.f32.gmra.mxu0 %v1989
        %v2317 = vpop.f32.mrf.mxu0
        %v2318 = vadd.f32 %v2032, %v2317
        %2319 = vmatmul.f32.gmra.mxu0 %v1990
        %v2320 = vpop.f32.mrf.mxu0
        %v2321 = vadd.f32 %v2037, %v2320
        %2322 = vmatmul.f32.gmra.mxu0 %v1991
        %v2323 = vpop.f32.mrf.mxu0
        %v2324 = vadd.f32 %v2042, %v2323
        %2325 = vmatmul.f32.gmra.mxu0 %v1992
        %v2326 = vpop.f32.mrf.mxu0
        %v2327 = vadd.f32 %v2047, %v2326
        %2328 = vmatmul.f32.gmra.mxu0 %v1993
        %v2329 = vpop.f32.mrf.mxu0
        %v2330 = vadd.f32 %v2052, %v2329
        %2331 = vmatmul.f32.gmra.mxu0 %v1994
        %v2332 = vpop.f32.mrf.mxu0
        %v2333 = vadd.f32 %v2057, %v2332
        %2334 = vmatmul.f32.gmra.mxu0 %v1995
        %v2335 = vpop.f32.mrf.mxu0
        %v2336 = vadd.f32 %v2062, %v2335
        %2337 = vmatmul.f32.gmra.mxu0 %v1996
        %v2338 = vpop.f32.mrf.mxu0
        %v2339 = vadd.f32 %v2067, %v2338
        %2340 = vmatmul.f32.gmra.mxu0 %v1997
        %v2341 = vpop.f32.mrf.mxu0
        %v2342 = vadd.f32 %v2072, %v2341
        %2343 = vmatmul.f32.gmra.mxu0 %v1998
        %v2344 = vpop.f32.mrf.mxu0
        %v2345 = vadd.f32 %v2077, %v2344
        %2346 = vmatmul.f32.gmra.mxu0 %v1999
        %v2347 = vpop.f32.mrf.mxu0
        %v2348 = vadd.f32 %v2082, %v2347
        %2349 = vmatmul.f32.gmra.mxu0 %v2000
        %v2350 = vpop.f32.mrf.mxu0
        %v2351 = vadd.f32 %v2087, %v2350
        %2352 = vmatmul.f32.gmra.mxu0 %v2001
        %v2353 = vpop.f32.mrf.mxu0
        %v2354 = vadd.f32 %v2092, %v2353
        %2355 = vmatmul.f32.gmra.mxu0 %v2002
        %v2356 = vpop.f32.mrf.mxu0
        %v2357 = vadd.f32 %v2097, %v2356
        %2358 = vdwg.mxu0
        %v2359 = vsub.f32 0.0, %v2117
        %v2360 = vsub.f32 0.0, %v2182
        %v2361 = vsub.f32 0.0, %v2247
        %v2362 = vsub.f32 0.0, %v2312
        %v2363 = vsub.f32 0.0, %v2120
        %v2364 = vsub.f32 0.0, %v2185
        %v2365 = vsub.f32 0.0, %v2250
        %v2366 = vsub.f32 0.0, %v2315
        %v2367 = vsub.f32 0.0, %v2123
        %v2368 = vsub.f32 0.0, %v2188
        %v2369 = vsub.f32 0.0, %v2253
        %v2370 = vsub.f32 0.0, %v2318
        %v2371 = vsub.f32 0.0, %v2126
        %v2372 = vsub.f32 0.0, %v2191
        %v2373 = vsub.f32 0.0, %v2256
        %v2374 = vsub.f32 0.0, %v2321
        %v2375 = vsub.f32 0.0, %v2129
        %v2376 = vsub.f32 0.0, %v2194
        %v2377 = vsub.f32 0.0, %v2259
        %v2378 = vsub.f32 0.0, %v2324
        %v2379 = vsub.f32 0.0, %v2132
        %v2380 = vsub.f32 0.0, %v2197
        %v2381 = vsub.f32 0.0, %v2262
        %v2382 = vsub.f32 0.0, %v2327
        %v2383 = vsub.f32 0.0, %v2135
        %v2384 = vsub.f32 0.0, %v2200
        %v2385 = vsub.f32 0.0, %v2265
        %v2386 = vsub.f32 0.0, %v2330
        %v2387 = vsub.f32 0.0, %v2138
        %v2388 = vsub.f32 0.0, %v2203
        %v2389 = vsub.f32 0.0, %v2268
        %v2390 = vsub.f32 0.0, %v2333
        %v2391 = vsub.f32 0.0, %v2141
        %v2392 = vsub.f32 0.0, %v2206
        %v2393 = vsub.f32 0.0, %v2271
        %v2394 = vsub.f32 0.0, %v2336
        %v2395 = vsub.f32 0.0, %v2144
        %v2396 = vsub.f32 0.0, %v2209
        %v2397 = vsub.f32 0.0, %v2274
        %v2398 = vsub.f32 0.0, %v2339
        %v2399 = vsub.f32 0.0, %v2147
        %v2400 = vsub.f32 0.0, %v2212
        %v2401 = vsub.f32 0.0, %v2277
        %v2402 = vsub.f32 0.0, %v2342
        %v2403 = vsub.f32 0.0, %v2150
        %v2404 = vsub.f32 0.0, %v2215
        %v2405 = vsub.f32 0.0, %v2280
        %v2406 = vsub.f32 0.0, %v2345
        %v2407 = vsub.f32 0.0, %v2153
        %v2408 = vsub.f32 0.0, %v2218
        %v2409 = vsub.f32 0.0, %v2283
        %v2410 = vsub.f32 0.0, %v2348
        %v2411 = vsub.f32 0.0, %v2156
        %v2412 = vsub.f32 0.0, %v2221
        %v2413 = vsub.f32 0.0, %v2286
        %v2414 = vsub.f32 0.0, %v2351
        %v2415 = vsub.f32 0.0, %v2159
        %v2416 = vsub.f32 0.0, %v2224
        %v2417 = vsub.f32 0.0, %v2289
        %v2418 = vsub.f32 0.0, %v2354
        %v2419 = vsub.f32 0.0, %v2162
        %v2420 = vsub.f32 0.0, %v2227
        %v2421 = vsub.f32 0.0, %v2292
        %v2422 = vsub.f32 0.0, %v2357
        %v2423 = vmul.f32 %v2359, 1.442695
        %v2424 = vpow.pop %v2423
        %v2425 = vmul.f32 %v2360, 1.442695
        %v2426 = vpow.pop %v2425
        %v2427 = vmul.f32 %v2361, 1.442695
        %v2428 = vpow.pop %v2427
        %v2429 = vmul.f32 %v2362, 1.442695
        %v2430 = vpow.pop %v2429
        %v2431 = vmul.f32 %v2363, 1.442695
        %v2432 = vpow.pop %v2431
        %v2433 = vmul.f32 %v2364, 1.442695
        %v2434 = vpow.pop %v2433
        %v2435 = vmul.f32 %v2365, 1.442695
        %v2436 = vpow.pop %v2435
        %v2437 = vmul.f32 %v2366, 1.442695
        %v2438 = vpow.pop %v2437
        %v2439 = vmul.f32 %v2367, 1.442695
        %v2440 = vpow.pop %v2439
        %v2441 = vmul.f32 %v2368, 1.442695
        %v2442 = vpow.pop %v2441
        %v2443 = vmul.f32 %v2369, 1.442695
        %v2444 = vpow.pop %v2443
        %v2445 = vmul.f32 %v2370, 1.442695
        %v2446 = vpow.pop %v2445
        %v2447 = vmul.f32 %v2371, 1.442695
        %v2448 = vpow.pop %v2447
        %v2449 = vmul.f32 %v2372, 1.442695
        %v2450 = vpow.pop %v2449
        %v2451 = vmul.f32 %v2373, 1.442695
        %v2452 = vpow.pop %v2451
        %v2453 = vmul.f32 %v2374, 1.442695
        %v2454 = vpow.pop %v2453
        %v2455 = vmul.f32 %v2375, 1.442695
        %v2456 = vpow.pop %v2455
        %v2457 = vmul.f32 %v2376, 1.442695
        %v2458 = vpow.pop %v2457
        %v2459 = vmul.f32 %v2377, 1.442695
        %v2460 = vpow.pop %v2459
        %v2461 = vmul.f32 %v2378, 1.442695
        %v2462 = vpow.pop %v2461
        %v2463 = vmul.f32 %v2379, 1.442695
        %v2464 = vpow.pop %v2463
        %v2465 = vmul.f32 %v2380, 1.442695
        %v2466 = vpow.pop %v2465
        %v2467 = vmul.f32 %v2381, 1.442695
        %v2468 = vpow.pop %v2467
        %v2469 = vmul.f32 %v2382, 1.442695
        %v2470 = vpow.pop %v2469
        %v2471 = vmul.f32 %v2383, 1.442695
        %v2472 = vpow.pop %v2471
        %v2473 = vmul.f32 %v2384, 1.442695
        %v2474 = vpow.pop %v2473
        %v2475 = vmul.f32 %v2385, 1.442695
        %v2476 = vpow.pop %v2475
        %v2477 = vmul.f32 %v2386, 1.442695
        %v2478 = vpow.pop %v2477
        %v2479 = vmul.f32 %v2387, 1.442695
        %v2480 = vpow.pop %v2479
        %v2481 = vmul.f32 %v2388, 1.442695
        %v2482 = vpow.pop %v2481
        %v2483 = vmul.f32 %v2389, 1.442695
        %v2484 = vpow.pop %v2483
        %v2485 = vmul.f32 %v2390, 1.442695
        %v2486 = vpow.pop %v2485
        %v2487 = vmul.f32 %v2391, 1.442695
        %v2488 = vpow.pop %v2487
        %v2489 = vmul.f32 %v2392, 1.442695
        %v2490 = vpow.pop %v2489
        %v2491 = vmul.f32 %v2393, 1.442695
        %v2492 = vpow.pop %v2491
        %v2493 = vmul.f32 %v2394, 1.442695
        %v2494 = vpow.pop %v2493
        %v2495 = vmul.f32 %v2395, 1.442695
        %v2496 = vpow.pop %v2495
        %v2497 = vmul.f32 %v2396, 1.442695
        %v2498 = vpow.pop %v2497
        %v2499 = vmul.f32 %v2397, 1.442695
        %v2500 = vpow.pop %v2499
        %v2501 = vmul.f32 %v2398, 1.442695
        %v2502 = vpow.pop %v2501
        %v2503 = vmul.f32 %v2399, 1.442695
        %v2504 = vpow.pop %v2503
        %v2505 = vmul.f32 %v2400, 1.442695
        %v2506 = vpow.pop %v2505
        %v2507 = vmul.f32 %v2401, 1.442695
        %v2508 = vpow.pop %v2507
        %v2509 = vmul.f32 %v2402, 1.442695
        %v2510 = vpow.pop %v2509
        %v2511 = vmul.f32 %v2403, 1.442695
        %v2512 = vpow.pop %v2511
        %v2513 = vmul.f32 %v2404, 1.442695
        %v2514 = vpow.pop %v2513
        %v2515 = vmul.f32 %v2405, 1.442695
        %v2516 = vpow.pop %v2515
        %v2517 = vmul.f32 %v2406, 1.442695
        %v2518 = vpow.pop %v2517
        %v2519 = vmul.f32 %v2407, 1.442695
        %v2520 = vpow.pop %v2519
        %v2521 = vmul.f32 %v2408, 1.442695
        %v2522 = vpow.pop %v2521
        %v2523 = vmul.f32 %v2409, 1.442695
        %v2524 = vpow.pop %v2523
        %v2525 = vmul.f32 %v2410, 1.442695
        %v2526 = vpow.pop %v2525
        %v2527 = vmul.f32 %v2411, 1.442695
        %v2528 = vpow.pop %v2527
        %v2529 = vmul.f32 %v2412, 1.442695
        %v2530 = vpow.pop %v2529
        %v2531 = vmul.f32 %v2413, 1.442695
        %v2532 = vpow.pop %v2531
        %v2533 = vmul.f32 %v2414, 1.442695
        %v2534 = vpow.pop %v2533
        %v2535 = vmul.f32 %v2415, 1.442695
        %v2536 = vpow.pop %v2535
        %v2537 = vmul.f32 %v2416, 1.442695
        %v2538 = vpow.pop %v2537
        %v2539 = vmul.f32 %v2417, 1.442695
        %v2540 = vpow.pop %v2539
        %v2541 = vmul.f32 %v2418, 1.442695
        %v2542 = vpow.pop %v2541
        %v2543 = vmul.f32 %v2419, 1.442695
        %v2544 = vpow.pop %v2543
        %v2545 = vmul.f32 %v2420, 1.442695
        %v2546 = vpow.pop %v2545
        %v2547 = vmul.f32 %v2421, 1.442695
        %v2548 = vpow.pop %v2547
        %v2549 = vmul.f32 %v2422, 1.442695
        %v2550 = vpow.pop %v2549
        %v2551 = vadd.f32 %v2424, 1.0
        %v2552 = vadd.f32 %v2426, 1.0
        %v2553 = vadd.f32 %v2428, 1.0
        %v2554 = vadd.f32 %v2430, 1.0
        %v2555 = vadd.f32 %v2432, 1.0
        %v2556 = vadd.f32 %v2434, 1.0
        %v2557 = vadd.f32 %v2436, 1.0
        %v2558 = vadd.f32 %v2438, 1.0
        %v2559 = vadd.f32 %v2440, 1.0
        %v2560 = vadd.f32 %v2442, 1.0
        %v2561 = vadd.f32 %v2444, 1.0
        %v2562 = vadd.f32 %v2446, 1.0
        %v2563 = vadd.f32 %v2448, 1.0
        %v2564 = vadd.f32 %v2450, 1.0
        %v2565 = vadd.f32 %v2452, 1.0
        %v2566 = vadd.f32 %v2454, 1.0
        %v2567 = vadd.f32 %v2456, 1.0
        %v2568 = vadd.f32 %v2458, 1.0
        %v2569 = vadd.f32 %v2460, 1.0
        %v2570 = vadd.f32 %v2462, 1.0
        %v2571 = vadd.f32 %v2464, 1.0
        %v2572 = vadd.f32 %v2466, 1.0
        %v2573 = vadd.f32 %v2468, 1.0
        %v2574 = vadd.f32 %v2470, 1.0
        %v2575 = vadd.f32 %v2472, 1.0
        %v2576 = vadd.f32 %v2474, 1.0
        %v2577 = vadd.f32 %v2476, 1.0
        %v2578 = vadd.f32 %v2478, 1.0
        %v2579 = vadd.f32 %v2480, 1.0
        %v2580 = vadd.f32 %v2482, 1.0
        %v2581 = vadd.f32 %v2484, 1.0
        %v2582 = vadd.f32 %v2486, 1.0
        %v2583 = vadd.f32 %v2488, 1.0
        %v2584 = vadd.f32 %v2490, 1.0
        %v2585 = vadd.f32 %v2492, 1.0
        %v2586 = vadd.f32 %v2494, 1.0
        %v2587 = vadd.f32 %v2496, 1.0
        %v2588 = vadd.f32 %v2498, 1.0
        %v2589 = vadd.f32 %v2500, 1.0
        %v2590 = vadd.f32 %v2502, 1.0
        %v2591 = vadd.f32 %v2504, 1.0
        %v2592 = vadd.f32 %v2506, 1.0
        %v2593 = vadd.f32 %v2508, 1.0
        %v2594 = vadd.f32 %v2510, 1.0
        %v2595 = vadd.f32 %v2512, 1.0
        %v2596 = vadd.f32 %v2514, 1.0
        %v2597 = vadd.f32 %v2516, 1.0
        %v2598 = vadd.f32 %v2518, 1.0
        %v2599 = vadd.f32 %v2520, 1.0
        %v2600 = vadd.f32 %v2522, 1.0
        %v2601 = vadd.f32 %v2524, 1.0
        %v2602 = vadd.f32 %v2526, 1.0
        %v2603 = vadd.f32 %v2528, 1.0
        %v2604 = vadd.f32 %v2530, 1.0
        %v2605 = vadd.f32 %v2532, 1.0
        %v2606 = vadd.f32 %v2534, 1.0
        %v2607 = vadd.f32 %v2536, 1.0
        %v2608 = vadd.f32 %v2538, 1.0
        %v2609 = vadd.f32 %v2540, 1.0
        %v2610 = vadd.f32 %v2542, 1.0
        %v2611 = vadd.f32 %v2544, 1.0
        %v2612 = vadd.f32 %v2546, 1.0
        %v2613 = vadd.f32 %v2548, 1.0
        %v2614 = vadd.f32 %v2550, 1.0
        %v2615 = vrcp.pop %v2551
        %v2616 = vmul.f32 %v2551, %v2615
        %v2617 = vsub.f32 1.0, %v2616
        %v2618 = vmul.f32 %v2615, %v2617
        %v2619 = vadd.f32 %v2615, %v2618
        %vm2620 = vweird.f32 %v2551
        %vm2621 = vweird.f32 %v2615
        %vm2622 = vmor %vm2620, %vm2621
        %v2623 = vsel %vm2622, %v2615, %v2619
        %v2624 = vand.u32 2147483647, %v2551
        %vm2625 = vcmp.eq.f32.partialorder %v2624, 8.507059e+37
        %v2626 = vand.u32 %v2551, 2147483648
        %v2627 = vor.u32 1.1754944e-38, %v2626
        %v2628 = vsel %vm2625, %v2627, %v2623
        %v2629 = vmul.f32 1.0, %v2628
        %v2630 = vrcp.pop %v2552
        %v2631 = vmul.f32 %v2552, %v2630
        %v2632 = vsub.f32 1.0, %v2631
        %v2633 = vmul.f32 %v2630, %v2632
        %v2634 = vadd.f32 %v2630, %v2633
        %vm2635 = vweird.f32 %v2552
        %vm2636 = vweird.f32 %v2630
        %vm2637 = vmor %vm2635, %vm2636
        %v2638 = vsel %vm2637, %v2630, %v2634
        %v2639 = vand.u32 2147483647, %v2552
        %vm2640 = vcmp.eq.f32.partialorder %v2639, 8.507059e+37
        %v2641 = vand.u32 %v2552, 2147483648
        %v2642 = vor.u32 1.1754944e-38, %v2641
        %v2643 = vsel %vm2640, %v2642, %v2638
        %v2644 = vmul.f32 1.0, %v2643
        %v2645 = vrcp.pop %v2553
        %v2646 = vmul.f32 %v2553, %v2645
        %v2647 = vsub.f32 1.0, %v2646
        %v2648 = vmul.f32 %v2645, %v2647
        %v2649 = vadd.f32 %v2645, %v2648
        %vm2650 = vweird.f32 %v2553
        %vm2651 = vweird.f32 %v2645
        %vm2652 = vmor %vm2650, %vm2651
        %v2653 = vsel %vm2652, %v2645, %v2649
        %v2654 = vand.u32 2147483647, %v2553
        %vm2655 = vcmp.eq.f32.partialorder %v2654, 8.507059e+37
        %v2656 = vand.u32 %v2553, 2147483648
        %v2657 = vor.u32 1.1754944e-38, %v2656
        %v2658 = vsel %vm2655, %v2657, %v2653
        %v2659 = vmul.f32 1.0, %v2658
        %v2660 = vrcp.pop %v2554
        %v2661 = vmul.f32 %v2554, %v2660
        %v2662 = vsub.f32 1.0, %v2661
        %v2663 = vmul.f32 %v2660, %v2662
        %v2664 = vadd.f32 %v2660, %v2663
        %vm2665 = vweird.f32 %v2554
        %vm2666 = vweird.f32 %v2660
        %vm2667 = vmor %vm2665, %vm2666
        %v2668 = vsel %vm2667, %v2660, %v2664
        %v2669 = vand.u32 2147483647, %v2554
        %vm2670 = vcmp.eq.f32.partialorder %v2669, 8.507059e+37
        %v2671 = vand.u32 %v2554, 2147483648
        %v2672 = vor.u32 1.1754944e-38, %v2671
        %v2673 = vsel %vm2670, %v2672, %v2668
        %v2674 = vmul.f32 1.0, %v2673
        %v2675 = vrcp.pop %v2555
        %v2676 = vmul.f32 %v2555, %v2675
        %v2677 = vsub.f32 1.0, %v2676
        %v2678 = vmul.f32 %v2675, %v2677
        %v2679 = vadd.f32 %v2675, %v2678
        %vm2680 = vweird.f32 %v2555
        %vm2681 = vweird.f32 %v2675
        %vm2682 = vmor %vm2680, %vm2681
        %v2683 = vsel %vm2682, %v2675, %v2679
        %v2684 = vand.u32 2147483647, %v2555
        %vm2685 = vcmp.eq.f32.partialorder %v2684, 8.507059e+37
        %v2686 = vand.u32 %v2555, 2147483648
        %v2687 = vor.u32 1.1754944e-38, %v2686
        %v2688 = vsel %vm2685, %v2687, %v2683
        %v2689 = vmul.f32 1.0, %v2688
        %v2690 = vrcp.pop %v2556
        %v2691 = vmul.f32 %v2556, %v2690
        %v2692 = vsub.f32 1.0, %v2691
        %v2693 = vmul.f32 %v2690, %v2692
        %v2694 = vadd.f32 %v2690, %v2693
        %vm2695 = vweird.f32 %v2556
        %vm2696 = vweird.f32 %v2690
        %vm2697 = vmor %vm2695, %vm2696
        %v2698 = vsel %vm2697, %v2690, %v2694
        %v2699 = vand.u32 2147483647, %v2556
        %vm2700 = vcmp.eq.f32.partialorder %v2699, 8.507059e+37
        %v2701 = vand.u32 %v2556, 2147483648
        %v2702 = vor.u32 1.1754944e-38, %v2701
        %v2703 = vsel %vm2700, %v2702, %v2698
        %v2704 = vmul.f32 1.0, %v2703
        %v2705 = vrcp.pop %v2557
        %v2706 = vmul.f32 %v2557, %v2705
        %v2707 = vsub.f32 1.0, %v2706
        %v2708 = vmul.f32 %v2705, %v2707
        %v2709 = vadd.f32 %v2705, %v2708
        %vm2710 = vweird.f32 %v2557
        %vm2711 = vweird.f32 %v2705
        %vm2712 = vmor %vm2710, %vm2711
        %v2713 = vsel %vm2712, %v2705, %v2709
        %v2714 = vand.u32 2147483647, %v2557
        %vm2715 = vcmp.eq.f32.partialorder %v2714, 8.507059e+37
        %v2716 = vand.u32 %v2557, 2147483648
        %v2717 = vor.u32 1.1754944e-38, %v2716
        %v2718 = vsel %vm2715, %v2717, %v2713
        %v2719 = vmul.f32 1.0, %v2718
        %v2720 = vrcp.pop %v2558
        %v2721 = vmul.f32 %v2558, %v2720
        %v2722 = vsub.f32 1.0, %v2721
        %v2723 = vmul.f32 %v2720, %v2722
        %v2724 = vadd.f32 %v2720, %v2723
        %vm2725 = vweird.f32 %v2558
        %vm2726 = vweird.f32 %v2720
        %vm2727 = vmor %vm2725, %vm2726
        %v2728 = vsel %vm2727, %v2720, %v2724
        %v2729 = vand.u32 2147483647, %v2558
        %vm2730 = vcmp.eq.f32.partialorder %v2729, 8.507059e+37
        %v2731 = vand.u32 %v2558, 2147483648
        %v2732 = vor.u32 1.1754944e-38, %v2731
        %v2733 = vsel %vm2730, %v2732, %v2728
        %v2734 = vmul.f32 1.0, %v2733
        %v2735 = vrcp.pop %v2559
        %v2736 = vmul.f32 %v2559, %v2735
        %v2737 = vsub.f32 1.0, %v2736
        %v2738 = vmul.f32 %v2735, %v2737
        %v2739 = vadd.f32 %v2735, %v2738
        %vm2740 = vweird.f32 %v2559
        %vm2741 = vweird.f32 %v2735
        %vm2742 = vmor %vm2740, %vm2741
        %v2743 = vsel %vm2742, %v2735, %v2739
        %v2744 = vand.u32 2147483647, %v2559
        %vm2745 = vcmp.eq.f32.partialorder %v2744, 8.507059e+37
        %v2746 = vand.u32 %v2559, 2147483648
        %v2747 = vor.u32 1.1754944e-38, %v2746
        %v2748 = vsel %vm2745, %v2747, %v2743
        %v2749 = vmul.f32 1.0, %v2748
        %v2750 = vrcp.pop %v2560
        %v2751 = vmul.f32 %v2560, %v2750
        %v2752 = vsub.f32 1.0, %v2751
        %v2753 = vmul.f32 %v2750, %v2752
        %v2754 = vadd.f32 %v2750, %v2753
        %vm2755 = vweird.f32 %v2560
        %vm2756 = vweird.f32 %v2750
        %vm2757 = vmor %vm2755, %vm2756
        %v2758 = vsel %vm2757, %v2750, %v2754
        %v2759 = vand.u32 2147483647, %v2560
        %vm2760 = vcmp.eq.f32.partialorder %v2759, 8.507059e+37
        %v2761 = vand.u32 %v2560, 2147483648
        %v2762 = vor.u32 1.1754944e-38, %v2761
        %v2763 = vsel %vm2760, %v2762, %v2758
        %v2764 = vmul.f32 1.0, %v2763
        %v2765 = vrcp.pop %v2561
        %v2766 = vmul.f32 %v2561, %v2765
        %v2767 = vsub.f32 1.0, %v2766
        %v2768 = vmul.f32 %v2765, %v2767
        %v2769 = vadd.f32 %v2765, %v2768
        %vm2770 = vweird.f32 %v2561
        %vm2771 = vweird.f32 %v2765
        %vm2772 = vmor %vm2770, %vm2771
        %v2773 = vsel %vm2772, %v2765, %v2769
        %v2774 = vand.u32 2147483647, %v2561
        %vm2775 = vcmp.eq.f32.partialorder %v2774, 8.507059e+37
        %v2776 = vand.u32 %v2561, 2147483648
        %v2777 = vor.u32 1.1754944e-38, %v2776
        %v2778 = vsel %vm2775, %v2777, %v2773
        %v2779 = vmul.f32 1.0, %v2778
        %v2780 = vrcp.pop %v2562
        %v2781 = vmul.f32 %v2562, %v2780
        %v2782 = vsub.f32 1.0, %v2781
        %v2783 = vmul.f32 %v2780, %v2782
        %v2784 = vadd.f32 %v2780, %v2783
        %vm2785 = vweird.f32 %v2562
        %vm2786 = vweird.f32 %v2780
        %vm2787 = vmor %vm2785, %vm2786
        %v2788 = vsel %vm2787, %v2780, %v2784
        %v2789 = vand.u32 2147483647, %v2562
        %vm2790 = vcmp.eq.f32.partialorder %v2789, 8.507059e+37
        %v2791 = vand.u32 %v2562, 2147483648
        %v2792 = vor.u32 1.1754944e-38, %v2791
        %v2793 = vsel %vm2790, %v2792, %v2788
        %v2794 = vmul.f32 1.0, %v2793
        %v2795 = vrcp.pop %v2563
        %v2796 = vmul.f32 %v2563, %v2795
        %v2797 = vsub.f32 1.0, %v2796
        %v2798 = vmul.f32 %v2795, %v2797
        %v2799 = vadd.f32 %v2795, %v2798
        %vm2800 = vweird.f32 %v2563
        %vm2801 = vweird.f32 %v2795
        %vm2802 = vmor %vm2800, %vm2801
        %v2803 = vsel %vm2802, %v2795, %v2799
        %v2804 = vand.u32 2147483647, %v2563
        %vm2805 = vcmp.eq.f32.partialorder %v2804, 8.507059e+37
        %v2806 = vand.u32 %v2563, 2147483648
        %v2807 = vor.u32 1.1754944e-38, %v2806
        %v2808 = vsel %vm2805, %v2807, %v2803
        %v2809 = vmul.f32 1.0, %v2808
        %v2810 = vrcp.pop %v2564
        %v2811 = vmul.f32 %v2564, %v2810
        %v2812 = vsub.f32 1.0, %v2811
        %v2813 = vmul.f32 %v2810, %v2812
        %v2814 = vadd.f32 %v2810, %v2813
        %vm2815 = vweird.f32 %v2564
        %vm2816 = vweird.f32 %v2810
        %vm2817 = vmor %vm2815, %vm2816
        %v2818 = vsel %vm2817, %v2810, %v2814
        %v2819 = vand.u32 2147483647, %v2564
        %vm2820 = vcmp.eq.f32.partialorder %v2819, 8.507059e+37
        %v2821 = vand.u32 %v2564, 2147483648
        %v2822 = vor.u32 1.1754944e-38, %v2821
        %v2823 = vsel %vm2820, %v2822, %v2818
        %v2824 = vmul.f32 1.0, %v2823
        %v2825 = vrcp.pop %v2565
        %v2826 = vmul.f32 %v2565, %v2825
        %v2827 = vsub.f32 1.0, %v2826
        %v2828 = vmul.f32 %v2825, %v2827
        %v2829 = vadd.f32 %v2825, %v2828
        %vm2830 = vweird.f32 %v2565
        %vm2831 = vweird.f32 %v2825
        %vm2832 = vmor %vm2830, %vm2831
        %v2833 = vsel %vm2832, %v2825, %v2829
        %v2834 = vand.u32 2147483647, %v2565
        %vm2835 = vcmp.eq.f32.partialorder %v2834, 8.507059e+37
        %v2836 = vand.u32 %v2565, 2147483648
        %v2837 = vor.u32 1.1754944e-38, %v2836
        %v2838 = vsel %vm2835, %v2837, %v2833
        %v2839 = vmul.f32 1.0, %v2838
        %v2840 = vrcp.pop %v2566
        %v2841 = vmul.f32 %v2566, %v2840
        %v2842 = vsub.f32 1.0, %v2841
        %v2843 = vmul.f32 %v2840, %v2842
        %v2844 = vadd.f32 %v2840, %v2843
        %vm2845 = vweird.f32 %v2566
        %vm2846 = vweird.f32 %v2840
        %vm2847 = vmor %vm2845, %vm2846
        %v2848 = vsel %vm2847, %v2840, %v2844
        %v2849 = vand.u32 2147483647, %v2566
        %vm2850 = vcmp.eq.f32.partialorder %v2849, 8.507059e+37
        %v2851 = vand.u32 %v2566, 2147483648
        %v2852 = vor.u32 1.1754944e-38, %v2851
        %v2853 = vsel %vm2850, %v2852, %v2848
        %v2854 = vmul.f32 1.0, %v2853
        %v2855 = vrcp.pop %v2567
        %v2856 = vmul.f32 %v2567, %v2855
        %v2857 = vsub.f32 1.0, %v2856
        %v2858 = vmul.f32 %v2855, %v2857
        %v2859 = vadd.f32 %v2855, %v2858
        %vm2860 = vweird.f32 %v2567
        %vm2861 = vweird.f32 %v2855
        %vm2862 = vmor %vm2860, %vm2861
        %v2863 = vsel %vm2862, %v2855, %v2859
        %v2864 = vand.u32 2147483647, %v2567
        %vm2865 = vcmp.eq.f32.partialorder %v2864, 8.507059e+37
        %v2866 = vand.u32 %v2567, 2147483648
        %v2867 = vor.u32 1.1754944e-38, %v2866
        %v2868 = vsel %vm2865, %v2867, %v2863
        %v2869 = vmul.f32 1.0, %v2868
        %v2870 = vrcp.pop %v2568
        %v2871 = vmul.f32 %v2568, %v2870
        %v2872 = vsub.f32 1.0, %v2871
        %v2873 = vmul.f32 %v2870, %v2872
        %v2874 = vadd.f32 %v2870, %v2873
        %vm2875 = vweird.f32 %v2568
        %vm2876 = vweird.f32 %v2870
        %vm2877 = vmor %vm2875, %vm2876
        %v2878 = vsel %vm2877, %v2870, %v2874
        %v2879 = vand.u32 2147483647, %v2568
        %vm2880 = vcmp.eq.f32.partialorder %v2879, 8.507059e+37
        %v2881 = vand.u32 %v2568, 2147483648
        %v2882 = vor.u32 1.1754944e-38, %v2881
        %v2883 = vsel %vm2880, %v2882, %v2878
        %v2884 = vmul.f32 1.0, %v2883
        %v2885 = vrcp.pop %v2569
        %v2886 = vmul.f32 %v2569, %v2885
        %v2887 = vsub.f32 1.0, %v2886
        %v2888 = vmul.f32 %v2885, %v2887
        %v2889 = vadd.f32 %v2885, %v2888
        %vm2890 = vweird.f32 %v2569
        %vm2891 = vweird.f32 %v2885
        %vm2892 = vmor %vm2890, %vm2891
        %v2893 = vsel %vm2892, %v2885, %v2889
        %v2894 = vand.u32 2147483647, %v2569
        %vm2895 = vcmp.eq.f32.partialorder %v2894, 8.507059e+37
        %v2896 = vand.u32 %v2569, 2147483648
        %v2897 = vor.u32 1.1754944e-38, %v2896
        %v2898 = vsel %vm2895, %v2897, %v2893
        %v2899 = vmul.f32 1.0, %v2898
        %v2900 = vrcp.pop %v2570
        %v2901 = vmul.f32 %v2570, %v2900
        %v2902 = vsub.f32 1.0, %v2901
        %v2903 = vmul.f32 %v2900, %v2902
        %v2904 = vadd.f32 %v2900, %v2903
        %vm2905 = vweird.f32 %v2570
        %vm2906 = vweird.f32 %v2900
        %vm2907 = vmor %vm2905, %vm2906
        %v2908 = vsel %vm2907, %v2900, %v2904
        %v2909 = vand.u32 2147483647, %v2570
        %vm2910 = vcmp.eq.f32.partialorder %v2909, 8.507059e+37
        %v2911 = vand.u32 %v2570, 2147483648
        %v2912 = vor.u32 1.1754944e-38, %v2911
        %v2913 = vsel %vm2910, %v2912, %v2908
        %v2914 = vmul.f32 1.0, %v2913
        %v2915 = vrcp.pop %v2571
        %v2916 = vmul.f32 %v2571, %v2915
        %v2917 = vsub.f32 1.0, %v2916
        %v2918 = vmul.f32 %v2915, %v2917
        %v2919 = vadd.f32 %v2915, %v2918
        %vm2920 = vweird.f32 %v2571
        %vm2921 = vweird.f32 %v2915
        %vm2922 = vmor %vm2920, %vm2921
        %v2923 = vsel %vm2922, %v2915, %v2919
        %v2924 = vand.u32 2147483647, %v2571
        %vm2925 = vcmp.eq.f32.partialorder %v2924, 8.507059e+37
        %v2926 = vand.u32 %v2571, 2147483648
        %v2927 = vor.u32 1.1754944e-38, %v2926
        %v2928 = vsel %vm2925, %v2927, %v2923
        %v2929 = vmul.f32 1.0, %v2928
        %v2930 = vrcp.pop %v2572
        %v2931 = vmul.f32 %v2572, %v2930
        %v2932 = vsub.f32 1.0, %v2931
        %v2933 = vmul.f32 %v2930, %v2932
        %v2934 = vadd.f32 %v2930, %v2933
        %vm2935 = vweird.f32 %v2572
        %vm2936 = vweird.f32 %v2930
        %vm2937 = vmor %vm2935, %vm2936
        %v2938 = vsel %vm2937, %v2930, %v2934
        %v2939 = vand.u32 2147483647, %v2572
        %vm2940 = vcmp.eq.f32.partialorder %v2939, 8.507059e+37
        %v2941 = vand.u32 %v2572, 2147483648
        %v2942 = vor.u32 1.1754944e-38, %v2941
        %v2943 = vsel %vm2940, %v2942, %v2938
        %v2944 = vmul.f32 1.0, %v2943
        %v2945 = vrcp.pop %v2573
        %v2946 = vmul.f32 %v2573, %v2945
        %v2947 = vsub.f32 1.0, %v2946
        %v2948 = vmul.f32 %v2945, %v2947
        %v2949 = vadd.f32 %v2945, %v2948
        %vm2950 = vweird.f32 %v2573
        %vm2951 = vweird.f32 %v2945
        %vm2952 = vmor %vm2950, %vm2951
        %v2953 = vsel %vm2952, %v2945, %v2949
        %v2954 = vand.u32 2147483647, %v2573
        %vm2955 = vcmp.eq.f32.partialorder %v2954, 8.507059e+37
        %v2956 = vand.u32 %v2573, 2147483648
        %v2957 = vor.u32 1.1754944e-38, %v2956
        %v2958 = vsel %vm2955, %v2957, %v2953
        %v2959 = vmul.f32 1.0, %v2958
        %v2960 = vrcp.pop %v2574
        %v2961 = vmul.f32 %v2574, %v2960
        %v2962 = vsub.f32 1.0, %v2961
        %v2963 = vmul.f32 %v2960, %v2962
        %v2964 = vadd.f32 %v2960, %v2963
        %vm2965 = vweird.f32 %v2574
        %vm2966 = vweird.f32 %v2960
        %vm2967 = vmor %vm2965, %vm2966
        %v2968 = vsel %vm2967, %v2960, %v2964
        %v2969 = vand.u32 2147483647, %v2574
        %vm2970 = vcmp.eq.f32.partialorder %v2969, 8.507059e+37
        %v2971 = vand.u32 %v2574, 2147483648
        %v2972 = vor.u32 1.1754944e-38, %v2971
        %v2973 = vsel %vm2970, %v2972, %v2968
        %v2974 = vmul.f32 1.0, %v2973
        %v2975 = vrcp.pop %v2575
        %v2976 = vmul.f32 %v2575, %v2975
        %v2977 = vsub.f32 1.0, %v2976
        %v2978 = vmul.f32 %v2975, %v2977
        %v2979 = vadd.f32 %v2975, %v2978
        %vm2980 = vweird.f32 %v2575
        %vm2981 = vweird.f32 %v2975
        %vm2982 = vmor %vm2980, %vm2981
        %v2983 = vsel %vm2982, %v2975, %v2979
        %v2984 = vand.u32 2147483647, %v2575
        %vm2985 = vcmp.eq.f32.partialorder %v2984, 8.507059e+37
        %v2986 = vand.u32 %v2575, 2147483648
        %v2987 = vor.u32 1.1754944e-38, %v2986
        %v2988 = vsel %vm2985, %v2987, %v2983
        %v2989 = vmul.f32 1.0, %v2988
        %v2990 = vrcp.pop %v2576
        %v2991 = vmul.f32 %v2576, %v2990
        %v2992 = vsub.f32 1.0, %v2991
        %v2993 = vmul.f32 %v2990, %v2992
        %v2994 = vadd.f32 %v2990, %v2993
        %vm2995 = vweird.f32 %v2576
        %vm2996 = vweird.f32 %v2990
        %vm2997 = vmor %vm2995, %vm2996
        %v2998 = vsel %vm2997, %v2990, %v2994
        %v2999 = vand.u32 2147483647, %v2576
        %vm3000 = vcmp.eq.f32.partialorder %v2999, 8.507059e+37
        %v3001 = vand.u32 %v2576, 2147483648
        %v3002 = vor.u32 1.1754944e-38, %v3001
        %v3003 = vsel %vm3000, %v3002, %v2998
        %v3004 = vmul.f32 1.0, %v3003
        %v3005 = vrcp.pop %v2577
        %v3006 = vmul.f32 %v2577, %v3005
        %v3007 = vsub.f32 1.0, %v3006
        %v3008 = vmul.f32 %v3005, %v3007
        %v3009 = vadd.f32 %v3005, %v3008
        %vm3010 = vweird.f32 %v2577
        %vm3011 = vweird.f32 %v3005
        %vm3012 = vmor %vm3010, %vm3011
        %v3013 = vsel %vm3012, %v3005, %v3009
        %v3014 = vand.u32 2147483647, %v2577
        %vm3015 = vcmp.eq.f32.partialorder %v3014, 8.507059e+37
        %v3016 = vand.u32 %v2577, 2147483648
        %v3017 = vor.u32 1.1754944e-38, %v3016
        %v3018 = vsel %vm3015, %v3017, %v3013
        %v3019 = vmul.f32 1.0, %v3018
        %v3020 = vrcp.pop %v2578
        %v3021 = vmul.f32 %v2578, %v3020
        %v3022 = vsub.f32 1.0, %v3021
        %v3023 = vmul.f32 %v3020, %v3022
        %v3024 = vadd.f32 %v3020, %v3023
        %vm3025 = vweird.f32 %v2578
        %vm3026 = vweird.f32 %v3020
        %vm3027 = vmor %vm3025, %vm3026
        %v3028 = vsel %vm3027, %v3020, %v3024
        %v3029 = vand.u32 2147483647, %v2578
        %vm3030 = vcmp.eq.f32.partialorder %v3029, 8.507059e+37
        %v3031 = vand.u32 %v2578, 2147483648
        %v3032 = vor.u32 1.1754944e-38, %v3031
        %v3033 = vsel %vm3030, %v3032, %v3028
        %v3034 = vmul.f32 1.0, %v3033
        %v3035 = vrcp.pop %v2579
        %v3036 = vmul.f32 %v2579, %v3035
        %v3037 = vsub.f32 1.0, %v3036
        %v3038 = vmul.f32 %v3035, %v3037
        %v3039 = vadd.f32 %v3035, %v3038
        %vm3040 = vweird.f32 %v2579
        %vm3041 = vweird.f32 %v3035
        %vm3042 = vmor %vm3040, %vm3041
        %v3043 = vsel %vm3042, %v3035, %v3039
        %v3044 = vand.u32 2147483647, %v2579
        %vm3045 = vcmp.eq.f32.partialorder %v3044, 8.507059e+37
        %v3046 = vand.u32 %v2579, 2147483648
        %v3047 = vor.u32 1.1754944e-38, %v3046
        %v3048 = vsel %vm3045, %v3047, %v3043
        %v3049 = vmul.f32 1.0, %v3048
        %v3050 = vrcp.pop %v2580
        %v3051 = vmul.f32 %v2580, %v3050
        %v3052 = vsub.f32 1.0, %v3051
        %v3053 = vmul.f32 %v3050, %v3052
        %v3054 = vadd.f32 %v3050, %v3053
        %vm3055 = vweird.f32 %v2580
        %vm3056 = vweird.f32 %v3050
        %vm3057 = vmor %vm3055, %vm3056
        %v3058 = vsel %vm3057, %v3050, %v3054
        %v3059 = vand.u32 2147483647, %v2580
        %vm3060 = vcmp.eq.f32.partialorder %v3059, 8.507059e+37
        %v3061 = vand.u32 %v2580, 2147483648
        %v3062 = vor.u32 1.1754944e-38, %v3061
        %v3063 = vsel %vm3060, %v3062, %v3058
        %v3064 = vmul.f32 1.0, %v3063
        %v3065 = vrcp.pop %v2581
        %v3066 = vmul.f32 %v2581, %v3065
        %v3067 = vsub.f32 1.0, %v3066
        %v3068 = vmul.f32 %v3065, %v3067
        %v3069 = vadd.f32 %v3065, %v3068
        %vm3070 = vweird.f32 %v2581
        %vm3071 = vweird.f32 %v3065
        %vm3072 = vmor %vm3070, %vm3071
        %v3073 = vsel %vm3072, %v3065, %v3069
        %v3074 = vand.u32 2147483647, %v2581
        %vm3075 = vcmp.eq.f32.partialorder %v3074, 8.507059e+37
        %v3076 = vand.u32 %v2581, 2147483648
        %v3077 = vor.u32 1.1754944e-38, %v3076
        %v3078 = vsel %vm3075, %v3077, %v3073
        %v3079 = vmul.f32 1.0, %v3078
        %v3080 = vrcp.pop %v2582
        %v3081 = vmul.f32 %v2582, %v3080
        %v3082 = vsub.f32 1.0, %v3081
        %v3083 = vmul.f32 %v3080, %v3082
        %v3084 = vadd.f32 %v3080, %v3083
        %vm3085 = vweird.f32 %v2582
        %vm3086 = vweird.f32 %v3080
        %vm3087 = vmor %vm3085, %vm3086
        %v3088 = vsel %vm3087, %v3080, %v3084
        %v3089 = vand.u32 2147483647, %v2582
        %vm3090 = vcmp.eq.f32.partialorder %v3089, 8.507059e+37
        %v3091 = vand.u32 %v2582, 2147483648
        %v3092 = vor.u32 1.1754944e-38, %v3091
        %v3093 = vsel %vm3090, %v3092, %v3088
        %v3094 = vmul.f32 1.0, %v3093
        %v3095 = vrcp.pop %v2583
        %v3096 = vmul.f32 %v2583, %v3095
        %v3097 = vsub.f32 1.0, %v3096
        %v3098 = vmul.f32 %v3095, %v3097
        %v3099 = vadd.f32 %v3095, %v3098
        %vm3100 = vweird.f32 %v2583
        %vm3101 = vweird.f32 %v3095
        %vm3102 = vmor %vm3100, %vm3101
        %v3103 = vsel %vm3102, %v3095, %v3099
        %v3104 = vand.u32 2147483647, %v2583
        %vm3105 = vcmp.eq.f32.partialorder %v3104, 8.507059e+37
        %v3106 = vand.u32 %v2583, 2147483648
        %v3107 = vor.u32 1.1754944e-38, %v3106
        %v3108 = vsel %vm3105, %v3107, %v3103
        %v3109 = vmul.f32 1.0, %v3108
        %v3110 = vrcp.pop %v2584
        %v3111 = vmul.f32 %v2584, %v3110
        %v3112 = vsub.f32 1.0, %v3111
        %v3113 = vmul.f32 %v3110, %v3112
        %v3114 = vadd.f32 %v3110, %v3113
        %vm3115 = vweird.f32 %v2584
        %vm3116 = vweird.f32 %v3110
        %vm3117 = vmor %vm3115, %vm3116
        %v3118 = vsel %vm3117, %v3110, %v3114
        %v3119 = vand.u32 2147483647, %v2584
        %vm3120 = vcmp.eq.f32.partialorder %v3119, 8.507059e+37
        %v3121 = vand.u32 %v2584, 2147483648
        %v3122 = vor.u32 1.1754944e-38, %v3121
        %v3123 = vsel %vm3120, %v3122, %v3118
        %v3124 = vmul.f32 1.0, %v3123
        %v3125 = vrcp.pop %v2585
        %v3126 = vmul.f32 %v2585, %v3125
        %v3127 = vsub.f32 1.0, %v3126
        %v3128 = vmul.f32 %v3125, %v3127
        %v3129 = vadd.f32 %v3125, %v3128
        %vm3130 = vweird.f32 %v2585
        %vm3131 = vweird.f32 %v3125
        %vm3132 = vmor %vm3130, %vm3131
        %v3133 = vsel %vm3132, %v3125, %v3129
        %v3134 = vand.u32 2147483647, %v2585
        %vm3135 = vcmp.eq.f32.partialorder %v3134, 8.507059e+37
        %v3136 = vand.u32 %v2585, 2147483648
        %v3137 = vor.u32 1.1754944e-38, %v3136
        %v3138 = vsel %vm3135, %v3137, %v3133
        %v3139 = vmul.f32 1.0, %v3138
        %v3140 = vrcp.pop %v2586
        %v3141 = vmul.f32 %v2586, %v3140
        %v3142 = vsub.f32 1.0, %v3141
        %v3143 = vmul.f32 %v3140, %v3142
        %v3144 = vadd.f32 %v3140, %v3143
        %vm3145 = vweird.f32 %v2586
        %vm3146 = vweird.f32 %v3140
        %vm3147 = vmor %vm3145, %vm3146
        %v3148 = vsel %vm3147, %v3140, %v3144
        %v3149 = vand.u32 2147483647, %v2586
        %vm3150 = vcmp.eq.f32.partialorder %v3149, 8.507059e+37
        %v3151 = vand.u32 %v2586, 2147483648
        %v3152 = vor.u32 1.1754944e-38, %v3151
        %v3153 = vsel %vm3150, %v3152, %v3148
        %v3154 = vmul.f32 1.0, %v3153
        %v3155 = vrcp.pop %v2587
        %v3156 = vmul.f32 %v2587, %v3155
        %v3157 = vsub.f32 1.0, %v3156
        %v3158 = vmul.f32 %v3155, %v3157
        %v3159 = vadd.f32 %v3155, %v3158
        %vm3160 = vweird.f32 %v2587
        %vm3161 = vweird.f32 %v3155
        %vm3162 = vmor %vm3160, %vm3161
        %v3163 = vsel %vm3162, %v3155, %v3159
        %v3164 = vand.u32 2147483647, %v2587
        %vm3165 = vcmp.eq.f32.partialorder %v3164, 8.507059e+37
        %v3166 = vand.u32 %v2587, 2147483648
        %v3167 = vor.u32 1.1754944e-38, %v3166
        %v3168 = vsel %vm3165, %v3167, %v3163
        %v3169 = vmul.f32 1.0, %v3168
        %v3170 = vrcp.pop %v2588
        %v3171 = vmul.f32 %v2588, %v3170
        %v3172 = vsub.f32 1.0, %v3171
        %v3173 = vmul.f32 %v3170, %v3172
        %v3174 = vadd.f32 %v3170, %v3173
        %vm3175 = vweird.f32 %v2588
        %vm3176 = vweird.f32 %v3170
        %vm3177 = vmor %vm3175, %vm3176
        %v3178 = vsel %vm3177, %v3170, %v3174
        %v3179 = vand.u32 2147483647, %v2588
        %vm3180 = vcmp.eq.f32.partialorder %v3179, 8.507059e+37
        %v3181 = vand.u32 %v2588, 2147483648
        %v3182 = vor.u32 1.1754944e-38, %v3181
        %v3183 = vsel %vm3180, %v3182, %v3178
        %v3184 = vmul.f32 1.0, %v3183
        %v3185 = vrcp.pop %v2589
        %v3186 = vmul.f32 %v2589, %v3185
        %v3187 = vsub.f32 1.0, %v3186
        %v3188 = vmul.f32 %v3185, %v3187
        %v3189 = vadd.f32 %v3185, %v3188
        %vm3190 = vweird.f32 %v2589
        %vm3191 = vweird.f32 %v3185
        %vm3192 = vmor %vm3190, %vm3191
        %v3193 = vsel %vm3192, %v3185, %v3189
        %v3194 = vand.u32 2147483647, %v2589
        %vm3195 = vcmp.eq.f32.partialorder %v3194, 8.507059e+37
        %v3196 = vand.u32 %v2589, 2147483648
        %v3197 = vor.u32 1.1754944e-38, %v3196
        %v3198 = vsel %vm3195, %v3197, %v3193
        %v3199 = vmul.f32 1.0, %v3198
        %v3200 = vrcp.pop %v2590
        %v3201 = vmul.f32 %v2590, %v3200
        %v3202 = vsub.f32 1.0, %v3201
        %v3203 = vmul.f32 %v3200, %v3202
        %v3204 = vadd.f32 %v3200, %v3203
        %vm3205 = vweird.f32 %v2590
        %vm3206 = vweird.f32 %v3200
        %vm3207 = vmor %vm3205, %vm3206
        %v3208 = vsel %vm3207, %v3200, %v3204
        %v3209 = vand.u32 2147483647, %v2590
        %vm3210 = vcmp.eq.f32.partialorder %v3209, 8.507059e+37
        %v3211 = vand.u32 %v2590, 2147483648
        %v3212 = vor.u32 1.1754944e-38, %v3211
        %v3213 = vsel %vm3210, %v3212, %v3208
        %v3214 = vmul.f32 1.0, %v3213
        %v3215 = vrcp.pop %v2591
        %v3216 = vmul.f32 %v2591, %v3215
        %v3217 = vsub.f32 1.0, %v3216
        %v3218 = vmul.f32 %v3215, %v3217
        %v3219 = vadd.f32 %v3215, %v3218
        %vm3220 = vweird.f32 %v2591
        %vm3221 = vweird.f32 %v3215
        %vm3222 = vmor %vm3220, %vm3221
        %v3223 = vsel %vm3222, %v3215, %v3219
        %v3224 = vand.u32 2147483647, %v2591
        %vm3225 = vcmp.eq.f32.partialorder %v3224, 8.507059e+37
        %v3226 = vand.u32 %v2591, 2147483648
        %v3227 = vor.u32 1.1754944e-38, %v3226
        %v3228 = vsel %vm3225, %v3227, %v3223
        %v3229 = vmul.f32 1.0, %v3228
        %v3230 = vrcp.pop %v2592
        %v3231 = vmul.f32 %v2592, %v3230
        %v3232 = vsub.f32 1.0, %v3231
        %v3233 = vmul.f32 %v3230, %v3232
        %v3234 = vadd.f32 %v3230, %v3233
        %vm3235 = vweird.f32 %v2592
        %vm3236 = vweird.f32 %v3230
        %vm3237 = vmor %vm3235, %vm3236
        %v3238 = vsel %vm3237, %v3230, %v3234
        %v3239 = vand.u32 2147483647, %v2592
        %vm3240 = vcmp.eq.f32.partialorder %v3239, 8.507059e+37
        %v3241 = vand.u32 %v2592, 2147483648
        %v3242 = vor.u32 1.1754944e-38, %v3241
        %v3243 = vsel %vm3240, %v3242, %v3238
        %v3244 = vmul.f32 1.0, %v3243
        %v3245 = vrcp.pop %v2593
        %v3246 = vmul.f32 %v2593, %v3245
        %v3247 = vsub.f32 1.0, %v3246
        %v3248 = vmul.f32 %v3245, %v3247
        %v3249 = vadd.f32 %v3245, %v3248
        %vm3250 = vweird.f32 %v2593
        %vm3251 = vweird.f32 %v3245
        %vm3252 = vmor %vm3250, %vm3251
        %v3253 = vsel %vm3252, %v3245, %v3249
        %v3254 = vand.u32 2147483647, %v2593
        %vm3255 = vcmp.eq.f32.partialorder %v3254, 8.507059e+37
        %v3256 = vand.u32 %v2593, 2147483648
        %v3257 = vor.u32 1.1754944e-38, %v3256
        %v3258 = vsel %vm3255, %v3257, %v3253
        %v3259 = vmul.f32 1.0, %v3258
        %v3260 = vrcp.pop %v2594
        %v3261 = vmul.f32 %v2594, %v3260
        %v3262 = vsub.f32 1.0, %v3261
        %v3263 = vmul.f32 %v3260, %v3262
        %v3264 = vadd.f32 %v3260, %v3263
        %vm3265 = vweird.f32 %v2594
        %vm3266 = vweird.f32 %v3260
        %vm3267 = vmor %vm3265, %vm3266
        %v3268 = vsel %vm3267, %v3260, %v3264
        %v3269 = vand.u32 2147483647, %v2594
        %vm3270 = vcmp.eq.f32.partialorder %v3269, 8.507059e+37
        %v3271 = vand.u32 %v2594, 2147483648
        %v3272 = vor.u32 1.1754944e-38, %v3271
        %v3273 = vsel %vm3270, %v3272, %v3268
        %v3274 = vmul.f32 1.0, %v3273
        %v3275 = vrcp.pop %v2595
        %v3276 = vmul.f32 %v2595, %v3275
        %v3277 = vsub.f32 1.0, %v3276
        %v3278 = vmul.f32 %v3275, %v3277
        %v3279 = vadd.f32 %v3275, %v3278
        %vm3280 = vweird.f32 %v2595
        %vm3281 = vweird.f32 %v3275
        %vm3282 = vmor %vm3280, %vm3281
        %v3283 = vsel %vm3282, %v3275, %v3279
        %v3284 = vand.u32 2147483647, %v2595
        %vm3285 = vcmp.eq.f32.partialorder %v3284, 8.507059e+37
        %v3286 = vand.u32 %v2595, 2147483648
        %v3287 = vor.u32 1.1754944e-38, %v3286
        %v3288 = vsel %vm3285, %v3287, %v3283
        %v3289 = vmul.f32 1.0, %v3288
        %v3290 = vrcp.pop %v2596
        %v3291 = vmul.f32 %v2596, %v3290
        %v3292 = vsub.f32 1.0, %v3291
        %v3293 = vmul.f32 %v3290, %v3292
        %v3294 = vadd.f32 %v3290, %v3293
        %vm3295 = vweird.f32 %v2596
        %vm3296 = vweird.f32 %v3290
        %vm3297 = vmor %vm3295, %vm3296
        %v3298 = vsel %vm3297, %v3290, %v3294
        %v3299 = vand.u32 2147483647, %v2596
        %vm3300 = vcmp.eq.f32.partialorder %v3299, 8.507059e+37
        %v3301 = vand.u32 %v2596, 2147483648
        %v3302 = vor.u32 1.1754944e-38, %v3301
        %v3303 = vsel %vm3300, %v3302, %v3298
        %v3304 = vmul.f32 1.0, %v3303
        %v3305 = vrcp.pop %v2597
        %v3306 = vmul.f32 %v2597, %v3305
        %v3307 = vsub.f32 1.0, %v3306
        %v3308 = vmul.f32 %v3305, %v3307
        %v3309 = vadd.f32 %v3305, %v3308
        %vm3310 = vweird.f32 %v2597
        %vm3311 = vweird.f32 %v3305
        %vm3312 = vmor %vm3310, %vm3311
        %v3313 = vsel %vm3312, %v3305, %v3309
        %v3314 = vand.u32 2147483647, %v2597
        %vm3315 = vcmp.eq.f32.partialorder %v3314, 8.507059e+37
        %v3316 = vand.u32 %v2597, 2147483648
        %v3317 = vor.u32 1.1754944e-38, %v3316
        %v3318 = vsel %vm3315, %v3317, %v3313
        %v3319 = vmul.f32 1.0, %v3318
        %v3320 = vrcp.pop %v2598
        %v3321 = vmul.f32 %v2598, %v3320
        %v3322 = vsub.f32 1.0, %v3321
        %v3323 = vmul.f32 %v3320, %v3322
        %v3324 = vadd.f32 %v3320, %v3323
        %vm3325 = vweird.f32 %v2598
        %vm3326 = vweird.f32 %v3320
        %vm3327 = vmor %vm3325, %vm3326
        %v3328 = vsel %vm3327, %v3320, %v3324
        %v3329 = vand.u32 2147483647, %v2598
        %vm3330 = vcmp.eq.f32.partialorder %v3329, 8.507059e+37
        %v3331 = vand.u32 %v2598, 2147483648
        %v3332 = vor.u32 1.1754944e-38, %v3331
        %v3333 = vsel %vm3330, %v3332, %v3328
        %v3334 = vmul.f32 1.0, %v3333
        %v3335 = vrcp.pop %v2599
        %v3336 = vmul.f32 %v2599, %v3335
        %v3337 = vsub.f32 1.0, %v3336
        %v3338 = vmul.f32 %v3335, %v3337
        %v3339 = vadd.f32 %v3335, %v3338
        %vm3340 = vweird.f32 %v2599
        %vm3341 = vweird.f32 %v3335
        %vm3342 = vmor %vm3340, %vm3341
        %v3343 = vsel %vm3342, %v3335, %v3339
        %v3344 = vand.u32 2147483647, %v2599
        %vm3345 = vcmp.eq.f32.partialorder %v3344, 8.507059e+37
        %v3346 = vand.u32 %v2599, 2147483648
        %v3347 = vor.u32 1.1754944e-38, %v3346
        %v3348 = vsel %vm3345, %v3347, %v3343
        %v3349 = vmul.f32 1.0, %v3348
        %v3350 = vrcp.pop %v2600
        %v3351 = vmul.f32 %v2600, %v3350
        %v3352 = vsub.f32 1.0, %v3351
        %v3353 = vmul.f32 %v3350, %v3352
        %v3354 = vadd.f32 %v3350, %v3353
        %vm3355 = vweird.f32 %v2600
        %vm3356 = vweird.f32 %v3350
        %vm3357 = vmor %vm3355, %vm3356
        %v3358 = vsel %vm3357, %v3350, %v3354
        %v3359 = vand.u32 2147483647, %v2600
        %vm3360 = vcmp.eq.f32.partialorder %v3359, 8.507059e+37
        %v3361 = vand.u32 %v2600, 2147483648
        %v3362 = vor.u32 1.1754944e-38, %v3361
        %v3363 = vsel %vm3360, %v3362, %v3358
        %v3364 = vmul.f32 1.0, %v3363
        %v3365 = vrcp.pop %v2601
        %v3366 = vmul.f32 %v2601, %v3365
        %v3367 = vsub.f32 1.0, %v3366
        %v3368 = vmul.f32 %v3365, %v3367
        %v3369 = vadd.f32 %v3365, %v3368
        %vm3370 = vweird.f32 %v2601
        %vm3371 = vweird.f32 %v3365
        %vm3372 = vmor %vm3370, %vm3371
        %v3373 = vsel %vm3372, %v3365, %v3369
        %v3374 = vand.u32 2147483647, %v2601
        %vm3375 = vcmp.eq.f32.partialorder %v3374, 8.507059e+37
        %v3376 = vand.u32 %v2601, 2147483648
        %v3377 = vor.u32 1.1754944e-38, %v3376
        %v3378 = vsel %vm3375, %v3377, %v3373
        %v3379 = vmul.f32 1.0, %v3378
        %v3380 = vrcp.pop %v2602
        %v3381 = vmul.f32 %v2602, %v3380
        %v3382 = vsub.f32 1.0, %v3381
        %v3383 = vmul.f32 %v3380, %v3382
        %v3384 = vadd.f32 %v3380, %v3383
        %vm3385 = vweird.f32 %v2602
        %vm3386 = vweird.f32 %v3380
        %vm3387 = vmor %vm3385, %vm3386
        %v3388 = vsel %vm3387, %v3380, %v3384
        %v3389 = vand.u32 2147483647, %v2602
        %vm3390 = vcmp.eq.f32.partialorder %v3389, 8.507059e+37
        %v3391 = vand.u32 %v2602, 2147483648
        %v3392 = vor.u32 1.1754944e-38, %v3391
        %v3393 = vsel %vm3390, %v3392, %v3388
        %v3394 = vmul.f32 1.0, %v3393
        %v3395 = vrcp.pop %v2603
        %v3396 = vmul.f32 %v2603, %v3395
        %v3397 = vsub.f32 1.0, %v3396
        %v3398 = vmul.f32 %v3395, %v3397
        %v3399 = vadd.f32 %v3395, %v3398
        %vm3400 = vweird.f32 %v2603
        %vm3401 = vweird.f32 %v3395
        %vm3402 = vmor %vm3400, %vm3401
        %v3403 = vsel %vm3402, %v3395, %v3399
        %v3404 = vand.u32 2147483647, %v2603
        %vm3405 = vcmp.eq.f32.partialorder %v3404, 8.507059e+37
        %v3406 = vand.u32 %v2603, 2147483648
        %v3407 = vor.u32 1.1754944e-38, %v3406
        %v3408 = vsel %vm3405, %v3407, %v3403
        %v3409 = vmul.f32 1.0, %v3408
        %v3410 = vrcp.pop %v2604
        %v3411 = vmul.f32 %v2604, %v3410
        %v3412 = vsub.f32 1.0, %v3411
        %v3413 = vmul.f32 %v3410, %v3412
        %v3414 = vadd.f32 %v3410, %v3413
        %vm3415 = vweird.f32 %v2604
        %vm3416 = vweird.f32 %v3410
        %vm3417 = vmor %vm3415, %vm3416
        %v3418 = vsel %vm3417, %v3410, %v3414
        %v3419 = vand.u32 2147483647, %v2604
        %vm3420 = vcmp.eq.f32.partialorder %v3419, 8.507059e+37
        %v3421 = vand.u32 %v2604, 2147483648
        %v3422 = vor.u32 1.1754944e-38, %v3421
        %v3423 = vsel %vm3420, %v3422, %v3418
        %v3424 = vmul.f32 1.0, %v3423
        %v3425 = vrcp.pop %v2605
        %v3426 = vmul.f32 %v2605, %v3425
        %v3427 = vsub.f32 1.0, %v3426
        %v3428 = vmul.f32 %v3425, %v3427
        %v3429 = vadd.f32 %v3425, %v3428
        %vm3430 = vweird.f32 %v2605
        %vm3431 = vweird.f32 %v3425
        %vm3432 = vmor %vm3430, %vm3431
        %v3433 = vsel %vm3432, %v3425, %v3429
        %v3434 = vand.u32 2147483647, %v2605
        %vm3435 = vcmp.eq.f32.partialorder %v3434, 8.507059e+37
        %v3436 = vand.u32 %v2605, 2147483648
        %v3437 = vor.u32 1.1754944e-38, %v3436
        %v3438 = vsel %vm3435, %v3437, %v3433
        %v3439 = vmul.f32 1.0, %v3438
        %v3440 = vrcp.pop %v2606
        %v3441 = vmul.f32 %v2606, %v3440
        %v3442 = vsub.f32 1.0, %v3441
        %v3443 = vmul.f32 %v3440, %v3442
        %v3444 = vadd.f32 %v3440, %v3443
        %vm3445 = vweird.f32 %v2606
        %vm3446 = vweird.f32 %v3440
        %vm3447 = vmor %vm3445, %vm3446
        %v3448 = vsel %vm3447, %v3440, %v3444
        %v3449 = vand.u32 2147483647, %v2606
        %vm3450 = vcmp.eq.f32.partialorder %v3449, 8.507059e+37
        %v3451 = vand.u32 %v2606, 2147483648
        %v3452 = vor.u32 1.1754944e-38, %v3451
        %v3453 = vsel %vm3450, %v3452, %v3448
        %v3454 = vmul.f32 1.0, %v3453
        %v3455 = vrcp.pop %v2607
        %v3456 = vmul.f32 %v2607, %v3455
        %v3457 = vsub.f32 1.0, %v3456
        %v3458 = vmul.f32 %v3455, %v3457
        %v3459 = vadd.f32 %v3455, %v3458
        %vm3460 = vweird.f32 %v2607
        %vm3461 = vweird.f32 %v3455
        %vm3462 = vmor %vm3460, %vm3461
        %v3463 = vsel %vm3462, %v3455, %v3459
        %v3464 = vand.u32 2147483647, %v2607
        %vm3465 = vcmp.eq.f32.partialorder %v3464, 8.507059e+37
        %v3466 = vand.u32 %v2607, 2147483648
        %v3467 = vor.u32 1.1754944e-38, %v3466
        %v3468 = vsel %vm3465, %v3467, %v3463
        %v3469 = vmul.f32 1.0, %v3468
        %v3470 = vrcp.pop %v2608
        %v3471 = vmul.f32 %v2608, %v3470
        %v3472 = vsub.f32 1.0, %v3471
        %v3473 = vmul.f32 %v3470, %v3472
        %v3474 = vadd.f32 %v3470, %v3473
        %vm3475 = vweird.f32 %v2608
        %vm3476 = vweird.f32 %v3470
        %vm3477 = vmor %vm3475, %vm3476
        %v3478 = vsel %vm3477, %v3470, %v3474
        %v3479 = vand.u32 2147483647, %v2608
        %vm3480 = vcmp.eq.f32.partialorder %v3479, 8.507059e+37
        %v3481 = vand.u32 %v2608, 2147483648
        %v3482 = vor.u32 1.1754944e-38, %v3481
        %v3483 = vsel %vm3480, %v3482, %v3478
        %v3484 = vmul.f32 1.0, %v3483
        %v3485 = vrcp.pop %v2609
        %v3486 = vmul.f32 %v2609, %v3485
        %v3487 = vsub.f32 1.0, %v3486
        %v3488 = vmul.f32 %v3485, %v3487
        %v3489 = vadd.f32 %v3485, %v3488
        %vm3490 = vweird.f32 %v2609
        %vm3491 = vweird.f32 %v3485
        %vm3492 = vmor %vm3490, %vm3491
        %v3493 = vsel %vm3492, %v3485, %v3489
        %v3494 = vand.u32 2147483647, %v2609
        %vm3495 = vcmp.eq.f32.partialorder %v3494, 8.507059e+37
        %v3496 = vand.u32 %v2609, 2147483648
        %v3497 = vor.u32 1.1754944e-38, %v3496
        %v3498 = vsel %vm3495, %v3497, %v3493
        %v3499 = vmul.f32 1.0, %v3498
        %v3500 = vrcp.pop %v2610
        %v3501 = vmul.f32 %v2610, %v3500
        %v3502 = vsub.f32 1.0, %v3501
        %v3503 = vmul.f32 %v3500, %v3502
        %v3504 = vadd.f32 %v3500, %v3503
        %vm3505 = vweird.f32 %v2610
        %vm3506 = vweird.f32 %v3500
        %vm3507 = vmor %vm3505, %vm3506
        %v3508 = vsel %vm3507, %v3500, %v3504
        %v3509 = vand.u32 2147483647, %v2610
        %vm3510 = vcmp.eq.f32.partialorder %v3509, 8.507059e+37
        %v3511 = vand.u32 %v2610, 2147483648
        %v3512 = vor.u32 1.1754944e-38, %v3511
        %v3513 = vsel %vm3510, %v3512, %v3508
        %v3514 = vmul.f32 1.0, %v3513
        %v3515 = vrcp.pop %v2611
        %v3516 = vmul.f32 %v2611, %v3515
        %v3517 = vsub.f32 1.0, %v3516
        %v3518 = vmul.f32 %v3515, %v3517
        %v3519 = vadd.f32 %v3515, %v3518
        %vm3520 = vweird.f32 %v2611
        %vm3521 = vweird.f32 %v3515
        %vm3522 = vmor %vm3520, %vm3521
        %v3523 = vsel %vm3522, %v3515, %v3519
        %v3524 = vand.u32 2147483647, %v2611
        %vm3525 = vcmp.eq.f32.partialorder %v3524, 8.507059e+37
        %v3526 = vand.u32 %v2611, 2147483648
        %v3527 = vor.u32 1.1754944e-38, %v3526
        %v3528 = vsel %vm3525, %v3527, %v3523
        %v3529 = vmul.f32 1.0, %v3528
        %v3530 = vrcp.pop %v2612
        %v3531 = vmul.f32 %v2612, %v3530
        %v3532 = vsub.f32 1.0, %v3531
        %v3533 = vmul.f32 %v3530, %v3532
        %v3534 = vadd.f32 %v3530, %v3533
        %vm3535 = vweird.f32 %v2612
        %vm3536 = vweird.f32 %v3530
        %vm3537 = vmor %vm3535, %vm3536
        %v3538 = vsel %vm3537, %v3530, %v3534
        %v3539 = vand.u32 2147483647, %v2612
        %vm3540 = vcmp.eq.f32.partialorder %v3539, 8.507059e+37
        %v3541 = vand.u32 %v2612, 2147483648
        %v3542 = vor.u32 1.1754944e-38, %v3541
        %v3543 = vsel %vm3540, %v3542, %v3538
        %v3544 = vmul.f32 1.0, %v3543
        %v3545 = vrcp.pop %v2613
        %v3546 = vmul.f32 %v2613, %v3545
        %v3547 = vsub.f32 1.0, %v3546
        %v3548 = vmul.f32 %v3545, %v3547
        %v3549 = vadd.f32 %v3545, %v3548
        %vm3550 = vweird.f32 %v2613
        %vm3551 = vweird.f32 %v3545
        %vm3552 = vmor %vm3550, %vm3551
        %v3553 = vsel %vm3552, %v3545, %v3549
        %v3554 = vand.u32 2147483647, %v2613
        %vm3555 = vcmp.eq.f32.partialorder %v3554, 8.507059e+37
        %v3556 = vand.u32 %v2613, 2147483648
        %v3557 = vor.u32 1.1754944e-38, %v3556
        %v3558 = vsel %vm3555, %v3557, %v3553
        %v3559 = vmul.f32 1.0, %v3558
        %v3560 = vrcp.pop %v2614
        %v3561 = vmul.f32 %v2614, %v3560
        %v3562 = vsub.f32 1.0, %v3561
        %v3563 = vmul.f32 %v3560, %v3562
        %v3564 = vadd.f32 %v3560, %v3563
        %vm3565 = vweird.f32 %v2614
        %vm3566 = vweird.f32 %v3560
        %vm3567 = vmor %vm3565, %vm3566
        %v3568 = vsel %vm3567, %v3560, %v3564
        %v3569 = vand.u32 2147483647, %v2614
        %vm3570 = vcmp.eq.f32.partialorder %v3569, 8.507059e+37
        %v3571 = vand.u32 %v2614, 2147483648
        %v3572 = vor.u32 1.1754944e-38, %v3571
        %v3573 = vsel %vm3570, %v3572, %v3568
        %v3574 = vmul.f32 1.0, %v3573
        %v3575 = vld [vmem:[%s5] sm:$0xff]
        %v3576 = vld [vmem:[%s5 + $0x8] sm:$0xff]
        %v3577 = vld [vmem:[%s5 + $0x10] sm:$0xff]
        %v3578 = vld [vmem:[%s5 + $0x18] sm:$0xff]
        %v3579 = vld [vmem:[%s5 + $0x20] sm:$0xff]
        %v3580 = vld [vmem:[%s5 + $0x28] sm:$0xff]
        %v3581 = vld [vmem:[%s5 + $0x30] sm:$0xff]
        %v3582 = vld [vmem:[%s5 + $0x38] sm:$0xff]
        %v3583 = vld [vmem:[%s5 + $0x40] sm:$0xff]
        %v3584 = vld [vmem:[%s5 + $0x48] sm:$0xff]
        %v3585 = vld [vmem:[%s5 + $0x50] sm:$0xff]
        %v3586 = vld [vmem:[%s5 + $0x58] sm:$0xff]
        %v3587 = vld [vmem:[%s5 + $0x60] sm:$0xff]
        %v3588 = vld [vmem:[%s5 + $0x68] sm:$0xff]
        %v3589 = vld [vmem:[%s5 + $0x70] sm:$0xff]
        %v3590 = vld [vmem:[%s5 + $0x78] sm:$0xff]
        %v3591 = vld [vmem:[%s6] sm:$0xff]
        %v3592 = vld [vmem:[%s6 + $0x8] sm:$0xff]
        %v3593 = vld [vmem:[%s6 + $0x10] sm:$0xff]
        %v3594 = vld [vmem:[%s6 + $0x18] sm:$0xff]
        %v3595 = vld [vmem:[%s6 + $0x20] sm:$0xff]
        %v3596 = vld [vmem:[%s6 + $0x28] sm:$0xff]
        %v3597 = vld [vmem:[%s6 + $0x30] sm:$0xff]
        %v3598 = vld [vmem:[%s6 + $0x38] sm:$0xff]
        %v3599 = vld [vmem:[%s6 + $0x40] sm:$0xff]
        %v3600 = vld [vmem:[%s6 + $0x48] sm:$0xff]
        %v3601 = vld [vmem:[%s6 + $0x50] sm:$0xff]
        %v3602 = vld [vmem:[%s6 + $0x58] sm:$0xff]
        %v3603 = vld [vmem:[%s6 + $0x60] sm:$0xff]
        %v3604 = vld [vmem:[%s6 + $0x68] sm:$0xff]
        %v3605 = vld [vmem:[%s6 + $0x70] sm:$0xff]
        %v3606 = vld [vmem:[%s6 + $0x78] sm:$0xff]
        %3608 = vset.pattern.permute.xlu0 0
        %3609 = vperm.xlu0 %3608, %v3591
        %v3610 = vpop.permute.xlu0 %3609
        %3613 = vset.pattern.permute.xlu0 0
        %3614 = vperm.xlu0 %3613, %v3592
        %v3615 = vpop.permute.xlu0 %3614
        %3618 = vset.pattern.permute.xlu0 0
        %3619 = vperm.xlu0 %3618, %v3593
        %v3620 = vpop.permute.xlu0 %3619
        %3623 = vset.pattern.permute.xlu0 0
        %3624 = vperm.xlu0 %3623, %v3594
        %v3625 = vpop.permute.xlu0 %3624
        %3628 = vset.pattern.permute.xlu0 0
        %3629 = vperm.xlu0 %3628, %v3595
        %v3630 = vpop.permute.xlu0 %3629
        %3633 = vset.pattern.permute.xlu0 0
        %3634 = vperm.xlu0 %3633, %v3596
        %v3635 = vpop.permute.xlu0 %3634
        %3638 = vset.pattern.permute.xlu0 0
        %3639 = vperm.xlu0 %3638, %v3597
        %v3640 = vpop.permute.xlu0 %3639
        %3643 = vset.pattern.permute.xlu0 0
        %3644 = vperm.xlu0 %3643, %v3598
        %v3645 = vpop.permute.xlu0 %3644
        %3648 = vset.pattern.permute.xlu0 0
        %3649 = vperm.xlu0 %3648, %v3599
        %v3650 = vpop.permute.xlu0 %3649
        %3653 = vset.pattern.permute.xlu0 0
        %3654 = vperm.xlu0 %3653, %v3600
        %v3655 = vpop.permute.xlu0 %3654
        %3658 = vset.pattern.permute.xlu0 0
        %3659 = vperm.xlu0 %3658, %v3601
        %v3660 = vpop.permute.xlu0 %3659
        %3663 = vset.pattern.permute.xlu0 0
        %3664 = vperm.xlu0 %3663, %v3602
        %v3665 = vpop.permute.xlu0 %3664
        %3668 = vset.pattern.permute.xlu0 0
        %3669 = vperm.xlu0 %3668, %v3603
        %v3670 = vpop.permute.xlu0 %3669
        %3673 = vset.pattern.permute.xlu0 0
        %3674 = vperm.xlu0 %3673, %v3604
        %v3675 = vpop.permute.xlu0 %3674
        %3678 = vset.pattern.permute.xlu0 0
        %3679 = vperm.xlu0 %3678, %v3605
        %v3680 = vpop.permute.xlu0 %3679
        %3683 = vset.pattern.permute.xlu0 0
        %3684 = vperm.xlu0 %3683, %v3606
        %v3685 = vpop.permute.xlu0 %3684
        %3687 = vmatpush.msra.mxu0 %v3529
        %3688 = vmatpush.msra.mxu0 %v3469
        %3689 = vmatpush.msra.mxu0 %v3409
        %3690 = vmatpush.msra.mxu0 %v3349
        %3691 = vmatpush.msra.mxu0 %v3289
        %3692 = vmatpush.msra.mxu0 %v3229
        %3693 = vmatpush.msra.mxu0 %v3169
        %3694 = vmatpush.msra.mxu0 %v3109
        %3695 = vmatpush.msra.mxu0 %v3049
        %3696 = vmatpush.msra.mxu0 %v2989
        %3697 = vmatpush.msra.mxu0 %v2929
        %3698 = vmatpush.msra.mxu0 %v2869
        %3699 = vmatpush.msra.mxu0 %v2809
        %3700 = vmatpush.msra.mxu0 %v2749
        %3701 = vmatpush.msra.mxu0 %v2689
        %3702 = vmatpush.msra.mxu0 %v2629
        %3703 = vmatmul.f32.gmra.mxu0 %v3575
        %v3704 = vpop.f32.mrf.mxu0
        %v3705 = vadd.f32 %v3610, %v3704
        %3706 = vmatmul.f32.gmra.mxu0 %v3576
        %v3707 = vpop.f32.mrf.mxu0
        %v3708 = vadd.f32 %v3615, %v3707
        %3709 = vmatmul.f32.gmra.mxu0 %v3577
        %v3710 = vpop.f32.mrf.mxu0
        %v3711 = vadd.f32 %v3620, %v3710
        %3712 = vmatmul.f32.gmra.mxu0 %v3578
        %v3713 = vpop.f32.mrf.mxu0
        %v3714 = vadd.f32 %v3625, %v3713
        %3715 = vmatmul.f32.gmra.mxu0 %v3579
        %v3716 = vpop.f32.mrf.mxu0
        %v3717 = vadd.f32 %v3630, %v3716
        %3718 = vmatmul.f32.gmra.mxu0 %v3580
        %v3719 = vpop.f32.mrf.mxu0
        %v3720 = vadd.f32 %v3635, %v3719
        %3721 = vmatmul.f32.gmra.mxu0 %v3581
        %v3722 = vpop.f32.mrf.mxu0
        %v3723 = vadd.f32 %v3640, %v3722
        %3724 = vmatmul.f32.gmra.mxu0 %v3582
        %v3725 = vpop.f32.mrf.mxu0
        %v3726 = vadd.f32 %v3645, %v3725
        %3727 = vmatmul.f32.gmra.mxu0 %v3583
        %v3728 = vpop.f32.mrf.mxu0
        %v3729 = vadd.f32 %v3650, %v3728
        %3730 = vmatmul.f32.gmra.mxu0 %v3584
        %v3731 = vpop.f32.mrf.mxu0
        %v3732 = vadd.f32 %v3655, %v3731
        %3733 = vmatmul.f32.gmra.mxu0 %v3585
        %v3734 = vpop.f32.mrf.mxu0
        %v3735 = vadd.f32 %v3660, %v3734
        %3736 = vmatmul.f32.gmra.mxu0 %v3586
        %v3737 = vpop.f32.mrf.mxu0
        %v3738 = vadd.f32 %v3665, %v3737
        %3739 = vmatmul.f32.gmra.mxu0 %v3587
        %v3740 = vpop.f32.mrf.mxu0
        %v3741 = vadd.f32 %v3670, %v3740
        %3742 = vmatmul.f32.gmra.mxu0 %v3588
        %v3743 = vpop.f32.mrf.mxu0
        %v3744 = vadd.f32 %v3675, %v3743
        %3745 = vmatmul.f32.gmra.mxu0 %v3589
        %v3746 = vpop.f32.mrf.mxu0
        %v3747 = vadd.f32 %v3680, %v3746
        %3748 = vmatmul.f32.gmra.mxu0 %v3590
        %v3749 = vpop.f32.mrf.mxu0
        %v3750 = vadd.f32 %v3685, %v3749
        %3751 = vdwg.mxu0
        %3752 = vmatpush.msra.mxu0 %v3544
        %3753 = vmatpush.msra.mxu0 %v3484
        %3754 = vmatpush.msra.mxu0 %v3424
        %3755 = vmatpush.msra.mxu0 %v3364
        %3756 = vmatpush.msra.mxu0 %v3304
        %3757 = vmatpush.msra.mxu0 %v3244
        %3758 = vmatpush.msra.mxu0 %v3184
        %3759 = vmatpush.msra.mxu0 %v3124
        %3760 = vmatpush.msra.mxu0 %v3064
        %3761 = vmatpush.msra.mxu0 %v3004
        %3762 = vmatpush.msra.mxu0 %v2944
        %3763 = vmatpush.msra.mxu0 %v2884
        %3764 = vmatpush.msra.mxu0 %v2824
        %3765 = vmatpush.msra.mxu0 %v2764
        %3766 = vmatpush.msra.mxu0 %v2704
        %3767 = vmatpush.msra.mxu0 %v2644
        %3768 = vmatmul.f32.gmra.mxu0 %v3575
        %v3769 = vpop.f32.mrf.mxu0
        %v3770 = vadd.f32 %v3610, %v3769
        %3771 = vmatmul.f32.gmra.mxu0 %v3576
        %v3772 = vpop.f32.mrf.mxu0
        %v3773 = vadd.f32 %v3615, %v3772
        %3774 = vmatmul.f32.gmra.mxu0 %v3577
        %v3775 = vpop.f32.mrf.mxu0
        %v3776 = vadd.f32 %v3620, %v3775
        %3777 = vmatmul.f32.gmra.mxu0 %v3578
        %v3778 = vpop.f32.mrf.mxu0
        %v3779 = vadd.f32 %v3625, %v3778
        %3780 = vmatmul.f32.gmra.mxu0 %v3579
        %v3781 = vpop.f32.mrf.mxu0
        %v3782 = vadd.f32 %v3630, %v3781
        %3783 = vmatmul.f32.gmra.mxu0 %v3580
        %v3784 = vpop.f32.mrf.mxu0
        %v3785 = vadd.f32 %v3635, %v3784
        %3786 = vmatmul.f32.gmra.mxu0 %v3581
        %v3787 = vpop.f32.mrf.mxu0
        %v3788 = vadd.f32 %v3640, %v3787
        %3789 = vmatmul.f32.gmra.mxu0 %v3582
        %v3790 = vpop.f32.mrf.mxu0
        %v3791 = vadd.f32 %v3645, %v3790
        %3792 = vmatmul.f32.gmra.mxu0 %v3583
        %v3793 = vpop.f32.mrf.mxu0
        %v3794 = vadd.f32 %v3650, %v3793
        %3795 = vmatmul.f32.gmra.mxu0 %v3584
        %v3796 = vpop.f32.mrf.mxu0
        %v3797 = vadd.f32 %v3655, %v3796
        %3798 = vmatmul.f32.gmra.mxu0 %v3585
        %v3799 = vpop.f32.mrf.mxu0
        %v3800 = vadd.f32 %v3660, %v3799
        %3801 = vmatmul.f32.gmra.mxu0 %v3586
        %v3802 = vpop.f32.mrf.mxu0
        %v3803 = vadd.f32 %v3665, %v3802
        %3804 = vmatmul.f32.gmra.mxu0 %v3587
        %v3805 = vpop.f32.mrf.mxu0
        %v3806 = vadd.f32 %v3670, %v3805
        %3807 = vmatmul.f32.gmra.mxu0 %v3588
        %v3808 = vpop.f32.mrf.mxu0
        %v3809 = vadd.f32 %v3675, %v3808
        %3810 = vmatmul.f32.gmra.mxu0 %v3589
        %v3811 = vpop.f32.mrf.mxu0
        %v3812 = vadd.f32 %v3680, %v3811
        %3813 = vmatmul.f32.gmra.mxu0 %v3590
        %v3814 = vpop.f32.mrf.mxu0
        %v3815 = vadd.f32 %v3685, %v3814
        %3816 = vdwg.mxu0
        %3817 = vmatpush.msra.mxu0 %v3559
        %3818 = vmatpush.msra.mxu0 %v3499
        %3819 = vmatpush.msra.mxu0 %v3439
        %3820 = vmatpush.msra.mxu0 %v3379
        %3821 = vmatpush.msra.mxu0 %v3319
        %3822 = vmatpush.msra.mxu0 %v3259
        %3823 = vmatpush.msra.mxu0 %v3199
        %3824 = vmatpush.msra.mxu0 %v3139
        %3825 = vmatpush.msra.mxu0 %v3079
        %3826 = vmatpush.msra.mxu0 %v3019
        %3827 = vmatpush.msra.mxu0 %v2959
        %3828 = vmatpush.msra.mxu0 %v2899
        %3829 = vmatpush.msra.mxu0 %v2839
        %3830 = vmatpush.msra.mxu0 %v2779
        %3831 = vmatpush.msra.mxu0 %v2719
        %3832 = vmatpush.msra.mxu0 %v2659
        %3833 = vmatmul.f32.gmra.mxu0 %v3575
        %v3834 = vpop.f32.mrf.mxu0
        %v3835 = vadd.f32 %v3610, %v3834
        %3836 = vmatmul.f32.gmra.mxu0 %v3576
        %v3837 = vpop.f32.mrf.mxu0
        %v3838 = vadd.f32 %v3615, %v3837
        %3839 = vmatmul.f32.gmra.mxu0 %v3577
        %v3840 = vpop.f32.mrf.mxu0
        %v3841 = vadd.f32 %v3620, %v3840
        %3842 = vmatmul.f32.gmra.mxu0 %v3578
        %v3843 = vpop.f32.mrf.mxu0
        %v3844 = vadd.f32 %v3625, %v3843
        %3845 = vmatmul.f32.gmra.mxu0 %v3579
        %v3846 = vpop.f32.mrf.mxu0
        %v3847 = vadd.f32 %v3630, %v3846
        %3848 = vmatmul.f32.gmra.mxu0 %v3580
        %v3849 = vpop.f32.mrf.mxu0
        %v3850 = vadd.f32 %v3635, %v3849
        %3851 = vmatmul.f32.gmra.mxu0 %v3581
        %v3852 = vpop.f32.mrf.mxu0
        %v3853 = vadd.f32 %v3640, %v3852
        %3854 = vmatmul.f32.gmra.mxu0 %v3582
        %v3855 = vpop.f32.mrf.mxu0
        %v3856 = vadd.f32 %v3645, %v3855
        %3857 = vmatmul.f32.gmra.mxu0 %v3583
        %v3858 = vpop.f32.mrf.mxu0
        %v3859 = vadd.f32 %v3650, %v3858
        %3860 = vmatmul.f32.gmra.mxu0 %v3584
        %v3861 = vpop.f32.mrf.mxu0
        %v3862 = vadd.f32 %v3655, %v3861
        %3863 = vmatmul.f32.gmra.mxu0 %v3585
        %v3864 = vpop.f32.mrf.mxu0
        %v3865 = vadd.f32 %v3660, %v3864
        %3866 = vmatmul.f32.gmra.mxu0 %v3586
        %v3867 = vpop.f32.mrf.mxu0
        %v3868 = vadd.f32 %v3665, %v3867
        %3869 = vmatmul.f32.gmra.mxu0 %v3587
        %v3870 = vpop.f32.mrf.mxu0
        %v3871 = vadd.f32 %v3670, %v3870
        %3872 = vmatmul.f32.gmra.mxu0 %v3588
        %v3873 = vpop.f32.mrf.mxu0
        %v3874 = vadd.f32 %v3675, %v3873
        %3875 = vmatmul.f32.gmra.mxu0 %v3589
        %v3876 = vpop.f32.mrf.mxu0
        %v3877 = vadd.f32 %v3680, %v3876
        %3878 = vmatmul.f32.gmra.mxu0 %v3590
        %v3879 = vpop.f32.mrf.mxu0
        %v3880 = vadd.f32 %v3685, %v3879
        %3881 = vdwg.mxu0
        %3882 = vmatpush.msra.mxu0 %v3574
        %3883 = vmatpush.msra.mxu0 %v3514
        %3884 = vmatpush.msra.mxu0 %v3454
        %3885 = vmatpush.msra.mxu0 %v3394
        %3886 = vmatpush.msra.mxu0 %v3334
        %3887 = vmatpush.msra.mxu0 %v3274
        %3888 = vmatpush.msra.mxu0 %v3214
        %3889 = vmatpush.msra.mxu0 %v3154
        %3890 = vmatpush.msra.mxu0 %v3094
        %3891 = vmatpush.msra.mxu0 %v3034
        %3892 = vmatpush.msra.mxu0 %v2974
        %3893 = vmatpush.msra.mxu0 %v2914
        %3894 = vmatpush.msra.mxu0 %v2854
        %3895 = vmatpush.msra.mxu0 %v2794
        %3896 = vmatpush.msra.mxu0 %v2734
        %3897 = vmatpush.msra.mxu0 %v2674
        %3898 = vmatmul.f32.gmra.mxu0 %v3575
        %v3899 = vpop.f32.mrf.mxu0
        %v3900 = vadd.f32 %v3610, %v3899
        %3901 = vmatmul.f32.gmra.mxu0 %v3576
        %v3902 = vpop.f32.mrf.mxu0
        %v3903 = vadd.f32 %v3615, %v3902
        %3904 = vmatmul.f32.gmra.mxu0 %v3577
        %v3905 = vpop.f32.mrf.mxu0
        %v3906 = vadd.f32 %v3620, %v3905
        %3907 = vmatmul.f32.gmra.mxu0 %v3578
        %v3908 = vpop.f32.mrf.mxu0
        %v3909 = vadd.f32 %v3625, %v3908
        %3910 = vmatmul.f32.gmra.mxu0 %v3579
        %v3911 = vpop.f32.mrf.mxu0
        %v3912 = vadd.f32 %v3630, %v3911
        %3913 = vmatmul.f32.gmra.mxu0 %v3580
        %v3914 = vpop.f32.mrf.mxu0
        %v3915 = vadd.f32 %v3635, %v3914
        %3916 = vmatmul.f32.gmra.mxu0 %v3581
        %v3917 = vpop.f32.mrf.mxu0
        %v3918 = vadd.f32 %v3640, %v3917
        %3919 = vmatmul.f32.gmra.mxu0 %v3582
        %v3920 = vpop.f32.mrf.mxu0
        %v3921 = vadd.f32 %v3645, %v3920
        %3922 = vmatmul.f32.gmra.mxu0 %v3583
        %v3923 = vpop.f32.mrf.mxu0
        %v3924 = vadd.f32 %v3650, %v3923
        %3925 = vmatmul.f32.gmra.mxu0 %v3584
        %v3926 = vpop.f32.mrf.mxu0
        %v3927 = vadd.f32 %v3655, %v3926
        %3928 = vmatmul.f32.gmra.mxu0 %v3585
        %v3929 = vpop.f32.mrf.mxu0
        %v3930 = vadd.f32 %v3660, %v3929
        %3931 = vmatmul.f32.gmra.mxu0 %v3586
        %v3932 = vpop.f32.mrf.mxu0
        %v3933 = vadd.f32 %v3665, %v3932
        %3934 = vmatmul.f32.gmra.mxu0 %v3587
        %v3935 = vpop.f32.mrf.mxu0
        %v3936 = vadd.f32 %v3670, %v3935
        %3937 = vmatmul.f32.gmra.mxu0 %v3588
        %v3938 = vpop.f32.mrf.mxu0
        %v3939 = vadd.f32 %v3675, %v3938
        %3940 = vmatmul.f32.gmra.mxu0 %v3589
        %v3941 = vpop.f32.mrf.mxu0
        %v3942 = vadd.f32 %v3680, %v3941
        %3943 = vmatmul.f32.gmra.mxu0 %v3590
        %v3944 = vpop.f32.mrf.mxu0
        %v3945 = vadd.f32 %v3685, %v3944
        %3946 = vdwg.mxu0
        %v3947 = vsub.f32 0.0, %v3705
        %v3948 = vsub.f32 0.0, %v3770
        %v3949 = vsub.f32 0.0, %v3835
        %v3950 = vsub.f32 0.0, %v3900
        %v3951 = vsub.f32 0.0, %v3708
        %v3952 = vsub.f32 0.0, %v3773
        %v3953 = vsub.f32 0.0, %v3838
        %v3954 = vsub.f32 0.0, %v3903
        %v3955 = vsub.f32 0.0, %v3711
        %v3956 = vsub.f32 0.0, %v3776
        %v3957 = vsub.f32 0.0, %v3841
        %v3958 = vsub.f32 0.0, %v3906
        %v3959 = vsub.f32 0.0, %v3714
        %v3960 = vsub.f32 0.0, %v3779
        %v3961 = vsub.f32 0.0, %v3844
        %v3962 = vsub.f32 0.0, %v3909
        %v3963 = vsub.f32 0.0, %v3717
        %v3964 = vsub.f32 0.0, %v3782
        %v3965 = vsub.f32 0.0, %v3847
        %v3966 = vsub.f32 0.0, %v3912
        %v3967 = vsub.f32 0.0, %v3720
        %v3968 = vsub.f32 0.0, %v3785
        %v3969 = vsub.f32 0.0, %v3850
        %v3970 = vsub.f32 0.0, %v3915
        %v3971 = vsub.f32 0.0, %v3723
        %v3972 = vsub.f32 0.0, %v3788
        %v3973 = vsub.f32 0.0, %v3853
        %v3974 = vsub.f32 0.0, %v3918
        %v3975 = vsub.f32 0.0, %v3726
        %v3976 = vsub.f32 0.0, %v3791
        %v3977 = vsub.f32 0.0, %v3856
        %v3978 = vsub.f32 0.0, %v3921
        %v3979 = vsub.f32 0.0, %v3729
        %v3980 = vsub.f32 0.0, %v3794
        %v3981 = vsub.f32 0.0, %v3859
        %v3982 = vsub.f32 0.0, %v3924
        %v3983 = vsub.f32 0.0, %v3732
        %v3984 = vsub.f32 0.0, %v3797
        %v3985 = vsub.f32 0.0, %v3862
        %v3986 = vsub.f32 0.0, %v3927
        %v3987 = vsub.f32 0.0, %v3735
        %v3988 = vsub.f32 0.0, %v3800
        %v3989 = vsub.f32 0.0, %v3865
        %v3990 = vsub.f32 0.0, %v3930
        %v3991 = vsub.f32 0.0, %v3738
        %v3992 = vsub.f32 0.0, %v3803
        %v3993 = vsub.f32 0.0, %v3868
        %v3994 = vsub.f32 0.0, %v3933
        %v3995 = vsub.f32 0.0, %v3741
        %v3996 = vsub.f32 0.0, %v3806
        %v3997 = vsub.f32 0.0, %v3871
        %v3998 = vsub.f32 0.0, %v3936
        %v3999 = vsub.f32 0.0, %v3744
        %v4000 = vsub.f32 0.0, %v3809
        %v4001 = vsub.f32 0.0, %v3874
        %v4002 = vsub.f32 0.0, %v3939
        %v4003 = vsub.f32 0.0, %v3747
        %v4004 = vsub.f32 0.0, %v3812
        %v4005 = vsub.f32 0.0, %v3877
        %v4006 = vsub.f32 0.0, %v3942
        %v4007 = vsub.f32 0.0, %v3750
        %v4008 = vsub.f32 0.0, %v3815
        %v4009 = vsub.f32 0.0, %v3880
        %v4010 = vsub.f32 0.0, %v3945
        %v4011 = vmul.f32 %v3947, 1.442695
        %v4012 = vpow.pop %v4011
        %v4013 = vmul.f32 %v3948, 1.442695
        %v4014 = vpow.pop %v4013
        %v4015 = vmul.f32 %v3949, 1.442695
        %v4016 = vpow.pop %v4015
        %v4017 = vmul.f32 %v3950, 1.442695
        %v4018 = vpow.pop %v4017
        %v4019 = vmul.f32 %v3951, 1.442695
        %v4020 = vpow.pop %v4019
        %v4021 = vmul.f32 %v3952, 1.442695
        %v4022 = vpow.pop %v4021
        %v4023 = vmul.f32 %v3953, 1.442695
        %v4024 = vpow.pop %v4023
        %v4025 = vmul.f32 %v3954, 1.442695
        %v4026 = vpow.pop %v4025
        %v4027 = vmul.f32 %v3955, 1.442695
        %v4028 = vpow.pop %v4027
        %v4029 = vmul.f32 %v3956, 1.442695
        %v4030 = vpow.pop %v4029
        %v4031 = vmul.f32 %v3957, 1.442695
        %v4032 = vpow.pop %v4031
        %v4033 = vmul.f32 %v3958, 1.442695
        %v4034 = vpow.pop %v4033
        %v4035 = vmul.f32 %v3959, 1.442695
        %v4036 = vpow.pop %v4035
        %v4037 = vmul.f32 %v3960, 1.442695
        %v4038 = vpow.pop %v4037
        %v4039 = vmul.f32 %v3961, 1.442695
        %v4040 = vpow.pop %v4039
        %v4041 = vmul.f32 %v3962, 1.442695
        %v4042 = vpow.pop %v4041
        %v4043 = vmul.f32 %v3963, 1.442695
        %v4044 = vpow.pop %v4043
        %v4045 = vmul.f32 %v3964, 1.442695
        %v4046 = vpow.pop %v4045
        %v4047 = vmul.f32 %v3965, 1.442695
        %v4048 = vpow.pop %v4047
        %v4049 = vmul.f32 %v3966, 1.442695
        %v4050 = vpow.pop %v4049
        %v4051 = vmul.f32 %v3967, 1.442695
        %v4052 = vpow.pop %v4051
        %v4053 = vmul.f32 %v3968, 1.442695
        %v4054 = vpow.pop %v4053
        %v4055 = vmul.f32 %v3969, 1.442695
        %v4056 = vpow.pop %v4055
        %v4057 = vmul.f32 %v3970, 1.442695
        %v4058 = vpow.pop %v4057
        %v4059 = vmul.f32 %v3971, 1.442695
        %v4060 = vpow.pop %v4059
        %v4061 = vmul.f32 %v3972, 1.442695
        %v4062 = vpow.pop %v4061
        %v4063 = vmul.f32 %v3973, 1.442695
        %v4064 = vpow.pop %v4063
        %v4065 = vmul.f32 %v3974, 1.442695
        %v4066 = vpow.pop %v4065
        %v4067 = vmul.f32 %v3975, 1.442695
        %v4068 = vpow.pop %v4067
        %v4069 = vmul.f32 %v3976, 1.442695
        %v4070 = vpow.pop %v4069
        %v4071 = vmul.f32 %v3977, 1.442695
        %v4072 = vpow.pop %v4071
        %v4073 = vmul.f32 %v3978, 1.442695
        %v4074 = vpow.pop %v4073
        %v4075 = vmul.f32 %v3979, 1.442695
        %v4076 = vpow.pop %v4075
        %v4077 = vmul.f32 %v3980, 1.442695
        %v4078 = vpow.pop %v4077
        %v4079 = vmul.f32 %v3981, 1.442695
        %v4080 = vpow.pop %v4079
        %v4081 = vmul.f32 %v3982, 1.442695
        %v4082 = vpow.pop %v4081
        %v4083 = vmul.f32 %v3983, 1.442695
        %v4084 = vpow.pop %v4083
        %v4085 = vmul.f32 %v3984, 1.442695
        %v4086 = vpow.pop %v4085
        %v4087 = vmul.f32 %v3985, 1.442695
        %v4088 = vpow.pop %v4087
        %v4089 = vmul.f32 %v3986, 1.442695
        %v4090 = vpow.pop %v4089
        %v4091 = vmul.f32 %v3987, 1.442695
        %v4092 = vpow.pop %v4091
        %v4093 = vmul.f32 %v3988, 1.442695
        %v4094 = vpow.pop %v4093
        %v4095 = vmul.f32 %v3989, 1.442695
        %v4096 = vpow.pop %v4095
        %v4097 = vmul.f32 %v3990, 1.442695
        %v4098 = vpow.pop %v4097
        %v4099 = vmul.f32 %v3991, 1.442695
        %v4100 = vpow.pop %v4099
        %v4101 = vmul.f32 %v3992, 1.442695
        %v4102 = vpow.pop %v4101
        %v4103 = vmul.f32 %v3993, 1.442695
        %v4104 = vpow.pop %v4103
        %v4105 = vmul.f32 %v3994, 1.442695
        %v4106 = vpow.pop %v4105
        %v4107 = vmul.f32 %v3995, 1.442695
        %v4108 = vpow.pop %v4107
        %v4109 = vmul.f32 %v3996, 1.442695
        %v4110 = vpow.pop %v4109
        %v4111 = vmul.f32 %v3997, 1.442695
        %v4112 = vpow.pop %v4111
        %v4113 = vmul.f32 %v3998, 1.442695
        %v4114 = vpow.pop %v4113
        %v4115 = vmul.f32 %v3999, 1.442695
        %v4116 = vpow.pop %v4115
        %v4117 = vmul.f32 %v4000, 1.442695
        %v4118 = vpow.pop %v4117
        %v4119 = vmul.f32 %v4001, 1.442695
        %v4120 = vpow.pop %v4119
        %v4121 = vmul.f32 %v4002, 1.442695
        %v4122 = vpow.pop %v4121
        %v4123 = vmul.f32 %v4003, 1.442695
        %v4124 = vpow.pop %v4123
        %v4125 = vmul.f32 %v4004, 1.442695
        %v4126 = vpow.pop %v4125
        %v4127 = vmul.f32 %v4005, 1.442695
        %v4128 = vpow.pop %v4127
        %v4129 = vmul.f32 %v4006, 1.442695
        %v4130 = vpow.pop %v4129
        %v4131 = vmul.f32 %v4007, 1.442695
        %v4132 = vpow.pop %v4131
        %v4133 = vmul.f32 %v4008, 1.442695
        %v4134 = vpow.pop %v4133
        %v4135 = vmul.f32 %v4009, 1.442695
        %v4136 = vpow.pop %v4135
        %v4137 = vmul.f32 %v4010, 1.442695
        %v4138 = vpow.pop %v4137
        %v4139 = vadd.f32 %v4012, 1.0
        %v4140 = vadd.f32 %v4014, 1.0
        %v4141 = vadd.f32 %v4016, 1.0
        %v4142 = vadd.f32 %v4018, 1.0
        %v4143 = vadd.f32 %v4020, 1.0
        %v4144 = vadd.f32 %v4022, 1.0
        %v4145 = vadd.f32 %v4024, 1.0
        %v4146 = vadd.f32 %v4026, 1.0
        %v4147 = vadd.f32 %v4028, 1.0
        %v4148 = vadd.f32 %v4030, 1.0
        %v4149 = vadd.f32 %v4032, 1.0
        %v4150 = vadd.f32 %v4034, 1.0
        %v4151 = vadd.f32 %v4036, 1.0
        %v4152 = vadd.f32 %v4038, 1.0
        %v4153 = vadd.f32 %v4040, 1.0
        %v4154 = vadd.f32 %v4042, 1.0
        %v4155 = vadd.f32 %v4044, 1.0
        %v4156 = vadd.f32 %v4046, 1.0
        %v4157 = vadd.f32 %v4048, 1.0
        %v4158 = vadd.f32 %v4050, 1.0
        %v4159 = vadd.f32 %v4052, 1.0
        %v4160 = vadd.f32 %v4054, 1.0
        %v4161 = vadd.f32 %v4056, 1.0
        %v4162 = vadd.f32 %v4058, 1.0
        %v4163 = vadd.f32 %v4060, 1.0
        %v4164 = vadd.f32 %v4062, 1.0
        %v4165 = vadd.f32 %v4064, 1.0
        %v4166 = vadd.f32 %v4066, 1.0
        %v4167 = vadd.f32 %v4068, 1.0
        %v4168 = vadd.f32 %v4070, 1.0
        %v4169 = vadd.f32 %v4072, 1.0
        %v4170 = vadd.f32 %v4074, 1.0
        %v4171 = vadd.f32 %v4076, 1.0
        %v4172 = vadd.f32 %v4078, 1.0
        %v4173 = vadd.f32 %v4080, 1.0
        %v4174 = vadd.f32 %v4082, 1.0
        %v4175 = vadd.f32 %v4084, 1.0
        %v4176 = vadd.f32 %v4086, 1.0
        %v4177 = vadd.f32 %v4088, 1.0
        %v4178 = vadd.f32 %v4090, 1.0
        %v4179 = vadd.f32 %v4092, 1.0
        %v4180 = vadd.f32 %v4094, 1.0
        %v4181 = vadd.f32 %v4096, 1.0
        %v4182 = vadd.f32 %v4098, 1.0
        %v4183 = vadd.f32 %v4100, 1.0
        %v4184 = vadd.f32 %v4102, 1.0
        %v4185 = vadd.f32 %v4104, 1.0
        %v4186 = vadd.f32 %v4106, 1.0
        %v4187 = vadd.f32 %v4108, 1.0
        %v4188 = vadd.f32 %v4110, 1.0
        %v4189 = vadd.f32 %v4112, 1.0
        %v4190 = vadd.f32 %v4114, 1.0
        %v4191 = vadd.f32 %v4116, 1.0
        %v4192 = vadd.f32 %v4118, 1.0
        %v4193 = vadd.f32 %v4120, 1.0
        %v4194 = vadd.f32 %v4122, 1.0
        %v4195 = vadd.f32 %v4124, 1.0
        %v4196 = vadd.f32 %v4126, 1.0
        %v4197 = vadd.f32 %v4128, 1.0
        %v4198 = vadd.f32 %v4130, 1.0
        %v4199 = vadd.f32 %v4132, 1.0
        %v4200 = vadd.f32 %v4134, 1.0
        %v4201 = vadd.f32 %v4136, 1.0
        %v4202 = vadd.f32 %v4138, 1.0
        %v4203 = vrcp.pop %v4139
        %v4204 = vmul.f32 %v4139, %v4203
        %v4205 = vsub.f32 1.0, %v4204
        %v4206 = vmul.f32 %v4203, %v4205
        %v4207 = vadd.f32 %v4203, %v4206
        %vm4208 = vweird.f32 %v4139
        %vm4209 = vweird.f32 %v4203
        %vm4210 = vmor %vm4208, %vm4209
        %v4211 = vsel %vm4210, %v4203, %v4207
        %v4212 = vand.u32 2147483647, %v4139
        %vm4213 = vcmp.eq.f32.partialorder %v4212, 8.507059e+37
        %v4214 = vand.u32 %v4139, 2147483648
        %v4215 = vor.u32 1.1754944e-38, %v4214
        %v4216 = vsel %vm4213, %v4215, %v4211
        %v4217 = vmul.f32 1.0, %v4216
        %v4218 = vrcp.pop %v4140
        %v4219 = vmul.f32 %v4140, %v4218
        %v4220 = vsub.f32 1.0, %v4219
        %v4221 = vmul.f32 %v4218, %v4220
        %v4222 = vadd.f32 %v4218, %v4221
        %vm4223 = vweird.f32 %v4140
        %vm4224 = vweird.f32 %v4218
        %vm4225 = vmor %vm4223, %vm4224
        %v4226 = vsel %vm4225, %v4218, %v4222
        %v4227 = vand.u32 2147483647, %v4140
        %vm4228 = vcmp.eq.f32.partialorder %v4227, 8.507059e+37
        %v4229 = vand.u32 %v4140, 2147483648
        %v4230 = vor.u32 1.1754944e-38, %v4229
        %v4231 = vsel %vm4228, %v4230, %v4226
        %v4232 = vmul.f32 1.0, %v4231
        %v4233 = vrcp.pop %v4141
        %v4234 = vmul.f32 %v4141, %v4233
        %v4235 = vsub.f32 1.0, %v4234
        %v4236 = vmul.f32 %v4233, %v4235
        %v4237 = vadd.f32 %v4233, %v4236
        %vm4238 = vweird.f32 %v4141
        %vm4239 = vweird.f32 %v4233
        %vm4240 = vmor %vm4238, %vm4239
        %v4241 = vsel %vm4240, %v4233, %v4237
        %v4242 = vand.u32 2147483647, %v4141
        %vm4243 = vcmp.eq.f32.partialorder %v4242, 8.507059e+37
        %v4244 = vand.u32 %v4141, 2147483648
        %v4245 = vor.u32 1.1754944e-38, %v4244
        %v4246 = vsel %vm4243, %v4245, %v4241
        %v4247 = vmul.f32 1.0, %v4246
        %v4248 = vrcp.pop %v4142
        %v4249 = vmul.f32 %v4142, %v4248
        %v4250 = vsub.f32 1.0, %v4249
        %v4251 = vmul.f32 %v4248, %v4250
        %v4252 = vadd.f32 %v4248, %v4251
        %vm4253 = vweird.f32 %v4142
        %vm4254 = vweird.f32 %v4248
        %vm4255 = vmor %vm4253, %vm4254
        %v4256 = vsel %vm4255, %v4248, %v4252
        %v4257 = vand.u32 2147483647, %v4142
        %vm4258 = vcmp.eq.f32.partialorder %v4257, 8.507059e+37
        %v4259 = vand.u32 %v4142, 2147483648
        %v4260 = vor.u32 1.1754944e-38, %v4259
        %v4261 = vsel %vm4258, %v4260, %v4256
        %v4262 = vmul.f32 1.0, %v4261
        %v4263 = vrcp.pop %v4143
        %v4264 = vmul.f32 %v4143, %v4263
        %v4265 = vsub.f32 1.0, %v4264
        %v4266 = vmul.f32 %v4263, %v4265
        %v4267 = vadd.f32 %v4263, %v4266
        %vm4268 = vweird.f32 %v4143
        %vm4269 = vweird.f32 %v4263
        %vm4270 = vmor %vm4268, %vm4269
        %v4271 = vsel %vm4270, %v4263, %v4267
        %v4272 = vand.u32 2147483647, %v4143
        %vm4273 = vcmp.eq.f32.partialorder %v4272, 8.507059e+37
        %v4274 = vand.u32 %v4143, 2147483648
        %v4275 = vor.u32 1.1754944e-38, %v4274
        %v4276 = vsel %vm4273, %v4275, %v4271
        %v4277 = vmul.f32 1.0, %v4276
        %v4278 = vrcp.pop %v4144
        %v4279 = vmul.f32 %v4144, %v4278
        %v4280 = vsub.f32 1.0, %v4279
        %v4281 = vmul.f32 %v4278, %v4280
        %v4282 = vadd.f32 %v4278, %v4281
        %vm4283 = vweird.f32 %v4144
        %vm4284 = vweird.f32 %v4278
        %vm4285 = vmor %vm4283, %vm4284
        %v4286 = vsel %vm4285, %v4278, %v4282
        %v4287 = vand.u32 2147483647, %v4144
        %vm4288 = vcmp.eq.f32.partialorder %v4287, 8.507059e+37
        %v4289 = vand.u32 %v4144, 2147483648
        %v4290 = vor.u32 1.1754944e-38, %v4289
        %v4291 = vsel %vm4288, %v4290, %v4286
        %v4292 = vmul.f32 1.0, %v4291
        %v4293 = vrcp.pop %v4145
        %v4294 = vmul.f32 %v4145, %v4293
        %v4295 = vsub.f32 1.0, %v4294
        %v4296 = vmul.f32 %v4293, %v4295
        %v4297 = vadd.f32 %v4293, %v4296
        %vm4298 = vweird.f32 %v4145
        %vm4299 = vweird.f32 %v4293
        %vm4300 = vmor %vm4298, %vm4299
        %v4301 = vsel %vm4300, %v4293, %v4297
        %v4302 = vand.u32 2147483647, %v4145
        %vm4303 = vcmp.eq.f32.partialorder %v4302, 8.507059e+37
        %v4304 = vand.u32 %v4145, 2147483648
        %v4305 = vor.u32 1.1754944e-38, %v4304
        %v4306 = vsel %vm4303, %v4305, %v4301
        %v4307 = vmul.f32 1.0, %v4306
        %v4308 = vrcp.pop %v4146
        %v4309 = vmul.f32 %v4146, %v4308
        %v4310 = vsub.f32 1.0, %v4309
        %v4311 = vmul.f32 %v4308, %v4310
        %v4312 = vadd.f32 %v4308, %v4311
        %vm4313 = vweird.f32 %v4146
        %vm4314 = vweird.f32 %v4308
        %vm4315 = vmor %vm4313, %vm4314
        %v4316 = vsel %vm4315, %v4308, %v4312
        %v4317 = vand.u32 2147483647, %v4146
        %vm4318 = vcmp.eq.f32.partialorder %v4317, 8.507059e+37
        %v4319 = vand.u32 %v4146, 2147483648
        %v4320 = vor.u32 1.1754944e-38, %v4319
        %v4321 = vsel %vm4318, %v4320, %v4316
        %v4322 = vmul.f32 1.0, %v4321
        %v4323 = vrcp.pop %v4147
        %v4324 = vmul.f32 %v4147, %v4323
        %v4325 = vsub.f32 1.0, %v4324
        %v4326 = vmul.f32 %v4323, %v4325
        %v4327 = vadd.f32 %v4323, %v4326
        %vm4328 = vweird.f32 %v4147
        %vm4329 = vweird.f32 %v4323
        %vm4330 = vmor %vm4328, %vm4329
        %v4331 = vsel %vm4330, %v4323, %v4327
        %v4332 = vand.u32 2147483647, %v4147
        %vm4333 = vcmp.eq.f32.partialorder %v4332, 8.507059e+37
        %v4334 = vand.u32 %v4147, 2147483648
        %v4335 = vor.u32 1.1754944e-38, %v4334
        %v4336 = vsel %vm4333, %v4335, %v4331
        %v4337 = vmul.f32 1.0, %v4336
        %v4338 = vrcp.pop %v4148
        %v4339 = vmul.f32 %v4148, %v4338
        %v4340 = vsub.f32 1.0, %v4339
        %v4341 = vmul.f32 %v4338, %v4340
        %v4342 = vadd.f32 %v4338, %v4341
        %vm4343 = vweird.f32 %v4148
        %vm4344 = vweird.f32 %v4338
        %vm4345 = vmor %vm4343, %vm4344
        %v4346 = vsel %vm4345, %v4338, %v4342
        %v4347 = vand.u32 2147483647, %v4148
        %vm4348 = vcmp.eq.f32.partialorder %v4347, 8.507059e+37
        %v4349 = vand.u32 %v4148, 2147483648
        %v4350 = vor.u32 1.1754944e-38, %v4349
        %v4351 = vsel %vm4348, %v4350, %v4346
        %v4352 = vmul.f32 1.0, %v4351
        %v4353 = vrcp.pop %v4149
        %v4354 = vmul.f32 %v4149, %v4353
        %v4355 = vsub.f32 1.0, %v4354
        %v4356 = vmul.f32 %v4353, %v4355
        %v4357 = vadd.f32 %v4353, %v4356
        %vm4358 = vweird.f32 %v4149
        %vm4359 = vweird.f32 %v4353
        %vm4360 = vmor %vm4358, %vm4359
        %v4361 = vsel %vm4360, %v4353, %v4357
        %v4362 = vand.u32 2147483647, %v4149
        %vm4363 = vcmp.eq.f32.partialorder %v4362, 8.507059e+37
        %v4364 = vand.u32 %v4149, 2147483648
        %v4365 = vor.u32 1.1754944e-38, %v4364
        %v4366 = vsel %vm4363, %v4365, %v4361
        %v4367 = vmul.f32 1.0, %v4366
        %v4368 = vrcp.pop %v4150
        %v4369 = vmul.f32 %v4150, %v4368
        %v4370 = vsub.f32 1.0, %v4369
        %v4371 = vmul.f32 %v4368, %v4370
        %v4372 = vadd.f32 %v4368, %v4371
        %vm4373 = vweird.f32 %v4150
        %vm4374 = vweird.f32 %v4368
        %vm4375 = vmor %vm4373, %vm4374
        %v4376 = vsel %vm4375, %v4368, %v4372
        %v4377 = vand.u32 2147483647, %v4150
        %vm4378 = vcmp.eq.f32.partialorder %v4377, 8.507059e+37
        %v4379 = vand.u32 %v4150, 2147483648
        %v4380 = vor.u32 1.1754944e-38, %v4379
        %v4381 = vsel %vm4378, %v4380, %v4376
        %v4382 = vmul.f32 1.0, %v4381
        %v4383 = vrcp.pop %v4151
        %v4384 = vmul.f32 %v4151, %v4383
        %v4385 = vsub.f32 1.0, %v4384
        %v4386 = vmul.f32 %v4383, %v4385
        %v4387 = vadd.f32 %v4383, %v4386
        %vm4388 = vweird.f32 %v4151
        %vm4389 = vweird.f32 %v4383
        %vm4390 = vmor %vm4388, %vm4389
        %v4391 = vsel %vm4390, %v4383, %v4387
        %v4392 = vand.u32 2147483647, %v4151
        %vm4393 = vcmp.eq.f32.partialorder %v4392, 8.507059e+37
        %v4394 = vand.u32 %v4151, 2147483648
        %v4395 = vor.u32 1.1754944e-38, %v4394
        %v4396 = vsel %vm4393, %v4395, %v4391
        %v4397 = vmul.f32 1.0, %v4396
        %v4398 = vrcp.pop %v4152
        %v4399 = vmul.f32 %v4152, %v4398
        %v4400 = vsub.f32 1.0, %v4399
        %v4401 = vmul.f32 %v4398, %v4400
        %v4402 = vadd.f32 %v4398, %v4401
        %vm4403 = vweird.f32 %v4152
        %vm4404 = vweird.f32 %v4398
        %vm4405 = vmor %vm4403, %vm4404
        %v4406 = vsel %vm4405, %v4398, %v4402
        %v4407 = vand.u32 2147483647, %v4152
        %vm4408 = vcmp.eq.f32.partialorder %v4407, 8.507059e+37
        %v4409 = vand.u32 %v4152, 2147483648
        %v4410 = vor.u32 1.1754944e-38, %v4409
        %v4411 = vsel %vm4408, %v4410, %v4406
        %v4412 = vmul.f32 1.0, %v4411
        %v4413 = vrcp.pop %v4153
        %v4414 = vmul.f32 %v4153, %v4413
        %v4415 = vsub.f32 1.0, %v4414
        %v4416 = vmul.f32 %v4413, %v4415
        %v4417 = vadd.f32 %v4413, %v4416
        %vm4418 = vweird.f32 %v4153
        %vm4419 = vweird.f32 %v4413
        %vm4420 = vmor %vm4418, %vm4419
        %v4421 = vsel %vm4420, %v4413, %v4417
        %v4422 = vand.u32 2147483647, %v4153
        %vm4423 = vcmp.eq.f32.partialorder %v4422, 8.507059e+37
        %v4424 = vand.u32 %v4153, 2147483648
        %v4425 = vor.u32 1.1754944e-38, %v4424
        %v4426 = vsel %vm4423, %v4425, %v4421
        %v4427 = vmul.f32 1.0, %v4426
        %v4428 = vrcp.pop %v4154
        %v4429 = vmul.f32 %v4154, %v4428
        %v4430 = vsub.f32 1.0, %v4429
        %v4431 = vmul.f32 %v4428, %v4430
        %v4432 = vadd.f32 %v4428, %v4431
        %vm4433 = vweird.f32 %v4154
        %vm4434 = vweird.f32 %v4428
        %vm4435 = vmor %vm4433, %vm4434
        %v4436 = vsel %vm4435, %v4428, %v4432
        %v4437 = vand.u32 2147483647, %v4154
        %vm4438 = vcmp.eq.f32.partialorder %v4437, 8.507059e+37
        %v4439 = vand.u32 %v4154, 2147483648
        %v4440 = vor.u32 1.1754944e-38, %v4439
        %v4441 = vsel %vm4438, %v4440, %v4436
        %v4442 = vmul.f32 1.0, %v4441
        %v4443 = vrcp.pop %v4155
        %v4444 = vmul.f32 %v4155, %v4443
        %v4445 = vsub.f32 1.0, %v4444
        %v4446 = vmul.f32 %v4443, %v4445
        %v4447 = vadd.f32 %v4443, %v4446
        %vm4448 = vweird.f32 %v4155
        %vm4449 = vweird.f32 %v4443
        %vm4450 = vmor %vm4448, %vm4449
        %v4451 = vsel %vm4450, %v4443, %v4447
        %v4452 = vand.u32 2147483647, %v4155
        %vm4453 = vcmp.eq.f32.partialorder %v4452, 8.507059e+37
        %v4454 = vand.u32 %v4155, 2147483648
        %v4455 = vor.u32 1.1754944e-38, %v4454
        %v4456 = vsel %vm4453, %v4455, %v4451
        %v4457 = vmul.f32 1.0, %v4456
        %v4458 = vrcp.pop %v4156
        %v4459 = vmul.f32 %v4156, %v4458
        %v4460 = vsub.f32 1.0, %v4459
        %v4461 = vmul.f32 %v4458, %v4460
        %v4462 = vadd.f32 %v4458, %v4461
        %vm4463 = vweird.f32 %v4156
        %vm4464 = vweird.f32 %v4458
        %vm4465 = vmor %vm4463, %vm4464
        %v4466 = vsel %vm4465, %v4458, %v4462
        %v4467 = vand.u32 2147483647, %v4156
        %vm4468 = vcmp.eq.f32.partialorder %v4467, 8.507059e+37
        %v4469 = vand.u32 %v4156, 2147483648
        %v4470 = vor.u32 1.1754944e-38, %v4469
        %v4471 = vsel %vm4468, %v4470, %v4466
        %v4472 = vmul.f32 1.0, %v4471
        %v4473 = vrcp.pop %v4157
        %v4474 = vmul.f32 %v4157, %v4473
        %v4475 = vsub.f32 1.0, %v4474
        %v4476 = vmul.f32 %v4473, %v4475
        %v4477 = vadd.f32 %v4473, %v4476
        %vm4478 = vweird.f32 %v4157
        %vm4479 = vweird.f32 %v4473
        %vm4480 = vmor %vm4478, %vm4479
        %v4481 = vsel %vm4480, %v4473, %v4477
        %v4482 = vand.u32 2147483647, %v4157
        %vm4483 = vcmp.eq.f32.partialorder %v4482, 8.507059e+37
        %v4484 = vand.u32 %v4157, 2147483648
        %v4485 = vor.u32 1.1754944e-38, %v4484
        %v4486 = vsel %vm4483, %v4485, %v4481
        %v4487 = vmul.f32 1.0, %v4486
        %v4488 = vrcp.pop %v4158
        %v4489 = vmul.f32 %v4158, %v4488
        %v4490 = vsub.f32 1.0, %v4489
        %v4491 = vmul.f32 %v4488, %v4490
        %v4492 = vadd.f32 %v4488, %v4491
        %vm4493 = vweird.f32 %v4158
        %vm4494 = vweird.f32 %v4488
        %vm4495 = vmor %vm4493, %vm4494
        %v4496 = vsel %vm4495, %v4488, %v4492
        %v4497 = vand.u32 2147483647, %v4158
        %vm4498 = vcmp.eq.f32.partialorder %v4497, 8.507059e+37
        %v4499 = vand.u32 %v4158, 2147483648
        %v4500 = vor.u32 1.1754944e-38, %v4499
        %v4501 = vsel %vm4498, %v4500, %v4496
        %v4502 = vmul.f32 1.0, %v4501
        %v4503 = vrcp.pop %v4159
        %v4504 = vmul.f32 %v4159, %v4503
        %v4505 = vsub.f32 1.0, %v4504
        %v4506 = vmul.f32 %v4503, %v4505
        %v4507 = vadd.f32 %v4503, %v4506
        %vm4508 = vweird.f32 %v4159
        %vm4509 = vweird.f32 %v4503
        %vm4510 = vmor %vm4508, %vm4509
        %v4511 = vsel %vm4510, %v4503, %v4507
        %v4512 = vand.u32 2147483647, %v4159
        %vm4513 = vcmp.eq.f32.partialorder %v4512, 8.507059e+37
        %v4514 = vand.u32 %v4159, 2147483648
        %v4515 = vor.u32 1.1754944e-38, %v4514
        %v4516 = vsel %vm4513, %v4515, %v4511
        %v4517 = vmul.f32 1.0, %v4516
        %v4518 = vrcp.pop %v4160
        %v4519 = vmul.f32 %v4160, %v4518
        %v4520 = vsub.f32 1.0, %v4519
        %v4521 = vmul.f32 %v4518, %v4520
        %v4522 = vadd.f32 %v4518, %v4521
        %vm4523 = vweird.f32 %v4160
        %vm4524 = vweird.f32 %v4518
        %vm4525 = vmor %vm4523, %vm4524
        %v4526 = vsel %vm4525, %v4518, %v4522
        %v4527 = vand.u32 2147483647, %v4160
        %vm4528 = vcmp.eq.f32.partialorder %v4527, 8.507059e+37
        %v4529 = vand.u32 %v4160, 2147483648
        %v4530 = vor.u32 1.1754944e-38, %v4529
        %v4531 = vsel %vm4528, %v4530, %v4526
        %v4532 = vmul.f32 1.0, %v4531
        %v4533 = vrcp.pop %v4161
        %v4534 = vmul.f32 %v4161, %v4533
        %v4535 = vsub.f32 1.0, %v4534
        %v4536 = vmul.f32 %v4533, %v4535
        %v4537 = vadd.f32 %v4533, %v4536
        %vm4538 = vweird.f32 %v4161
        %vm4539 = vweird.f32 %v4533
        %vm4540 = vmor %vm4538, %vm4539
        %v4541 = vsel %vm4540, %v4533, %v4537
        %v4542 = vand.u32 2147483647, %v4161
        %vm4543 = vcmp.eq.f32.partialorder %v4542, 8.507059e+37
        %v4544 = vand.u32 %v4161, 2147483648
        %v4545 = vor.u32 1.1754944e-38, %v4544
        %v4546 = vsel %vm4543, %v4545, %v4541
        %v4547 = vmul.f32 1.0, %v4546
        %v4548 = vrcp.pop %v4162
        %v4549 = vmul.f32 %v4162, %v4548
        %v4550 = vsub.f32 1.0, %v4549
        %v4551 = vmul.f32 %v4548, %v4550
        %v4552 = vadd.f32 %v4548, %v4551
        %vm4553 = vweird.f32 %v4162
        %vm4554 = vweird.f32 %v4548
        %vm4555 = vmor %vm4553, %vm4554
        %v4556 = vsel %vm4555, %v4548, %v4552
        %v4557 = vand.u32 2147483647, %v4162
        %vm4558 = vcmp.eq.f32.partialorder %v4557, 8.507059e+37
        %v4559 = vand.u32 %v4162, 2147483648
        %v4560 = vor.u32 1.1754944e-38, %v4559
        %v4561 = vsel %vm4558, %v4560, %v4556
        %v4562 = vmul.f32 1.0, %v4561
        %v4563 = vrcp.pop %v4163
        %v4564 = vmul.f32 %v4163, %v4563
        %v4565 = vsub.f32 1.0, %v4564
        %v4566 = vmul.f32 %v4563, %v4565
        %v4567 = vadd.f32 %v4563, %v4566
        %vm4568 = vweird.f32 %v4163
        %vm4569 = vweird.f32 %v4563
        %vm4570 = vmor %vm4568, %vm4569
        %v4571 = vsel %vm4570, %v4563, %v4567
        %v4572 = vand.u32 2147483647, %v4163
        %vm4573 = vcmp.eq.f32.partialorder %v4572, 8.507059e+37
        %v4574 = vand.u32 %v4163, 2147483648
        %v4575 = vor.u32 1.1754944e-38, %v4574
        %v4576 = vsel %vm4573, %v4575, %v4571
        %v4577 = vmul.f32 1.0, %v4576
        %v4578 = vrcp.pop %v4164
        %v4579 = vmul.f32 %v4164, %v4578
        %v4580 = vsub.f32 1.0, %v4579
        %v4581 = vmul.f32 %v4578, %v4580
        %v4582 = vadd.f32 %v4578, %v4581
        %vm4583 = vweird.f32 %v4164
        %vm4584 = vweird.f32 %v4578
        %vm4585 = vmor %vm4583, %vm4584
        %v4586 = vsel %vm4585, %v4578, %v4582
        %v4587 = vand.u32 2147483647, %v4164
        %vm4588 = vcmp.eq.f32.partialorder %v4587, 8.507059e+37
        %v4589 = vand.u32 %v4164, 2147483648
        %v4590 = vor.u32 1.1754944e-38, %v4589
        %v4591 = vsel %vm4588, %v4590, %v4586
        %v4592 = vmul.f32 1.0, %v4591
        %v4593 = vrcp.pop %v4165
        %v4594 = vmul.f32 %v4165, %v4593
        %v4595 = vsub.f32 1.0, %v4594
        %v4596 = vmul.f32 %v4593, %v4595
        %v4597 = vadd.f32 %v4593, %v4596
        %vm4598 = vweird.f32 %v4165
        %vm4599 = vweird.f32 %v4593
        %vm4600 = vmor %vm4598, %vm4599
        %v4601 = vsel %vm4600, %v4593, %v4597
        %v4602 = vand.u32 2147483647, %v4165
        %vm4603 = vcmp.eq.f32.partialorder %v4602, 8.507059e+37
        %v4604 = vand.u32 %v4165, 2147483648
        %v4605 = vor.u32 1.1754944e-38, %v4604
        %v4606 = vsel %vm4603, %v4605, %v4601
        %v4607 = vmul.f32 1.0, %v4606
        %v4608 = vrcp.pop %v4166
        %v4609 = vmul.f32 %v4166, %v4608
        %v4610 = vsub.f32 1.0, %v4609
        %v4611 = vmul.f32 %v4608, %v4610
        %v4612 = vadd.f32 %v4608, %v4611
        %vm4613 = vweird.f32 %v4166
        %vm4614 = vweird.f32 %v4608
        %vm4615 = vmor %vm4613, %vm4614
        %v4616 = vsel %vm4615, %v4608, %v4612
        %v4617 = vand.u32 2147483647, %v4166
        %vm4618 = vcmp.eq.f32.partialorder %v4617, 8.507059e+37
        %v4619 = vand.u32 %v4166, 2147483648
        %v4620 = vor.u32 1.1754944e-38, %v4619
        %v4621 = vsel %vm4618, %v4620, %v4616
        %v4622 = vmul.f32 1.0, %v4621
        %v4623 = vrcp.pop %v4167
        %v4624 = vmul.f32 %v4167, %v4623
        %v4625 = vsub.f32 1.0, %v4624
        %v4626 = vmul.f32 %v4623, %v4625
        %v4627 = vadd.f32 %v4623, %v4626
        %vm4628 = vweird.f32 %v4167
        %vm4629 = vweird.f32 %v4623
        %vm4630 = vmor %vm4628, %vm4629
        %v4631 = vsel %vm4630, %v4623, %v4627
        %v4632 = vand.u32 2147483647, %v4167
        %vm4633 = vcmp.eq.f32.partialorder %v4632, 8.507059e+37
        %v4634 = vand.u32 %v4167, 2147483648
        %v4635 = vor.u32 1.1754944e-38, %v4634
        %v4636 = vsel %vm4633, %v4635, %v4631
        %v4637 = vmul.f32 1.0, %v4636
        %v4638 = vrcp.pop %v4168
        %v4639 = vmul.f32 %v4168, %v4638
        %v4640 = vsub.f32 1.0, %v4639
        %v4641 = vmul.f32 %v4638, %v4640
        %v4642 = vadd.f32 %v4638, %v4641
        %vm4643 = vweird.f32 %v4168
        %vm4644 = vweird.f32 %v4638
        %vm4645 = vmor %vm4643, %vm4644
        %v4646 = vsel %vm4645, %v4638, %v4642
        %v4647 = vand.u32 2147483647, %v4168
        %vm4648 = vcmp.eq.f32.partialorder %v4647, 8.507059e+37
        %v4649 = vand.u32 %v4168, 2147483648
        %v4650 = vor.u32 1.1754944e-38, %v4649
        %v4651 = vsel %vm4648, %v4650, %v4646
        %v4652 = vmul.f32 1.0, %v4651
        %v4653 = vrcp.pop %v4169
        %v4654 = vmul.f32 %v4169, %v4653
        %v4655 = vsub.f32 1.0, %v4654
        %v4656 = vmul.f32 %v4653, %v4655
        %v4657 = vadd.f32 %v4653, %v4656
        %vm4658 = vweird.f32 %v4169
        %vm4659 = vweird.f32 %v4653
        %vm4660 = vmor %vm4658, %vm4659
        %v4661 = vsel %vm4660, %v4653, %v4657
        %v4662 = vand.u32 2147483647, %v4169
        %vm4663 = vcmp.eq.f32.partialorder %v4662, 8.507059e+37
        %v4664 = vand.u32 %v4169, 2147483648
        %v4665 = vor.u32 1.1754944e-38, %v4664
        %v4666 = vsel %vm4663, %v4665, %v4661
        %v4667 = vmul.f32 1.0, %v4666
        %v4668 = vrcp.pop %v4170
        %v4669 = vmul.f32 %v4170, %v4668
        %v4670 = vsub.f32 1.0, %v4669
        %v4671 = vmul.f32 %v4668, %v4670
        %v4672 = vadd.f32 %v4668, %v4671
        %vm4673 = vweird.f32 %v4170
        %vm4674 = vweird.f32 %v4668
        %vm4675 = vmor %vm4673, %vm4674
        %v4676 = vsel %vm4675, %v4668, %v4672
        %v4677 = vand.u32 2147483647, %v4170
        %vm4678 = vcmp.eq.f32.partialorder %v4677, 8.507059e+37
        %v4679 = vand.u32 %v4170, 2147483648
        %v4680 = vor.u32 1.1754944e-38, %v4679
        %v4681 = vsel %vm4678, %v4680, %v4676
        %v4682 = vmul.f32 1.0, %v4681
        %v4683 = vrcp.pop %v4171
        %v4684 = vmul.f32 %v4171, %v4683
        %v4685 = vsub.f32 1.0, %v4684
        %v4686 = vmul.f32 %v4683, %v4685
        %v4687 = vadd.f32 %v4683, %v4686
        %vm4688 = vweird.f32 %v4171
        %vm4689 = vweird.f32 %v4683
        %vm4690 = vmor %vm4688, %vm4689
        %v4691 = vsel %vm4690, %v4683, %v4687
        %v4692 = vand.u32 2147483647, %v4171
        %vm4693 = vcmp.eq.f32.partialorder %v4692, 8.507059e+37
        %v4694 = vand.u32 %v4171, 2147483648
        %v4695 = vor.u32 1.1754944e-38, %v4694
        %v4696 = vsel %vm4693, %v4695, %v4691
        %v4697 = vmul.f32 1.0, %v4696
        %v4698 = vrcp.pop %v4172
        %v4699 = vmul.f32 %v4172, %v4698
        %v4700 = vsub.f32 1.0, %v4699
        %v4701 = vmul.f32 %v4698, %v4700
        %v4702 = vadd.f32 %v4698, %v4701
        %vm4703 = vweird.f32 %v4172
        %vm4704 = vweird.f32 %v4698
        %vm4705 = vmor %vm4703, %vm4704
        %v4706 = vsel %vm4705, %v4698, %v4702
        %v4707 = vand.u32 2147483647, %v4172
        %vm4708 = vcmp.eq.f32.partialorder %v4707, 8.507059e+37
        %v4709 = vand.u32 %v4172, 2147483648
        %v4710 = vor.u32 1.1754944e-38, %v4709
        %v4711 = vsel %vm4708, %v4710, %v4706
        %v4712 = vmul.f32 1.0, %v4711
        %v4713 = vrcp.pop %v4173
        %v4714 = vmul.f32 %v4173, %v4713
        %v4715 = vsub.f32 1.0, %v4714
        %v4716 = vmul.f32 %v4713, %v4715
        %v4717 = vadd.f32 %v4713, %v4716
        %vm4718 = vweird.f32 %v4173
        %vm4719 = vweird.f32 %v4713
        %vm4720 = vmor %vm4718, %vm4719
        %v4721 = vsel %vm4720, %v4713, %v4717
        %v4722 = vand.u32 2147483647, %v4173
        %vm4723 = vcmp.eq.f32.partialorder %v4722, 8.507059e+37
        %v4724 = vand.u32 %v4173, 2147483648
        %v4725 = vor.u32 1.1754944e-38, %v4724
        %v4726 = vsel %vm4723, %v4725, %v4721
        %v4727 = vmul.f32 1.0, %v4726
        %v4728 = vrcp.pop %v4174
        %v4729 = vmul.f32 %v4174, %v4728
        %v4730 = vsub.f32 1.0, %v4729
        %v4731 = vmul.f32 %v4728, %v4730
        %v4732 = vadd.f32 %v4728, %v4731
        %vm4733 = vweird.f32 %v4174
        %vm4734 = vweird.f32 %v4728
        %vm4735 = vmor %vm4733, %vm4734
        %v4736 = vsel %vm4735, %v4728, %v4732
        %v4737 = vand.u32 2147483647, %v4174
        %vm4738 = vcmp.eq.f32.partialorder %v4737, 8.507059e+37
        %v4739 = vand.u32 %v4174, 2147483648
        %v4740 = vor.u32 1.1754944e-38, %v4739
        %v4741 = vsel %vm4738, %v4740, %v4736
        %v4742 = vmul.f32 1.0, %v4741
        %v4743 = vrcp.pop %v4175
        %v4744 = vmul.f32 %v4175, %v4743
        %v4745 = vsub.f32 1.0, %v4744
        %v4746 = vmul.f32 %v4743, %v4745
        %v4747 = vadd.f32 %v4743, %v4746
        %vm4748 = vweird.f32 %v4175
        %vm4749 = vweird.f32 %v4743
        %vm4750 = vmor %vm4748, %vm4749
        %v4751 = vsel %vm4750, %v4743, %v4747
        %v4752 = vand.u32 2147483647, %v4175
        %vm4753 = vcmp.eq.f32.partialorder %v4752, 8.507059e+37
        %v4754 = vand.u32 %v4175, 2147483648
        %v4755 = vor.u32 1.1754944e-38, %v4754
        %v4756 = vsel %vm4753, %v4755, %v4751
        %v4757 = vmul.f32 1.0, %v4756
        %v4758 = vrcp.pop %v4176
        %v4759 = vmul.f32 %v4176, %v4758
        %v4760 = vsub.f32 1.0, %v4759
        %v4761 = vmul.f32 %v4758, %v4760
        %v4762 = vadd.f32 %v4758, %v4761
        %vm4763 = vweird.f32 %v4176
        %vm4764 = vweird.f32 %v4758
        %vm4765 = vmor %vm4763, %vm4764
        %v4766 = vsel %vm4765, %v4758, %v4762
        %v4767 = vand.u32 2147483647, %v4176
        %vm4768 = vcmp.eq.f32.partialorder %v4767, 8.507059e+37
        %v4769 = vand.u32 %v4176, 2147483648
        %v4770 = vor.u32 1.1754944e-38, %v4769
        %v4771 = vsel %vm4768, %v4770, %v4766
        %v4772 = vmul.f32 1.0, %v4771
        %v4773 = vrcp.pop %v4177
        %v4774 = vmul.f32 %v4177, %v4773
        %v4775 = vsub.f32 1.0, %v4774
        %v4776 = vmul.f32 %v4773, %v4775
        %v4777 = vadd.f32 %v4773, %v4776
        %vm4778 = vweird.f32 %v4177
        %vm4779 = vweird.f32 %v4773
        %vm4780 = vmor %vm4778, %vm4779
        %v4781 = vsel %vm4780, %v4773, %v4777
        %v4782 = vand.u32 2147483647, %v4177
        %vm4783 = vcmp.eq.f32.partialorder %v4782, 8.507059e+37
        %v4784 = vand.u32 %v4177, 2147483648
        %v4785 = vor.u32 1.1754944e-38, %v4784
        %v4786 = vsel %vm4783, %v4785, %v4781
        %v4787 = vmul.f32 1.0, %v4786
        %v4788 = vrcp.pop %v4178
        %v4789 = vmul.f32 %v4178, %v4788
        %v4790 = vsub.f32 1.0, %v4789
        %v4791 = vmul.f32 %v4788, %v4790
        %v4792 = vadd.f32 %v4788, %v4791
        %vm4793 = vweird.f32 %v4178
        %vm4794 = vweird.f32 %v4788
        %vm4795 = vmor %vm4793, %vm4794
        %v4796 = vsel %vm4795, %v4788, %v4792
        %v4797 = vand.u32 2147483647, %v4178
        %vm4798 = vcmp.eq.f32.partialorder %v4797, 8.507059e+37
        %v4799 = vand.u32 %v4178, 2147483648
        %v4800 = vor.u32 1.1754944e-38, %v4799
        %v4801 = vsel %vm4798, %v4800, %v4796
        %v4802 = vmul.f32 1.0, %v4801
        %v4803 = vrcp.pop %v4179
        %v4804 = vmul.f32 %v4179, %v4803
        %v4805 = vsub.f32 1.0, %v4804
        %v4806 = vmul.f32 %v4803, %v4805
        %v4807 = vadd.f32 %v4803, %v4806
        %vm4808 = vweird.f32 %v4179
        %vm4809 = vweird.f32 %v4803
        %vm4810 = vmor %vm4808, %vm4809
        %v4811 = vsel %vm4810, %v4803, %v4807
        %v4812 = vand.u32 2147483647, %v4179
        %vm4813 = vcmp.eq.f32.partialorder %v4812, 8.507059e+37
        %v4814 = vand.u32 %v4179, 2147483648
        %v4815 = vor.u32 1.1754944e-38, %v4814
        %v4816 = vsel %vm4813, %v4815, %v4811
        %v4817 = vmul.f32 1.0, %v4816
        %v4818 = vrcp.pop %v4180
        %v4819 = vmul.f32 %v4180, %v4818
        %v4820 = vsub.f32 1.0, %v4819
        %v4821 = vmul.f32 %v4818, %v4820
        %v4822 = vadd.f32 %v4818, %v4821
        %vm4823 = vweird.f32 %v4180
        %vm4824 = vweird.f32 %v4818
        %vm4825 = vmor %vm4823, %vm4824
        %v4826 = vsel %vm4825, %v4818, %v4822
        %v4827 = vand.u32 2147483647, %v4180
        %vm4828 = vcmp.eq.f32.partialorder %v4827, 8.507059e+37
        %v4829 = vand.u32 %v4180, 2147483648
        %v4830 = vor.u32 1.1754944e-38, %v4829
        %v4831 = vsel %vm4828, %v4830, %v4826
        %v4832 = vmul.f32 1.0, %v4831
        %v4833 = vrcp.pop %v4181
        %v4834 = vmul.f32 %v4181, %v4833
        %v4835 = vsub.f32 1.0, %v4834
        %v4836 = vmul.f32 %v4833, %v4835
        %v4837 = vadd.f32 %v4833, %v4836
        %vm4838 = vweird.f32 %v4181
        %vm4839 = vweird.f32 %v4833
        %vm4840 = vmor %vm4838, %vm4839
        %v4841 = vsel %vm4840, %v4833, %v4837
        %v4842 = vand.u32 2147483647, %v4181
        %vm4843 = vcmp.eq.f32.partialorder %v4842, 8.507059e+37
        %v4844 = vand.u32 %v4181, 2147483648
        %v4845 = vor.u32 1.1754944e-38, %v4844
        %v4846 = vsel %vm4843, %v4845, %v4841
        %v4847 = vmul.f32 1.0, %v4846
        %v4848 = vrcp.pop %v4182
        %v4849 = vmul.f32 %v4182, %v4848
        %v4850 = vsub.f32 1.0, %v4849
        %v4851 = vmul.f32 %v4848, %v4850
        %v4852 = vadd.f32 %v4848, %v4851
        %vm4853 = vweird.f32 %v4182
        %vm4854 = vweird.f32 %v4848
        %vm4855 = vmor %vm4853, %vm4854
        %v4856 = vsel %vm4855, %v4848, %v4852
        %v4857 = vand.u32 2147483647, %v4182
        %vm4858 = vcmp.eq.f32.partialorder %v4857, 8.507059e+37
        %v4859 = vand.u32 %v4182, 2147483648
        %v4860 = vor.u32 1.1754944e-38, %v4859
        %v4861 = vsel %vm4858, %v4860, %v4856
        %v4862 = vmul.f32 1.0, %v4861
        %v4863 = vrcp.pop %v4183
        %v4864 = vmul.f32 %v4183, %v4863
        %v4865 = vsub.f32 1.0, %v4864
        %v4866 = vmul.f32 %v4863, %v4865
        %v4867 = vadd.f32 %v4863, %v4866
        %vm4868 = vweird.f32 %v4183
        %vm4869 = vweird.f32 %v4863
        %vm4870 = vmor %vm4868, %vm4869
        %v4871 = vsel %vm4870, %v4863, %v4867
        %v4872 = vand.u32 2147483647, %v4183
        %vm4873 = vcmp.eq.f32.partialorder %v4872, 8.507059e+37
        %v4874 = vand.u32 %v4183, 2147483648
        %v4875 = vor.u32 1.1754944e-38, %v4874
        %v4876 = vsel %vm4873, %v4875, %v4871
        %v4877 = vmul.f32 1.0, %v4876
        %v4878 = vrcp.pop %v4184
        %v4879 = vmul.f32 %v4184, %v4878
        %v4880 = vsub.f32 1.0, %v4879
        %v4881 = vmul.f32 %v4878, %v4880
        %v4882 = vadd.f32 %v4878, %v4881
        %vm4883 = vweird.f32 %v4184
        %vm4884 = vweird.f32 %v4878
        %vm4885 = vmor %vm4883, %vm4884
        %v4886 = vsel %vm4885, %v4878, %v4882
        %v4887 = vand.u32 2147483647, %v4184
        %vm4888 = vcmp.eq.f32.partialorder %v4887, 8.507059e+37
        %v4889 = vand.u32 %v4184, 2147483648
        %v4890 = vor.u32 1.1754944e-38, %v4889
        %v4891 = vsel %vm4888, %v4890, %v4886
        %v4892 = vmul.f32 1.0, %v4891
        %v4893 = vrcp.pop %v4185
        %v4894 = vmul.f32 %v4185, %v4893
        %v4895 = vsub.f32 1.0, %v4894
        %v4896 = vmul.f32 %v4893, %v4895
        %v4897 = vadd.f32 %v4893, %v4896
        %vm4898 = vweird.f32 %v4185
        %vm4899 = vweird.f32 %v4893
        %vm4900 = vmor %vm4898, %vm4899
        %v4901 = vsel %vm4900, %v4893, %v4897
        %v4902 = vand.u32 2147483647, %v4185
        %vm4903 = vcmp.eq.f32.partialorder %v4902, 8.507059e+37
        %v4904 = vand.u32 %v4185, 2147483648
        %v4905 = vor.u32 1.1754944e-38, %v4904
        %v4906 = vsel %vm4903, %v4905, %v4901
        %v4907 = vmul.f32 1.0, %v4906
        %v4908 = vrcp.pop %v4186
        %v4909 = vmul.f32 %v4186, %v4908
        %v4910 = vsub.f32 1.0, %v4909
        %v4911 = vmul.f32 %v4908, %v4910
        %v4912 = vadd.f32 %v4908, %v4911
        %vm4913 = vweird.f32 %v4186
        %vm4914 = vweird.f32 %v4908
        %vm4915 = vmor %vm4913, %vm4914
        %v4916 = vsel %vm4915, %v4908, %v4912
        %v4917 = vand.u32 2147483647, %v4186
        %vm4918 = vcmp.eq.f32.partialorder %v4917, 8.507059e+37
        %v4919 = vand.u32 %v4186, 2147483648
        %v4920 = vor.u32 1.1754944e-38, %v4919
        %v4921 = vsel %vm4918, %v4920, %v4916
        %v4922 = vmul.f32 1.0, %v4921
        %v4923 = vrcp.pop %v4187
        %v4924 = vmul.f32 %v4187, %v4923
        %v4925 = vsub.f32 1.0, %v4924
        %v4926 = vmul.f32 %v4923, %v4925
        %v4927 = vadd.f32 %v4923, %v4926
        %vm4928 = vweird.f32 %v4187
        %vm4929 = vweird.f32 %v4923
        %vm4930 = vmor %vm4928, %vm4929
        %v4931 = vsel %vm4930, %v4923, %v4927
        %v4932 = vand.u32 2147483647, %v4187
        %vm4933 = vcmp.eq.f32.partialorder %v4932, 8.507059e+37
        %v4934 = vand.u32 %v4187, 2147483648
        %v4935 = vor.u32 1.1754944e-38, %v4934
        %v4936 = vsel %vm4933, %v4935, %v4931
        %v4937 = vmul.f32 1.0, %v4936
        %v4938 = vrcp.pop %v4188
        %v4939 = vmul.f32 %v4188, %v4938
        %v4940 = vsub.f32 1.0, %v4939
        %v4941 = vmul.f32 %v4938, %v4940
        %v4942 = vadd.f32 %v4938, %v4941
        %vm4943 = vweird.f32 %v4188
        %vm4944 = vweird.f32 %v4938
        %vm4945 = vmor %vm4943, %vm4944
        %v4946 = vsel %vm4945, %v4938, %v4942
        %v4947 = vand.u32 2147483647, %v4188
        %vm4948 = vcmp.eq.f32.partialorder %v4947, 8.507059e+37
        %v4949 = vand.u32 %v4188, 2147483648
        %v4950 = vor.u32 1.1754944e-38, %v4949
        %v4951 = vsel %vm4948, %v4950, %v4946
        %v4952 = vmul.f32 1.0, %v4951
        %v4953 = vrcp.pop %v4189
        %v4954 = vmul.f32 %v4189, %v4953
        %v4955 = vsub.f32 1.0, %v4954
        %v4956 = vmul.f32 %v4953, %v4955
        %v4957 = vadd.f32 %v4953, %v4956
        %vm4958 = vweird.f32 %v4189
        %vm4959 = vweird.f32 %v4953
        %vm4960 = vmor %vm4958, %vm4959
        %v4961 = vsel %vm4960, %v4953, %v4957
        %v4962 = vand.u32 2147483647, %v4189
        %vm4963 = vcmp.eq.f32.partialorder %v4962, 8.507059e+37
        %v4964 = vand.u32 %v4189, 2147483648
        %v4965 = vor.u32 1.1754944e-38, %v4964
        %v4966 = vsel %vm4963, %v4965, %v4961
        %v4967 = vmul.f32 1.0, %v4966
        %v4968 = vrcp.pop %v4190
        %v4969 = vmul.f32 %v4190, %v4968
        %v4970 = vsub.f32 1.0, %v4969
        %v4971 = vmul.f32 %v4968, %v4970
        %v4972 = vadd.f32 %v4968, %v4971
        %vm4973 = vweird.f32 %v4190
        %vm4974 = vweird.f32 %v4968
        %vm4975 = vmor %vm4973, %vm4974
        %v4976 = vsel %vm4975, %v4968, %v4972
        %v4977 = vand.u32 2147483647, %v4190
        %vm4978 = vcmp.eq.f32.partialorder %v4977, 8.507059e+37
        %v4979 = vand.u32 %v4190, 2147483648
        %v4980 = vor.u32 1.1754944e-38, %v4979
        %v4981 = vsel %vm4978, %v4980, %v4976
        %v4982 = vmul.f32 1.0, %v4981
        %v4983 = vrcp.pop %v4191
        %v4984 = vmul.f32 %v4191, %v4983
        %v4985 = vsub.f32 1.0, %v4984
        %v4986 = vmul.f32 %v4983, %v4985
        %v4987 = vadd.f32 %v4983, %v4986
        %vm4988 = vweird.f32 %v4191
        %vm4989 = vweird.f32 %v4983
        %vm4990 = vmor %vm4988, %vm4989
        %v4991 = vsel %vm4990, %v4983, %v4987
        %v4992 = vand.u32 2147483647, %v4191
        %vm4993 = vcmp.eq.f32.partialorder %v4992, 8.507059e+37
        %v4994 = vand.u32 %v4191, 2147483648
        %v4995 = vor.u32 1.1754944e-38, %v4994
        %v4996 = vsel %vm4993, %v4995, %v4991
        %v4997 = vmul.f32 1.0, %v4996
        %v4998 = vrcp.pop %v4192
        %v4999 = vmul.f32 %v4192, %v4998
        %v5000 = vsub.f32 1.0, %v4999
        %v5001 = vmul.f32 %v4998, %v5000
        %v5002 = vadd.f32 %v4998, %v5001
        %vm5003 = vweird.f32 %v4192
        %vm5004 = vweird.f32 %v4998
        %vm5005 = vmor %vm5003, %vm5004
        %v5006 = vsel %vm5005, %v4998, %v5002
        %v5007 = vand.u32 2147483647, %v4192
        %vm5008 = vcmp.eq.f32.partialorder %v5007, 8.507059e+37
        %v5009 = vand.u32 %v4192, 2147483648
        %v5010 = vor.u32 1.1754944e-38, %v5009
        %v5011 = vsel %vm5008, %v5010, %v5006
        %v5012 = vmul.f32 1.0, %v5011
        %v5013 = vrcp.pop %v4193
        %v5014 = vmul.f32 %v4193, %v5013
        %v5015 = vsub.f32 1.0, %v5014
        %v5016 = vmul.f32 %v5013, %v5015
        %v5017 = vadd.f32 %v5013, %v5016
        %vm5018 = vweird.f32 %v4193
        %vm5019 = vweird.f32 %v5013
        %vm5020 = vmor %vm5018, %vm5019
        %v5021 = vsel %vm5020, %v5013, %v5017
        %v5022 = vand.u32 2147483647, %v4193
        %vm5023 = vcmp.eq.f32.partialorder %v5022, 8.507059e+37
        %v5024 = vand.u32 %v4193, 2147483648
        %v5025 = vor.u32 1.1754944e-38, %v5024
        %v5026 = vsel %vm5023, %v5025, %v5021
        %v5027 = vmul.f32 1.0, %v5026
        %v5028 = vrcp.pop %v4194
        %v5029 = vmul.f32 %v4194, %v5028
        %v5030 = vsub.f32 1.0, %v5029
        %v5031 = vmul.f32 %v5028, %v5030
        %v5032 = vadd.f32 %v5028, %v5031
        %vm5033 = vweird.f32 %v4194
        %vm5034 = vweird.f32 %v5028
        %vm5035 = vmor %vm5033, %vm5034
        %v5036 = vsel %vm5035, %v5028, %v5032
        %v5037 = vand.u32 2147483647, %v4194
        %vm5038 = vcmp.eq.f32.partialorder %v5037, 8.507059e+37
        %v5039 = vand.u32 %v4194, 2147483648
        %v5040 = vor.u32 1.1754944e-38, %v5039
        %v5041 = vsel %vm5038, %v5040, %v5036
        %v5042 = vmul.f32 1.0, %v5041
        %v5043 = vrcp.pop %v4195
        %v5044 = vmul.f32 %v4195, %v5043
        %v5045 = vsub.f32 1.0, %v5044
        %v5046 = vmul.f32 %v5043, %v5045
        %v5047 = vadd.f32 %v5043, %v5046
        %vm5048 = vweird.f32 %v4195
        %vm5049 = vweird.f32 %v5043
        %vm5050 = vmor %vm5048, %vm5049
        %v5051 = vsel %vm5050, %v5043, %v5047
        %v5052 = vand.u32 2147483647, %v4195
        %vm5053 = vcmp.eq.f32.partialorder %v5052, 8.507059e+37
        %v5054 = vand.u32 %v4195, 2147483648
        %v5055 = vor.u32 1.1754944e-38, %v5054
        %v5056 = vsel %vm5053, %v5055, %v5051
        %v5057 = vmul.f32 1.0, %v5056
        %v5058 = vrcp.pop %v4196
        %v5059 = vmul.f32 %v4196, %v5058
        %v5060 = vsub.f32 1.0, %v5059
        %v5061 = vmul.f32 %v5058, %v5060
        %v5062 = vadd.f32 %v5058, %v5061
        %vm5063 = vweird.f32 %v4196
        %vm5064 = vweird.f32 %v5058
        %vm5065 = vmor %vm5063, %vm5064
        %v5066 = vsel %vm5065, %v5058, %v5062
        %v5067 = vand.u32 2147483647, %v4196
        %vm5068 = vcmp.eq.f32.partialorder %v5067, 8.507059e+37
        %v5069 = vand.u32 %v4196, 2147483648
        %v5070 = vor.u32 1.1754944e-38, %v5069
        %v5071 = vsel %vm5068, %v5070, %v5066
        %v5072 = vmul.f32 1.0, %v5071
        %v5073 = vrcp.pop %v4197
        %v5074 = vmul.f32 %v4197, %v5073
        %v5075 = vsub.f32 1.0, %v5074
        %v5076 = vmul.f32 %v5073, %v5075
        %v5077 = vadd.f32 %v5073, %v5076
        %vm5078 = vweird.f32 %v4197
        %vm5079 = vweird.f32 %v5073
        %vm5080 = vmor %vm5078, %vm5079
        %v5081 = vsel %vm5080, %v5073, %v5077
        %v5082 = vand.u32 2147483647, %v4197
        %vm5083 = vcmp.eq.f32.partialorder %v5082, 8.507059e+37
        %v5084 = vand.u32 %v4197, 2147483648
        %v5085 = vor.u32 1.1754944e-38, %v5084
        %v5086 = vsel %vm5083, %v5085, %v5081
        %v5087 = vmul.f32 1.0, %v5086
        %v5088 = vrcp.pop %v4198
        %v5089 = vmul.f32 %v4198, %v5088
        %v5090 = vsub.f32 1.0, %v5089
        %v5091 = vmul.f32 %v5088, %v5090
        %v5092 = vadd.f32 %v5088, %v5091
        %vm5093 = vweird.f32 %v4198
        %vm5094 = vweird.f32 %v5088
        %vm5095 = vmor %vm5093, %vm5094
        %v5096 = vsel %vm5095, %v5088, %v5092
        %v5097 = vand.u32 2147483647, %v4198
        %vm5098 = vcmp.eq.f32.partialorder %v5097, 8.507059e+37
        %v5099 = vand.u32 %v4198, 2147483648
        %v5100 = vor.u32 1.1754944e-38, %v5099
        %v5101 = vsel %vm5098, %v5100, %v5096
        %v5102 = vmul.f32 1.0, %v5101
        %v5103 = vrcp.pop %v4199
        %v5104 = vmul.f32 %v4199, %v5103
        %v5105 = vsub.f32 1.0, %v5104
        %v5106 = vmul.f32 %v5103, %v5105
        %v5107 = vadd.f32 %v5103, %v5106
        %vm5108 = vweird.f32 %v4199
        %vm5109 = vweird.f32 %v5103
        %vm5110 = vmor %vm5108, %vm5109
        %v5111 = vsel %vm5110, %v5103, %v5107
        %v5112 = vand.u32 2147483647, %v4199
        %vm5113 = vcmp.eq.f32.partialorder %v5112, 8.507059e+37
        %v5114 = vand.u32 %v4199, 2147483648
        %v5115 = vor.u32 1.1754944e-38, %v5114
        %v5116 = vsel %vm5113, %v5115, %v5111
        %v5117 = vmul.f32 1.0, %v5116
        %v5118 = vrcp.pop %v4200
        %v5119 = vmul.f32 %v4200, %v5118
        %v5120 = vsub.f32 1.0, %v5119
        %v5121 = vmul.f32 %v5118, %v5120
        %v5122 = vadd.f32 %v5118, %v5121
        %vm5123 = vweird.f32 %v4200
        %vm5124 = vweird.f32 %v5118
        %vm5125 = vmor %vm5123, %vm5124
        %v5126 = vsel %vm5125, %v5118, %v5122
        %v5127 = vand.u32 2147483647, %v4200
        %vm5128 = vcmp.eq.f32.partialorder %v5127, 8.507059e+37
        %v5129 = vand.u32 %v4200, 2147483648
        %v5130 = vor.u32 1.1754944e-38, %v5129
        %v5131 = vsel %vm5128, %v5130, %v5126
        %v5132 = vmul.f32 1.0, %v5131
        %v5133 = vrcp.pop %v4201
        %v5134 = vmul.f32 %v4201, %v5133
        %v5135 = vsub.f32 1.0, %v5134
        %v5136 = vmul.f32 %v5133, %v5135
        %v5137 = vadd.f32 %v5133, %v5136
        %vm5138 = vweird.f32 %v4201
        %vm5139 = vweird.f32 %v5133
        %vm5140 = vmor %vm5138, %vm5139
        %v5141 = vsel %vm5140, %v5133, %v5137
        %v5142 = vand.u32 2147483647, %v4201
        %vm5143 = vcmp.eq.f32.partialorder %v5142, 8.507059e+37
        %v5144 = vand.u32 %v4201, 2147483648
        %v5145 = vor.u32 1.1754944e-38, %v5144
        %v5146 = vsel %vm5143, %v5145, %v5141
        %v5147 = vmul.f32 1.0, %v5146
        %v5148 = vrcp.pop %v4202
        %v5149 = vmul.f32 %v4202, %v5148
        %v5150 = vsub.f32 1.0, %v5149
        %v5151 = vmul.f32 %v5148, %v5150
        %v5152 = vadd.f32 %v5148, %v5151
        %vm5153 = vweird.f32 %v4202
        %vm5154 = vweird.f32 %v5148
        %vm5155 = vmor %vm5153, %vm5154
        %v5156 = vsel %vm5155, %v5148, %v5152
        %v5157 = vand.u32 2147483647, %v4202
        %vm5158 = vcmp.eq.f32.partialorder %v5157, 8.507059e+37
        %v5159 = vand.u32 %v4202, 2147483648
        %v5160 = vor.u32 1.1754944e-38, %v5159
        %v5161 = vsel %vm5158, %v5160, %v5156
        %v5162 = vmul.f32 1.0, %v5161
        %v5163 = vld [vmem:[%s7] sm:$0xff]
        %v5164 = vld [vmem:[%s7 + $0x8] sm:$0xff]
        %v5165 = vld [vmem:[%s7 + $0x10] sm:$0xff]
        %v5166 = vld [vmem:[%s7 + $0x18] sm:$0xff]
        %v5167 = vld [vmem:[%s7 + $0x20] sm:$0xff]
        %v5168 = vld [vmem:[%s7 + $0x28] sm:$0xff]
        %v5169 = vld [vmem:[%s7 + $0x30] sm:$0xff]
        %v5170 = vld [vmem:[%s7 + $0x38] sm:$0xff]
        %v5171 = vld [vmem:[%s7 + $0x40] sm:$0xff]
        %v5172 = vld [vmem:[%s7 + $0x48] sm:$0xff]
        %v5173 = vld [vmem:[%s7 + $0x50] sm:$0xff]
        %v5174 = vld [vmem:[%s7 + $0x58] sm:$0xff]
        %v5175 = vld [vmem:[%s7 + $0x60] sm:$0xff]
        %v5176 = vld [vmem:[%s7 + $0x68] sm:$0xff]
        %v5177 = vld [vmem:[%s7 + $0x70] sm:$0xff]
        %v5178 = vld [vmem:[%s7 + $0x78] sm:$0xff]
        %v5179 = vld [vmem:[%s8] sm:$0xff]
        %v5180 = vld [vmem:[%s8 + $0x8] sm:$0xff]
        %v5181 = vld [vmem:[%s8 + $0x10] sm:$0xff]
        %v5182 = vld [vmem:[%s8 + $0x18] sm:$0xff]
        %v5183 = vld [vmem:[%s8 + $0x20] sm:$0xff]
        %v5184 = vld [vmem:[%s8 + $0x28] sm:$0xff]
        %v5185 = vld [vmem:[%s8 + $0x30] sm:$0xff]
        %v5186 = vld [vmem:[%s8 + $0x38] sm:$0xff]
        %v5187 = vld [vmem:[%s8 + $0x40] sm:$0xff]
        %v5188 = vld [vmem:[%s8 + $0x48] sm:$0xff]
        %v5189 = vld [vmem:[%s8 + $0x50] sm:$0xff]
        %v5190 = vld [vmem:[%s8 + $0x58] sm:$0xff]
        %v5191 = vld [vmem:[%s8 + $0x60] sm:$0xff]
        %v5192 = vld [vmem:[%s8 + $0x68] sm:$0xff]
        %v5193 = vld [vmem:[%s8 + $0x70] sm:$0xff]
        %v5194 = vld [vmem:[%s8 + $0x78] sm:$0xff]
        %5196 = vset.pattern.permute.xlu0 0
        %5197 = vperm.xlu0 %5196, %v5179
        %v5198 = vpop.permute.xlu0 %5197
        %5201 = vset.pattern.permute.xlu0 0
        %5202 = vperm.xlu0 %5201, %v5180
        %v5203 = vpop.permute.xlu0 %5202
        %5206 = vset.pattern.permute.xlu0 0
        %5207 = vperm.xlu0 %5206, %v5181
        %v5208 = vpop.permute.xlu0 %5207
        %5211 = vset.pattern.permute.xlu0 0
        %5212 = vperm.xlu0 %5211, %v5182
        %v5213 = vpop.permute.xlu0 %5212
        %5216 = vset.pattern.permute.xlu0 0
        %5217 = vperm.xlu0 %5216, %v5183
        %v5218 = vpop.permute.xlu0 %5217
        %5221 = vset.pattern.permute.xlu0 0
        %5222 = vperm.xlu0 %5221, %v5184
        %v5223 = vpop.permute.xlu0 %5222
        %5226 = vset.pattern.permute.xlu0 0
        %5227 = vperm.xlu0 %5226, %v5185
        %v5228 = vpop.permute.xlu0 %5227
        %5231 = vset.pattern.permute.xlu0 0
        %5232 = vperm.xlu0 %5231, %v5186
        %v5233 = vpop.permute.xlu0 %5232
        %5236 = vset.pattern.permute.xlu0 0
        %5237 = vperm.xlu0 %5236, %v5187
        %v5238 = vpop.permute.xlu0 %5237
        %5241 = vset.pattern.permute.xlu0 0
        %5242 = vperm.xlu0 %5241, %v5188
        %v5243 = vpop.permute.xlu0 %5242
        %5246 = vset.pattern.permute.xlu0 0
        %5247 = vperm.xlu0 %5246, %v5189
        %v5248 = vpop.permute.xlu0 %5247
        %5251 = vset.pattern.permute.xlu0 0
        %5252 = vperm.xlu0 %5251, %v5190
        %v5253 = vpop.permute.xlu0 %5252
        %5256 = vset.pattern.permute.xlu0 0
        %5257 = vperm.xlu0 %5256, %v5191
        %v5258 = vpop.permute.xlu0 %5257
        %5261 = vset.pattern.permute.xlu0 0
        %5262 = vperm.xlu0 %5261, %v5192
        %v5263 = vpop.permute.xlu0 %5262
        %5266 = vset.pattern.permute.xlu0 0
        %5267 = vperm.xlu0 %5266, %v5193
        %v5268 = vpop.permute.xlu0 %5267
        %5271 = vset.pattern.permute.xlu0 0
        %5272 = vperm.xlu0 %5271, %v5194
        %v5273 = vpop.permute.xlu0 %5272
        %5275 = vmatpush.msra.mxu0 %v5117
        %5276 = vmatpush.msra.mxu0 %v5057
        %5277 = vmatpush.msra.mxu0 %v4997
        %5278 = vmatpush.msra.mxu0 %v4937
        %5279 = vmatpush.msra.mxu0 %v4877
        %5280 = vmatpush.msra.mxu0 %v4817
        %5281 = vmatpush.msra.mxu0 %v4757
        %5282 = vmatpush.msra.mxu0 %v4697
        %5283 = vmatpush.msra.mxu0 %v4637
        %5284 = vmatpush.msra.mxu0 %v4577
        %5285 = vmatpush.msra.mxu0 %v4517
        %5286 = vmatpush.msra.mxu0 %v4457
        %5287 = vmatpush.msra.mxu0 %v4397
        %5288 = vmatpush.msra.mxu0 %v4337
        %5289 = vmatpush.msra.mxu0 %v4277
        %5290 = vmatpush.msra.mxu0 %v4217
        %5291 = vmatmul.f32.gmra.mxu0 %v5163
        %v5292 = vpop.f32.mrf.mxu0
        %v5293 = vadd.f32 %v5198, %v5292
        %5294 = vmatmul.f32.gmra.mxu0 %v5164
        %v5295 = vpop.f32.mrf.mxu0
        %v5296 = vadd.f32 %v5203, %v5295
        %5297 = vmatmul.f32.gmra.mxu0 %v5165
        %v5298 = vpop.f32.mrf.mxu0
        %v5299 = vadd.f32 %v5208, %v5298
        %5300 = vmatmul.f32.gmra.mxu0 %v5166
        %v5301 = vpop.f32.mrf.mxu0
        %v5302 = vadd.f32 %v5213, %v5301
        %5303 = vmatmul.f32.gmra.mxu0 %v5167
        %v5304 = vpop.f32.mrf.mxu0
        %v5305 = vadd.f32 %v5218, %v5304
        %5306 = vmatmul.f32.gmra.mxu0 %v5168
        %v5307 = vpop.f32.mrf.mxu0
        %v5308 = vadd.f32 %v5223, %v5307
        %5309 = vmatmul.f32.gmra.mxu0 %v5169
        %v5310 = vpop.f32.mrf.mxu0
        %v5311 = vadd.f32 %v5228, %v5310
        %5312 = vmatmul.f32.gmra.mxu0 %v5170
        %v5313 = vpop.f32.mrf.mxu0
        %v5314 = vadd.f32 %v5233, %v5313
        %5315 = vmatmul.f32.gmra.mxu0 %v5171
        %v5316 = vpop.f32.mrf.mxu0
        %v5317 = vadd.f32 %v5238, %v5316
        %5318 = vmatmul.f32.gmra.mxu0 %v5172
        %v5319 = vpop.f32.mrf.mxu0
        %v5320 = vadd.f32 %v5243, %v5319
        %5321 = vmatmul.f32.gmra.mxu0 %v5173
        %v5322 = vpop.f32.mrf.mxu0
        %v5323 = vadd.f32 %v5248, %v5322
        %5324 = vmatmul.f32.gmra.mxu0 %v5174
        %v5325 = vpop.f32.mrf.mxu0
        %v5326 = vadd.f32 %v5253, %v5325
        %5327 = vmatmul.f32.gmra.mxu0 %v5175
        %v5328 = vpop.f32.mrf.mxu0
        %v5329 = vadd.f32 %v5258, %v5328
        %5330 = vmatmul.f32.gmra.mxu0 %v5176
        %v5331 = vpop.f32.mrf.mxu0
        %v5332 = vadd.f32 %v5263, %v5331
        %5333 = vmatmul.f32.gmra.mxu0 %v5177
        %v5334 = vpop.f32.mrf.mxu0
        %v5335 = vadd.f32 %v5268, %v5334
        %5336 = vmatmul.f32.gmra.mxu0 %v5178
        %v5337 = vpop.f32.mrf.mxu0
        %v5338 = vadd.f32 %v5273, %v5337
        %5339 = vdwg.mxu0
        %5340 = vmatpush.msra.mxu0 %v5132
        %5341 = vmatpush.msra.mxu0 %v5072
        %5342 = vmatpush.msra.mxu0 %v5012
        %5343 = vmatpush.msra.mxu0 %v4952
        %5344 = vmatpush.msra.mxu0 %v4892
        %5345 = vmatpush.msra.mxu0 %v4832
        %5346 = vmatpush.msra.mxu0 %v4772
        %5347 = vmatpush.msra.mxu0 %v4712
        %5348 = vmatpush.msra.mxu0 %v4652
        %5349 = vmatpush.msra.mxu0 %v4592
        %5350 = vmatpush.msra.mxu0 %v4532
        %5351 = vmatpush.msra.mxu0 %v4472
        %5352 = vmatpush.msra.mxu0 %v4412
        %5353 = vmatpush.msra.mxu0 %v4352
        %5354 = vmatpush.msra.mxu0 %v4292
        %5355 = vmatpush.msra.mxu0 %v4232
        %5356 = vmatmul.f32.gmra.mxu0 %v5163
        %v5357 = vpop.f32.mrf.mxu0
        %v5358 = vadd.f32 %v5198, %v5357
        %5359 = vmatmul.f32.gmra.mxu0 %v5164
        %v5360 = vpop.f32.mrf.mxu0
        %v5361 = vadd.f32 %v5203, %v5360
        %5362 = vmatmul.f32.gmra.mxu0 %v5165
        %v5363 = vpop.f32.mrf.mxu0
        %v5364 = vadd.f32 %v5208, %v5363
        %5365 = vmatmul.f32.gmra.mxu0 %v5166
        %v5366 = vpop.f32.mrf.mxu0
        %v5367 = vadd.f32 %v5213, %v5366
        %5368 = vmatmul.f32.gmra.mxu0 %v5167
        %v5369 = vpop.f32.mrf.mxu0
        %v5370 = vadd.f32 %v5218, %v5369
        %5371 = vmatmul.f32.gmra.mxu0 %v5168
        %v5372 = vpop.f32.mrf.mxu0
        %v5373 = vadd.f32 %v5223, %v5372
        %5374 = vmatmul.f32.gmra.mxu0 %v5169
        %v5375 = vpop.f32.mrf.mxu0
        %v5376 = vadd.f32 %v5228, %v5375
        %5377 = vmatmul.f32.gmra.mxu0 %v5170
        %v5378 = vpop.f32.mrf.mxu0
        %v5379 = vadd.f32 %v5233, %v5378
        %5380 = vmatmul.f32.gmra.mxu0 %v5171
        %v5381 = vpop.f32.mrf.mxu0
        %v5382 = vadd.f32 %v5238, %v5381
        %5383 = vmatmul.f32.gmra.mxu0 %v5172
        %v5384 = vpop.f32.mrf.mxu0
        %v5385 = vadd.f32 %v5243, %v5384
        %5386 = vmatmul.f32.gmra.mxu0 %v5173
        %v5387 = vpop.f32.mrf.mxu0
        %v5388 = vadd.f32 %v5248, %v5387
        %5389 = vmatmul.f32.gmra.mxu0 %v5174
        %v5390 = vpop.f32.mrf.mxu0
        %v5391 = vadd.f32 %v5253, %v5390
        %5392 = vmatmul.f32.gmra.mxu0 %v5175
        %v5393 = vpop.f32.mrf.mxu0
        %v5394 = vadd.f32 %v5258, %v5393
        %5395 = vmatmul.f32.gmra.mxu0 %v5176
        %v5396 = vpop.f32.mrf.mxu0
        %v5397 = vadd.f32 %v5263, %v5396
        %5398 = vmatmul.f32.gmra.mxu0 %v5177
        %v5399 = vpop.f32.mrf.mxu0
        %v5400 = vadd.f32 %v5268, %v5399
        %5401 = vmatmul.f32.gmra.mxu0 %v5178
        %v5402 = vpop.f32.mrf.mxu0
        %v5403 = vadd.f32 %v5273, %v5402
        %5404 = vdwg.mxu0
        %5405 = vmatpush.msra.mxu0 %v5147
        %5406 = vmatpush.msra.mxu0 %v5087
        %5407 = vmatpush.msra.mxu0 %v5027
        %5408 = vmatpush.msra.mxu0 %v4967
        %5409 = vmatpush.msra.mxu0 %v4907
        %5410 = vmatpush.msra.mxu0 %v4847
        %5411 = vmatpush.msra.mxu0 %v4787
        %5412 = vmatpush.msra.mxu0 %v4727
        %5413 = vmatpush.msra.mxu0 %v4667
        %5414 = vmatpush.msra.mxu0 %v4607
        %5415 = vmatpush.msra.mxu0 %v4547
        %5416 = vmatpush.msra.mxu0 %v4487
        %5417 = vmatpush.msra.mxu0 %v4427
        %5418 = vmatpush.msra.mxu0 %v4367
        %5419 = vmatpush.msra.mxu0 %v4307
        %5420 = vmatpush.msra.mxu0 %v4247
        %5421 = vmatmul.f32.gmra.mxu0 %v5163
        %v5422 = vpop.f32.mrf.mxu0
        %v5423 = vadd.f32 %v5198, %v5422
        %5424 = vmatmul.f32.gmra.mxu0 %v5164
        %v5425 = vpop.f32.mrf.mxu0
        %v5426 = vadd.f32 %v5203, %v5425
        %5427 = vmatmul.f32.gmra.mxu0 %v5165
        %v5428 = vpop.f32.mrf.mxu0
        %v5429 = vadd.f32 %v5208, %v5428
        %5430 = vmatmul.f32.gmra.mxu0 %v5166
        %v5431 = vpop.f32.mrf.mxu0
        %v5432 = vadd.f32 %v5213, %v5431
        %5433 = vmatmul.f32.gmra.mxu0 %v5167
        %v5434 = vpop.f32.mrf.mxu0
        %v5435 = vadd.f32 %v5218, %v5434
        %5436 = vmatmul.f32.gmra.mxu0 %v5168
        %v5437 = vpop.f32.mrf.mxu0
        %v5438 = vadd.f32 %v5223, %v5437
        %5439 = vmatmul.f32.gmra.mxu0 %v5169
        %v5440 = vpop.f32.mrf.mxu0
        %v5441 = vadd.f32 %v5228, %v5440
        %5442 = vmatmul.f32.gmra.mxu0 %v5170
        %v5443 = vpop.f32.mrf.mxu0
        %v5444 = vadd.f32 %v5233, %v5443
        %5445 = vmatmul.f32.gmra.mxu0 %v5171
        %v5446 = vpop.f32.mrf.mxu0
        %v5447 = vadd.f32 %v5238, %v5446
        %5448 = vmatmul.f32.gmra.mxu0 %v5172
        %v5449 = vpop.f32.mrf.mxu0
        %v5450 = vadd.f32 %v5243, %v5449
        %5451 = vmatmul.f32.gmra.mxu0 %v5173
        %v5452 = vpop.f32.mrf.mxu0
        %v5453 = vadd.f32 %v5248, %v5452
        %5454 = vmatmul.f32.gmra.mxu0 %v5174
        %v5455 = vpop.f32.mrf.mxu0
        %v5456 = vadd.f32 %v5253, %v5455
        %5457 = vmatmul.f32.gmra.mxu0 %v5175
        %v5458 = vpop.f32.mrf.mxu0
        %v5459 = vadd.f32 %v5258, %v5458
        %5460 = vmatmul.f32.gmra.mxu0 %v5176
        %v5461 = vpop.f32.mrf.mxu0
        %v5462 = vadd.f32 %v5263, %v5461
        %5463 = vmatmul.f32.gmra.mxu0 %v5177
        %v5464 = vpop.f32.mrf.mxu0
        %v5465 = vadd.f32 %v5268, %v5464
        %5466 = vmatmul.f32.gmra.mxu0 %v5178
        %v5467 = vpop.f32.mrf.mxu0
        %v5468 = vadd.f32 %v5273, %v5467
        %5469 = vdwg.mxu0
        %5470 = vmatpush.msra.mxu0 %v5162
        %5471 = vmatpush.msra.mxu0 %v5102
        %5472 = vmatpush.msra.mxu0 %v5042
        %5473 = vmatpush.msra.mxu0 %v4982
        %5474 = vmatpush.msra.mxu0 %v4922
        %5475 = vmatpush.msra.mxu0 %v4862
        %5476 = vmatpush.msra.mxu0 %v4802
        %5477 = vmatpush.msra.mxu0 %v4742
        %5478 = vmatpush.msra.mxu0 %v4682
        %5479 = vmatpush.msra.mxu0 %v4622
        %5480 = vmatpush.msra.mxu0 %v4562
        %5481 = vmatpush.msra.mxu0 %v4502
        %5482 = vmatpush.msra.mxu0 %v4442
        %5483 = vmatpush.msra.mxu0 %v4382
        %5484 = vmatpush.msra.mxu0 %v4322
        %5485 = vmatpush.msra.mxu0 %v4262
        %5486 = vmatmul.f32.gmra.mxu0 %v5163
        %v5487 = vpop.f32.mrf.mxu0
        %v5488 = vadd.f32 %v5198, %v5487
        %5489 = vmatmul.f32.gmra.mxu0 %v5164
        %v5490 = vpop.f32.mrf.mxu0
        %v5491 = vadd.f32 %v5203, %v5490
        %5492 = vmatmul.f32.gmra.mxu0 %v5165
        %v5493 = vpop.f32.mrf.mxu0
        %v5494 = vadd.f32 %v5208, %v5493
        %5495 = vmatmul.f32.gmra.mxu0 %v5166
        %v5496 = vpop.f32.mrf.mxu0
        %v5497 = vadd.f32 %v5213, %v5496
        %5498 = vmatmul.f32.gmra.mxu0 %v5167
        %v5499 = vpop.f32.mrf.mxu0
        %v5500 = vadd.f32 %v5218, %v5499
        %5501 = vmatmul.f32.gmra.mxu0 %v5168
        %v5502 = vpop.f32.mrf.mxu0
        %v5503 = vadd.f32 %v5223, %v5502
        %5504 = vmatmul.f32.gmra.mxu0 %v5169
        %v5505 = vpop.f32.mrf.mxu0
        %v5506 = vadd.f32 %v5228, %v5505
        %5507 = vmatmul.f32.gmra.mxu0 %v5170
        %v5508 = vpop.f32.mrf.mxu0
        %v5509 = vadd.f32 %v5233, %v5508
        %5510 = vmatmul.f32.gmra.mxu0 %v5171
        %v5511 = vpop.f32.mrf.mxu0
        %v5512 = vadd.f32 %v5238, %v5511
        %5513 = vmatmul.f32.gmra.mxu0 %v5172
        %v5514 = vpop.f32.mrf.mxu0
        %v5515 = vadd.f32 %v5243, %v5514
        %5516 = vmatmul.f32.gmra.mxu0 %v5173
        %v5517 = vpop.f32.mrf.mxu0
        %v5518 = vadd.f32 %v5248, %v5517
        %5519 = vmatmul.f32.gmra.mxu0 %v5174
        %v5520 = vpop.f32.mrf.mxu0
        %v5521 = vadd.f32 %v5253, %v5520
        %5522 = vmatmul.f32.gmra.mxu0 %v5175
        %v5523 = vpop.f32.mrf.mxu0
        %v5524 = vadd.f32 %v5258, %v5523
        %5525 = vmatmul.f32.gmra.mxu0 %v5176
        %v5526 = vpop.f32.mrf.mxu0
        %v5527 = vadd.f32 %v5263, %v5526
        %5528 = vmatmul.f32.gmra.mxu0 %v5177
        %v5529 = vpop.f32.mrf.mxu0
        %v5530 = vadd.f32 %v5268, %v5529
        %5531 = vmatmul.f32.gmra.mxu0 %v5178
        %v5532 = vpop.f32.mrf.mxu0
        %v5533 = vadd.f32 %v5273, %v5532
        %5534 = vdwg.mxu0
        %v5535 = vsub.f32 0.0, %v5293
        %v5536 = vsub.f32 0.0, %v5358
        %v5537 = vsub.f32 0.0, %v5423
        %v5538 = vsub.f32 0.0, %v5488
        %v5539 = vsub.f32 0.0, %v5296
        %v5540 = vsub.f32 0.0, %v5361
        %v5541 = vsub.f32 0.0, %v5426
        %v5542 = vsub.f32 0.0, %v5491
        %v5543 = vsub.f32 0.0, %v5299
        %v5544 = vsub.f32 0.0, %v5364
        %v5545 = vsub.f32 0.0, %v5429
        %v5546 = vsub.f32 0.0, %v5494
        %v5547 = vsub.f32 0.0, %v5302
        %v5548 = vsub.f32 0.0, %v5367
        %v5549 = vsub.f32 0.0, %v5432
        %v5550 = vsub.f32 0.0, %v5497
        %v5551 = vsub.f32 0.0, %v5305
        %v5552 = vsub.f32 0.0, %v5370
        %v5553 = vsub.f32 0.0, %v5435
        %v5554 = vsub.f32 0.0, %v5500
        %v5555 = vsub.f32 0.0, %v5308
        %v5556 = vsub.f32 0.0, %v5373
        %v5557 = vsub.f32 0.0, %v5438
        %v5558 = vsub.f32 0.0, %v5503
        %v5559 = vsub.f32 0.0, %v5311
        %v5560 = vsub.f32 0.0, %v5376
        %v5561 = vsub.f32 0.0, %v5441
        %v5562 = vsub.f32 0.0, %v5506
        %v5563 = vsub.f32 0.0, %v5314
        %v5564 = vsub.f32 0.0, %v5379
        %v5565 = vsub.f32 0.0, %v5444
        %v5566 = vsub.f32 0.0, %v5509
        %v5567 = vsub.f32 0.0, %v5317
        %v5568 = vsub.f32 0.0, %v5382
        %v5569 = vsub.f32 0.0, %v5447
        %v5570 = vsub.f32 0.0, %v5512
        %v5571 = vsub.f32 0.0, %v5320
        %v5572 = vsub.f32 0.0, %v5385
        %v5573 = vsub.f32 0.0, %v5450
        %v5574 = vsub.f32 0.0, %v5515
        %v5575 = vsub.f32 0.0, %v5323
        %v5576 = vsub.f32 0.0, %v5388
        %v5577 = vsub.f32 0.0, %v5453
        %v5578 = vsub.f32 0.0, %v5518
        %v5579 = vsub.f32 0.0, %v5326
        %v5580 = vsub.f32 0.0, %v5391
        %v5581 = vsub.f32 0.0, %v5456
        %v5582 = vsub.f32 0.0, %v5521
        %v5583 = vsub.f32 0.0, %v5329
        %v5584 = vsub.f32 0.0, %v5394
        %v5585 = vsub.f32 0.0, %v5459
        %v5586 = vsub.f32 0.0, %v5524
        %v5587 = vsub.f32 0.0, %v5332
        %v5588 = vsub.f32 0.0, %v5397
        %v5589 = vsub.f32 0.0, %v5462
        %v5590 = vsub.f32 0.0, %v5527
        %v5591 = vsub.f32 0.0, %v5335
        %v5592 = vsub.f32 0.0, %v5400
        %v5593 = vsub.f32 0.0, %v5465
        %v5594 = vsub.f32 0.0, %v5530
        %v5595 = vsub.f32 0.0, %v5338
        %v5596 = vsub.f32 0.0, %v5403
        %v5597 = vsub.f32 0.0, %v5468
        %v5598 = vsub.f32 0.0, %v5533
        %v5599 = vmul.f32 %v5535, 1.442695
        %v5600 = vpow.pop %v5599
        %v5601 = vmul.f32 %v5536, 1.442695
        %v5602 = vpow.pop %v5601
        %v5603 = vmul.f32 %v5537, 1.442695
        %v5604 = vpow.pop %v5603
        %v5605 = vmul.f32 %v5538, 1.442695
        %v5606 = vpow.pop %v5605
        %v5607 = vmul.f32 %v5539, 1.442695
        %v5608 = vpow.pop %v5607
        %v5609 = vmul.f32 %v5540, 1.442695
        %v5610 = vpow.pop %v5609
        %v5611 = vmul.f32 %v5541, 1.442695
        %v5612 = vpow.pop %v5611
        %v5613 = vmul.f32 %v5542, 1.442695
        %v5614 = vpow.pop %v5613
        %v5615 = vmul.f32 %v5543, 1.442695
        %v5616 = vpow.pop %v5615
        %v5617 = vmul.f32 %v5544, 1.442695
        %v5618 = vpow.pop %v5617
        %v5619 = vmul.f32 %v5545, 1.442695
        %v5620 = vpow.pop %v5619
        %v5621 = vmul.f32 %v5546, 1.442695
        %v5622 = vpow.pop %v5621
        %v5623 = vmul.f32 %v5547, 1.442695
        %v5624 = vpow.pop %v5623
        %v5625 = vmul.f32 %v5548, 1.442695
        %v5626 = vpow.pop %v5625
        %v5627 = vmul.f32 %v5549, 1.442695
        %v5628 = vpow.pop %v5627
        %v5629 = vmul.f32 %v5550, 1.442695
        %v5630 = vpow.pop %v5629
        %v5631 = vmul.f32 %v5551, 1.442695
        %v5632 = vpow.pop %v5631
        %v5633 = vmul.f32 %v5552, 1.442695
        %v5634 = vpow.pop %v5633
        %v5635 = vmul.f32 %v5553, 1.442695
        %v5636 = vpow.pop %v5635
        %v5637 = vmul.f32 %v5554, 1.442695
        %v5638 = vpow.pop %v5637
        %v5639 = vmul.f32 %v5555, 1.442695
        %v5640 = vpow.pop %v5639
        %v5641 = vmul.f32 %v5556, 1.442695
        %v5642 = vpow.pop %v5641
        %v5643 = vmul.f32 %v5557, 1.442695
        %v5644 = vpow.pop %v5643
        %v5645 = vmul.f32 %v5558, 1.442695
        %v5646 = vpow.pop %v5645
        %v5647 = vmul.f32 %v5559, 1.442695
        %v5648 = vpow.pop %v5647
        %v5649 = vmul.f32 %v5560, 1.442695
        %v5650 = vpow.pop %v5649
        %v5651 = vmul.f32 %v5561, 1.442695
        %v5652 = vpow.pop %v5651
        %v5653 = vmul.f32 %v5562, 1.442695
        %v5654 = vpow.pop %v5653
        %v5655 = vmul.f32 %v5563, 1.442695
        %v5656 = vpow.pop %v5655
        %v5657 = vmul.f32 %v5564, 1.442695
        %v5658 = vpow.pop %v5657
        %v5659 = vmul.f32 %v5565, 1.442695
        %v5660 = vpow.pop %v5659
        %v5661 = vmul.f32 %v5566, 1.442695
        %v5662 = vpow.pop %v5661
        %v5663 = vmul.f32 %v5567, 1.442695
        %v5664 = vpow.pop %v5663
        %v5665 = vmul.f32 %v5568, 1.442695
        %v5666 = vpow.pop %v5665
        %v5667 = vmul.f32 %v5569, 1.442695
        %v5668 = vpow.pop %v5667
        %v5669 = vmul.f32 %v5570, 1.442695
        %v5670 = vpow.pop %v5669
        %v5671 = vmul.f32 %v5571, 1.442695
        %v5672 = vpow.pop %v5671
        %v5673 = vmul.f32 %v5572, 1.442695
        %v5674 = vpow.pop %v5673
        %v5675 = vmul.f32 %v5573, 1.442695
        %v5676 = vpow.pop %v5675
        %v5677 = vmul.f32 %v5574, 1.442695
        %v5678 = vpow.pop %v5677
        %v5679 = vmul.f32 %v5575, 1.442695
        %v5680 = vpow.pop %v5679
        %v5681 = vmul.f32 %v5576, 1.442695
        %v5682 = vpow.pop %v5681
        %v5683 = vmul.f32 %v5577, 1.442695
        %v5684 = vpow.pop %v5683
        %v5685 = vmul.f32 %v5578, 1.442695
        %v5686 = vpow.pop %v5685
        %v5687 = vmul.f32 %v5579, 1.442695
        %v5688 = vpow.pop %v5687
        %v5689 = vmul.f32 %v5580, 1.442695
        %v5690 = vpow.pop %v5689
        %v5691 = vmul.f32 %v5581, 1.442695
        %v5692 = vpow.pop %v5691
        %v5693 = vmul.f32 %v5582, 1.442695
        %v5694 = vpow.pop %v5693
        %v5695 = vmul.f32 %v5583, 1.442695
        %v5696 = vpow.pop %v5695
        %v5697 = vmul.f32 %v5584, 1.442695
        %v5698 = vpow.pop %v5697
        %v5699 = vmul.f32 %v5585, 1.442695
        %v5700 = vpow.pop %v5699
        %v5701 = vmul.f32 %v5586, 1.442695
        %v5702 = vpow.pop %v5701
        %v5703 = vmul.f32 %v5587, 1.442695
        %v5704 = vpow.pop %v5703
        %v5705 = vmul.f32 %v5588, 1.442695
        %v5706 = vpow.pop %v5705
        %v5707 = vmul.f32 %v5589, 1.442695
        %v5708 = vpow.pop %v5707
        %v5709 = vmul.f32 %v5590, 1.442695
        %v5710 = vpow.pop %v5709
        %v5711 = vmul.f32 %v5591, 1.442695
        %v5712 = vpow.pop %v5711
        %v5713 = vmul.f32 %v5592, 1.442695
        %v5714 = vpow.pop %v5713
        %v5715 = vmul.f32 %v5593, 1.442695
        %v5716 = vpow.pop %v5715
        %v5717 = vmul.f32 %v5594, 1.442695
        %v5718 = vpow.pop %v5717
        %v5719 = vmul.f32 %v5595, 1.442695
        %v5720 = vpow.pop %v5719
        %v5721 = vmul.f32 %v5596, 1.442695
        %v5722 = vpow.pop %v5721
        %v5723 = vmul.f32 %v5597, 1.442695
        %v5724 = vpow.pop %v5723
        %v5725 = vmul.f32 %v5598, 1.442695
        %v5726 = vpow.pop %v5725
        %v5727 = vadd.f32 %v5600, 1.0
        %v5728 = vadd.f32 %v5602, 1.0
        %v5729 = vadd.f32 %v5604, 1.0
        %v5730 = vadd.f32 %v5606, 1.0
        %v5731 = vadd.f32 %v5608, 1.0
        %v5732 = vadd.f32 %v5610, 1.0
        %v5733 = vadd.f32 %v5612, 1.0
        %v5734 = vadd.f32 %v5614, 1.0
        %v5735 = vadd.f32 %v5616, 1.0
        %v5736 = vadd.f32 %v5618, 1.0
        %v5737 = vadd.f32 %v5620, 1.0
        %v5738 = vadd.f32 %v5622, 1.0
        %v5739 = vadd.f32 %v5624, 1.0
        %v5740 = vadd.f32 %v5626, 1.0
        %v5741 = vadd.f32 %v5628, 1.0
        %v5742 = vadd.f32 %v5630, 1.0
        %v5743 = vadd.f32 %v5632, 1.0
        %v5744 = vadd.f32 %v5634, 1.0
        %v5745 = vadd.f32 %v5636, 1.0
        %v5746 = vadd.f32 %v5638, 1.0
        %v5747 = vadd.f32 %v5640, 1.0
        %v5748 = vadd.f32 %v5642, 1.0
        %v5749 = vadd.f32 %v5644, 1.0
        %v5750 = vadd.f32 %v5646, 1.0
        %v5751 = vadd.f32 %v5648, 1.0
        %v5752 = vadd.f32 %v5650, 1.0
        %v5753 = vadd.f32 %v5652, 1.0
        %v5754 = vadd.f32 %v5654, 1.0
        %v5755 = vadd.f32 %v5656, 1.0
        %v5756 = vadd.f32 %v5658, 1.0
        %v5757 = vadd.f32 %v5660, 1.0
        %v5758 = vadd.f32 %v5662, 1.0
        %v5759 = vadd.f32 %v5664, 1.0
        %v5760 = vadd.f32 %v5666, 1.0
        %v5761 = vadd.f32 %v5668, 1.0
        %v5762 = vadd.f32 %v5670, 1.0
        %v5763 = vadd.f32 %v5672, 1.0
        %v5764 = vadd.f32 %v5674, 1.0
        %v5765 = vadd.f32 %v5676, 1.0
        %v5766 = vadd.f32 %v5678, 1.0
        %v5767 = vadd.f32 %v5680, 1.0
        %v5768 = vadd.f32 %v5682, 1.0
        %v5769 = vadd.f32 %v5684, 1.0
        %v5770 = vadd.f32 %v5686, 1.0
        %v5771 = vadd.f32 %v5688, 1.0
        %v5772 = vadd.f32 %v5690, 1.0
        %v5773 = vadd.f32 %v5692, 1.0
        %v5774 = vadd.f32 %v5694, 1.0
        %v5775 = vadd.f32 %v5696, 1.0
        %v5776 = vadd.f32 %v5698, 1.0
        %v5777 = vadd.f32 %v5700, 1.0
        %v5778 = vadd.f32 %v5702, 1.0
        %v5779 = vadd.f32 %v5704, 1.0
        %v5780 = vadd.f32 %v5706, 1.0
        %v5781 = vadd.f32 %v5708, 1.0
        %v5782 = vadd.f32 %v5710, 1.0
        %v5783 = vadd.f32 %v5712, 1.0
        %v5784 = vadd.f32 %v5714, 1.0
        %v5785 = vadd.f32 %v5716, 1.0
        %v5786 = vadd.f32 %v5718, 1.0
        %v5787 = vadd.f32 %v5720, 1.0
        %v5788 = vadd.f32 %v5722, 1.0
        %v5789 = vadd.f32 %v5724, 1.0
        %v5790 = vadd.f32 %v5726, 1.0
        %v5791 = vrcp.pop %v5727
        %v5792 = vmul.f32 %v5727, %v5791
        %v5793 = vsub.f32 1.0, %v5792
        %v5794 = vmul.f32 %v5791, %v5793
        %v5795 = vadd.f32 %v5791, %v5794
        %vm5796 = vweird.f32 %v5727
        %vm5797 = vweird.f32 %v5791
        %vm5798 = vmor %vm5796, %vm5797
        %v5799 = vsel %vm5798, %v5791, %v5795
        %v5800 = vand.u32 2147483647, %v5727
        %vm5801 = vcmp.eq.f32.partialorder %v5800, 8.507059e+37
        %v5802 = vand.u32 %v5727, 2147483648
        %v5803 = vor.u32 1.1754944e-38, %v5802
        %v5804 = vsel %vm5801, %v5803, %v5799
        %v5805 = vmul.f32 1.0, %v5804
        %v5806 = vrcp.pop %v5728
        %v5807 = vmul.f32 %v5728, %v5806
        %v5808 = vsub.f32 1.0, %v5807
        %v5809 = vmul.f32 %v5806, %v5808
        %v5810 = vadd.f32 %v5806, %v5809
        %vm5811 = vweird.f32 %v5728
        %vm5812 = vweird.f32 %v5806
        %vm5813 = vmor %vm5811, %vm5812
        %v5814 = vsel %vm5813, %v5806, %v5810
        %v5815 = vand.u32 2147483647, %v5728
        %vm5816 = vcmp.eq.f32.partialorder %v5815, 8.507059e+37
        %v5817 = vand.u32 %v5728, 2147483648
        %v5818 = vor.u32 1.1754944e-38, %v5817
        %v5819 = vsel %vm5816, %v5818, %v5814
        %v5820 = vmul.f32 1.0, %v5819
        %v5821 = vrcp.pop %v5729
        %v5822 = vmul.f32 %v5729, %v5821
        %v5823 = vsub.f32 1.0, %v5822
        %v5824 = vmul.f32 %v5821, %v5823
        %v5825 = vadd.f32 %v5821, %v5824
        %vm5826 = vweird.f32 %v5729
        %vm5827 = vweird.f32 %v5821
        %vm5828 = vmor %vm5826, %vm5827
        %v5829 = vsel %vm5828, %v5821, %v5825
        %v5830 = vand.u32 2147483647, %v5729
        %vm5831 = vcmp.eq.f32.partialorder %v5830, 8.507059e+37
        %v5832 = vand.u32 %v5729, 2147483648
        %v5833 = vor.u32 1.1754944e-38, %v5832
        %v5834 = vsel %vm5831, %v5833, %v5829
        %v5835 = vmul.f32 1.0, %v5834
        %v5836 = vrcp.pop %v5730
        %v5837 = vmul.f32 %v5730, %v5836
        %v5838 = vsub.f32 1.0, %v5837
        %v5839 = vmul.f32 %v5836, %v5838
        %v5840 = vadd.f32 %v5836, %v5839
        %vm5841 = vweird.f32 %v5730
        %vm5842 = vweird.f32 %v5836
        %vm5843 = vmor %vm5841, %vm5842
        %v5844 = vsel %vm5843, %v5836, %v5840
        %v5845 = vand.u32 2147483647, %v5730
        %vm5846 = vcmp.eq.f32.partialorder %v5845, 8.507059e+37
        %v5847 = vand.u32 %v5730, 2147483648
        %v5848 = vor.u32 1.1754944e-38, %v5847
        %v5849 = vsel %vm5846, %v5848, %v5844
        %v5850 = vmul.f32 1.0, %v5849
        %v5851 = vrcp.pop %v5731
        %v5852 = vmul.f32 %v5731, %v5851
        %v5853 = vsub.f32 1.0, %v5852
        %v5854 = vmul.f32 %v5851, %v5853
        %v5855 = vadd.f32 %v5851, %v5854
        %vm5856 = vweird.f32 %v5731
        %vm5857 = vweird.f32 %v5851
        %vm5858 = vmor %vm5856, %vm5857
        %v5859 = vsel %vm5858, %v5851, %v5855
        %v5860 = vand.u32 2147483647, %v5731
        %vm5861 = vcmp.eq.f32.partialorder %v5860, 8.507059e+37
        %v5862 = vand.u32 %v5731, 2147483648
        %v5863 = vor.u32 1.1754944e-38, %v5862
        %v5864 = vsel %vm5861, %v5863, %v5859
        %v5865 = vmul.f32 1.0, %v5864
        %v5866 = vrcp.pop %v5732
        %v5867 = vmul.f32 %v5732, %v5866
        %v5868 = vsub.f32 1.0, %v5867
        %v5869 = vmul.f32 %v5866, %v5868
        %v5870 = vadd.f32 %v5866, %v5869
        %vm5871 = vweird.f32 %v5732
        %vm5872 = vweird.f32 %v5866
        %vm5873 = vmor %vm5871, %vm5872
        %v5874 = vsel %vm5873, %v5866, %v5870
        %v5875 = vand.u32 2147483647, %v5732
        %vm5876 = vcmp.eq.f32.partialorder %v5875, 8.507059e+37
        %v5877 = vand.u32 %v5732, 2147483648
        %v5878 = vor.u32 1.1754944e-38, %v5877
        %v5879 = vsel %vm5876, %v5878, %v5874
        %v5880 = vmul.f32 1.0, %v5879
        %v5881 = vrcp.pop %v5733
        %v5882 = vmul.f32 %v5733, %v5881
        %v5883 = vsub.f32 1.0, %v5882
        %v5884 = vmul.f32 %v5881, %v5883
        %v5885 = vadd.f32 %v5881, %v5884
        %vm5886 = vweird.f32 %v5733
        %vm5887 = vweird.f32 %v5881
        %vm5888 = vmor %vm5886, %vm5887
        %v5889 = vsel %vm5888, %v5881, %v5885
        %v5890 = vand.u32 2147483647, %v5733
        %vm5891 = vcmp.eq.f32.partialorder %v5890, 8.507059e+37
        %v5892 = vand.u32 %v5733, 2147483648
        %v5893 = vor.u32 1.1754944e-38, %v5892
        %v5894 = vsel %vm5891, %v5893, %v5889
        %v5895 = vmul.f32 1.0, %v5894
        %v5896 = vrcp.pop %v5734
        %v5897 = vmul.f32 %v5734, %v5896
        %v5898 = vsub.f32 1.0, %v5897
        %v5899 = vmul.f32 %v5896, %v5898
        %v5900 = vadd.f32 %v5896, %v5899
        %vm5901 = vweird.f32 %v5734
        %vm5902 = vweird.f32 %v5896
        %vm5903 = vmor %vm5901, %vm5902
        %v5904 = vsel %vm5903, %v5896, %v5900
        %v5905 = vand.u32 2147483647, %v5734
        %vm5906 = vcmp.eq.f32.partialorder %v5905, 8.507059e+37
        %v5907 = vand.u32 %v5734, 2147483648
        %v5908 = vor.u32 1.1754944e-38, %v5907
        %v5909 = vsel %vm5906, %v5908, %v5904
        %v5910 = vmul.f32 1.0, %v5909
        %v5911 = vrcp.pop %v5735
        %v5912 = vmul.f32 %v5735, %v5911
        %v5913 = vsub.f32 1.0, %v5912
        %v5914 = vmul.f32 %v5911, %v5913
        %v5915 = vadd.f32 %v5911, %v5914
        %vm5916 = vweird.f32 %v5735
        %vm5917 = vweird.f32 %v5911
        %vm5918 = vmor %vm5916, %vm5917
        %v5919 = vsel %vm5918, %v5911, %v5915
        %v5920 = vand.u32 2147483647, %v5735
        %vm5921 = vcmp.eq.f32.partialorder %v5920, 8.507059e+37
        %v5922 = vand.u32 %v5735, 2147483648
        %v5923 = vor.u32 1.1754944e-38, %v5922
        %v5924 = vsel %vm5921, %v5923, %v5919
        %v5925 = vmul.f32 1.0, %v5924
        %v5926 = vrcp.pop %v5736
        %v5927 = vmul.f32 %v5736, %v5926
        %v5928 = vsub.f32 1.0, %v5927
        %v5929 = vmul.f32 %v5926, %v5928
        %v5930 = vadd.f32 %v5926, %v5929
        %vm5931 = vweird.f32 %v5736
        %vm5932 = vweird.f32 %v5926
        %vm5933 = vmor %vm5931, %vm5932
        %v5934 = vsel %vm5933, %v5926, %v5930
        %v5935 = vand.u32 2147483647, %v5736
        %vm5936 = vcmp.eq.f32.partialorder %v5935, 8.507059e+37
        %v5937 = vand.u32 %v5736, 2147483648
        %v5938 = vor.u32 1.1754944e-38, %v5937
        %v5939 = vsel %vm5936, %v5938, %v5934
        %v5940 = vmul.f32 1.0, %v5939
        %v5941 = vrcp.pop %v5737
        %v5942 = vmul.f32 %v5737, %v5941
        %v5943 = vsub.f32 1.0, %v5942
        %v5944 = vmul.f32 %v5941, %v5943
        %v5945 = vadd.f32 %v5941, %v5944
        %vm5946 = vweird.f32 %v5737
        %vm5947 = vweird.f32 %v5941
        %vm5948 = vmor %vm5946, %vm5947
        %v5949 = vsel %vm5948, %v5941, %v5945
        %v5950 = vand.u32 2147483647, %v5737
        %vm5951 = vcmp.eq.f32.partialorder %v5950, 8.507059e+37
        %v5952 = vand.u32 %v5737, 2147483648
        %v5953 = vor.u32 1.1754944e-38, %v5952
        %v5954 = vsel %vm5951, %v5953, %v5949
        %v5955 = vmul.f32 1.0, %v5954
        %v5956 = vrcp.pop %v5738
        %v5957 = vmul.f32 %v5738, %v5956
        %v5958 = vsub.f32 1.0, %v5957
        %v5959 = vmul.f32 %v5956, %v5958
        %v5960 = vadd.f32 %v5956, %v5959
        %vm5961 = vweird.f32 %v5738
        %vm5962 = vweird.f32 %v5956
        %vm5963 = vmor %vm5961, %vm5962
        %v5964 = vsel %vm5963, %v5956, %v5960
        %v5965 = vand.u32 2147483647, %v5738
        %vm5966 = vcmp.eq.f32.partialorder %v5965, 8.507059e+37
        %v5967 = vand.u32 %v5738, 2147483648
        %v5968 = vor.u32 1.1754944e-38, %v5967
        %v5969 = vsel %vm5966, %v5968, %v5964
        %v5970 = vmul.f32 1.0, %v5969
        %v5971 = vrcp.pop %v5739
        %v5972 = vmul.f32 %v5739, %v5971
        %v5973 = vsub.f32 1.0, %v5972
        %v5974 = vmul.f32 %v5971, %v5973
        %v5975 = vadd.f32 %v5971, %v5974
        %vm5976 = vweird.f32 %v5739
        %vm5977 = vweird.f32 %v5971
        %vm5978 = vmor %vm5976, %vm5977
        %v5979 = vsel %vm5978, %v5971, %v5975
        %v5980 = vand.u32 2147483647, %v5739
        %vm5981 = vcmp.eq.f32.partialorder %v5980, 8.507059e+37
        %v5982 = vand.u32 %v5739, 2147483648
        %v5983 = vor.u32 1.1754944e-38, %v5982
        %v5984 = vsel %vm5981, %v5983, %v5979
        %v5985 = vmul.f32 1.0, %v5984
        %v5986 = vrcp.pop %v5740
        %v5987 = vmul.f32 %v5740, %v5986
        %v5988 = vsub.f32 1.0, %v5987
        %v5989 = vmul.f32 %v5986, %v5988
        %v5990 = vadd.f32 %v5986, %v5989
        %vm5991 = vweird.f32 %v5740
        %vm5992 = vweird.f32 %v5986
        %vm5993 = vmor %vm5991, %vm5992
        %v5994 = vsel %vm5993, %v5986, %v5990
        %v5995 = vand.u32 2147483647, %v5740
        %vm5996 = vcmp.eq.f32.partialorder %v5995, 8.507059e+37
        %v5997 = vand.u32 %v5740, 2147483648
        %v5998 = vor.u32 1.1754944e-38, %v5997
        %v5999 = vsel %vm5996, %v5998, %v5994
        %v6000 = vmul.f32 1.0, %v5999
        %v6001 = vrcp.pop %v5741
        %v6002 = vmul.f32 %v5741, %v6001
        %v6003 = vsub.f32 1.0, %v6002
        %v6004 = vmul.f32 %v6001, %v6003
        %v6005 = vadd.f32 %v6001, %v6004
        %vm6006 = vweird.f32 %v5741
        %vm6007 = vweird.f32 %v6001
        %vm6008 = vmor %vm6006, %vm6007
        %v6009 = vsel %vm6008, %v6001, %v6005
        %v6010 = vand.u32 2147483647, %v5741
        %vm6011 = vcmp.eq.f32.partialorder %v6010, 8.507059e+37
        %v6012 = vand.u32 %v5741, 2147483648
        %v6013 = vor.u32 1.1754944e-38, %v6012
        %v6014 = vsel %vm6011, %v6013, %v6009
        %v6015 = vmul.f32 1.0, %v6014
        %v6016 = vrcp.pop %v5742
        %v6017 = vmul.f32 %v5742, %v6016
        %v6018 = vsub.f32 1.0, %v6017
        %v6019 = vmul.f32 %v6016, %v6018
        %v6020 = vadd.f32 %v6016, %v6019
        %vm6021 = vweird.f32 %v5742
        %vm6022 = vweird.f32 %v6016
        %vm6023 = vmor %vm6021, %vm6022
        %v6024 = vsel %vm6023, %v6016, %v6020
        %v6025 = vand.u32 2147483647, %v5742
        %vm6026 = vcmp.eq.f32.partialorder %v6025, 8.507059e+37
        %v6027 = vand.u32 %v5742, 2147483648
        %v6028 = vor.u32 1.1754944e-38, %v6027
        %v6029 = vsel %vm6026, %v6028, %v6024
        %v6030 = vmul.f32 1.0, %v6029
        %v6031 = vrcp.pop %v5743
        %v6032 = vmul.f32 %v5743, %v6031
        %v6033 = vsub.f32 1.0, %v6032
        %v6034 = vmul.f32 %v6031, %v6033
        %v6035 = vadd.f32 %v6031, %v6034
        %vm6036 = vweird.f32 %v5743
        %vm6037 = vweird.f32 %v6031
        %vm6038 = vmor %vm6036, %vm6037
        %v6039 = vsel %vm6038, %v6031, %v6035
        %v6040 = vand.u32 2147483647, %v5743
        %vm6041 = vcmp.eq.f32.partialorder %v6040, 8.507059e+37
        %v6042 = vand.u32 %v5743, 2147483648
        %v6043 = vor.u32 1.1754944e-38, %v6042
        %v6044 = vsel %vm6041, %v6043, %v6039
        %v6045 = vmul.f32 1.0, %v6044
        %v6046 = vrcp.pop %v5744
        %v6047 = vmul.f32 %v5744, %v6046
        %v6048 = vsub.f32 1.0, %v6047
        %v6049 = vmul.f32 %v6046, %v6048
        %v6050 = vadd.f32 %v6046, %v6049
        %vm6051 = vweird.f32 %v5744
        %vm6052 = vweird.f32 %v6046
        %vm6053 = vmor %vm6051, %vm6052
        %v6054 = vsel %vm6053, %v6046, %v6050
        %v6055 = vand.u32 2147483647, %v5744
        %vm6056 = vcmp.eq.f32.partialorder %v6055, 8.507059e+37
        %v6057 = vand.u32 %v5744, 2147483648
        %v6058 = vor.u32 1.1754944e-38, %v6057
        %v6059 = vsel %vm6056, %v6058, %v6054
        %v6060 = vmul.f32 1.0, %v6059
        %v6061 = vrcp.pop %v5745
        %v6062 = vmul.f32 %v5745, %v6061
        %v6063 = vsub.f32 1.0, %v6062
        %v6064 = vmul.f32 %v6061, %v6063
        %v6065 = vadd.f32 %v6061, %v6064
        %vm6066 = vweird.f32 %v5745
        %vm6067 = vweird.f32 %v6061
        %vm6068 = vmor %vm6066, %vm6067
        %v6069 = vsel %vm6068, %v6061, %v6065
        %v6070 = vand.u32 2147483647, %v5745
        %vm6071 = vcmp.eq.f32.partialorder %v6070, 8.507059e+37
        %v6072 = vand.u32 %v5745, 2147483648
        %v6073 = vor.u32 1.1754944e-38, %v6072
        %v6074 = vsel %vm6071, %v6073, %v6069
        %v6075 = vmul.f32 1.0, %v6074
        %v6076 = vrcp.pop %v5746
        %v6077 = vmul.f32 %v5746, %v6076
        %v6078 = vsub.f32 1.0, %v6077
        %v6079 = vmul.f32 %v6076, %v6078
        %v6080 = vadd.f32 %v6076, %v6079
        %vm6081 = vweird.f32 %v5746
        %vm6082 = vweird.f32 %v6076
        %vm6083 = vmor %vm6081, %vm6082
        %v6084 = vsel %vm6083, %v6076, %v6080
        %v6085 = vand.u32 2147483647, %v5746
        %vm6086 = vcmp.eq.f32.partialorder %v6085, 8.507059e+37
        %v6087 = vand.u32 %v5746, 2147483648
        %v6088 = vor.u32 1.1754944e-38, %v6087
        %v6089 = vsel %vm6086, %v6088, %v6084
        %v6090 = vmul.f32 1.0, %v6089
        %v6091 = vrcp.pop %v5747
        %v6092 = vmul.f32 %v5747, %v6091
        %v6093 = vsub.f32 1.0, %v6092
        %v6094 = vmul.f32 %v6091, %v6093
        %v6095 = vadd.f32 %v6091, %v6094
        %vm6096 = vweird.f32 %v5747
        %vm6097 = vweird.f32 %v6091
        %vm6098 = vmor %vm6096, %vm6097
        %v6099 = vsel %vm6098, %v6091, %v6095
        %v6100 = vand.u32 2147483647, %v5747
        %vm6101 = vcmp.eq.f32.partialorder %v6100, 8.507059e+37
        %v6102 = vand.u32 %v5747, 2147483648
        %v6103 = vor.u32 1.1754944e-38, %v6102
        %v6104 = vsel %vm6101, %v6103, %v6099
        %v6105 = vmul.f32 1.0, %v6104
        %v6106 = vrcp.pop %v5748
        %v6107 = vmul.f32 %v5748, %v6106
        %v6108 = vsub.f32 1.0, %v6107
        %v6109 = vmul.f32 %v6106, %v6108
        %v6110 = vadd.f32 %v6106, %v6109
        %vm6111 = vweird.f32 %v5748
        %vm6112 = vweird.f32 %v6106
        %vm6113 = vmor %vm6111, %vm6112
        %v6114 = vsel %vm6113, %v6106, %v6110
        %v6115 = vand.u32 2147483647, %v5748
        %vm6116 = vcmp.eq.f32.partialorder %v6115, 8.507059e+37
        %v6117 = vand.u32 %v5748, 2147483648
        %v6118 = vor.u32 1.1754944e-38, %v6117
        %v6119 = vsel %vm6116, %v6118, %v6114
        %v6120 = vmul.f32 1.0, %v6119
        %v6121 = vrcp.pop %v5749
        %v6122 = vmul.f32 %v5749, %v6121
        %v6123 = vsub.f32 1.0, %v6122
        %v6124 = vmul.f32 %v6121, %v6123
        %v6125 = vadd.f32 %v6121, %v6124
        %vm6126 = vweird.f32 %v5749
        %vm6127 = vweird.f32 %v6121
        %vm6128 = vmor %vm6126, %vm6127
        %v6129 = vsel %vm6128, %v6121, %v6125
        %v6130 = vand.u32 2147483647, %v5749
        %vm6131 = vcmp.eq.f32.partialorder %v6130, 8.507059e+37
        %v6132 = vand.u32 %v5749, 2147483648
        %v6133 = vor.u32 1.1754944e-38, %v6132
        %v6134 = vsel %vm6131, %v6133, %v6129
        %v6135 = vmul.f32 1.0, %v6134
        %v6136 = vrcp.pop %v5750
        %v6137 = vmul.f32 %v5750, %v6136
        %v6138 = vsub.f32 1.0, %v6137
        %v6139 = vmul.f32 %v6136, %v6138
        %v6140 = vadd.f32 %v6136, %v6139
        %vm6141 = vweird.f32 %v5750
        %vm6142 = vweird.f32 %v6136
        %vm6143 = vmor %vm6141, %vm6142
        %v6144 = vsel %vm6143, %v6136, %v6140
        %v6145 = vand.u32 2147483647, %v5750
        %vm6146 = vcmp.eq.f32.partialorder %v6145, 8.507059e+37
        %v6147 = vand.u32 %v5750, 2147483648
        %v6148 = vor.u32 1.1754944e-38, %v6147
        %v6149 = vsel %vm6146, %v6148, %v6144
        %v6150 = vmul.f32 1.0, %v6149
        %v6151 = vrcp.pop %v5751
        %v6152 = vmul.f32 %v5751, %v6151
        %v6153 = vsub.f32 1.0, %v6152
        %v6154 = vmul.f32 %v6151, %v6153
        %v6155 = vadd.f32 %v6151, %v6154
        %vm6156 = vweird.f32 %v5751
        %vm6157 = vweird.f32 %v6151
        %vm6158 = vmor %vm6156, %vm6157
        %v6159 = vsel %vm6158, %v6151, %v6155
        %v6160 = vand.u32 2147483647, %v5751
        %vm6161 = vcmp.eq.f32.partialorder %v6160, 8.507059e+37
        %v6162 = vand.u32 %v5751, 2147483648
        %v6163 = vor.u32 1.1754944e-38, %v6162
        %v6164 = vsel %vm6161, %v6163, %v6159
        %v6165 = vmul.f32 1.0, %v6164
        %v6166 = vrcp.pop %v5752
        %v6167 = vmul.f32 %v5752, %v6166
        %v6168 = vsub.f32 1.0, %v6167
        %v6169 = vmul.f32 %v6166, %v6168
        %v6170 = vadd.f32 %v6166, %v6169
        %vm6171 = vweird.f32 %v5752
        %vm6172 = vweird.f32 %v6166
        %vm6173 = vmor %vm6171, %vm6172
        %v6174 = vsel %vm6173, %v6166, %v6170
        %v6175 = vand.u32 2147483647, %v5752
        %vm6176 = vcmp.eq.f32.partialorder %v6175, 8.507059e+37
        %v6177 = vand.u32 %v5752, 2147483648
        %v6178 = vor.u32 1.1754944e-38, %v6177
        %v6179 = vsel %vm6176, %v6178, %v6174
        %v6180 = vmul.f32 1.0, %v6179
        %v6181 = vrcp.pop %v5753
        %v6182 = vmul.f32 %v5753, %v6181
        %v6183 = vsub.f32 1.0, %v6182
        %v6184 = vmul.f32 %v6181, %v6183
        %v6185 = vadd.f32 %v6181, %v6184
        %vm6186 = vweird.f32 %v5753
        %vm6187 = vweird.f32 %v6181
        %vm6188 = vmor %vm6186, %vm6187
        %v6189 = vsel %vm6188, %v6181, %v6185
        %v6190 = vand.u32 2147483647, %v5753
        %vm6191 = vcmp.eq.f32.partialorder %v6190, 8.507059e+37
        %v6192 = vand.u32 %v5753, 2147483648
        %v6193 = vor.u32 1.1754944e-38, %v6192
        %v6194 = vsel %vm6191, %v6193, %v6189
        %v6195 = vmul.f32 1.0, %v6194
        %v6196 = vrcp.pop %v5754
        %v6197 = vmul.f32 %v5754, %v6196
        %v6198 = vsub.f32 1.0, %v6197
        %v6199 = vmul.f32 %v6196, %v6198
        %v6200 = vadd.f32 %v6196, %v6199
        %vm6201 = vweird.f32 %v5754
        %vm6202 = vweird.f32 %v6196
        %vm6203 = vmor %vm6201, %vm6202
        %v6204 = vsel %vm6203, %v6196, %v6200
        %v6205 = vand.u32 2147483647, %v5754
        %vm6206 = vcmp.eq.f32.partialorder %v6205, 8.507059e+37
        %v6207 = vand.u32 %v5754, 2147483648
        %v6208 = vor.u32 1.1754944e-38, %v6207
        %v6209 = vsel %vm6206, %v6208, %v6204
        %v6210 = vmul.f32 1.0, %v6209
        %v6211 = vrcp.pop %v5755
        %v6212 = vmul.f32 %v5755, %v6211
        %v6213 = vsub.f32 1.0, %v6212
        %v6214 = vmul.f32 %v6211, %v6213
        %v6215 = vadd.f32 %v6211, %v6214
        %vm6216 = vweird.f32 %v5755
        %vm6217 = vweird.f32 %v6211
        %vm6218 = vmor %vm6216, %vm6217
        %v6219 = vsel %vm6218, %v6211, %v6215
        %v6220 = vand.u32 2147483647, %v5755
        %vm6221 = vcmp.eq.f32.partialorder %v6220, 8.507059e+37
        %v6222 = vand.u32 %v5755, 2147483648
        %v6223 = vor.u32 1.1754944e-38, %v6222
        %v6224 = vsel %vm6221, %v6223, %v6219
        %v6225 = vmul.f32 1.0, %v6224
        %v6226 = vrcp.pop %v5756
        %v6227 = vmul.f32 %v5756, %v6226
        %v6228 = vsub.f32 1.0, %v6227
        %v6229 = vmul.f32 %v6226, %v6228
        %v6230 = vadd.f32 %v6226, %v6229
        %vm6231 = vweird.f32 %v5756
        %vm6232 = vweird.f32 %v6226
        %vm6233 = vmor %vm6231, %vm6232
        %v6234 = vsel %vm6233, %v6226, %v6230
        %v6235 = vand.u32 2147483647, %v5756
        %vm6236 = vcmp.eq.f32.partialorder %v6235, 8.507059e+37
        %v6237 = vand.u32 %v5756, 2147483648
        %v6238 = vor.u32 1.1754944e-38, %v6237
        %v6239 = vsel %vm6236, %v6238, %v6234
        %v6240 = vmul.f32 1.0, %v6239
        %v6241 = vrcp.pop %v5757
        %v6242 = vmul.f32 %v5757, %v6241
        %v6243 = vsub.f32 1.0, %v6242
        %v6244 = vmul.f32 %v6241, %v6243
        %v6245 = vadd.f32 %v6241, %v6244
        %vm6246 = vweird.f32 %v5757
        %vm6247 = vweird.f32 %v6241
        %vm6248 = vmor %vm6246, %vm6247
        %v6249 = vsel %vm6248, %v6241, %v6245
        %v6250 = vand.u32 2147483647, %v5757
        %vm6251 = vcmp.eq.f32.partialorder %v6250, 8.507059e+37
        %v6252 = vand.u32 %v5757, 2147483648
        %v6253 = vor.u32 1.1754944e-38, %v6252
        %v6254 = vsel %vm6251, %v6253, %v6249
        %v6255 = vmul.f32 1.0, %v6254
        %v6256 = vrcp.pop %v5758
        %v6257 = vmul.f32 %v5758, %v6256
        %v6258 = vsub.f32 1.0, %v6257
        %v6259 = vmul.f32 %v6256, %v6258
        %v6260 = vadd.f32 %v6256, %v6259
        %vm6261 = vweird.f32 %v5758
        %vm6262 = vweird.f32 %v6256
        %vm6263 = vmor %vm6261, %vm6262
        %v6264 = vsel %vm6263, %v6256, %v6260
        %v6265 = vand.u32 2147483647, %v5758
        %vm6266 = vcmp.eq.f32.partialorder %v6265, 8.507059e+37
        %v6267 = vand.u32 %v5758, 2147483648
        %v6268 = vor.u32 1.1754944e-38, %v6267
        %v6269 = vsel %vm6266, %v6268, %v6264
        %v6270 = vmul.f32 1.0, %v6269
        %v6271 = vrcp.pop %v5759
        %v6272 = vmul.f32 %v5759, %v6271
        %v6273 = vsub.f32 1.0, %v6272
        %v6274 = vmul.f32 %v6271, %v6273
        %v6275 = vadd.f32 %v6271, %v6274
        %vm6276 = vweird.f32 %v5759
        %vm6277 = vweird.f32 %v6271
        %vm6278 = vmor %vm6276, %vm6277
        %v6279 = vsel %vm6278, %v6271, %v6275
        %v6280 = vand.u32 2147483647, %v5759
        %vm6281 = vcmp.eq.f32.partialorder %v6280, 8.507059e+37
        %v6282 = vand.u32 %v5759, 2147483648
        %v6283 = vor.u32 1.1754944e-38, %v6282
        %v6284 = vsel %vm6281, %v6283, %v6279
        %v6285 = vmul.f32 1.0, %v6284
        %v6286 = vrcp.pop %v5760
        %v6287 = vmul.f32 %v5760, %v6286
        %v6288 = vsub.f32 1.0, %v6287
        %v6289 = vmul.f32 %v6286, %v6288
        %v6290 = vadd.f32 %v6286, %v6289
        %vm6291 = vweird.f32 %v5760
        %vm6292 = vweird.f32 %v6286
        %vm6293 = vmor %vm6291, %vm6292
        %v6294 = vsel %vm6293, %v6286, %v6290
        %v6295 = vand.u32 2147483647, %v5760
        %vm6296 = vcmp.eq.f32.partialorder %v6295, 8.507059e+37
        %v6297 = vand.u32 %v5760, 2147483648
        %v6298 = vor.u32 1.1754944e-38, %v6297
        %v6299 = vsel %vm6296, %v6298, %v6294
        %v6300 = vmul.f32 1.0, %v6299
        %v6301 = vrcp.pop %v5761
        %v6302 = vmul.f32 %v5761, %v6301
        %v6303 = vsub.f32 1.0, %v6302
        %v6304 = vmul.f32 %v6301, %v6303
        %v6305 = vadd.f32 %v6301, %v6304
        %vm6306 = vweird.f32 %v5761
        %vm6307 = vweird.f32 %v6301
        %vm6308 = vmor %vm6306, %vm6307
        %v6309 = vsel %vm6308, %v6301, %v6305
        %v6310 = vand.u32 2147483647, %v5761
        %vm6311 = vcmp.eq.f32.partialorder %v6310, 8.507059e+37
        %v6312 = vand.u32 %v5761, 2147483648
        %v6313 = vor.u32 1.1754944e-38, %v6312
        %v6314 = vsel %vm6311, %v6313, %v6309
        %v6315 = vmul.f32 1.0, %v6314
        %v6316 = vrcp.pop %v5762
        %v6317 = vmul.f32 %v5762, %v6316
        %v6318 = vsub.f32 1.0, %v6317
        %v6319 = vmul.f32 %v6316, %v6318
        %v6320 = vadd.f32 %v6316, %v6319
        %vm6321 = vweird.f32 %v5762
        %vm6322 = vweird.f32 %v6316
        %vm6323 = vmor %vm6321, %vm6322
        %v6324 = vsel %vm6323, %v6316, %v6320
        %v6325 = vand.u32 2147483647, %v5762
        %vm6326 = vcmp.eq.f32.partialorder %v6325, 8.507059e+37
        %v6327 = vand.u32 %v5762, 2147483648
        %v6328 = vor.u32 1.1754944e-38, %v6327
        %v6329 = vsel %vm6326, %v6328, %v6324
        %v6330 = vmul.f32 1.0, %v6329
        %v6331 = vrcp.pop %v5763
        %v6332 = vmul.f32 %v5763, %v6331
        %v6333 = vsub.f32 1.0, %v6332
        %v6334 = vmul.f32 %v6331, %v6333
        %v6335 = vadd.f32 %v6331, %v6334
        %vm6336 = vweird.f32 %v5763
        %vm6337 = vweird.f32 %v6331
        %vm6338 = vmor %vm6336, %vm6337
        %v6339 = vsel %vm6338, %v6331, %v6335
        %v6340 = vand.u32 2147483647, %v5763
        %vm6341 = vcmp.eq.f32.partialorder %v6340, 8.507059e+37
        %v6342 = vand.u32 %v5763, 2147483648
        %v6343 = vor.u32 1.1754944e-38, %v6342
        %v6344 = vsel %vm6341, %v6343, %v6339
        %v6345 = vmul.f32 1.0, %v6344
        %v6346 = vrcp.pop %v5764
        %v6347 = vmul.f32 %v5764, %v6346
        %v6348 = vsub.f32 1.0, %v6347
        %v6349 = vmul.f32 %v6346, %v6348
        %v6350 = vadd.f32 %v6346, %v6349
        %vm6351 = vweird.f32 %v5764
        %vm6352 = vweird.f32 %v6346
        %vm6353 = vmor %vm6351, %vm6352
        %v6354 = vsel %vm6353, %v6346, %v6350
        %v6355 = vand.u32 2147483647, %v5764
        %vm6356 = vcmp.eq.f32.partialorder %v6355, 8.507059e+37
        %v6357 = vand.u32 %v5764, 2147483648
        %v6358 = vor.u32 1.1754944e-38, %v6357
        %v6359 = vsel %vm6356, %v6358, %v6354
        %v6360 = vmul.f32 1.0, %v6359
        %v6361 = vrcp.pop %v5765
        %v6362 = vmul.f32 %v5765, %v6361
        %v6363 = vsub.f32 1.0, %v6362
        %v6364 = vmul.f32 %v6361, %v6363
        %v6365 = vadd.f32 %v6361, %v6364
        %vm6366 = vweird.f32 %v5765
        %vm6367 = vweird.f32 %v6361
        %vm6368 = vmor %vm6366, %vm6367
        %v6369 = vsel %vm6368, %v6361, %v6365
        %v6370 = vand.u32 2147483647, %v5765
        %vm6371 = vcmp.eq.f32.partialorder %v6370, 8.507059e+37
        %v6372 = vand.u32 %v5765, 2147483648
        %v6373 = vor.u32 1.1754944e-38, %v6372
        %v6374 = vsel %vm6371, %v6373, %v6369
        %v6375 = vmul.f32 1.0, %v6374
        %v6376 = vrcp.pop %v5766
        %v6377 = vmul.f32 %v5766, %v6376
        %v6378 = vsub.f32 1.0, %v6377
        %v6379 = vmul.f32 %v6376, %v6378
        %v6380 = vadd.f32 %v6376, %v6379
        %vm6381 = vweird.f32 %v5766
        %vm6382 = vweird.f32 %v6376
        %vm6383 = vmor %vm6381, %vm6382
        %v6384 = vsel %vm6383, %v6376, %v6380
        %v6385 = vand.u32 2147483647, %v5766
        %vm6386 = vcmp.eq.f32.partialorder %v6385, 8.507059e+37
        %v6387 = vand.u32 %v5766, 2147483648
        %v6388 = vor.u32 1.1754944e-38, %v6387
        %v6389 = vsel %vm6386, %v6388, %v6384
        %v6390 = vmul.f32 1.0, %v6389
        %v6391 = vrcp.pop %v5767
        %v6392 = vmul.f32 %v5767, %v6391
        %v6393 = vsub.f32 1.0, %v6392
        %v6394 = vmul.f32 %v6391, %v6393
        %v6395 = vadd.f32 %v6391, %v6394
        %vm6396 = vweird.f32 %v5767
        %vm6397 = vweird.f32 %v6391
        %vm6398 = vmor %vm6396, %vm6397
        %v6399 = vsel %vm6398, %v6391, %v6395
        %v6400 = vand.u32 2147483647, %v5767
        %vm6401 = vcmp.eq.f32.partialorder %v6400, 8.507059e+37
        %v6402 = vand.u32 %v5767, 2147483648
        %v6403 = vor.u32 1.1754944e-38, %v6402
        %v6404 = vsel %vm6401, %v6403, %v6399
        %v6405 = vmul.f32 1.0, %v6404
        %v6406 = vrcp.pop %v5768
        %v6407 = vmul.f32 %v5768, %v6406
        %v6408 = vsub.f32 1.0, %v6407
        %v6409 = vmul.f32 %v6406, %v6408
        %v6410 = vadd.f32 %v6406, %v6409
        %vm6411 = vweird.f32 %v5768
        %vm6412 = vweird.f32 %v6406
        %vm6413 = vmor %vm6411, %vm6412
        %v6414 = vsel %vm6413, %v6406, %v6410
        %v6415 = vand.u32 2147483647, %v5768
        %vm6416 = vcmp.eq.f32.partialorder %v6415, 8.507059e+37
        %v6417 = vand.u32 %v5768, 2147483648
        %v6418 = vor.u32 1.1754944e-38, %v6417
        %v6419 = vsel %vm6416, %v6418, %v6414
        %v6420 = vmul.f32 1.0, %v6419
        %v6421 = vrcp.pop %v5769
        %v6422 = vmul.f32 %v5769, %v6421
        %v6423 = vsub.f32 1.0, %v6422
        %v6424 = vmul.f32 %v6421, %v6423
        %v6425 = vadd.f32 %v6421, %v6424
        %vm6426 = vweird.f32 %v5769
        %vm6427 = vweird.f32 %v6421
        %vm6428 = vmor %vm6426, %vm6427
        %v6429 = vsel %vm6428, %v6421, %v6425
        %v6430 = vand.u32 2147483647, %v5769
        %vm6431 = vcmp.eq.f32.partialorder %v6430, 8.507059e+37
        %v6432 = vand.u32 %v5769, 2147483648
        %v6433 = vor.u32 1.1754944e-38, %v6432
        %v6434 = vsel %vm6431, %v6433, %v6429
        %v6435 = vmul.f32 1.0, %v6434
        %v6436 = vrcp.pop %v5770
        %v6437 = vmul.f32 %v5770, %v6436
        %v6438 = vsub.f32 1.0, %v6437
        %v6439 = vmul.f32 %v6436, %v6438
        %v6440 = vadd.f32 %v6436, %v6439
        %vm6441 = vweird.f32 %v5770
        %vm6442 = vweird.f32 %v6436
        %vm6443 = vmor %vm6441, %vm6442
        %v6444 = vsel %vm6443, %v6436, %v6440
        %v6445 = vand.u32 2147483647, %v5770
        %vm6446 = vcmp.eq.f32.partialorder %v6445, 8.507059e+37
        %v6447 = vand.u32 %v5770, 2147483648
        %v6448 = vor.u32 1.1754944e-38, %v6447
        %v6449 = vsel %vm6446, %v6448, %v6444
        %v6450 = vmul.f32 1.0, %v6449
        %v6451 = vrcp.pop %v5771
        %v6452 = vmul.f32 %v5771, %v6451
        %v6453 = vsub.f32 1.0, %v6452
        %v6454 = vmul.f32 %v6451, %v6453
        %v6455 = vadd.f32 %v6451, %v6454
        %vm6456 = vweird.f32 %v5771
        %vm6457 = vweird.f32 %v6451
        %vm6458 = vmor %vm6456, %vm6457
        %v6459 = vsel %vm6458, %v6451, %v6455
        %v6460 = vand.u32 2147483647, %v5771
        %vm6461 = vcmp.eq.f32.partialorder %v6460, 8.507059e+37
        %v6462 = vand.u32 %v5771, 2147483648
        %v6463 = vor.u32 1.1754944e-38, %v6462
        %v6464 = vsel %vm6461, %v6463, %v6459
        %v6465 = vmul.f32 1.0, %v6464
        %v6466 = vrcp.pop %v5772
        %v6467 = vmul.f32 %v5772, %v6466
        %v6468 = vsub.f32 1.0, %v6467
        %v6469 = vmul.f32 %v6466, %v6468
        %v6470 = vadd.f32 %v6466, %v6469
        %vm6471 = vweird.f32 %v5772
        %vm6472 = vweird.f32 %v6466
        %vm6473 = vmor %vm6471, %vm6472
        %v6474 = vsel %vm6473, %v6466, %v6470
        %v6475 = vand.u32 2147483647, %v5772
        %vm6476 = vcmp.eq.f32.partialorder %v6475, 8.507059e+37
        %v6477 = vand.u32 %v5772, 2147483648
        %v6478 = vor.u32 1.1754944e-38, %v6477
        %v6479 = vsel %vm6476, %v6478, %v6474
        %v6480 = vmul.f32 1.0, %v6479
        %v6481 = vrcp.pop %v5773
        %v6482 = vmul.f32 %v5773, %v6481
        %v6483 = vsub.f32 1.0, %v6482
        %v6484 = vmul.f32 %v6481, %v6483
        %v6485 = vadd.f32 %v6481, %v6484
        %vm6486 = vweird.f32 %v5773
        %vm6487 = vweird.f32 %v6481
        %vm6488 = vmor %vm6486, %vm6487
        %v6489 = vsel %vm6488, %v6481, %v6485
        %v6490 = vand.u32 2147483647, %v5773
        %vm6491 = vcmp.eq.f32.partialorder %v6490, 8.507059e+37
        %v6492 = vand.u32 %v5773, 2147483648
        %v6493 = vor.u32 1.1754944e-38, %v6492
        %v6494 = vsel %vm6491, %v6493, %v6489
        %v6495 = vmul.f32 1.0, %v6494
        %v6496 = vrcp.pop %v5774
        %v6497 = vmul.f32 %v5774, %v6496
        %v6498 = vsub.f32 1.0, %v6497
        %v6499 = vmul.f32 %v6496, %v6498
        %v6500 = vadd.f32 %v6496, %v6499
        %vm6501 = vweird.f32 %v5774
        %vm6502 = vweird.f32 %v6496
        %vm6503 = vmor %vm6501, %vm6502
        %v6504 = vsel %vm6503, %v6496, %v6500
        %v6505 = vand.u32 2147483647, %v5774
        %vm6506 = vcmp.eq.f32.partialorder %v6505, 8.507059e+37
        %v6507 = vand.u32 %v5774, 2147483648
        %v6508 = vor.u32 1.1754944e-38, %v6507
        %v6509 = vsel %vm6506, %v6508, %v6504
        %v6510 = vmul.f32 1.0, %v6509
        %v6511 = vrcp.pop %v5775
        %v6512 = vmul.f32 %v5775, %v6511
        %v6513 = vsub.f32 1.0, %v6512
        %v6514 = vmul.f32 %v6511, %v6513
        %v6515 = vadd.f32 %v6511, %v6514
        %vm6516 = vweird.f32 %v5775
        %vm6517 = vweird.f32 %v6511
        %vm6518 = vmor %vm6516, %vm6517
        %v6519 = vsel %vm6518, %v6511, %v6515
        %v6520 = vand.u32 2147483647, %v5775
        %vm6521 = vcmp.eq.f32.partialorder %v6520, 8.507059e+37
        %v6522 = vand.u32 %v5775, 2147483648
        %v6523 = vor.u32 1.1754944e-38, %v6522
        %v6524 = vsel %vm6521, %v6523, %v6519
        %v6525 = vmul.f32 1.0, %v6524
        %v6526 = vrcp.pop %v5776
        %v6527 = vmul.f32 %v5776, %v6526
        %v6528 = vsub.f32 1.0, %v6527
        %v6529 = vmul.f32 %v6526, %v6528
        %v6530 = vadd.f32 %v6526, %v6529
        %vm6531 = vweird.f32 %v5776
        %vm6532 = vweird.f32 %v6526
        %vm6533 = vmor %vm6531, %vm6532
        %v6534 = vsel %vm6533, %v6526, %v6530
        %v6535 = vand.u32 2147483647, %v5776
        %vm6536 = vcmp.eq.f32.partialorder %v6535, 8.507059e+37
        %v6537 = vand.u32 %v5776, 2147483648
        %v6538 = vor.u32 1.1754944e-38, %v6537
        %v6539 = vsel %vm6536, %v6538, %v6534
        %v6540 = vmul.f32 1.0, %v6539
        %v6541 = vrcp.pop %v5777
        %v6542 = vmul.f32 %v5777, %v6541
        %v6543 = vsub.f32 1.0, %v6542
        %v6544 = vmul.f32 %v6541, %v6543
        %v6545 = vadd.f32 %v6541, %v6544
        %vm6546 = vweird.f32 %v5777
        %vm6547 = vweird.f32 %v6541
        %vm6548 = vmor %vm6546, %vm6547
        %v6549 = vsel %vm6548, %v6541, %v6545
        %v6550 = vand.u32 2147483647, %v5777
        %vm6551 = vcmp.eq.f32.partialorder %v6550, 8.507059e+37
        %v6552 = vand.u32 %v5777, 2147483648
        %v6553 = vor.u32 1.1754944e-38, %v6552
        %v6554 = vsel %vm6551, %v6553, %v6549
        %v6555 = vmul.f32 1.0, %v6554
        %v6556 = vrcp.pop %v5778
        %v6557 = vmul.f32 %v5778, %v6556
        %v6558 = vsub.f32 1.0, %v6557
        %v6559 = vmul.f32 %v6556, %v6558
        %v6560 = vadd.f32 %v6556, %v6559
        %vm6561 = vweird.f32 %v5778
        %vm6562 = vweird.f32 %v6556
        %vm6563 = vmor %vm6561, %vm6562
        %v6564 = vsel %vm6563, %v6556, %v6560
        %v6565 = vand.u32 2147483647, %v5778
        %vm6566 = vcmp.eq.f32.partialorder %v6565, 8.507059e+37
        %v6567 = vand.u32 %v5778, 2147483648
        %v6568 = vor.u32 1.1754944e-38, %v6567
        %v6569 = vsel %vm6566, %v6568, %v6564
        %v6570 = vmul.f32 1.0, %v6569
        %v6571 = vrcp.pop %v5779
        %v6572 = vmul.f32 %v5779, %v6571
        %v6573 = vsub.f32 1.0, %v6572
        %v6574 = vmul.f32 %v6571, %v6573
        %v6575 = vadd.f32 %v6571, %v6574
        %vm6576 = vweird.f32 %v5779
        %vm6577 = vweird.f32 %v6571
        %vm6578 = vmor %vm6576, %vm6577
        %v6579 = vsel %vm6578, %v6571, %v6575
        %v6580 = vand.u32 2147483647, %v5779
        %vm6581 = vcmp.eq.f32.partialorder %v6580, 8.507059e+37
        %v6582 = vand.u32 %v5779, 2147483648
        %v6583 = vor.u32 1.1754944e-38, %v6582
        %v6584 = vsel %vm6581, %v6583, %v6579
        %v6585 = vmul.f32 1.0, %v6584
        %v6586 = vrcp.pop %v5780
        %v6587 = vmul.f32 %v5780, %v6586
        %v6588 = vsub.f32 1.0, %v6587
        %v6589 = vmul.f32 %v6586, %v6588
        %v6590 = vadd.f32 %v6586, %v6589
        %vm6591 = vweird.f32 %v5780
        %vm6592 = vweird.f32 %v6586
        %vm6593 = vmor %vm6591, %vm6592
        %v6594 = vsel %vm6593, %v6586, %v6590
        %v6595 = vand.u32 2147483647, %v5780
        %vm6596 = vcmp.eq.f32.partialorder %v6595, 8.507059e+37
        %v6597 = vand.u32 %v5780, 2147483648
        %v6598 = vor.u32 1.1754944e-38, %v6597
        %v6599 = vsel %vm6596, %v6598, %v6594
        %v6600 = vmul.f32 1.0, %v6599
        %v6601 = vrcp.pop %v5781
        %v6602 = vmul.f32 %v5781, %v6601
        %v6603 = vsub.f32 1.0, %v6602
        %v6604 = vmul.f32 %v6601, %v6603
        %v6605 = vadd.f32 %v6601, %v6604
        %vm6606 = vweird.f32 %v5781
        %vm6607 = vweird.f32 %v6601
        %vm6608 = vmor %vm6606, %vm6607
        %v6609 = vsel %vm6608, %v6601, %v6605
        %v6610 = vand.u32 2147483647, %v5781
        %vm6611 = vcmp.eq.f32.partialorder %v6610, 8.507059e+37
        %v6612 = vand.u32 %v5781, 2147483648
        %v6613 = vor.u32 1.1754944e-38, %v6612
        %v6614 = vsel %vm6611, %v6613, %v6609
        %v6615 = vmul.f32 1.0, %v6614
        %v6616 = vrcp.pop %v5782
        %v6617 = vmul.f32 %v5782, %v6616
        %v6618 = vsub.f32 1.0, %v6617
        %v6619 = vmul.f32 %v6616, %v6618
        %v6620 = vadd.f32 %v6616, %v6619
        %vm6621 = vweird.f32 %v5782
        %vm6622 = vweird.f32 %v6616
        %vm6623 = vmor %vm6621, %vm6622
        %v6624 = vsel %vm6623, %v6616, %v6620
        %v6625 = vand.u32 2147483647, %v5782
        %vm6626 = vcmp.eq.f32.partialorder %v6625, 8.507059e+37
        %v6627 = vand.u32 %v5782, 2147483648
        %v6628 = vor.u32 1.1754944e-38, %v6627
        %v6629 = vsel %vm6626, %v6628, %v6624
        %v6630 = vmul.f32 1.0, %v6629
        %v6631 = vrcp.pop %v5783
        %v6632 = vmul.f32 %v5783, %v6631
        %v6633 = vsub.f32 1.0, %v6632
        %v6634 = vmul.f32 %v6631, %v6633
        %v6635 = vadd.f32 %v6631, %v6634
        %vm6636 = vweird.f32 %v5783
        %vm6637 = vweird.f32 %v6631
        %vm6638 = vmor %vm6636, %vm6637
        %v6639 = vsel %vm6638, %v6631, %v6635
        %v6640 = vand.u32 2147483647, %v5783
        %vm6641 = vcmp.eq.f32.partialorder %v6640, 8.507059e+37
        %v6642 = vand.u32 %v5783, 2147483648
        %v6643 = vor.u32 1.1754944e-38, %v6642
        %v6644 = vsel %vm6641, %v6643, %v6639
        %v6645 = vmul.f32 1.0, %v6644
        %v6646 = vrcp.pop %v5784
        %v6647 = vmul.f32 %v5784, %v6646
        %v6648 = vsub.f32 1.0, %v6647
        %v6649 = vmul.f32 %v6646, %v6648
        %v6650 = vadd.f32 %v6646, %v6649
        %vm6651 = vweird.f32 %v5784
        %vm6652 = vweird.f32 %v6646
        %vm6653 = vmor %vm6651, %vm6652
        %v6654 = vsel %vm6653, %v6646, %v6650
        %v6655 = vand.u32 2147483647, %v5784
        %vm6656 = vcmp.eq.f32.partialorder %v6655, 8.507059e+37
        %v6657 = vand.u32 %v5784, 2147483648
        %v6658 = vor.u32 1.1754944e-38, %v6657
        %v6659 = vsel %vm6656, %v6658, %v6654
        %v6660 = vmul.f32 1.0, %v6659
        %v6661 = vrcp.pop %v5785
        %v6662 = vmul.f32 %v5785, %v6661
        %v6663 = vsub.f32 1.0, %v6662
        %v6664 = vmul.f32 %v6661, %v6663
        %v6665 = vadd.f32 %v6661, %v6664
        %vm6666 = vweird.f32 %v5785
        %vm6667 = vweird.f32 %v6661
        %vm6668 = vmor %vm6666, %vm6667
        %v6669 = vsel %vm6668, %v6661, %v6665
        %v6670 = vand.u32 2147483647, %v5785
        %vm6671 = vcmp.eq.f32.partialorder %v6670, 8.507059e+37
        %v6672 = vand.u32 %v5785, 2147483648
        %v6673 = vor.u32 1.1754944e-38, %v6672
        %v6674 = vsel %vm6671, %v6673, %v6669
        %v6675 = vmul.f32 1.0, %v6674
        %v6676 = vrcp.pop %v5786
        %v6677 = vmul.f32 %v5786, %v6676
        %v6678 = vsub.f32 1.0, %v6677
        %v6679 = vmul.f32 %v6676, %v6678
        %v6680 = vadd.f32 %v6676, %v6679
        %vm6681 = vweird.f32 %v5786
        %vm6682 = vweird.f32 %v6676
        %vm6683 = vmor %vm6681, %vm6682
        %v6684 = vsel %vm6683, %v6676, %v6680
        %v6685 = vand.u32 2147483647, %v5786
        %vm6686 = vcmp.eq.f32.partialorder %v6685, 8.507059e+37
        %v6687 = vand.u32 %v5786, 2147483648
        %v6688 = vor.u32 1.1754944e-38, %v6687
        %v6689 = vsel %vm6686, %v6688, %v6684
        %v6690 = vmul.f32 1.0, %v6689
        %v6691 = vrcp.pop %v5787
        %v6692 = vmul.f32 %v5787, %v6691
        %v6693 = vsub.f32 1.0, %v6692
        %v6694 = vmul.f32 %v6691, %v6693
        %v6695 = vadd.f32 %v6691, %v6694
        %vm6696 = vweird.f32 %v5787
        %vm6697 = vweird.f32 %v6691
        %vm6698 = vmor %vm6696, %vm6697
        %v6699 = vsel %vm6698, %v6691, %v6695
        %v6700 = vand.u32 2147483647, %v5787
        %vm6701 = vcmp.eq.f32.partialorder %v6700, 8.507059e+37
        %v6702 = vand.u32 %v5787, 2147483648
        %v6703 = vor.u32 1.1754944e-38, %v6702
        %v6704 = vsel %vm6701, %v6703, %v6699
        %v6705 = vmul.f32 1.0, %v6704
        %v6706 = vrcp.pop %v5788
        %v6707 = vmul.f32 %v5788, %v6706
        %v6708 = vsub.f32 1.0, %v6707
        %v6709 = vmul.f32 %v6706, %v6708
        %v6710 = vadd.f32 %v6706, %v6709
        %vm6711 = vweird.f32 %v5788
        %vm6712 = vweird.f32 %v6706
        %vm6713 = vmor %vm6711, %vm6712
        %v6714 = vsel %vm6713, %v6706, %v6710
        %v6715 = vand.u32 2147483647, %v5788
        %vm6716 = vcmp.eq.f32.partialorder %v6715, 8.507059e+37
        %v6717 = vand.u32 %v5788, 2147483648
        %v6718 = vor.u32 1.1754944e-38, %v6717
        %v6719 = vsel %vm6716, %v6718, %v6714
        %v6720 = vmul.f32 1.0, %v6719
        %v6721 = vrcp.pop %v5789
        %v6722 = vmul.f32 %v5789, %v6721
        %v6723 = vsub.f32 1.0, %v6722
        %v6724 = vmul.f32 %v6721, %v6723
        %v6725 = vadd.f32 %v6721, %v6724
        %vm6726 = vweird.f32 %v5789
        %vm6727 = vweird.f32 %v6721
        %vm6728 = vmor %vm6726, %vm6727
        %v6729 = vsel %vm6728, %v6721, %v6725
        %v6730 = vand.u32 2147483647, %v5789
        %vm6731 = vcmp.eq.f32.partialorder %v6730, 8.507059e+37
        %v6732 = vand.u32 %v5789, 2147483648
        %v6733 = vor.u32 1.1754944e-38, %v6732
        %v6734 = vsel %vm6731, %v6733, %v6729
        %v6735 = vmul.f32 1.0, %v6734
        %v6736 = vrcp.pop %v5790
        %v6737 = vmul.f32 %v5790, %v6736
        %v6738 = vsub.f32 1.0, %v6737
        %v6739 = vmul.f32 %v6736, %v6738
        %v6740 = vadd.f32 %v6736, %v6739
        %vm6741 = vweird.f32 %v5790
        %vm6742 = vweird.f32 %v6736
        %vm6743 = vmor %vm6741, %vm6742
        %v6744 = vsel %vm6743, %v6736, %v6740
        %v6745 = vand.u32 2147483647, %v5790
        %vm6746 = vcmp.eq.f32.partialorder %v6745, 8.507059e+37
        %v6747 = vand.u32 %v5790, 2147483648
        %v6748 = vor.u32 1.1754944e-38, %v6747
        %v6749 = vsel %vm6746, %v6748, %v6744
        %v6750 = vmul.f32 1.0, %v6749
        %v6751 = vld [vmem:[%s9] sm:$0xff]
        %v6752 = vld [vmem:[%s9 + $0x8] sm:$0xff]
        %v6753 = vld [vmem:[%s9 + $0x10] sm:$0xff]
        %v6754 = vld [vmem:[%s9 + $0x18] sm:$0xff]
        %v6755 = vld [vmem:[%s9 + $0x20] sm:$0xff]
        %v6756 = vld [vmem:[%s9 + $0x28] sm:$0xff]
        %v6757 = vld [vmem:[%s9 + $0x30] sm:$0xff]
        %v6758 = vld [vmem:[%s9 + $0x38] sm:$0xff]
        %v6759 = vld [vmem:[%s9 + $0x40] sm:$0xff]
        %v6760 = vld [vmem:[%s9 + $0x48] sm:$0xff]
        %v6761 = vld [vmem:[%s9 + $0x50] sm:$0xff]
        %v6762 = vld [vmem:[%s9 + $0x58] sm:$0xff]
        %v6763 = vld [vmem:[%s9 + $0x60] sm:$0xff]
        %v6764 = vld [vmem:[%s9 + $0x68] sm:$0xff]
        %v6765 = vld [vmem:[%s9 + $0x70] sm:$0xff]
        %v6766 = vld [vmem:[%s9 + $0x78] sm:$0xff]
        %v6767 = vld [vmem:[%s10] sm:$0xff]
        %v6768 = vld [vmem:[%s10 + $0x8] sm:$0xff]
        %v6769 = vld [vmem:[%s10 + $0x10] sm:$0xff]
        %v6770 = vld [vmem:[%s10 + $0x18] sm:$0xff]
        %v6771 = vld [vmem:[%s10 + $0x20] sm:$0xff]
        %v6772 = vld [vmem:[%s10 + $0x28] sm:$0xff]
        %v6773 = vld [vmem:[%s10 + $0x30] sm:$0xff]
        %v6774 = vld [vmem:[%s10 + $0x38] sm:$0xff]
        %v6775 = vld [vmem:[%s10 + $0x40] sm:$0xff]
        %v6776 = vld [vmem:[%s10 + $0x48] sm:$0xff]
        %v6777 = vld [vmem:[%s10 + $0x50] sm:$0xff]
        %v6778 = vld [vmem:[%s10 + $0x58] sm:$0xff]
        %v6779 = vld [vmem:[%s10 + $0x60] sm:$0xff]
        %v6780 = vld [vmem:[%s10 + $0x68] sm:$0xff]
        %v6781 = vld [vmem:[%s10 + $0x70] sm:$0xff]
        %v6782 = vld [vmem:[%s10 + $0x78] sm:$0xff]
        %6784 = vset.pattern.permute.xlu0 0
        %6785 = vperm.xlu0 %6784, %v6767
        %v6786 = vpop.permute.xlu0 %6785
        %6789 = vset.pattern.permute.xlu0 0
        %6790 = vperm.xlu0 %6789, %v6768
        %v6791 = vpop.permute.xlu0 %6790
        %6794 = vset.pattern.permute.xlu0 0
        %6795 = vperm.xlu0 %6794, %v6769
        %v6796 = vpop.permute.xlu0 %6795
        %6799 = vset.pattern.permute.xlu0 0
        %6800 = vperm.xlu0 %6799, %v6770
        %v6801 = vpop.permute.xlu0 %6800
        %6804 = vset.pattern.permute.xlu0 0
        %6805 = vperm.xlu0 %6804, %v6771
        %v6806 = vpop.permute.xlu0 %6805
        %6809 = vset.pattern.permute.xlu0 0
        %6810 = vperm.xlu0 %6809, %v6772
        %v6811 = vpop.permute.xlu0 %6810
        %6814 = vset.pattern.permute.xlu0 0
        %6815 = vperm.xlu0 %6814, %v6773
        %v6816 = vpop.permute.xlu0 %6815
        %6819 = vset.pattern.permute.xlu0 0
        %6820 = vperm.xlu0 %6819, %v6774
        %v6821 = vpop.permute.xlu0 %6820
        %6824 = vset.pattern.permute.xlu0 0
        %6825 = vperm.xlu0 %6824, %v6775
        %v6826 = vpop.permute.xlu0 %6825
        %6829 = vset.pattern.permute.xlu0 0
        %6830 = vperm.xlu0 %6829, %v6776
        %v6831 = vpop.permute.xlu0 %6830
        %6834 = vset.pattern.permute.xlu0 0
        %6835 = vperm.xlu0 %6834, %v6777
        %v6836 = vpop.permute.xlu0 %6835
        %6839 = vset.pattern.permute.xlu0 0
        %6840 = vperm.xlu0 %6839, %v6778
        %v6841 = vpop.permute.xlu0 %6840
        %6844 = vset.pattern.permute.xlu0 0
        %6845 = vperm.xlu0 %6844, %v6779
        %v6846 = vpop.permute.xlu0 %6845
        %6849 = vset.pattern.permute.xlu0 0
        %6850 = vperm.xlu0 %6849, %v6780
        %v6851 = vpop.permute.xlu0 %6850
        %6854 = vset.pattern.permute.xlu0 0
        %6855 = vperm.xlu0 %6854, %v6781
        %v6856 = vpop.permute.xlu0 %6855
        %6859 = vset.pattern.permute.xlu0 0
        %6860 = vperm.xlu0 %6859, %v6782
        %v6861 = vpop.permute.xlu0 %6860
        %6863 = vmatpush.msra.mxu0 %v6705
        %6864 = vmatpush.msra.mxu0 %v6645
        %6865 = vmatpush.msra.mxu0 %v6585
        %6866 = vmatpush.msra.mxu0 %v6525
        %6867 = vmatpush.msra.mxu0 %v6465
        %6868 = vmatpush.msra.mxu0 %v6405
        %6869 = vmatpush.msra.mxu0 %v6345
        %6870 = vmatpush.msra.mxu0 %v6285
        %6871 = vmatpush.msra.mxu0 %v6225
        %6872 = vmatpush.msra.mxu0 %v6165
        %6873 = vmatpush.msra.mxu0 %v6105
        %6874 = vmatpush.msra.mxu0 %v6045
        %6875 = vmatpush.msra.mxu0 %v5985
        %6876 = vmatpush.msra.mxu0 %v5925
        %6877 = vmatpush.msra.mxu0 %v5865
        %6878 = vmatpush.msra.mxu0 %v5805
        %6879 = vmatmul.f32.gmra.mxu0 %v6751
        %v6880 = vpop.f32.mrf.mxu0
        %v6881 = vadd.f32 %v6786, %v6880
        %6882 = vmatmul.f32.gmra.mxu0 %v6752
        %v6883 = vpop.f32.mrf.mxu0
        %v6884 = vadd.f32 %v6791, %v6883
        %6885 = vmatmul.f32.gmra.mxu0 %v6753
        %v6886 = vpop.f32.mrf.mxu0
        %v6887 = vadd.f32 %v6796, %v6886
        %6888 = vmatmul.f32.gmra.mxu0 %v6754
        %v6889 = vpop.f32.mrf.mxu0
        %v6890 = vadd.f32 %v6801, %v6889
        %6891 = vmatmul.f32.gmra.mxu0 %v6755
        %v6892 = vpop.f32.mrf.mxu0
        %v6893 = vadd.f32 %v6806, %v6892
        %6894 = vmatmul.f32.gmra.mxu0 %v6756
        %v6895 = vpop.f32.mrf.mxu0
        %v6896 = vadd.f32 %v6811, %v6895
        %6897 = vmatmul.f32.gmra.mxu0 %v6757
        %v6898 = vpop.f32.mrf.mxu0
        %v6899 = vadd.f32 %v6816, %v6898
        %6900 = vmatmul.f32.gmra.mxu0 %v6758
        %v6901 = vpop.f32.mrf.mxu0
        %v6902 = vadd.f32 %v6821, %v6901
        %6903 = vmatmul.f32.gmra.mxu0 %v6759
        %v6904 = vpop.f32.mrf.mxu0
        %v6905 = vadd.f32 %v6826, %v6904
        %6906 = vmatmul.f32.gmra.mxu0 %v6760
        %v6907 = vpop.f32.mrf.mxu0
        %v6908 = vadd.f32 %v6831, %v6907
        %6909 = vmatmul.f32.gmra.mxu0 %v6761
        %v6910 = vpop.f32.mrf.mxu0
        %v6911 = vadd.f32 %v6836, %v6910
        %6912 = vmatmul.f32.gmra.mxu0 %v6762
        %v6913 = vpop.f32.mrf.mxu0
        %v6914 = vadd.f32 %v6841, %v6913
        %6915 = vmatmul.f32.gmra.mxu0 %v6763
        %v6916 = vpop.f32.mrf.mxu0
        %v6917 = vadd.f32 %v6846, %v6916
        %6918 = vmatmul.f32.gmra.mxu0 %v6764
        %v6919 = vpop.f32.mrf.mxu0
        %v6920 = vadd.f32 %v6851, %v6919
        %6921 = vmatmul.f32.gmra.mxu0 %v6765
        %v6922 = vpop.f32.mrf.mxu0
        %v6923 = vadd.f32 %v6856, %v6922
        %6924 = vmatmul.f32.gmra.mxu0 %v6766
        %v6925 = vpop.f32.mrf.mxu0
        %v6926 = vadd.f32 %v6861, %v6925
        %6927 = vdwg.mxu0
        %6928 = vmatpush.msra.mxu0 %v6720
        %6929 = vmatpush.msra.mxu0 %v6660
        %6930 = vmatpush.msra.mxu0 %v6600
        %6931 = vmatpush.msra.mxu0 %v6540
        %6932 = vmatpush.msra.mxu0 %v6480
        %6933 = vmatpush.msra.mxu0 %v6420
        %6934 = vmatpush.msra.mxu0 %v6360
        %6935 = vmatpush.msra.mxu0 %v6300
        %6936 = vmatpush.msra.mxu0 %v6240
        %6937 = vmatpush.msra.mxu0 %v6180
        %6938 = vmatpush.msra.mxu0 %v6120
        %6939 = vmatpush.msra.mxu0 %v6060
        %6940 = vmatpush.msra.mxu0 %v6000
        %6941 = vmatpush.msra.mxu0 %v5940
        %6942 = vmatpush.msra.mxu0 %v5880
        %6943 = vmatpush.msra.mxu0 %v5820
        %6944 = vmatmul.f32.gmra.mxu0 %v6751
        %v6945 = vpop.f32.mrf.mxu0
        %v6946 = vadd.f32 %v6786, %v6945
        %6947 = vmatmul.f32.gmra.mxu0 %v6752
        %v6948 = vpop.f32.mrf.mxu0
        %v6949 = vadd.f32 %v6791, %v6948
        %6950 = vmatmul.f32.gmra.mxu0 %v6753
        %v6951 = vpop.f32.mrf.mxu0
        %v6952 = vadd.f32 %v6796, %v6951
        %6953 = vmatmul.f32.gmra.mxu0 %v6754
        %v6954 = vpop.f32.mrf.mxu0
        %v6955 = vadd.f32 %v6801, %v6954
        %6956 = vmatmul.f32.gmra.mxu0 %v6755
        %v6957 = vpop.f32.mrf.mxu0
        %v6958 = vadd.f32 %v6806, %v6957
        %6959 = vmatmul.f32.gmra.mxu0 %v6756
        %v6960 = vpop.f32.mrf.mxu0
        %v6961 = vadd.f32 %v6811, %v6960
        %6962 = vmatmul.f32.gmra.mxu0 %v6757
        %v6963 = vpop.f32.mrf.mxu0
        %v6964 = vadd.f32 %v6816, %v6963
        %6965 = vmatmul.f32.gmra.mxu0 %v6758
        %v6966 = vpop.f32.mrf.mxu0
        %v6967 = vadd.f32 %v6821, %v6966
        %6968 = vmatmul.f32.gmra.mxu0 %v6759
        %v6969 = vpop.f32.mrf.mxu0
        %v6970 = vadd.f32 %v6826, %v6969
        %6971 = vmatmul.f32.gmra.mxu0 %v6760
        %v6972 = vpop.f32.mrf.mxu0
        %v6973 = vadd.f32 %v6831, %v6972
        %6974 = vmatmul.f32.gmra.mxu0 %v6761
        %v6975 = vpop.f32.mrf.mxu0
        %v6976 = vadd.f32 %v6836, %v6975
        %6977 = vmatmul.f32.gmra.mxu0 %v6762
        %v6978 = vpop.f32.mrf.mxu0
        %v6979 = vadd.f32 %v6841, %v6978
        %6980 = vmatmul.f32.gmra.mxu0 %v6763
        %v6981 = vpop.f32.mrf.mxu0
        %v6982 = vadd.f32 %v6846, %v6981
        %6983 = vmatmul.f32.gmra.mxu0 %v6764
        %v6984 = vpop.f32.mrf.mxu0
        %v6985 = vadd.f32 %v6851, %v6984
        %6986 = vmatmul.f32.gmra.mxu0 %v6765
        %v6987 = vpop.f32.mrf.mxu0
        %v6988 = vadd.f32 %v6856, %v6987
        %6989 = vmatmul.f32.gmra.mxu0 %v6766
        %v6990 = vpop.f32.mrf.mxu0
        %v6991 = vadd.f32 %v6861, %v6990
        %6992 = vdwg.mxu0
        %6993 = vmatpush.msra.mxu0 %v6735
        %6994 = vmatpush.msra.mxu0 %v6675
        %6995 = vmatpush.msra.mxu0 %v6615
        %6996 = vmatpush.msra.mxu0 %v6555
        %6997 = vmatpush.msra.mxu0 %v6495
        %6998 = vmatpush.msra.mxu0 %v6435
        %6999 = vmatpush.msra.mxu0 %v6375
        %7000 = vmatpush.msra.mxu0 %v6315
        %7001 = vmatpush.msra.mxu0 %v6255
        %7002 = vmatpush.msra.mxu0 %v6195
        %7003 = vmatpush.msra.mxu0 %v6135
        %7004 = vmatpush.msra.mxu0 %v6075
        %7005 = vmatpush.msra.mxu0 %v6015
        %7006 = vmatpush.msra.mxu0 %v5955
        %7007 = vmatpush.msra.mxu0 %v5895
        %7008 = vmatpush.msra.mxu0 %v5835
        %7009 = vmatmul.f32.gmra.mxu0 %v6751
        %v7010 = vpop.f32.mrf.mxu0
        %v7011 = vadd.f32 %v6786, %v7010
        %7012 = vmatmul.f32.gmra.mxu0 %v6752
        %v7013 = vpop.f32.mrf.mxu0
        %v7014 = vadd.f32 %v6791, %v7013
        %7015 = vmatmul.f32.gmra.mxu0 %v6753
        %v7016 = vpop.f32.mrf.mxu0
        %v7017 = vadd.f32 %v6796, %v7016
        %7018 = vmatmul.f32.gmra.mxu0 %v6754
        %v7019 = vpop.f32.mrf.mxu0
        %v7020 = vadd.f32 %v6801, %v7019
        %7021 = vmatmul.f32.gmra.mxu0 %v6755
        %v7022 = vpop.f32.mrf.mxu0
        %v7023 = vadd.f32 %v6806, %v7022
        %7024 = vmatmul.f32.gmra.mxu0 %v6756
        %v7025 = vpop.f32.mrf.mxu0
        %v7026 = vadd.f32 %v6811, %v7025
        %7027 = vmatmul.f32.gmra.mxu0 %v6757
        %v7028 = vpop.f32.mrf.mxu0
        %v7029 = vadd.f32 %v6816, %v7028
        %7030 = vmatmul.f32.gmra.mxu0 %v6758
        %v7031 = vpop.f32.mrf.mxu0
        %v7032 = vadd.f32 %v6821, %v7031
        %7033 = vmatmul.f32.gmra.mxu0 %v6759
        %v7034 = vpop.f32.mrf.mxu0
        %v7035 = vadd.f32 %v6826, %v7034
        %7036 = vmatmul.f32.gmra.mxu0 %v6760
        %v7037 = vpop.f32.mrf.mxu0
        %v7038 = vadd.f32 %v6831, %v7037
        %7039 = vmatmul.f32.gmra.mxu0 %v6761
        %v7040 = vpop.f32.mrf.mxu0
        %v7041 = vadd.f32 %v6836, %v7040
        %7042 = vmatmul.f32.gmra.mxu0 %v6762
        %v7043 = vpop.f32.mrf.mxu0
        %v7044 = vadd.f32 %v6841, %v7043
        %7045 = vmatmul.f32.gmra.mxu0 %v6763
        %v7046 = vpop.f32.mrf.mxu0
        %v7047 = vadd.f32 %v6846, %v7046
        %7048 = vmatmul.f32.gmra.mxu0 %v6764
        %v7049 = vpop.f32.mrf.mxu0
        %v7050 = vadd.f32 %v6851, %v7049
        %7051 = vmatmul.f32.gmra.mxu0 %v6765
        %v7052 = vpop.f32.mrf.mxu0
        %v7053 = vadd.f32 %v6856, %v7052
        %7054 = vmatmul.f32.gmra.mxu0 %v6766
        %v7055 = vpop.f32.mrf.mxu0
        %v7056 = vadd.f32 %v6861, %v7055
        %7057 = vdwg.mxu0
        %7058 = vmatpush.msra.mxu0 %v6750
        %7059 = vmatpush.msra.mxu0 %v6690
        %7060 = vmatpush.msra.mxu0 %v6630
        %7061 = vmatpush.msra.mxu0 %v6570
        %7062 = vmatpush.msra.mxu0 %v6510
        %7063 = vmatpush.msra.mxu0 %v6450
        %7064 = vmatpush.msra.mxu0 %v6390
        %7065 = vmatpush.msra.mxu0 %v6330
        %7066 = vmatpush.msra.mxu0 %v6270
        %7067 = vmatpush.msra.mxu0 %v6210
        %7068 = vmatpush.msra.mxu0 %v6150
        %7069 = vmatpush.msra.mxu0 %v6090
        %7070 = vmatpush.msra.mxu0 %v6030
        %7071 = vmatpush.msra.mxu0 %v5970
        %7072 = vmatpush.msra.mxu0 %v5910
        %7073 = vmatpush.msra.mxu0 %v5850
        %7074 = vmatmul.f32.gmra.mxu0 %v6751
        %v7075 = vpop.f32.mrf.mxu0
        %v7076 = vadd.f32 %v6786, %v7075
        %7077 = vmatmul.f32.gmra.mxu0 %v6752
        %v7078 = vpop.f32.mrf.mxu0
        %v7079 = vadd.f32 %v6791, %v7078
        %7080 = vmatmul.f32.gmra.mxu0 %v6753
        %v7081 = vpop.f32.mrf.mxu0
        %v7082 = vadd.f32 %v6796, %v7081
        %7083 = vmatmul.f32.gmra.mxu0 %v6754
        %v7084 = vpop.f32.mrf.mxu0
        %v7085 = vadd.f32 %v6801, %v7084
        %7086 = vmatmul.f32.gmra.mxu0 %v6755
        %v7087 = vpop.f32.mrf.mxu0
        %v7088 = vadd.f32 %v6806, %v7087
        %7089 = vmatmul.f32.gmra.mxu0 %v6756
        %v7090 = vpop.f32.mrf.mxu0
        %v7091 = vadd.f32 %v6811, %v7090
        %7092 = vmatmul.f32.gmra.mxu0 %v6757
        %v7093 = vpop.f32.mrf.mxu0
        %v7094 = vadd.f32 %v6816, %v7093
        %7095 = vmatmul.f32.gmra.mxu0 %v6758
        %v7096 = vpop.f32.mrf.mxu0
        %v7097 = vadd.f32 %v6821, %v7096
        %7098 = vmatmul.f32.gmra.mxu0 %v6759
        %v7099 = vpop.f32.mrf.mxu0
        %v7100 = vadd.f32 %v6826, %v7099
        %7101 = vmatmul.f32.gmra.mxu0 %v6760
        %v7102 = vpop.f32.mrf.mxu0
        %v7103 = vadd.f32 %v6831, %v7102
        %7104 = vmatmul.f32.gmra.mxu0 %v6761
        %v7105 = vpop.f32.mrf.mxu0
        %v7106 = vadd.f32 %v6836, %v7105
        %7107 = vmatmul.f32.gmra.mxu0 %v6762
        %v7108 = vpop.f32.mrf.mxu0
        %v7109 = vadd.f32 %v6841, %v7108
        %7110 = vmatmul.f32.gmra.mxu0 %v6763
        %v7111 = vpop.f32.mrf.mxu0
        %v7112 = vadd.f32 %v6846, %v7111
        %7113 = vmatmul.f32.gmra.mxu0 %v6764
        %v7114 = vpop.f32.mrf.mxu0
        %v7115 = vadd.f32 %v6851, %v7114
        %7116 = vmatmul.f32.gmra.mxu0 %v6765
        %v7117 = vpop.f32.mrf.mxu0
        %v7118 = vadd.f32 %v6856, %v7117
        %7119 = vmatmul.f32.gmra.mxu0 %v6766
        %v7120 = vpop.f32.mrf.mxu0
        %v7121 = vadd.f32 %v6861, %v7120
        %7122 = vdwg.mxu0
        %v7123 = vsub.f32 0.0, %v6881
        %v7124 = vsub.f32 0.0, %v6946
        %v7125 = vsub.f32 0.0, %v7011
        %v7126 = vsub.f32 0.0, %v7076
        %v7127 = vsub.f32 0.0, %v6884
        %v7128 = vsub.f32 0.0, %v6949
        %v7129 = vsub.f32 0.0, %v7014
        %v7130 = vsub.f32 0.0, %v7079
        %v7131 = vsub.f32 0.0, %v6887
        %v7132 = vsub.f32 0.0, %v6952
        %v7133 = vsub.f32 0.0, %v7017
        %v7134 = vsub.f32 0.0, %v7082
        %v7135 = vsub.f32 0.0, %v6890
        %v7136 = vsub.f32 0.0, %v6955
        %v7137 = vsub.f32 0.0, %v7020
        %v7138 = vsub.f32 0.0, %v7085
        %v7139 = vsub.f32 0.0, %v6893
        %v7140 = vsub.f32 0.0, %v6958
        %v7141 = vsub.f32 0.0, %v7023
        %v7142 = vsub.f32 0.0, %v7088
        %v7143 = vsub.f32 0.0, %v6896
        %v7144 = vsub.f32 0.0, %v6961
        %v7145 = vsub.f32 0.0, %v7026
        %v7146 = vsub.f32 0.0, %v7091
        %v7147 = vsub.f32 0.0, %v6899
        %v7148 = vsub.f32 0.0, %v6964
        %v7149 = vsub.f32 0.0, %v7029
        %v7150 = vsub.f32 0.0, %v7094
        %v7151 = vsub.f32 0.0, %v6902
        %v7152 = vsub.f32 0.0, %v6967
        %v7153 = vsub.f32 0.0, %v7032
        %v7154 = vsub.f32 0.0, %v7097
        %v7155 = vsub.f32 0.0, %v6905
        %v7156 = vsub.f32 0.0, %v6970
        %v7157 = vsub.f32 0.0, %v7035
        %v7158 = vsub.f32 0.0, %v7100
        %v7159 = vsub.f32 0.0, %v6908
        %v7160 = vsub.f32 0.0, %v6973
        %v7161 = vsub.f32 0.0, %v7038
        %v7162 = vsub.f32 0.0, %v7103
        %v7163 = vsub.f32 0.0, %v6911
        %v7164 = vsub.f32 0.0, %v6976
        %v7165 = vsub.f32 0.0, %v7041
        %v7166 = vsub.f32 0.0, %v7106
        %v7167 = vsub.f32 0.0, %v6914
        %v7168 = vsub.f32 0.0, %v6979
        %v7169 = vsub.f32 0.0, %v7044
        %v7170 = vsub.f32 0.0, %v7109
        %v7171 = vsub.f32 0.0, %v6917
        %v7172 = vsub.f32 0.0, %v6982
        %v7173 = vsub.f32 0.0, %v7047
        %v7174 = vsub.f32 0.0, %v7112
        %v7175 = vsub.f32 0.0, %v6920
        %v7176 = vsub.f32 0.0, %v6985
        %v7177 = vsub.f32 0.0, %v7050
        %v7178 = vsub.f32 0.0, %v7115
        %v7179 = vsub.f32 0.0, %v6923
        %v7180 = vsub.f32 0.0, %v6988
        %v7181 = vsub.f32 0.0, %v7053
        %v7182 = vsub.f32 0.0, %v7118
        %v7183 = vsub.f32 0.0, %v6926
        %v7184 = vsub.f32 0.0, %v6991
        %v7185 = vsub.f32 0.0, %v7056
        %v7186 = vsub.f32 0.0, %v7121
        %v7187 = vmul.f32 %v7123, 1.442695
        %v7188 = vpow.pop %v7187
        %v7189 = vmul.f32 %v7124, 1.442695
        %v7190 = vpow.pop %v7189
        %v7191 = vmul.f32 %v7125, 1.442695
        %v7192 = vpow.pop %v7191
        %v7193 = vmul.f32 %v7126, 1.442695
        %v7194 = vpow.pop %v7193
        %v7195 = vmul.f32 %v7127, 1.442695
        %v7196 = vpow.pop %v7195
        %v7197 = vmul.f32 %v7128, 1.442695
        %v7198 = vpow.pop %v7197
        %v7199 = vmul.f32 %v7129, 1.442695
        %v7200 = vpow.pop %v7199
        %v7201 = vmul.f32 %v7130, 1.442695
        %v7202 = vpow.pop %v7201
        %v7203 = vmul.f32 %v7131, 1.442695
        %v7204 = vpow.pop %v7203
        %v7205 = vmul.f32 %v7132, 1.442695
        %v7206 = vpow.pop %v7205
        %v7207 = vmul.f32 %v7133, 1.442695
        %v7208 = vpow.pop %v7207
        %v7209 = vmul.f32 %v7134, 1.442695
        %v7210 = vpow.pop %v7209
        %v7211 = vmul.f32 %v7135, 1.442695
        %v7212 = vpow.pop %v7211
        %v7213 = vmul.f32 %v7136, 1.442695
        %v7214 = vpow.pop %v7213
        %v7215 = vmul.f32 %v7137, 1.442695
        %v7216 = vpow.pop %v7215
        %v7217 = vmul.f32 %v7138, 1.442695
        %v7218 = vpow.pop %v7217
        %v7219 = vmul.f32 %v7139, 1.442695
        %v7220 = vpow.pop %v7219
        %v7221 = vmul.f32 %v7140, 1.442695
        %v7222 = vpow.pop %v7221
        %v7223 = vmul.f32 %v7141, 1.442695
        %v7224 = vpow.pop %v7223
        %v7225 = vmul.f32 %v7142, 1.442695
        %v7226 = vpow.pop %v7225
        %v7227 = vmul.f32 %v7143, 1.442695
        %v7228 = vpow.pop %v7227
        %v7229 = vmul.f32 %v7144, 1.442695
        %v7230 = vpow.pop %v7229
        %v7231 = vmul.f32 %v7145, 1.442695
        %v7232 = vpow.pop %v7231
        %v7233 = vmul.f32 %v7146, 1.442695
        %v7234 = vpow.pop %v7233
        %v7235 = vmul.f32 %v7147, 1.442695
        %v7236 = vpow.pop %v7235
        %v7237 = vmul.f32 %v7148, 1.442695
        %v7238 = vpow.pop %v7237
        %v7239 = vmul.f32 %v7149, 1.442695
        %v7240 = vpow.pop %v7239
        %v7241 = vmul.f32 %v7150, 1.442695
        %v7242 = vpow.pop %v7241
        %v7243 = vmul.f32 %v7151, 1.442695
        %v7244 = vpow.pop %v7243
        %v7245 = vmul.f32 %v7152, 1.442695
        %v7246 = vpow.pop %v7245
        %v7247 = vmul.f32 %v7153, 1.442695
        %v7248 = vpow.pop %v7247
        %v7249 = vmul.f32 %v7154, 1.442695
        %v7250 = vpow.pop %v7249
        %v7251 = vmul.f32 %v7155, 1.442695
        %v7252 = vpow.pop %v7251
        %v7253 = vmul.f32 %v7156, 1.442695
        %v7254 = vpow.pop %v7253
        %v7255 = vmul.f32 %v7157, 1.442695
        %v7256 = vpow.pop %v7255
        %v7257 = vmul.f32 %v7158, 1.442695
        %v7258 = vpow.pop %v7257
        %v7259 = vmul.f32 %v7159, 1.442695
        %v7260 = vpow.pop %v7259
        %v7261 = vmul.f32 %v7160, 1.442695
        %v7262 = vpow.pop %v7261
        %v7263 = vmul.f32 %v7161, 1.442695
        %v7264 = vpow.pop %v7263
        %v7265 = vmul.f32 %v7162, 1.442695
        %v7266 = vpow.pop %v7265
        %v7267 = vmul.f32 %v7163, 1.442695
        %v7268 = vpow.pop %v7267
        %v7269 = vmul.f32 %v7164, 1.442695
        %v7270 = vpow.pop %v7269
        %v7271 = vmul.f32 %v7165, 1.442695
        %v7272 = vpow.pop %v7271
        %v7273 = vmul.f32 %v7166, 1.442695
        %v7274 = vpow.pop %v7273
        %v7275 = vmul.f32 %v7167, 1.442695
        %v7276 = vpow.pop %v7275
        %v7277 = vmul.f32 %v7168, 1.442695
        %v7278 = vpow.pop %v7277
        %v7279 = vmul.f32 %v7169, 1.442695
        %v7280 = vpow.pop %v7279
        %v7281 = vmul.f32 %v7170, 1.442695
        %v7282 = vpow.pop %v7281
        %v7283 = vmul.f32 %v7171, 1.442695
        %v7284 = vpow.pop %v7283
        %v7285 = vmul.f32 %v7172, 1.442695
        %v7286 = vpow.pop %v7285
        %v7287 = vmul.f32 %v7173, 1.442695
        %v7288 = vpow.pop %v7287
        %v7289 = vmul.f32 %v7174, 1.442695
        %v7290 = vpow.pop %v7289
        %v7291 = vmul.f32 %v7175, 1.442695
        %v7292 = vpow.pop %v7291
        %v7293 = vmul.f32 %v7176, 1.442695
        %v7294 = vpow.pop %v7293
        %v7295 = vmul.f32 %v7177, 1.442695
        %v7296 = vpow.pop %v7295
        %v7297 = vmul.f32 %v7178, 1.442695
        %v7298 = vpow.pop %v7297
        %v7299 = vmul.f32 %v7179, 1.442695
        %v7300 = vpow.pop %v7299
        %v7301 = vmul.f32 %v7180, 1.442695
        %v7302 = vpow.pop %v7301
        %v7303 = vmul.f32 %v7181, 1.442695
        %v7304 = vpow.pop %v7303
        %v7305 = vmul.f32 %v7182, 1.442695
        %v7306 = vpow.pop %v7305
        %v7307 = vmul.f32 %v7183, 1.442695
        %v7308 = vpow.pop %v7307
        %v7309 = vmul.f32 %v7184, 1.442695
        %v7310 = vpow.pop %v7309
        %v7311 = vmul.f32 %v7185, 1.442695
        %v7312 = vpow.pop %v7311
        %v7313 = vmul.f32 %v7186, 1.442695
        %v7314 = vpow.pop %v7313
        %v7315 = vadd.f32 %v7188, 1.0
        %v7316 = vadd.f32 %v7190, 1.0
        %v7317 = vadd.f32 %v7192, 1.0
        %v7318 = vadd.f32 %v7194, 1.0
        %v7319 = vadd.f32 %v7196, 1.0
        %v7320 = vadd.f32 %v7198, 1.0
        %v7321 = vadd.f32 %v7200, 1.0
        %v7322 = vadd.f32 %v7202, 1.0
        %v7323 = vadd.f32 %v7204, 1.0
        %v7324 = vadd.f32 %v7206, 1.0
        %v7325 = vadd.f32 %v7208, 1.0
        %v7326 = vadd.f32 %v7210, 1.0
        %v7327 = vadd.f32 %v7212, 1.0
        %v7328 = vadd.f32 %v7214, 1.0
        %v7329 = vadd.f32 %v7216, 1.0
        %v7330 = vadd.f32 %v7218, 1.0
        %v7331 = vadd.f32 %v7220, 1.0
        %v7332 = vadd.f32 %v7222, 1.0
        %v7333 = vadd.f32 %v7224, 1.0
        %v7334 = vadd.f32 %v7226, 1.0
        %v7335 = vadd.f32 %v7228, 1.0
        %v7336 = vadd.f32 %v7230, 1.0
        %v7337 = vadd.f32 %v7232, 1.0
        %v7338 = vadd.f32 %v7234, 1.0
        %v7339 = vadd.f32 %v7236, 1.0
        %v7340 = vadd.f32 %v7238, 1.0
        %v7341 = vadd.f32 %v7240, 1.0
        %v7342 = vadd.f32 %v7242, 1.0
        %v7343 = vadd.f32 %v7244, 1.0
        %v7344 = vadd.f32 %v7246, 1.0
        %v7345 = vadd.f32 %v7248, 1.0
        %v7346 = vadd.f32 %v7250, 1.0
        %v7347 = vadd.f32 %v7252, 1.0
        %v7348 = vadd.f32 %v7254, 1.0
        %v7349 = vadd.f32 %v7256, 1.0
        %v7350 = vadd.f32 %v7258, 1.0
        %v7351 = vadd.f32 %v7260, 1.0
        %v7352 = vadd.f32 %v7262, 1.0
        %v7353 = vadd.f32 %v7264, 1.0
        %v7354 = vadd.f32 %v7266, 1.0
        %v7355 = vadd.f32 %v7268, 1.0
        %v7356 = vadd.f32 %v7270, 1.0
        %v7357 = vadd.f32 %v7272, 1.0
        %v7358 = vadd.f32 %v7274, 1.0
        %v7359 = vadd.f32 %v7276, 1.0
        %v7360 = vadd.f32 %v7278, 1.0
        %v7361 = vadd.f32 %v7280, 1.0
        %v7362 = vadd.f32 %v7282, 1.0
        %v7363 = vadd.f32 %v7284, 1.0
        %v7364 = vadd.f32 %v7286, 1.0
        %v7365 = vadd.f32 %v7288, 1.0
        %v7366 = vadd.f32 %v7290, 1.0
        %v7367 = vadd.f32 %v7292, 1.0
        %v7368 = vadd.f32 %v7294, 1.0
        %v7369 = vadd.f32 %v7296, 1.0
        %v7370 = vadd.f32 %v7298, 1.0
        %v7371 = vadd.f32 %v7300, 1.0
        %v7372 = vadd.f32 %v7302, 1.0
        %v7373 = vadd.f32 %v7304, 1.0
        %v7374 = vadd.f32 %v7306, 1.0
        %v7375 = vadd.f32 %v7308, 1.0
        %v7376 = vadd.f32 %v7310, 1.0
        %v7377 = vadd.f32 %v7312, 1.0
        %v7378 = vadd.f32 %v7314, 1.0
        %v7379 = vrcp.pop %v7315
        %v7380 = vmul.f32 %v7315, %v7379
        %v7381 = vsub.f32 1.0, %v7380
        %v7382 = vmul.f32 %v7379, %v7381
        %v7383 = vadd.f32 %v7379, %v7382
        %vm7384 = vweird.f32 %v7315
        %vm7385 = vweird.f32 %v7379
        %vm7386 = vmor %vm7384, %vm7385
        %v7387 = vsel %vm7386, %v7379, %v7383
        %v7388 = vand.u32 2147483647, %v7315
        %vm7389 = vcmp.eq.f32.partialorder %v7388, 8.507059e+37
        %v7390 = vand.u32 %v7315, 2147483648
        %v7391 = vor.u32 1.1754944e-38, %v7390
        %v7392 = vsel %vm7389, %v7391, %v7387
        %v7393 = vmul.f32 1.0, %v7392
        %v7394 = vrcp.pop %v7316
        %v7395 = vmul.f32 %v7316, %v7394
        %v7396 = vsub.f32 1.0, %v7395
        %v7397 = vmul.f32 %v7394, %v7396
        %v7398 = vadd.f32 %v7394, %v7397
        %vm7399 = vweird.f32 %v7316
        %vm7400 = vweird.f32 %v7394
        %vm7401 = vmor %vm7399, %vm7400
        %v7402 = vsel %vm7401, %v7394, %v7398
        %v7403 = vand.u32 2147483647, %v7316
        %vm7404 = vcmp.eq.f32.partialorder %v7403, 8.507059e+37
        %v7405 = vand.u32 %v7316, 2147483648
        %v7406 = vor.u32 1.1754944e-38, %v7405
        %v7407 = vsel %vm7404, %v7406, %v7402
        %v7408 = vmul.f32 1.0, %v7407
        %v7409 = vrcp.pop %v7317
        %v7410 = vmul.f32 %v7317, %v7409
        %v7411 = vsub.f32 1.0, %v7410
        %v7412 = vmul.f32 %v7409, %v7411
        %v7413 = vadd.f32 %v7409, %v7412
        %vm7414 = vweird.f32 %v7317
        %vm7415 = vweird.f32 %v7409
        %vm7416 = vmor %vm7414, %vm7415
        %v7417 = vsel %vm7416, %v7409, %v7413
        %v7418 = vand.u32 2147483647, %v7317
        %vm7419 = vcmp.eq.f32.partialorder %v7418, 8.507059e+37
        %v7420 = vand.u32 %v7317, 2147483648
        %v7421 = vor.u32 1.1754944e-38, %v7420
        %v7422 = vsel %vm7419, %v7421, %v7417
        %v7423 = vmul.f32 1.0, %v7422
        %v7424 = vrcp.pop %v7318
        %v7425 = vmul.f32 %v7318, %v7424
        %v7426 = vsub.f32 1.0, %v7425
        %v7427 = vmul.f32 %v7424, %v7426
        %v7428 = vadd.f32 %v7424, %v7427
        %vm7429 = vweird.f32 %v7318
        %vm7430 = vweird.f32 %v7424
        %vm7431 = vmor %vm7429, %vm7430
        %v7432 = vsel %vm7431, %v7424, %v7428
        %v7433 = vand.u32 2147483647, %v7318
        %vm7434 = vcmp.eq.f32.partialorder %v7433, 8.507059e+37
        %v7435 = vand.u32 %v7318, 2147483648
        %v7436 = vor.u32 1.1754944e-38, %v7435
        %v7437 = vsel %vm7434, %v7436, %v7432
        %v7438 = vmul.f32 1.0, %v7437
        %v7439 = vrcp.pop %v7319
        %v7440 = vmul.f32 %v7319, %v7439
        %v7441 = vsub.f32 1.0, %v7440
        %v7442 = vmul.f32 %v7439, %v7441
        %v7443 = vadd.f32 %v7439, %v7442
        %vm7444 = vweird.f32 %v7319
        %vm7445 = vweird.f32 %v7439
        %vm7446 = vmor %vm7444, %vm7445
        %v7447 = vsel %vm7446, %v7439, %v7443
        %v7448 = vand.u32 2147483647, %v7319
        %vm7449 = vcmp.eq.f32.partialorder %v7448, 8.507059e+37
        %v7450 = vand.u32 %v7319, 2147483648
        %v7451 = vor.u32 1.1754944e-38, %v7450
        %v7452 = vsel %vm7449, %v7451, %v7447
        %v7453 = vmul.f32 1.0, %v7452
        %v7454 = vrcp.pop %v7320
        %v7455 = vmul.f32 %v7320, %v7454
        %v7456 = vsub.f32 1.0, %v7455
        %v7457 = vmul.f32 %v7454, %v7456
        %v7458 = vadd.f32 %v7454, %v7457
        %vm7459 = vweird.f32 %v7320
        %vm7460 = vweird.f32 %v7454
        %vm7461 = vmor %vm7459, %vm7460
        %v7462 = vsel %vm7461, %v7454, %v7458
        %v7463 = vand.u32 2147483647, %v7320
        %vm7464 = vcmp.eq.f32.partialorder %v7463, 8.507059e+37
        %v7465 = vand.u32 %v7320, 2147483648
        %v7466 = vor.u32 1.1754944e-38, %v7465
        %v7467 = vsel %vm7464, %v7466, %v7462
        %v7468 = vmul.f32 1.0, %v7467
        %v7469 = vrcp.pop %v7321
        %v7470 = vmul.f32 %v7321, %v7469
        %v7471 = vsub.f32 1.0, %v7470
        %v7472 = vmul.f32 %v7469, %v7471
        %v7473 = vadd.f32 %v7469, %v7472
        %vm7474 = vweird.f32 %v7321
        %vm7475 = vweird.f32 %v7469
        %vm7476 = vmor %vm7474, %vm7475
        %v7477 = vsel %vm7476, %v7469, %v7473
        %v7478 = vand.u32 2147483647, %v7321
        %vm7479 = vcmp.eq.f32.partialorder %v7478, 8.507059e+37
        %v7480 = vand.u32 %v7321, 2147483648
        %v7481 = vor.u32 1.1754944e-38, %v7480
        %v7482 = vsel %vm7479, %v7481, %v7477
        %v7483 = vmul.f32 1.0, %v7482
        %v7484 = vrcp.pop %v7322
        %v7485 = vmul.f32 %v7322, %v7484
        %v7486 = vsub.f32 1.0, %v7485
        %v7487 = vmul.f32 %v7484, %v7486
        %v7488 = vadd.f32 %v7484, %v7487
        %vm7489 = vweird.f32 %v7322
        %vm7490 = vweird.f32 %v7484
        %vm7491 = vmor %vm7489, %vm7490
        %v7492 = vsel %vm7491, %v7484, %v7488
        %v7493 = vand.u32 2147483647, %v7322
        %vm7494 = vcmp.eq.f32.partialorder %v7493, 8.507059e+37
        %v7495 = vand.u32 %v7322, 2147483648
        %v7496 = vor.u32 1.1754944e-38, %v7495
        %v7497 = vsel %vm7494, %v7496, %v7492
        %v7498 = vmul.f32 1.0, %v7497
        %v7499 = vrcp.pop %v7323
        %v7500 = vmul.f32 %v7323, %v7499
        %v7501 = vsub.f32 1.0, %v7500
        %v7502 = vmul.f32 %v7499, %v7501
        %v7503 = vadd.f32 %v7499, %v7502
        %vm7504 = vweird.f32 %v7323
        %vm7505 = vweird.f32 %v7499
        %vm7506 = vmor %vm7504, %vm7505
        %v7507 = vsel %vm7506, %v7499, %v7503
        %v7508 = vand.u32 2147483647, %v7323
        %vm7509 = vcmp.eq.f32.partialorder %v7508, 8.507059e+37
        %v7510 = vand.u32 %v7323, 2147483648
        %v7511 = vor.u32 1.1754944e-38, %v7510
        %v7512 = vsel %vm7509, %v7511, %v7507
        %v7513 = vmul.f32 1.0, %v7512
        %v7514 = vrcp.pop %v7324
        %v7515 = vmul.f32 %v7324, %v7514
        %v7516 = vsub.f32 1.0, %v7515
        %v7517 = vmul.f32 %v7514, %v7516
        %v7518 = vadd.f32 %v7514, %v7517
        %vm7519 = vweird.f32 %v7324
        %vm7520 = vweird.f32 %v7514
        %vm7521 = vmor %vm7519, %vm7520
        %v7522 = vsel %vm7521, %v7514, %v7518
        %v7523 = vand.u32 2147483647, %v7324
        %vm7524 = vcmp.eq.f32.partialorder %v7523, 8.507059e+37
        %v7525 = vand.u32 %v7324, 2147483648
        %v7526 = vor.u32 1.1754944e-38, %v7525
        %v7527 = vsel %vm7524, %v7526, %v7522
        %v7528 = vmul.f32 1.0, %v7527
        %v7529 = vrcp.pop %v7325
        %v7530 = vmul.f32 %v7325, %v7529
        %v7531 = vsub.f32 1.0, %v7530
        %v7532 = vmul.f32 %v7529, %v7531
        %v7533 = vadd.f32 %v7529, %v7532
        %vm7534 = vweird.f32 %v7325
        %vm7535 = vweird.f32 %v7529
        %vm7536 = vmor %vm7534, %vm7535
        %v7537 = vsel %vm7536, %v7529, %v7533
        %v7538 = vand.u32 2147483647, %v7325
        %vm7539 = vcmp.eq.f32.partialorder %v7538, 8.507059e+37
        %v7540 = vand.u32 %v7325, 2147483648
        %v7541 = vor.u32 1.1754944e-38, %v7540
        %v7542 = vsel %vm7539, %v7541, %v7537
        %v7543 = vmul.f32 1.0, %v7542
        %v7544 = vrcp.pop %v7326
        %v7545 = vmul.f32 %v7326, %v7544
        %v7546 = vsub.f32 1.0, %v7545
        %v7547 = vmul.f32 %v7544, %v7546
        %v7548 = vadd.f32 %v7544, %v7547
        %vm7549 = vweird.f32 %v7326
        %vm7550 = vweird.f32 %v7544
        %vm7551 = vmor %vm7549, %vm7550
        %v7552 = vsel %vm7551, %v7544, %v7548
        %v7553 = vand.u32 2147483647, %v7326
        %vm7554 = vcmp.eq.f32.partialorder %v7553, 8.507059e+37
        %v7555 = vand.u32 %v7326, 2147483648
        %v7556 = vor.u32 1.1754944e-38, %v7555
        %v7557 = vsel %vm7554, %v7556, %v7552
        %v7558 = vmul.f32 1.0, %v7557
        %v7559 = vrcp.pop %v7327
        %v7560 = vmul.f32 %v7327, %v7559
        %v7561 = vsub.f32 1.0, %v7560
        %v7562 = vmul.f32 %v7559, %v7561
        %v7563 = vadd.f32 %v7559, %v7562
        %vm7564 = vweird.f32 %v7327
        %vm7565 = vweird.f32 %v7559
        %vm7566 = vmor %vm7564, %vm7565
        %v7567 = vsel %vm7566, %v7559, %v7563
        %v7568 = vand.u32 2147483647, %v7327
        %vm7569 = vcmp.eq.f32.partialorder %v7568, 8.507059e+37
        %v7570 = vand.u32 %v7327, 2147483648
        %v7571 = vor.u32 1.1754944e-38, %v7570
        %v7572 = vsel %vm7569, %v7571, %v7567
        %v7573 = vmul.f32 1.0, %v7572
        %v7574 = vrcp.pop %v7328
        %v7575 = vmul.f32 %v7328, %v7574
        %v7576 = vsub.f32 1.0, %v7575
        %v7577 = vmul.f32 %v7574, %v7576
        %v7578 = vadd.f32 %v7574, %v7577
        %vm7579 = vweird.f32 %v7328
        %vm7580 = vweird.f32 %v7574
        %vm7581 = vmor %vm7579, %vm7580
        %v7582 = vsel %vm7581, %v7574, %v7578
        %v7583 = vand.u32 2147483647, %v7328
        %vm7584 = vcmp.eq.f32.partialorder %v7583, 8.507059e+37
        %v7585 = vand.u32 %v7328, 2147483648
        %v7586 = vor.u32 1.1754944e-38, %v7585
        %v7587 = vsel %vm7584, %v7586, %v7582
        %v7588 = vmul.f32 1.0, %v7587
        %v7589 = vrcp.pop %v7329
        %v7590 = vmul.f32 %v7329, %v7589
        %v7591 = vsub.f32 1.0, %v7590
        %v7592 = vmul.f32 %v7589, %v7591
        %v7593 = vadd.f32 %v7589, %v7592
        %vm7594 = vweird.f32 %v7329
        %vm7595 = vweird.f32 %v7589
        %vm7596 = vmor %vm7594, %vm7595
        %v7597 = vsel %vm7596, %v7589, %v7593
        %v7598 = vand.u32 2147483647, %v7329
        %vm7599 = vcmp.eq.f32.partialorder %v7598, 8.507059e+37
        %v7600 = vand.u32 %v7329, 2147483648
        %v7601 = vor.u32 1.1754944e-38, %v7600
        %v7602 = vsel %vm7599, %v7601, %v7597
        %v7603 = vmul.f32 1.0, %v7602
        %v7604 = vrcp.pop %v7330
        %v7605 = vmul.f32 %v7330, %v7604
        %v7606 = vsub.f32 1.0, %v7605
        %v7607 = vmul.f32 %v7604, %v7606
        %v7608 = vadd.f32 %v7604, %v7607
        %vm7609 = vweird.f32 %v7330
        %vm7610 = vweird.f32 %v7604
        %vm7611 = vmor %vm7609, %vm7610
        %v7612 = vsel %vm7611, %v7604, %v7608
        %v7613 = vand.u32 2147483647, %v7330
        %vm7614 = vcmp.eq.f32.partialorder %v7613, 8.507059e+37
        %v7615 = vand.u32 %v7330, 2147483648
        %v7616 = vor.u32 1.1754944e-38, %v7615
        %v7617 = vsel %vm7614, %v7616, %v7612
        %v7618 = vmul.f32 1.0, %v7617
        %v7619 = vrcp.pop %v7331
        %v7620 = vmul.f32 %v7331, %v7619
        %v7621 = vsub.f32 1.0, %v7620
        %v7622 = vmul.f32 %v7619, %v7621
        %v7623 = vadd.f32 %v7619, %v7622
        %vm7624 = vweird.f32 %v7331
        %vm7625 = vweird.f32 %v7619
        %vm7626 = vmor %vm7624, %vm7625
        %v7627 = vsel %vm7626, %v7619, %v7623
        %v7628 = vand.u32 2147483647, %v7331
        %vm7629 = vcmp.eq.f32.partialorder %v7628, 8.507059e+37
        %v7630 = vand.u32 %v7331, 2147483648
        %v7631 = vor.u32 1.1754944e-38, %v7630
        %v7632 = vsel %vm7629, %v7631, %v7627
        %v7633 = vmul.f32 1.0, %v7632
        %v7634 = vrcp.pop %v7332
        %v7635 = vmul.f32 %v7332, %v7634
        %v7636 = vsub.f32 1.0, %v7635
        %v7637 = vmul.f32 %v7634, %v7636
        %v7638 = vadd.f32 %v7634, %v7637
        %vm7639 = vweird.f32 %v7332
        %vm7640 = vweird.f32 %v7634
        %vm7641 = vmor %vm7639, %vm7640
        %v7642 = vsel %vm7641, %v7634, %v7638
        %v7643 = vand.u32 2147483647, %v7332
        %vm7644 = vcmp.eq.f32.partialorder %v7643, 8.507059e+37
        %v7645 = vand.u32 %v7332, 2147483648
        %v7646 = vor.u32 1.1754944e-38, %v7645
        %v7647 = vsel %vm7644, %v7646, %v7642
        %v7648 = vmul.f32 1.0, %v7647
        %v7649 = vrcp.pop %v7333
        %v7650 = vmul.f32 %v7333, %v7649
        %v7651 = vsub.f32 1.0, %v7650
        %v7652 = vmul.f32 %v7649, %v7651
        %v7653 = vadd.f32 %v7649, %v7652
        %vm7654 = vweird.f32 %v7333
        %vm7655 = vweird.f32 %v7649
        %vm7656 = vmor %vm7654, %vm7655
        %v7657 = vsel %vm7656, %v7649, %v7653
        %v7658 = vand.u32 2147483647, %v7333
        %vm7659 = vcmp.eq.f32.partialorder %v7658, 8.507059e+37
        %v7660 = vand.u32 %v7333, 2147483648
        %v7661 = vor.u32 1.1754944e-38, %v7660
        %v7662 = vsel %vm7659, %v7661, %v7657
        %v7663 = vmul.f32 1.0, %v7662
        %v7664 = vrcp.pop %v7334
        %v7665 = vmul.f32 %v7334, %v7664
        %v7666 = vsub.f32 1.0, %v7665
        %v7667 = vmul.f32 %v7664, %v7666
        %v7668 = vadd.f32 %v7664, %v7667
        %vm7669 = vweird.f32 %v7334
        %vm7670 = vweird.f32 %v7664
        %vm7671 = vmor %vm7669, %vm7670
        %v7672 = vsel %vm7671, %v7664, %v7668
        %v7673 = vand.u32 2147483647, %v7334
        %vm7674 = vcmp.eq.f32.partialorder %v7673, 8.507059e+37
        %v7675 = vand.u32 %v7334, 2147483648
        %v7676 = vor.u32 1.1754944e-38, %v7675
        %v7677 = vsel %vm7674, %v7676, %v7672
        %v7678 = vmul.f32 1.0, %v7677
        %v7679 = vrcp.pop %v7335
        %v7680 = vmul.f32 %v7335, %v7679
        %v7681 = vsub.f32 1.0, %v7680
        %v7682 = vmul.f32 %v7679, %v7681
        %v7683 = vadd.f32 %v7679, %v7682
        %vm7684 = vweird.f32 %v7335
        %vm7685 = vweird.f32 %v7679
        %vm7686 = vmor %vm7684, %vm7685
        %v7687 = vsel %vm7686, %v7679, %v7683
        %v7688 = vand.u32 2147483647, %v7335
        %vm7689 = vcmp.eq.f32.partialorder %v7688, 8.507059e+37
        %v7690 = vand.u32 %v7335, 2147483648
        %v7691 = vor.u32 1.1754944e-38, %v7690
        %v7692 = vsel %vm7689, %v7691, %v7687
        %v7693 = vmul.f32 1.0, %v7692
        %v7694 = vrcp.pop %v7336
        %v7695 = vmul.f32 %v7336, %v7694
        %v7696 = vsub.f32 1.0, %v7695
        %v7697 = vmul.f32 %v7694, %v7696
        %v7698 = vadd.f32 %v7694, %v7697
        %vm7699 = vweird.f32 %v7336
        %vm7700 = vweird.f32 %v7694
        %vm7701 = vmor %vm7699, %vm7700
        %v7702 = vsel %vm7701, %v7694, %v7698
        %v7703 = vand.u32 2147483647, %v7336
        %vm7704 = vcmp.eq.f32.partialorder %v7703, 8.507059e+37
        %v7705 = vand.u32 %v7336, 2147483648
        %v7706 = vor.u32 1.1754944e-38, %v7705
        %v7707 = vsel %vm7704, %v7706, %v7702
        %v7708 = vmul.f32 1.0, %v7707
        %v7709 = vrcp.pop %v7337
        %v7710 = vmul.f32 %v7337, %v7709
        %v7711 = vsub.f32 1.0, %v7710
        %v7712 = vmul.f32 %v7709, %v7711
        %v7713 = vadd.f32 %v7709, %v7712
        %vm7714 = vweird.f32 %v7337
        %vm7715 = vweird.f32 %v7709
        %vm7716 = vmor %vm7714, %vm7715
        %v7717 = vsel %vm7716, %v7709, %v7713
        %v7718 = vand.u32 2147483647, %v7337
        %vm7719 = vcmp.eq.f32.partialorder %v7718, 8.507059e+37
        %v7720 = vand.u32 %v7337, 2147483648
        %v7721 = vor.u32 1.1754944e-38, %v7720
        %v7722 = vsel %vm7719, %v7721, %v7717
        %v7723 = vmul.f32 1.0, %v7722
        %v7724 = vrcp.pop %v7338
        %v7725 = vmul.f32 %v7338, %v7724
        %v7726 = vsub.f32 1.0, %v7725
        %v7727 = vmul.f32 %v7724, %v7726
        %v7728 = vadd.f32 %v7724, %v7727
        %vm7729 = vweird.f32 %v7338
        %vm7730 = vweird.f32 %v7724
        %vm7731 = vmor %vm7729, %vm7730
        %v7732 = vsel %vm7731, %v7724, %v7728
        %v7733 = vand.u32 2147483647, %v7338
        %vm7734 = vcmp.eq.f32.partialorder %v7733, 8.507059e+37
        %v7735 = vand.u32 %v7338, 2147483648
        %v7736 = vor.u32 1.1754944e-38, %v7735
        %v7737 = vsel %vm7734, %v7736, %v7732
        %v7738 = vmul.f32 1.0, %v7737
        %v7739 = vrcp.pop %v7339
        %v7740 = vmul.f32 %v7339, %v7739
        %v7741 = vsub.f32 1.0, %v7740
        %v7742 = vmul.f32 %v7739, %v7741
        %v7743 = vadd.f32 %v7739, %v7742
        %vm7744 = vweird.f32 %v7339
        %vm7745 = vweird.f32 %v7739
        %vm7746 = vmor %vm7744, %vm7745
        %v7747 = vsel %vm7746, %v7739, %v7743
        %v7748 = vand.u32 2147483647, %v7339
        %vm7749 = vcmp.eq.f32.partialorder %v7748, 8.507059e+37
        %v7750 = vand.u32 %v7339, 2147483648
        %v7751 = vor.u32 1.1754944e-38, %v7750
        %v7752 = vsel %vm7749, %v7751, %v7747
        %v7753 = vmul.f32 1.0, %v7752
        %v7754 = vrcp.pop %v7340
        %v7755 = vmul.f32 %v7340, %v7754
        %v7756 = vsub.f32 1.0, %v7755
        %v7757 = vmul.f32 %v7754, %v7756
        %v7758 = vadd.f32 %v7754, %v7757
        %vm7759 = vweird.f32 %v7340
        %vm7760 = vweird.f32 %v7754
        %vm7761 = vmor %vm7759, %vm7760
        %v7762 = vsel %vm7761, %v7754, %v7758
        %v7763 = vand.u32 2147483647, %v7340
        %vm7764 = vcmp.eq.f32.partialorder %v7763, 8.507059e+37
        %v7765 = vand.u32 %v7340, 2147483648
        %v7766 = vor.u32 1.1754944e-38, %v7765
        %v7767 = vsel %vm7764, %v7766, %v7762
        %v7768 = vmul.f32 1.0, %v7767
        %v7769 = vrcp.pop %v7341
        %v7770 = vmul.f32 %v7341, %v7769
        %v7771 = vsub.f32 1.0, %v7770
        %v7772 = vmul.f32 %v7769, %v7771
        %v7773 = vadd.f32 %v7769, %v7772
        %vm7774 = vweird.f32 %v7341
        %vm7775 = vweird.f32 %v7769
        %vm7776 = vmor %vm7774, %vm7775
        %v7777 = vsel %vm7776, %v7769, %v7773
        %v7778 = vand.u32 2147483647, %v7341
        %vm7779 = vcmp.eq.f32.partialorder %v7778, 8.507059e+37
        %v7780 = vand.u32 %v7341, 2147483648
        %v7781 = vor.u32 1.1754944e-38, %v7780
        %v7782 = vsel %vm7779, %v7781, %v7777
        %v7783 = vmul.f32 1.0, %v7782
        %v7784 = vrcp.pop %v7342
        %v7785 = vmul.f32 %v7342, %v7784
        %v7786 = vsub.f32 1.0, %v7785
        %v7787 = vmul.f32 %v7784, %v7786
        %v7788 = vadd.f32 %v7784, %v7787
        %vm7789 = vweird.f32 %v7342
        %vm7790 = vweird.f32 %v7784
        %vm7791 = vmor %vm7789, %vm7790
        %v7792 = vsel %vm7791, %v7784, %v7788
        %v7793 = vand.u32 2147483647, %v7342
        %vm7794 = vcmp.eq.f32.partialorder %v7793, 8.507059e+37
        %v7795 = vand.u32 %v7342, 2147483648
        %v7796 = vor.u32 1.1754944e-38, %v7795
        %v7797 = vsel %vm7794, %v7796, %v7792
        %v7798 = vmul.f32 1.0, %v7797
        %v7799 = vrcp.pop %v7343
        %v7800 = vmul.f32 %v7343, %v7799
        %v7801 = vsub.f32 1.0, %v7800
        %v7802 = vmul.f32 %v7799, %v7801
        %v7803 = vadd.f32 %v7799, %v7802
        %vm7804 = vweird.f32 %v7343
        %vm7805 = vweird.f32 %v7799
        %vm7806 = vmor %vm7804, %vm7805
        %v7807 = vsel %vm7806, %v7799, %v7803
        %v7808 = vand.u32 2147483647, %v7343
        %vm7809 = vcmp.eq.f32.partialorder %v7808, 8.507059e+37
        %v7810 = vand.u32 %v7343, 2147483648
        %v7811 = vor.u32 1.1754944e-38, %v7810
        %v7812 = vsel %vm7809, %v7811, %v7807
        %v7813 = vmul.f32 1.0, %v7812
        %v7814 = vrcp.pop %v7344
        %v7815 = vmul.f32 %v7344, %v7814
        %v7816 = vsub.f32 1.0, %v7815
        %v7817 = vmul.f32 %v7814, %v7816
        %v7818 = vadd.f32 %v7814, %v7817
        %vm7819 = vweird.f32 %v7344
        %vm7820 = vweird.f32 %v7814
        %vm7821 = vmor %vm7819, %vm7820
        %v7822 = vsel %vm7821, %v7814, %v7818
        %v7823 = vand.u32 2147483647, %v7344
        %vm7824 = vcmp.eq.f32.partialorder %v7823, 8.507059e+37
        %v7825 = vand.u32 %v7344, 2147483648
        %v7826 = vor.u32 1.1754944e-38, %v7825
        %v7827 = vsel %vm7824, %v7826, %v7822
        %v7828 = vmul.f32 1.0, %v7827
        %v7829 = vrcp.pop %v7345
        %v7830 = vmul.f32 %v7345, %v7829
        %v7831 = vsub.f32 1.0, %v7830
        %v7832 = vmul.f32 %v7829, %v7831
        %v7833 = vadd.f32 %v7829, %v7832
        %vm7834 = vweird.f32 %v7345
        %vm7835 = vweird.f32 %v7829
        %vm7836 = vmor %vm7834, %vm7835
        %v7837 = vsel %vm7836, %v7829, %v7833
        %v7838 = vand.u32 2147483647, %v7345
        %vm7839 = vcmp.eq.f32.partialorder %v7838, 8.507059e+37
        %v7840 = vand.u32 %v7345, 2147483648
        %v7841 = vor.u32 1.1754944e-38, %v7840
        %v7842 = vsel %vm7839, %v7841, %v7837
        %v7843 = vmul.f32 1.0, %v7842
        %v7844 = vrcp.pop %v7346
        %v7845 = vmul.f32 %v7346, %v7844
        %v7846 = vsub.f32 1.0, %v7845
        %v7847 = vmul.f32 %v7844, %v7846
        %v7848 = vadd.f32 %v7844, %v7847
        %vm7849 = vweird.f32 %v7346
        %vm7850 = vweird.f32 %v7844
        %vm7851 = vmor %vm7849, %vm7850
        %v7852 = vsel %vm7851, %v7844, %v7848
        %v7853 = vand.u32 2147483647, %v7346
        %vm7854 = vcmp.eq.f32.partialorder %v7853, 8.507059e+37
        %v7855 = vand.u32 %v7346, 2147483648
        %v7856 = vor.u32 1.1754944e-38, %v7855
        %v7857 = vsel %vm7854, %v7856, %v7852
        %v7858 = vmul.f32 1.0, %v7857
        %v7859 = vrcp.pop %v7347
        %v7860 = vmul.f32 %v7347, %v7859
        %v7861 = vsub.f32 1.0, %v7860
        %v7862 = vmul.f32 %v7859, %v7861
        %v7863 = vadd.f32 %v7859, %v7862
        %vm7864 = vweird.f32 %v7347
        %vm7865 = vweird.f32 %v7859
        %vm7866 = vmor %vm7864, %vm7865
        %v7867 = vsel %vm7866, %v7859, %v7863
        %v7868 = vand.u32 2147483647, %v7347
        %vm7869 = vcmp.eq.f32.partialorder %v7868, 8.507059e+37
        %v7870 = vand.u32 %v7347, 2147483648
        %v7871 = vor.u32 1.1754944e-38, %v7870
        %v7872 = vsel %vm7869, %v7871, %v7867
        %v7873 = vmul.f32 1.0, %v7872
        %v7874 = vrcp.pop %v7348
        %v7875 = vmul.f32 %v7348, %v7874
        %v7876 = vsub.f32 1.0, %v7875
        %v7877 = vmul.f32 %v7874, %v7876
        %v7878 = vadd.f32 %v7874, %v7877
        %vm7879 = vweird.f32 %v7348
        %vm7880 = vweird.f32 %v7874
        %vm7881 = vmor %vm7879, %vm7880
        %v7882 = vsel %vm7881, %v7874, %v7878
        %v7883 = vand.u32 2147483647, %v7348
        %vm7884 = vcmp.eq.f32.partialorder %v7883, 8.507059e+37
        %v7885 = vand.u32 %v7348, 2147483648
        %v7886 = vor.u32 1.1754944e-38, %v7885
        %v7887 = vsel %vm7884, %v7886, %v7882
        %v7888 = vmul.f32 1.0, %v7887
        %v7889 = vrcp.pop %v7349
        %v7890 = vmul.f32 %v7349, %v7889
        %v7891 = vsub.f32 1.0, %v7890
        %v7892 = vmul.f32 %v7889, %v7891
        %v7893 = vadd.f32 %v7889, %v7892
        %vm7894 = vweird.f32 %v7349
        %vm7895 = vweird.f32 %v7889
        %vm7896 = vmor %vm7894, %vm7895
        %v7897 = vsel %vm7896, %v7889, %v7893
        %v7898 = vand.u32 2147483647, %v7349
        %vm7899 = vcmp.eq.f32.partialorder %v7898, 8.507059e+37
        %v7900 = vand.u32 %v7349, 2147483648
        %v7901 = vor.u32 1.1754944e-38, %v7900
        %v7902 = vsel %vm7899, %v7901, %v7897
        %v7903 = vmul.f32 1.0, %v7902
        %v7904 = vrcp.pop %v7350
        %v7905 = vmul.f32 %v7350, %v7904
        %v7906 = vsub.f32 1.0, %v7905
        %v7907 = vmul.f32 %v7904, %v7906
        %v7908 = vadd.f32 %v7904, %v7907
        %vm7909 = vweird.f32 %v7350
        %vm7910 = vweird.f32 %v7904
        %vm7911 = vmor %vm7909, %vm7910
        %v7912 = vsel %vm7911, %v7904, %v7908
        %v7913 = vand.u32 2147483647, %v7350
        %vm7914 = vcmp.eq.f32.partialorder %v7913, 8.507059e+37
        %v7915 = vand.u32 %v7350, 2147483648
        %v7916 = vor.u32 1.1754944e-38, %v7915
        %v7917 = vsel %vm7914, %v7916, %v7912
        %v7918 = vmul.f32 1.0, %v7917
        %v7919 = vrcp.pop %v7351
        %v7920 = vmul.f32 %v7351, %v7919
        %v7921 = vsub.f32 1.0, %v7920
        %v7922 = vmul.f32 %v7919, %v7921
        %v7923 = vadd.f32 %v7919, %v7922
        %vm7924 = vweird.f32 %v7351
        %vm7925 = vweird.f32 %v7919
        %vm7926 = vmor %vm7924, %vm7925
        %v7927 = vsel %vm7926, %v7919, %v7923
        %v7928 = vand.u32 2147483647, %v7351
        %vm7929 = vcmp.eq.f32.partialorder %v7928, 8.507059e+37
        %v7930 = vand.u32 %v7351, 2147483648
        %v7931 = vor.u32 1.1754944e-38, %v7930
        %v7932 = vsel %vm7929, %v7931, %v7927
        %v7933 = vmul.f32 1.0, %v7932
        %v7934 = vrcp.pop %v7352
        %v7935 = vmul.f32 %v7352, %v7934
        %v7936 = vsub.f32 1.0, %v7935
        %v7937 = vmul.f32 %v7934, %v7936
        %v7938 = vadd.f32 %v7934, %v7937
        %vm7939 = vweird.f32 %v7352
        %vm7940 = vweird.f32 %v7934
        %vm7941 = vmor %vm7939, %vm7940
        %v7942 = vsel %vm7941, %v7934, %v7938
        %v7943 = vand.u32 2147483647, %v7352
        %vm7944 = vcmp.eq.f32.partialorder %v7943, 8.507059e+37
        %v7945 = vand.u32 %v7352, 2147483648
        %v7946 = vor.u32 1.1754944e-38, %v7945
        %v7947 = vsel %vm7944, %v7946, %v7942
        %v7948 = vmul.f32 1.0, %v7947
        %v7949 = vrcp.pop %v7353
        %v7950 = vmul.f32 %v7353, %v7949
        %v7951 = vsub.f32 1.0, %v7950
        %v7952 = vmul.f32 %v7949, %v7951
        %v7953 = vadd.f32 %v7949, %v7952
        %vm7954 = vweird.f32 %v7353
        %vm7955 = vweird.f32 %v7949
        %vm7956 = vmor %vm7954, %vm7955
        %v7957 = vsel %vm7956, %v7949, %v7953
        %v7958 = vand.u32 2147483647, %v7353
        %vm7959 = vcmp.eq.f32.partialorder %v7958, 8.507059e+37
        %v7960 = vand.u32 %v7353, 2147483648
        %v7961 = vor.u32 1.1754944e-38, %v7960
        %v7962 = vsel %vm7959, %v7961, %v7957
        %v7963 = vmul.f32 1.0, %v7962
        %v7964 = vrcp.pop %v7354
        %v7965 = vmul.f32 %v7354, %v7964
        %v7966 = vsub.f32 1.0, %v7965
        %v7967 = vmul.f32 %v7964, %v7966
        %v7968 = vadd.f32 %v7964, %v7967
        %vm7969 = vweird.f32 %v7354
        %vm7970 = vweird.f32 %v7964
        %vm7971 = vmor %vm7969, %vm7970
        %v7972 = vsel %vm7971, %v7964, %v7968
        %v7973 = vand.u32 2147483647, %v7354
        %vm7974 = vcmp.eq.f32.partialorder %v7973, 8.507059e+37
        %v7975 = vand.u32 %v7354, 2147483648
        %v7976 = vor.u32 1.1754944e-38, %v7975
        %v7977 = vsel %vm7974, %v7976, %v7972
        %v7978 = vmul.f32 1.0, %v7977
        %v7979 = vrcp.pop %v7355
        %v7980 = vmul.f32 %v7355, %v7979
        %v7981 = vsub.f32 1.0, %v7980
        %v7982 = vmul.f32 %v7979, %v7981
        %v7983 = vadd.f32 %v7979, %v7982
        %vm7984 = vweird.f32 %v7355
        %vm7985 = vweird.f32 %v7979
        %vm7986 = vmor %vm7984, %vm7985
        %v7987 = vsel %vm7986, %v7979, %v7983
        %v7988 = vand.u32 2147483647, %v7355
        %vm7989 = vcmp.eq.f32.partialorder %v7988, 8.507059e+37
        %v7990 = vand.u32 %v7355, 2147483648
        %v7991 = vor.u32 1.1754944e-38, %v7990
        %v7992 = vsel %vm7989, %v7991, %v7987
        %v7993 = vmul.f32 1.0, %v7992
        %v7994 = vrcp.pop %v7356
        %v7995 = vmul.f32 %v7356, %v7994
        %v7996 = vsub.f32 1.0, %v7995
        %v7997 = vmul.f32 %v7994, %v7996
        %v7998 = vadd.f32 %v7994, %v7997
        %vm7999 = vweird.f32 %v7356
        %vm8000 = vweird.f32 %v7994
        %vm8001 = vmor %vm7999, %vm8000
        %v8002 = vsel %vm8001, %v7994, %v7998
        %v8003 = vand.u32 2147483647, %v7356
        %vm8004 = vcmp.eq.f32.partialorder %v8003, 8.507059e+37
        %v8005 = vand.u32 %v7356, 2147483648
        %v8006 = vor.u32 1.1754944e-38, %v8005
        %v8007 = vsel %vm8004, %v8006, %v8002
        %v8008 = vmul.f32 1.0, %v8007
        %v8009 = vrcp.pop %v7357
        %v8010 = vmul.f32 %v7357, %v8009
        %v8011 = vsub.f32 1.0, %v8010
        %v8012 = vmul.f32 %v8009, %v8011
        %v8013 = vadd.f32 %v8009, %v8012
        %vm8014 = vweird.f32 %v7357
        %vm8015 = vweird.f32 %v8009
        %vm8016 = vmor %vm8014, %vm8015
        %v8017 = vsel %vm8016, %v8009, %v8013
        %v8018 = vand.u32 2147483647, %v7357
        %vm8019 = vcmp.eq.f32.partialorder %v8018, 8.507059e+37
        %v8020 = vand.u32 %v7357, 2147483648
        %v8021 = vor.u32 1.1754944e-38, %v8020
        %v8022 = vsel %vm8019, %v8021, %v8017
        %v8023 = vmul.f32 1.0, %v8022
        %v8024 = vrcp.pop %v7358
        %v8025 = vmul.f32 %v7358, %v8024
        %v8026 = vsub.f32 1.0, %v8025
        %v8027 = vmul.f32 %v8024, %v8026
        %v8028 = vadd.f32 %v8024, %v8027
        %vm8029 = vweird.f32 %v7358
        %vm8030 = vweird.f32 %v8024
        %vm8031 = vmor %vm8029, %vm8030
        %v8032 = vsel %vm8031, %v8024, %v8028
        %v8033 = vand.u32 2147483647, %v7358
        %vm8034 = vcmp.eq.f32.partialorder %v8033, 8.507059e+37
        %v8035 = vand.u32 %v7358, 2147483648
        %v8036 = vor.u32 1.1754944e-38, %v8035
        %v8037 = vsel %vm8034, %v8036, %v8032
        %v8038 = vmul.f32 1.0, %v8037
        %v8039 = vrcp.pop %v7359
        %v8040 = vmul.f32 %v7359, %v8039
        %v8041 = vsub.f32 1.0, %v8040
        %v8042 = vmul.f32 %v8039, %v8041
        %v8043 = vadd.f32 %v8039, %v8042
        %vm8044 = vweird.f32 %v7359
        %vm8045 = vweird.f32 %v8039
        %vm8046 = vmor %vm8044, %vm8045
        %v8047 = vsel %vm8046, %v8039, %v8043
        %v8048 = vand.u32 2147483647, %v7359
        %vm8049 = vcmp.eq.f32.partialorder %v8048, 8.507059e+37
        %v8050 = vand.u32 %v7359, 2147483648
        %v8051 = vor.u32 1.1754944e-38, %v8050
        %v8052 = vsel %vm8049, %v8051, %v8047
        %v8053 = vmul.f32 1.0, %v8052
        %v8054 = vrcp.pop %v7360
        %v8055 = vmul.f32 %v7360, %v8054
        %v8056 = vsub.f32 1.0, %v8055
        %v8057 = vmul.f32 %v8054, %v8056
        %v8058 = vadd.f32 %v8054, %v8057
        %vm8059 = vweird.f32 %v7360
        %vm8060 = vweird.f32 %v8054
        %vm8061 = vmor %vm8059, %vm8060
        %v8062 = vsel %vm8061, %v8054, %v8058
        %v8063 = vand.u32 2147483647, %v7360
        %vm8064 = vcmp.eq.f32.partialorder %v8063, 8.507059e+37
        %v8065 = vand.u32 %v7360, 2147483648
        %v8066 = vor.u32 1.1754944e-38, %v8065
        %v8067 = vsel %vm8064, %v8066, %v8062
        %v8068 = vmul.f32 1.0, %v8067
        %v8069 = vrcp.pop %v7361
        %v8070 = vmul.f32 %v7361, %v8069
        %v8071 = vsub.f32 1.0, %v8070
        %v8072 = vmul.f32 %v8069, %v8071
        %v8073 = vadd.f32 %v8069, %v8072
        %vm8074 = vweird.f32 %v7361
        %vm8075 = vweird.f32 %v8069
        %vm8076 = vmor %vm8074, %vm8075
        %v8077 = vsel %vm8076, %v8069, %v8073
        %v8078 = vand.u32 2147483647, %v7361
        %vm8079 = vcmp.eq.f32.partialorder %v8078, 8.507059e+37
        %v8080 = vand.u32 %v7361, 2147483648
        %v8081 = vor.u32 1.1754944e-38, %v8080
        %v8082 = vsel %vm8079, %v8081, %v8077
        %v8083 = vmul.f32 1.0, %v8082
        %v8084 = vrcp.pop %v7362
        %v8085 = vmul.f32 %v7362, %v8084
        %v8086 = vsub.f32 1.0, %v8085
        %v8087 = vmul.f32 %v8084, %v8086
        %v8088 = vadd.f32 %v8084, %v8087
        %vm8089 = vweird.f32 %v7362
        %vm8090 = vweird.f32 %v8084
        %vm8091 = vmor %vm8089, %vm8090
        %v8092 = vsel %vm8091, %v8084, %v8088
        %v8093 = vand.u32 2147483647, %v7362
        %vm8094 = vcmp.eq.f32.partialorder %v8093, 8.507059e+37
        %v8095 = vand.u32 %v7362, 2147483648
        %v8096 = vor.u32 1.1754944e-38, %v8095
        %v8097 = vsel %vm8094, %v8096, %v8092
        %v8098 = vmul.f32 1.0, %v8097
        %v8099 = vrcp.pop %v7363
        %v8100 = vmul.f32 %v7363, %v8099
        %v8101 = vsub.f32 1.0, %v8100
        %v8102 = vmul.f32 %v8099, %v8101
        %v8103 = vadd.f32 %v8099, %v8102
        %vm8104 = vweird.f32 %v7363
        %vm8105 = vweird.f32 %v8099
        %vm8106 = vmor %vm8104, %vm8105
        %v8107 = vsel %vm8106, %v8099, %v8103
        %v8108 = vand.u32 2147483647, %v7363
        %vm8109 = vcmp.eq.f32.partialorder %v8108, 8.507059e+37
        %v8110 = vand.u32 %v7363, 2147483648
        %v8111 = vor.u32 1.1754944e-38, %v8110
        %v8112 = vsel %vm8109, %v8111, %v8107
        %v8113 = vmul.f32 1.0, %v8112
        %v8114 = vrcp.pop %v7364
        %v8115 = vmul.f32 %v7364, %v8114
        %v8116 = vsub.f32 1.0, %v8115
        %v8117 = vmul.f32 %v8114, %v8116
        %v8118 = vadd.f32 %v8114, %v8117
        %vm8119 = vweird.f32 %v7364
        %vm8120 = vweird.f32 %v8114
        %vm8121 = vmor %vm8119, %vm8120
        %v8122 = vsel %vm8121, %v8114, %v8118
        %v8123 = vand.u32 2147483647, %v7364
        %vm8124 = vcmp.eq.f32.partialorder %v8123, 8.507059e+37
        %v8125 = vand.u32 %v7364, 2147483648
        %v8126 = vor.u32 1.1754944e-38, %v8125
        %v8127 = vsel %vm8124, %v8126, %v8122
        %v8128 = vmul.f32 1.0, %v8127
        %v8129 = vrcp.pop %v7365
        %v8130 = vmul.f32 %v7365, %v8129
        %v8131 = vsub.f32 1.0, %v8130
        %v8132 = vmul.f32 %v8129, %v8131
        %v8133 = vadd.f32 %v8129, %v8132
        %vm8134 = vweird.f32 %v7365
        %vm8135 = vweird.f32 %v8129
        %vm8136 = vmor %vm8134, %vm8135
        %v8137 = vsel %vm8136, %v8129, %v8133
        %v8138 = vand.u32 2147483647, %v7365
        %vm8139 = vcmp.eq.f32.partialorder %v8138, 8.507059e+37
        %v8140 = vand.u32 %v7365, 2147483648
        %v8141 = vor.u32 1.1754944e-38, %v8140
        %v8142 = vsel %vm8139, %v8141, %v8137
        %v8143 = vmul.f32 1.0, %v8142
        %v8144 = vrcp.pop %v7366
        %v8145 = vmul.f32 %v7366, %v8144
        %v8146 = vsub.f32 1.0, %v8145
        %v8147 = vmul.f32 %v8144, %v8146
        %v8148 = vadd.f32 %v8144, %v8147
        %vm8149 = vweird.f32 %v7366
        %vm8150 = vweird.f32 %v8144
        %vm8151 = vmor %vm8149, %vm8150
        %v8152 = vsel %vm8151, %v8144, %v8148
        %v8153 = vand.u32 2147483647, %v7366
        %vm8154 = vcmp.eq.f32.partialorder %v8153, 8.507059e+37
        %v8155 = vand.u32 %v7366, 2147483648
        %v8156 = vor.u32 1.1754944e-38, %v8155
        %v8157 = vsel %vm8154, %v8156, %v8152
        %v8158 = vmul.f32 1.0, %v8157
        %v8159 = vrcp.pop %v7367
        %v8160 = vmul.f32 %v7367, %v8159
        %v8161 = vsub.f32 1.0, %v8160
        %v8162 = vmul.f32 %v8159, %v8161
        %v8163 = vadd.f32 %v8159, %v8162
        %vm8164 = vweird.f32 %v7367
        %vm8165 = vweird.f32 %v8159
        %vm8166 = vmor %vm8164, %vm8165
        %v8167 = vsel %vm8166, %v8159, %v8163
        %v8168 = vand.u32 2147483647, %v7367
        %vm8169 = vcmp.eq.f32.partialorder %v8168, 8.507059e+37
        %v8170 = vand.u32 %v7367, 2147483648
        %v8171 = vor.u32 1.1754944e-38, %v8170
        %v8172 = vsel %vm8169, %v8171, %v8167
        %v8173 = vmul.f32 1.0, %v8172
        %v8174 = vrcp.pop %v7368
        %v8175 = vmul.f32 %v7368, %v8174
        %v8176 = vsub.f32 1.0, %v8175
        %v8177 = vmul.f32 %v8174, %v8176
        %v8178 = vadd.f32 %v8174, %v8177
        %vm8179 = vweird.f32 %v7368
        %vm8180 = vweird.f32 %v8174
        %vm8181 = vmor %vm8179, %vm8180
        %v8182 = vsel %vm8181, %v8174, %v8178
        %v8183 = vand.u32 2147483647, %v7368
        %vm8184 = vcmp.eq.f32.partialorder %v8183, 8.507059e+37
        %v8185 = vand.u32 %v7368, 2147483648
        %v8186 = vor.u32 1.1754944e-38, %v8185
        %v8187 = vsel %vm8184, %v8186, %v8182
        %v8188 = vmul.f32 1.0, %v8187
        %v8189 = vrcp.pop %v7369
        %v8190 = vmul.f32 %v7369, %v8189
        %v8191 = vsub.f32 1.0, %v8190
        %v8192 = vmul.f32 %v8189, %v8191
        %v8193 = vadd.f32 %v8189, %v8192
        %vm8194 = vweird.f32 %v7369
        %vm8195 = vweird.f32 %v8189
        %vm8196 = vmor %vm8194, %vm8195
        %v8197 = vsel %vm8196, %v8189, %v8193
        %v8198 = vand.u32 2147483647, %v7369
        %vm8199 = vcmp.eq.f32.partialorder %v8198, 8.507059e+37
        %v8200 = vand.u32 %v7369, 2147483648
        %v8201 = vor.u32 1.1754944e-38, %v8200
        %v8202 = vsel %vm8199, %v8201, %v8197
        %v8203 = vmul.f32 1.0, %v8202
        %v8204 = vrcp.pop %v7370
        %v8205 = vmul.f32 %v7370, %v8204
        %v8206 = vsub.f32 1.0, %v8205
        %v8207 = vmul.f32 %v8204, %v8206
        %v8208 = vadd.f32 %v8204, %v8207
        %vm8209 = vweird.f32 %v7370
        %vm8210 = vweird.f32 %v8204
        %vm8211 = vmor %vm8209, %vm8210
        %v8212 = vsel %vm8211, %v8204, %v8208
        %v8213 = vand.u32 2147483647, %v7370
        %vm8214 = vcmp.eq.f32.partialorder %v8213, 8.507059e+37
        %v8215 = vand.u32 %v7370, 2147483648
        %v8216 = vor.u32 1.1754944e-38, %v8215
        %v8217 = vsel %vm8214, %v8216, %v8212
        %v8218 = vmul.f32 1.0, %v8217
        %v8219 = vrcp.pop %v7371
        %v8220 = vmul.f32 %v7371, %v8219
        %v8221 = vsub.f32 1.0, %v8220
        %v8222 = vmul.f32 %v8219, %v8221
        %v8223 = vadd.f32 %v8219, %v8222
        %vm8224 = vweird.f32 %v7371
        %vm8225 = vweird.f32 %v8219
        %vm8226 = vmor %vm8224, %vm8225
        %v8227 = vsel %vm8226, %v8219, %v8223
        %v8228 = vand.u32 2147483647, %v7371
        %vm8229 = vcmp.eq.f32.partialorder %v8228, 8.507059e+37
        %v8230 = vand.u32 %v7371, 2147483648
        %v8231 = vor.u32 1.1754944e-38, %v8230
        %v8232 = vsel %vm8229, %v8231, %v8227
        %v8233 = vmul.f32 1.0, %v8232
        %v8234 = vrcp.pop %v7372
        %v8235 = vmul.f32 %v7372, %v8234
        %v8236 = vsub.f32 1.0, %v8235
        %v8237 = vmul.f32 %v8234, %v8236
        %v8238 = vadd.f32 %v8234, %v8237
        %vm8239 = vweird.f32 %v7372
        %vm8240 = vweird.f32 %v8234
        %vm8241 = vmor %vm8239, %vm8240
        %v8242 = vsel %vm8241, %v8234, %v8238
        %v8243 = vand.u32 2147483647, %v7372
        %vm8244 = vcmp.eq.f32.partialorder %v8243, 8.507059e+37
        %v8245 = vand.u32 %v7372, 2147483648
        %v8246 = vor.u32 1.1754944e-38, %v8245
        %v8247 = vsel %vm8244, %v8246, %v8242
        %v8248 = vmul.f32 1.0, %v8247
        %v8249 = vrcp.pop %v7373
        %v8250 = vmul.f32 %v7373, %v8249
        %v8251 = vsub.f32 1.0, %v8250
        %v8252 = vmul.f32 %v8249, %v8251
        %v8253 = vadd.f32 %v8249, %v8252
        %vm8254 = vweird.f32 %v7373
        %vm8255 = vweird.f32 %v8249
        %vm8256 = vmor %vm8254, %vm8255
        %v8257 = vsel %vm8256, %v8249, %v8253
        %v8258 = vand.u32 2147483647, %v7373
        %vm8259 = vcmp.eq.f32.partialorder %v8258, 8.507059e+37
        %v8260 = vand.u32 %v7373, 2147483648
        %v8261 = vor.u32 1.1754944e-38, %v8260
        %v8262 = vsel %vm8259, %v8261, %v8257
        %v8263 = vmul.f32 1.0, %v8262
        %v8264 = vrcp.pop %v7374
        %v8265 = vmul.f32 %v7374, %v8264
        %v8266 = vsub.f32 1.0, %v8265
        %v8267 = vmul.f32 %v8264, %v8266
        %v8268 = vadd.f32 %v8264, %v8267
        %vm8269 = vweird.f32 %v7374
        %vm8270 = vweird.f32 %v8264
        %vm8271 = vmor %vm8269, %vm8270
        %v8272 = vsel %vm8271, %v8264, %v8268
        %v8273 = vand.u32 2147483647, %v7374
        %vm8274 = vcmp.eq.f32.partialorder %v8273, 8.507059e+37
        %v8275 = vand.u32 %v7374, 2147483648
        %v8276 = vor.u32 1.1754944e-38, %v8275
        %v8277 = vsel %vm8274, %v8276, %v8272
        %v8278 = vmul.f32 1.0, %v8277
        %v8279 = vrcp.pop %v7375
        %v8280 = vmul.f32 %v7375, %v8279
        %v8281 = vsub.f32 1.0, %v8280
        %v8282 = vmul.f32 %v8279, %v8281
        %v8283 = vadd.f32 %v8279, %v8282
        %vm8284 = vweird.f32 %v7375
        %vm8285 = vweird.f32 %v8279
        %vm8286 = vmor %vm8284, %vm8285
        %v8287 = vsel %vm8286, %v8279, %v8283
        %v8288 = vand.u32 2147483647, %v7375
        %vm8289 = vcmp.eq.f32.partialorder %v8288, 8.507059e+37
        %v8290 = vand.u32 %v7375, 2147483648
        %v8291 = vor.u32 1.1754944e-38, %v8290
        %v8292 = vsel %vm8289, %v8291, %v8287
        %v8293 = vmul.f32 1.0, %v8292
        %v8294 = vrcp.pop %v7376
        %v8295 = vmul.f32 %v7376, %v8294
        %v8296 = vsub.f32 1.0, %v8295
        %v8297 = vmul.f32 %v8294, %v8296
        %v8298 = vadd.f32 %v8294, %v8297
        %vm8299 = vweird.f32 %v7376
        %vm8300 = vweird.f32 %v8294
        %vm8301 = vmor %vm8299, %vm8300
        %v8302 = vsel %vm8301, %v8294, %v8298
        %v8303 = vand.u32 2147483647, %v7376
        %vm8304 = vcmp.eq.f32.partialorder %v8303, 8.507059e+37
        %v8305 = vand.u32 %v7376, 2147483648
        %v8306 = vor.u32 1.1754944e-38, %v8305
        %v8307 = vsel %vm8304, %v8306, %v8302
        %v8308 = vmul.f32 1.0, %v8307
        %v8309 = vrcp.pop %v7377
        %v8310 = vmul.f32 %v7377, %v8309
        %v8311 = vsub.f32 1.0, %v8310
        %v8312 = vmul.f32 %v8309, %v8311
        %v8313 = vadd.f32 %v8309, %v8312
        %vm8314 = vweird.f32 %v7377
        %vm8315 = vweird.f32 %v8309
        %vm8316 = vmor %vm8314, %vm8315
        %v8317 = vsel %vm8316, %v8309, %v8313
        %v8318 = vand.u32 2147483647, %v7377
        %vm8319 = vcmp.eq.f32.partialorder %v8318, 8.507059e+37
        %v8320 = vand.u32 %v7377, 2147483648
        %v8321 = vor.u32 1.1754944e-38, %v8320
        %v8322 = vsel %vm8319, %v8321, %v8317
        %v8323 = vmul.f32 1.0, %v8322
        %v8324 = vrcp.pop %v7378
        %v8325 = vmul.f32 %v7378, %v8324
        %v8326 = vsub.f32 1.0, %v8325
        %v8327 = vmul.f32 %v8324, %v8326
        %v8328 = vadd.f32 %v8324, %v8327
        %vm8329 = vweird.f32 %v7378
        %vm8330 = vweird.f32 %v8324
        %vm8331 = vmor %vm8329, %vm8330
        %v8332 = vsel %vm8331, %v8324, %v8328
        %v8333 = vand.u32 2147483647, %v7378
        %vm8334 = vcmp.eq.f32.partialorder %v8333, 8.507059e+37
        %v8335 = vand.u32 %v7378, 2147483648
        %v8336 = vor.u32 1.1754944e-38, %v8335
        %v8337 = vsel %vm8334, %v8336, %v8332
        %v8338 = vmul.f32 1.0, %v8337
        %v8339 = vld [vmem:[%s11] sm:$0x1]
        %v8340 = vld [vmem:[#allocation2] sm:$0x1]
        %8342 = vset.pattern.permute.xlu0 0
        %8343 = vperm.xlu0 %8342, %v8340
        %v8344 = vpop.permute.xlu0 %8343
        %v8346 = vperm.slane %v8344, 0
        %8347 = vmatpush.msra.mxu0 %v8293
        %8348 = vmatpush.msra.mxu0 %v8233
        %8349 = vmatpush.msra.mxu0 %v8173
        %8350 = vmatpush.msra.mxu0 %v8113
        %8351 = vmatpush.msra.mxu0 %v8053
        %8352 = vmatpush.msra.mxu0 %v7993
        %8353 = vmatpush.msra.mxu0 %v7933
        %8354 = vmatpush.msra.mxu0 %v7873
        %8355 = vmatpush.msra.mxu0 %v7813
        %8356 = vmatpush.msra.mxu0 %v7753
        %8357 = vmatpush.msra.mxu0 %v7693
        %8358 = vmatpush.msra.mxu0 %v7633
        %8359 = vmatpush.msra.mxu0 %v7573
        %8360 = vmatpush.msra.mxu0 %v7513
        %8361 = vmatpush.msra.mxu0 %v7453
        %8362 = vmatpush.msra.mxu0 %v7393
        %8363 = vmatmul.f32.gmra.mxu0 %v8339
        %v8364 = vpop.f32.mrf.mxu0
        %v8365 = vadd.f32 %v8346, %v8364
        %8366 = vdwg.mxu0
        %8367 = vmatpush.msra.mxu0 %v8308
        %8368 = vmatpush.msra.mxu0 %v8248
        %8369 = vmatpush.msra.mxu0 %v8188
        %8370 = vmatpush.msra.mxu0 %v8128
        %8371 = vmatpush.msra.mxu0 %v8068
        %8372 = vmatpush.msra.mxu0 %v8008
        %8373 = vmatpush.msra.mxu0 %v7948
        %8374 = vmatpush.msra.mxu0 %v7888
        %8375 = vmatpush.msra.mxu0 %v7828
        %8376 = vmatpush.msra.mxu0 %v7768
        %8377 = vmatpush.msra.mxu0 %v7708
        %8378 = vmatpush.msra.mxu0 %v7648
        %8379 = vmatpush.msra.mxu0 %v7588
        %8380 = vmatpush.msra.mxu0 %v7528
        %8381 = vmatpush.msra.mxu0 %v7468
        %8382 = vmatpush.msra.mxu0 %v7408
        %8383 = vmatmul.f32.gmra.mxu0 %v8339
        %v8384 = vpop.f32.mrf.mxu0
        %v8385 = vadd.f32 %v8346, %v8384
        %8386 = vdwg.mxu0
        %8387 = vmatpush.msra.mxu0 %v8323
        %8388 = vmatpush.msra.mxu0 %v8263
        %8389 = vmatpush.msra.mxu0 %v8203
        %8390 = vmatpush.msra.mxu0 %v8143
        %8391 = vmatpush.msra.mxu0 %v8083
        %8392 = vmatpush.msra.mxu0 %v8023
        %8393 = vmatpush.msra.mxu0 %v7963
        %8394 = vmatpush.msra.mxu0 %v7903
        %8395 = vmatpush.msra.mxu0 %v7843
        %8396 = vmatpush.msra.mxu0 %v7783
        %8397 = vmatpush.msra.mxu0 %v7723
        %8398 = vmatpush.msra.mxu0 %v7663
        %8399 = vmatpush.msra.mxu0 %v7603
        %8400 = vmatpush.msra.mxu0 %v7543
        %8401 = vmatpush.msra.mxu0 %v7483
        %8402 = vmatpush.msra.mxu0 %v7423
        %8403 = vmatmul.f32.gmra.mxu0 %v8339
        %v8404 = vpop.f32.mrf.mxu0
        %v8405 = vadd.f32 %v8346, %v8404
        %8406 = vdwg.mxu0
        %8407 = vmatpush.msra.mxu0 %v8338
        %8408 = vmatpush.msra.mxu0 %v8278
        %8409 = vmatpush.msra.mxu0 %v8218
        %8410 = vmatpush.msra.mxu0 %v8158
        %8411 = vmatpush.msra.mxu0 %v8098
        %8412 = vmatpush.msra.mxu0 %v8038
        %8413 = vmatpush.msra.mxu0 %v7978
        %8414 = vmatpush.msra.mxu0 %v7918
        %8415 = vmatpush.msra.mxu0 %v7858
        %8416 = vmatpush.msra.mxu0 %v7798
        %8417 = vmatpush.msra.mxu0 %v7738
        %8418 = vmatpush.msra.mxu0 %v7678
        %8419 = vmatpush.msra.mxu0 %v7618
        %8420 = vmatpush.msra.mxu0 %v7558
        %8421 = vmatpush.msra.mxu0 %v7498
        %8422 = vmatpush.msra.mxu0 %v7438
        %8423 = vmatmul.f32.gmra.mxu0 %v8339
        %v8424 = vpop.f32.mrf.mxu0
        %v8425 = vadd.f32 %v8346, %v8424
        %8426 = vdwg.mxu0
        %v8431 = vrot.slane %v8385, 7
        %v8432 = vrot.slane %v8405, 6
        %v8433 = vrot.slane %v8425, 5
        %vm8434 = vcmask 1040384
        %v8435 = vsel %vm8434, %v8365, %v8431
        %vm8436 = vcmask 1042434
        %v8437 = vsel %vm8436, %v8432, %v8433
        %vm8438 = vcmask 1041408
        %v8439 = vsel %vm8438, %v8435, %v8437
        %v8441 = vlaneseq
        %vm8442 = vcmp.ge.s32.totalorder %v8441, 0
        %vm8443 = vcmp.lt.s32.totalorder %v8441, 512
        %vm8444 = vmand %vm8442, %vm8443
        %8445 = vst.msk [vmem:[%s434] sm:$0xf] %vm8444, %v8439
        %s8446 = sand.u32 %s315, 1
        %s8447 = scalar_lea.sflag [#allocation4], %s8446
        %s8448 = sand.u32 %s315, 1
        %s8449 = smul.addr %s8448, 4
        %s8450 = scalar_lea.vmem [#allocation3], %s8449
        // Predicated region
        $region73: #{tpu_custom_call.1} parent=71 // pred_check
          %p8451 = pneg %p325
        $region74: #{tpu_custom_call.1} parent=71 // pred_check_branch
          %8453 = sbr.rel (%p8451) target = $region76
        $region75: #{tpu_custom_call.1} parent=71 // pred_region
          %s8454 = smul.u32 4, %s29
          %8456 = vsyncadd %s8447, 0
          %s8457 = scalar_lea.hbm %s13, %s8454
          %s8459 = sshll.u32 %s8450, 4
          %s8460 = int_to_ptr.vmem [resolvable:$true] %s8459
          %s8461 = sshll.u32 %s8457, 4
          %s8462 = int_to_ptr.hbm [resolvable:$true] %s8461
          %8464 = dma.vmem_to_hbm [thread:$0]  %s8460, 64, %s8462, %s8447
        $region76: #{tpu_custom_call.1} parent=71 // pred_fallthru
          _
      $region72: #{tpu_custom_call.1} parent=5 // pred_fallthru
        _
      %p8465 = scmp.le.s32.totalorder 2, %s24
      // Predicated region
      $region77: #{tpu_custom_call.1} parent=5 // pred_check
        %p8466 = pneg %p8465
      $region78: #{tpu_custom_call.1} parent=5 // pred_check_branch
        %8468 = sbr.rel (%p8466) target = $region80
      $region79: #{tpu_custom_call.1} parent=5 // pred_region
        %s8469 = ssub.s32 %s24, 2
        // Predicated region
        $region81: #{tpu_custom_call.1} parent=79 // pred_check
          %p8470 = pneg %p331
        $region82: #{tpu_custom_call.1} parent=79 // pred_check_branch
          %8472 = sbr.rel (%p8470) target = $region84
        $region83: #{tpu_custom_call.1} parent=79 // pred_region
          %s8473 = sand.u32 %s316, 1
          %s8474 = scalar_lea.sflag [#allocation4], %s8473
          %s8475 = sand.u32 %s316, 1
          %s8476 = smul.addr %s8475, 4
          %s8477 = scalar_lea.vmem [#allocation3], %s8476
          %8479 = dma.done %s8474, 64
        $region84: #{tpu_custom_call.1} parent=79 // pred_fallthru
          _
      $region80: #{tpu_custom_call.1} parent=5 // pred_fallthru
        _
    $region6: #{tpu_custom_call.1} parent=1 // loop_footer
      %s28 = sadd.s32 1, %s24
    $region7: #{tpu_custom_call.1} parent=1 // loop_footer_branch
      %23 = sbr.rel target = $region3
    $region8: #{tpu_custom_call.1} parent=1 // loop_exit
      _
    %8480 = vsyncpa [#allocation4], 1
    %s8481 = scalar_lea.sflag [#allocation4], 1
    %8482 = vsyncpa %s8481, 1

</llo_original>
